<compile_context>
chip_gen: v7x
topology: tpu7x:2x2x1
jax: 0.10.0
libtpu: 0.0.40
codegen_flags: <defaults>
</compile_context>

<pallas_src>
import functools

import numpy as np
import jax
import jax.numpy as jnp
from jax import lax
from jax.experimental import pallas as pl
from jax.experimental.pallas import tpu as pltpu

_EPS = 1e-5
_CDT = jnp.bfloat16                      # MXU-operand / activation-storage dtype
_VMEM_LIMIT = 48 * 1024 * 1024           # raised scoped-VMEM limit (safe on v5e/v6e/v7x)


# ---------------------------------------------------------------------------
# Kernel 1: im2col patches @ W + InstanceNorm + ReLU  (stem + downsample convs)
# ---------------------------------------------------------------------------
def _matmul_in_relu_kernel(p_ref, w_ref, o_ref, *, inv_m, eps):
    # p_ref: (M, K) bf16 ; w_ref: (K, N) bf16 ; o_ref: (M, N) bf16
    y = jnp.dot(p_ref[...], w_ref[...], preferred_element_type=jnp.float32)
    # One-pass InstanceNorm statistics (conv bias omitted: IN cancels it exactly).
    s = jnp.sum(y, axis=0, keepdims=True)
    ss = jnp.sum(y * y, axis=0, keepdims=True)
    mean = s * inv_m
    var = jnp.maximum(ss * inv_m - mean * mean, 0.0)
    y = (y - mean) * lax.rsqrt(var + eps)
    y = jnp.maximum(y, 0.0)
    o_ref[...] = y.astype(o_ref.dtype)


def matmul_in_relu(patches, weight):
    """patches: [B, M, K] bf16 ; weight: [K, N] bf16 -> [B, M, N] bf16."""
    B, M, K = patches.shape
    N = weight.shape[1]
    kernel = functools.partial(_matmul_in_relu_kernel, inv_m=1.0 / M, eps=_EPS)
    cost = pl.CostEstimate(
        flops=int(2 * B * M * K * N + 6 * B * M * N),
        transcendentals=int(B * N),
        bytes_accessed=int(2 * (B * M * K + K * N + B * M * N)))
    # TODO(synk): for very large spatial sizes (v7x 64 MiB VMEM) tile M with an
    # extra 'arbitrary' grid axis, carry sum/sumsq in VMEM scratch and normalize
    # in a second pass; at the resolutions used here one batch element fits.
    return pl.pallas_call(
        kernel,
        out_shape=jax.ShapeDtypeStruct((B, M, N), _CDT),
        grid=(B,),
        in_specs=[
            pl.BlockSpec((None, M, K), lambda b: (b, 0, 0)),
            pl.BlockSpec((K, N), lambda b: (0, 0)),
        ],
        out_specs=pl.BlockSpec((None, M, N), lambda b: (b, 0, 0)),
        compiler_params=pltpu.CompilerParams(
            dimension_semantics=("parallel",),
            vmem_limit_bytes=_VMEM_LIMIT),
        cost_estimate=cost,
    )(patches, weight)


# ---------------------------------------------------------------------------
# Kernel 2: im2col-free tap-sum conv + InstanceNorm + (residual) + activation
# ---------------------------------------------------------------------------
def _make_tap_conv_kernel(groups, Mq, inv_m, has_residual, activation, eps):
    def kernel(*refs):
        if has_residual:
            x_ref, w_ref, mask_ref, r_ref, o_ref = refs
        else:
            x_ref, w_ref, mask_ref, o_ref = refs

        # Per output group: sum of row-shifted [Mq, C] @ [C, N] tap matmuls on
        # the flattened padded activation (bf16 operands, f32 accumulation).
        ys = []
        for taps in groups:                                  # static structure
            acc = None
            for off, ti in taps:                             # static offsets
                lhs = x_ref[pl.ds(off, Mq), :]
                d = jnp.dot(lhs, w_ref[ti], preferred_element_type=jnp.float32)
                acc = d if acc is None else acc + d
            ys.append(acc)

        # One-pass InstanceNorm stats over the valid columns of every group
        # (the last Wq-W columns of each flattened row are junk and masked out).
        m = mask_ref[...]                                    # (Mq, 1) f32 {0,1}
        s = None
        ss = None
        for y in ys:
            ym = y * m
            ps = jnp.sum(ym, axis=0, keepdims=True)
            pss = jnp.sum(ym * y, axis=0, keepdims=True)
            s = ps if s is None else s + ps
            ss = pss if ss is None else ss + pss
        mean = s * inv_m
        var = jnp.maximum(ss * inv_m - mean * mean, 0.0)
        scale = lax.rsqrt(var + eps)

        for g, y in enumerate(ys):
            y = (y - mean) * scale
            if has_residual:
                y = y + r_ref[g].astype(jnp.float32)
            if activation == "relu":
                y = jnp.maximum(y, 0.0)
            o_ref[g] = y.astype(o_ref.dtype)

    return kernel


def tap_conv_in_act(x_flat, w_taps, mask, groups, *, Mq, N, valid_per_group,
                    residual=None, activation="relu"):
    """x_flat: [B, Lf, C] bf16 (padded row-flattened input); w_taps: [T, C, N] bf16;
    mask: [Mq, 1] f32; residual: [B, G, Mq, N] bf16 or None -> [B, G, Mq, N] bf16."""
    B, Lf, C = x_flat.shape
    T = w_taps.shape[0]
    G = len(groups)
    inv_m = 1.0 / float(G * valid_per_group)
    kernel = _make_tap_conv_kernel(groups, Mq, inv_m, residual is not None,
                                   activation, _EPS)
    in_specs = [
        pl.BlockSpec((None, Lf, C), lambda b: (b, 0, 0)),
        pl.BlockSpec((T, C, N), lambda b: (0, 0, 0)),
        pl.BlockSpec((Mq, 1), lambda b: (0, 0)),
    ]
    args = [x_flat, w_taps, mask]
    if residual is not None:
        in_specs.append(pl.BlockSpec((None, G, Mq, N), lambda b: (b, 0, 0, 0)))
        args.append(residual)
    n_taps = sum(len(g) for g in groups)
    cost = pl.CostEstimate(
        flops=int(2 * B * n_taps * Mq * C * N + 10 * B * G * Mq * N),
        transcendentals=int(B * N),
        bytes_accessed=int(2 * (B * Lf * C + T * C * N
                                + (2 if residual is not None else 1) * B * G * Mq * N)))
    return pl.pallas_call(
        kernel,
        out_shape=jax.ShapeDtypeStruct((B, G, Mq, N), _CDT),
        grid=(B,),
        in_specs=in_specs,
        out_specs=pl.BlockSpec((None, G, Mq, N), lambda b: (b, 0, 0, 0)),
        compiler_params=pltpu.CompilerParams(
            dimension_semantics=("parallel",),
            vmem_limit_bytes=_VMEM_LIMIT),
        cost_estimate=cost,
    )(*args)


# ---------------------------------------------------------------------------
# JAX glue: padding, im2col (stem/downsample only), layer wrappers
# ---------------------------------------------------------------------------
def _im2col(x, k, stride):
    """x: [B, H, W, C] -> patches [B, OH*OW, k*k*C], feature order (dy, dx, c)."""
    B, H, W, C = x.shape
    oh = (H - k) // stride + 1
    ow = (W - k) // stride + 1
    cols = []
    for dy in range(k):
        for dx in range(k):
            cols.append(x[:, dy:dy + stride * oh:stride,
                          dx:dx + stride * ow:stride, :])
    p = jnp.stack(cols, axis=3)                  # [B, oh, ow, k*k, C]
    return p.reshape(B, oh * ow, k * k * C), oh, ow


def conv_in_relu(x, w, *, stride, pad, pad_value=0.0, pad_mode="constant"):
    """Conv2d + InstanceNorm + ReLU (bias dropped: exactly cancelled by IN).
    x: [B,H,W,C] bf16 ; w: PyTorch Conv2d weight [N, C, kh, kw]."""
    if pad > 0:
        if pad_mode == "reflect":
            x = jnp.pad(x, ((0, 0), (pad, pad), (pad, pad), (0, 0)), mode="reflect")
        else:
            x = jnp.pad(x, ((0, 0), (pad, pad), (pad, pad), (0, 0)),
                        constant_values=pad_value)
    N, C, kh, kw = w.shape
    patches, oh, ow = _im2col(x.astype(_CDT), kh, stride)
    wm = jnp.transpose(w, (2, 3, 1, 0)).reshape(kh * kw * C, N).astype(_CDT)
    y = matmul_in_relu(patches, wm)
    return y.reshape(x.shape[0], oh, ow, N)


def conv3x3_reflect_in_act(x, w, *, residual=None, activation="relu"):
    """ReflectionPad2d(1) + Conv2d(C,N,3) + IN + optional residual + activation,
    as a fused im2col-free tap-sum kernel.  x: [B,H,W,C] bf16; w: [N,C,3,3]."""
    B, H, W, C = x.shape
    N = w.shape[0]
    Wq = W + 2
    Mq = H * Wq
    x_pad = jnp.pad(x, ((0, 0), (1, 1), (1, 1), (0, 0)), mode="reflect")
    flat = x_pad.reshape(B, (H + 2) * Wq, C)
    need = (2 * Wq + 2) + Mq                       # last tap offset + tile rows
    if need > flat.shape[1]:
        flat = jnp.pad(flat, ((0, 0), (0, need - flat.shape[1]), (0, 0)))
    groups = (tuple((dy * Wq + dx, dy * 3 + dx)
                    for dy in range(3) for dx in range(3)),)
    w_taps = jnp.stack([w[:, :, dy, dx].T
                        for dy in range(3) for dx in range(3)], axis=0)
    mask = jnp.asarray((np.arange(Mq) % Wq < W).astype(np.float32).reshape(Mq, 1))
    res = None
    if residual is not None:
        res = jnp.pad(residual, ((0, 0), (0, 0), (0, 2), (0, 0))
                      ).reshape(B, 1, Mq, N).astype(_CDT)
    y = tap_conv_in_act(flat.astype(_CDT), w_taps.astype(_CDT), mask, groups,
                        Mq=Mq, N=N, valid_per_group=H * W,
                        residual=res, activation=activation)
    # drop the junk columns of every flattened row: (B,1,Mq,N) -> (B,H,W,N)
    return y.reshape(B, H, Wq, N)[:, :, :W, :]


def conv_transpose_in_relu(x, w):
    """ConvTranspose2d(C,N,3,stride=2,padding=1,output_padding=1) + IN + ReLU via
    sub-pixel decomposition (4 output-parity groups; no structural zeros, no
    dilated im2col).  x: [B,H,W,C] bf16 ; w: PyTorch weight [C, N, 3, 3]."""
    B, H, W, C = x.shape
    N = w.shape[1]
    Wq = W + 1
    Mq = H * Wq
    x_pad = jnp.pad(x, ((0, 0), (0, 1), (0, 1), (0, 0)))     # zero-pad bottom/right
    flat = x_pad.reshape(B, (H + 1) * Wq, C)
    need = (Wq + 1) + Mq
    if need > flat.shape[1]:
        flat = jnp.pad(flat, ((0, 0), (0, need - flat.shape[1]), (0, 0)))
    # tap index t = ky*3 + kx ; out[2m+r, 2n+s] = sum of listed taps per (r,s)
    groups = (
        ((0, 4),),                                   # (0,0): x[m,n]   w[1,1]
        ((1, 3), (0, 5)),                            # (0,1): x[m,n+1] w[1,0] + x[m,n] w[1,2]
        ((Wq, 1), (0, 7)),                           # (1,0): x[m+1,n] w[0,1] + x[m,n] w[2,1]
        ((Wq + 1, 0), (Wq, 2), (1, 6), (0, 8)),      # (1,1): 4 corner taps
    )
    w_taps = jnp.stack([w[:, :, ky, kx]
                        for ky in range(3) for kx in range(3)], axis=0)
    mask = jnp.asarray((np.arange(Mq) % Wq < W).astype(np.float32).reshape(Mq, 1))
    y = tap_conv_in_act(flat.astype(_CDT), w_taps.astype(_CDT), mask, groups,
                        Mq=Mq, N=N, valid_per_group=H * W,
                        residual=None, activation="relu")
    # (B, 4, Mq, N) -> interleave parity classes into (B, 2H, 2W, N)
    y = y.reshape(B, 2, 2, H, Wq, N)[:, :, :, :, :W, :]
    y = jnp.transpose(y, (0, 3, 1, 4, 2, 5)).reshape(B, 2 * H, 2 * W, N)
    return y


def final_conv_tanh(x, w, b):
    """ConstantPad2d(3,-1) + Conv2d(32,1,7) + Tanh.  C_out=1 would force a
    lane-width-1 (masked-store) Pallas output, so this tiny layer runs as plain
    XLA per the performance review."""
    xp = jnp.pad(x, ((0, 0), (3, 3), (3, 3), (0, 0)), constant_values=-1.0)
    wk = jnp.transpose(w, (2, 3, 1, 0)).astype(_CDT)          # HWIO
    y = lax.conv_general_dilated(
        xp.astype(_CDT), wk, window_strides=(1, 1), padding="VALID",
        dimension_numbers=("NHWC", "HWIO", "NHWC"),
        preferred_element_type=jnp.float32)
    return jnp.tanh(y + b.astype(jnp.float32))


def residual_block(x, rb_params):
    w1, b1, w2, b2 = rb_params          # biases unused: cancelled exactly by IN
    h = conv3x3_reflect_in_act(x, w1, residual=None, activation="relu")
    return conv3x3_reflect_in_act(h, w2, residual=x, activation="none")


# ---------------------------------------------------------------------------
# Parameter init (deterministic, PyTorch-like uniform bounds)
# ---------------------------------------------------------------------------
def _conv_params(key, c_out, c_in, k):
    k1, k2 = jax.random.split(key)
    bound = 1.0 / float(c_in * k * k) ** 0.5
    w = jax.random.uniform(k1, (c_out, c_in, k, k), jnp.float32, -bound, bound)
    b = jax.random.uniform(k2, (c_out,), jnp.float32, -bound, bound)
    return w, b


def _convT_params(key, c_in, c_out, k):
    k1, k2 = jax.random.split(key)
    bound = 1.0 / float(c_in * k * k) ** 0.5
    w = jax.random.uniform(k1, (c_in, c_out, k, k), jnp.float32, -bound, bound)
    b = jax.random.uniform(k2, (c_out,), jnp.float32, -bound, bound)
    return w, b


def init_generator_params(key, input_nc, n_residual_blocks=9):
    keys = jax.random.split(key, 6 + 2 * n_residual_blocks)
    p = {}
    p["c1"] = _conv_params(keys[0], 32, input_nc, 7)
    p["c2"] = _conv_params(keys[1], 64, 32, 3)
    p["c3"] = _conv_params(keys[2], 128, 64, 3)
    res = []
    for i in range(n_residual_blocks):
        w1, b1 = _conv_params(keys[3 + 2 * i], 128, 128, 3)
        w2, b2 = _conv_params(keys[4 + 2 * i], 128, 128, 3)
        res.append((w1, b1, w2, b2))
    p["res"] = res
    p["t1"] = _convT_params(keys[3 + 2 * n_residual_blocks], 128, 64, 3)
    p["t2"] = _convT_params(keys[4 + 2 * n_residual_blocks], 64, 32, 3)
    p["c4"] = _conv_params(keys[5 + 2 * n_residual_blocks], 1, 32, 7)
    return p


# ---------------------------------------------------------------------------
# Generator forward (matches the PyTorch nn.Sequential exactly)
# ---------------------------------------------------------------------------
def generator_forward(params, x_nchw):
    x = jnp.transpose(x_nchw, (0, 2, 3, 1)).astype(_CDT)     # NCHW -> NHWC, bf16

    # ConstantPad2d(3,-1) + Conv(in,32,7) + IN + ReLU   (bias cancelled by IN)
    h = conv_in_relu(x, params["c1"][0], stride=1, pad=3, pad_value=-1.0)
    # Conv(32,64,3,s2,p1) + IN + ReLU
    h = conv_in_relu(h, params["c2"][0], stride=2, pad=1)
    # Conv(64,128,3,s2,p1) + IN + ReLU
    h = conv_in_relu(h, params["c3"][0], stride=2, pad=1)
    # 9 residual blocks (im2col-free fused 3x3 tap-sum kernels)
    for rb in params["res"]:
        h = residual_block(h, rb)
    # ConvTranspose(128,64,3,s2,p1,op1) + IN + ReLU  (sub-pixel decomposition)
    h = conv_transpose_in_relu(h, params["t1"][0])
    # ConvTranspose(64,32,3,s2,p1,op1) + IN + ReLU
    h = conv_transpose_in_relu(h, params["t2"][0])
    # ConstantPad2d(3,-1) + Conv(32,1,7) + Tanh  (plain XLA, C_out=1)
    h = final_conv_tanh(h, params["c4"][0], params["c4"][1])

    return jnp.transpose(h, (0, 3, 1, 2))                    # NHWC -> NCHW (f32)


if __name__ == "__main__":
    key = jax.random.PRNGKey(0)
    k_param, k_x = jax.random.split(key)

    B, input_nc, H, W = 2, 3, 16, 16
    params = init_generator_params(k_param, input_nc, n_residual_blocks=9)
    x = jax.random.normal(k_x, (B, input_nc, H, W), jnp.float32)

    fwd = jax.jit(functools.partial(generator_forward, params))
    out = jax.block_until_ready(fwd(x))

    assert out.shape == (B, 1, H, W), out.shape
    assert bool(jnp.all(jnp.isfinite(out)))
    assert bool(jnp.all(jnp.abs(out) <= 1.0))  # tanh range
    print("KERNEL_OK")
</pallas_src>

<mosaic_0001>
module attributes {stable_mosaic.version = 11 : i64} {
  func.func @_matmul_in_relu_kernel(%arg0: i32, %arg1: memref<1x256x147xbf16, #tpu.memory_space<vmem>>, %arg2: memref<147x32xbf16, #tpu.memory_space<vmem>>, %arg3: memref<1x256x32xbf16, #tpu.memory_space<vmem>>) attributes {dimension_semantics = [#tpu.dimension_semantics<parallel>], iteration_bounds = array<i64: 2>, scalar_prefetch = 0 : i64, scratch_operands = 0 : i64, tpu.core_type = #tpu.core_type<tc>, window_params = [{transform_indices = @transform_0, window_bounds = array<i64: 1, 256, 147>}, {pipeline_mode = #tpu.pipeline_mode<synchronous>, transform_indices = @transform_1, window_bounds = array<i64: 147, 32>}, {transform_indices = @transform_2, window_bounds = array<i64: 1, 256, 32>}]} {
    %c0 = arith.constant 0 : index
    %c0_0 = arith.constant 0 : index
    %c0_1 = arith.constant 0 : index
    %0 = vector.load %arg1[%c0, %c0_0, %c0_1] : memref<1x256x147xbf16, #tpu.memory_space<vmem>>, vector<1x256x147xbf16>
    %1 = vector.shape_cast %0 : vector<1x256x147xbf16> to vector<256x147xbf16>
    %c0_2 = arith.constant 0 : index
    %c0_3 = arith.constant 0 : index
    %2 = vector.load %arg2[%c0_2, %c0_3] : memref<147x32xbf16, #tpu.memory_space<vmem>>, vector<147x32xbf16>
    %cst = arith.constant dense<0.000000e+00> : vector<256x32xf32>
    %3 = tpu.matmul %1, %2, %cst {dimension_numbers = #tpu.dot_dimension_numbers<[1], [0], [0], [1], [0, 0, 1, 1], [], []>} : vector<256x147xbf16>, vector<147x32xbf16>, vector<256x32xf32> -> vector<256x32xf32>
    %cst_4 = arith.constant dense<0.000000e+00> : vector<32xf32>
    %4 = vector.multi_reduction <add>, %3, %cst_4 [0] : vector<256x32xf32> to vector<32xf32>
    %5 = vector.shape_cast %4 : vector<32xf32> to vector<1x32xf32>
    %6 = arith.mulf %3, %3 : vector<256x32xf32>
    %cst_5 = arith.constant dense<0.000000e+00> : vector<32xf32>
    %7 = vector.multi_reduction <add>, %6, %cst_5 [0] : vector<256x32xf32> to vector<32xf32>
    %8 = vector.shape_cast %7 : vector<32xf32> to vector<1x32xf32>
    %cst_6 = arith.constant 3.906250e-03 : f32
    %9 = vector.broadcast %cst_6 : f32 to vector<1x32xf32>
    %10 = arith.mulf %5, %9 : vector<1x32xf32>
    %cst_7 = arith.constant 3.906250e-03 : f32
    %11 = vector.broadcast %cst_7 : f32 to vector<1x32xf32>
    %12 = arith.mulf %8, %11 : vector<1x32xf32>
    %13 = arith.mulf %10, %10 : vector<1x32xf32>
    %14 = arith.subf %12, %13 : vector<1x32xf32>
    %cst_8 = arith.constant 0.000000e+00 : f32
    %15 = vector.broadcast %cst_8 : f32 to vector<1x32xf32>
    %16 = arith.maximumf %14, %15 : vector<1x32xf32>
    %17 = vector.broadcast %10 : vector<1x32xf32> to vector<256x32xf32>
    %18 = arith.subf %3, %17 : vector<256x32xf32>
    %cst_9 = arith.constant 9.99999974E-6 : f32
    %19 = vector.broadcast %cst_9 : f32 to vector<1x32xf32>
    %20 = arith.addf %16, %19 : vector<1x32xf32>
    %21 = math.rsqrt %20 : vector<1x32xf32>
    %22 = vector.broadcast %21 : vector<1x32xf32> to vector<256x32xf32>
    %23 = arith.mulf %18, %22 : vector<256x32xf32>
    %cst_10 = arith.constant 0.000000e+00 : f32
    %24 = vector.broadcast %cst_10 : f32 to vector<256x32xf32>
    %25 = arith.maximumf %23, %24 : vector<256x32xf32>
    %26 = arith.truncf %25 : vector<256x32xf32> to vector<256x32xbf16>
    %c0_11 = arith.constant 0 : index
    %c0_12 = arith.constant 0 : index
    %c0_13 = arith.constant 0 : index
    %27 = vector.load %arg3[%c0_11, %c0_12, %c0_13] : memref<1x256x32xbf16, #tpu.memory_space<vmem>>, vector<1x256x32xbf16>
    %28 = vector.shape_cast %27 : vector<1x256x32xbf16> to vector<256x32xbf16>
    %29 = vector.shape_cast %26 : vector<256x32xbf16> to vector<1x256x32xbf16>
    tpu.vector_store %arg3[%c0_11, %c0_12, %c0_13], %29 {strides = array<i32>} : memref<1x256x32xbf16, #tpu.memory_space<vmem>>, vector<1x256x32xbf16>,
    return
  }
  func.func @transform_0(%arg0: i32) -> (i32, i32, i32) {
    %c0_i32 = arith.constant 0 : i32
    %c0_i32_0 = arith.constant 0 : i32
    %c0_i32_1 = arith.constant 0 : i32
    return %arg0, %c0_i32, %c0_i32_0 : i32, i32, i32
  }
  func.func @transform_1(%arg0: i32) -> (i32, i32) {
    %c0_i32 = arith.constant 0 : i32
    %c0_i32_0 = arith.constant 0 : i32
    %c0_i32_1 = arith.constant 0 : i32
    return %c0_i32, %c0_i32_0 : i32, i32
  }
  func.func @transform_2(%arg0: i32) -> (i32, i32, i32) {
    %c0_i32 = arith.constant 0 : i32
    %c0_i32_0 = arith.constant 0 : i32
    %c0_i32_1 = arith.constant 0 : i32
    return %arg0, %c0_i32, %c0_i32_0 : i32, i32, i32
  }
}

module attributes {stable_mosaic.version = 11 : i64} {
  func.func @_matmul_in_relu_kernel(%arg0: i32, %arg1: memref<1x64x288xbf16, #tpu.memory_space<vmem>>, %arg2: memref<288x64xbf16, #tpu.memory_space<vmem>>, %arg3: memref<1x64x64xbf16, #tpu.memory_space<vmem>>) attributes {dimension_semantics = [#tpu.dimension_semantics<parallel>], iteration_bounds = array<i64: 2>, scalar_prefetch = 0 : i64, scratch_operands = 0 : i64, tpu.core_type = #tpu.core_type<tc>, window_params = [{transform_indices = @transform_0, window_bounds = array<i64: 1, 64, 288>}, {pipeline_mode = #tpu.pipeline_mode<synchronous>, transform_indices = @transform_1, window_bounds = array<i64: 288, 64>}, {transform_indices = @transform_2, window_bounds = array<i64: 1, 64, 64>}]} {
    %c0 = arith.constant 0 : index
    %c0_0 = arith.constant 0 : index
    %c0_1 = arith.constant 0 : index
    %0 = vector.load %arg1[%c0, %c0_0, %c0_1] : memref<1x64x288xbf16, #tpu.memory_space<vmem>>, vector<1x64x288xbf16>
    %1 = vector.shape_cast %0 : vector<1x64x288xbf16> to vector<64x288xbf16>
    %c0_2 = arith.constant 0 : index
    %c0_3 = arith.constant 0 : index
    %2 = vector.load %arg2[%c0_2, %c0_3] : memref<288x64xbf16, #tpu.memory_space<vmem>>, vector<288x64xbf16>
    %cst = arith.constant dense<0.000000e+00> : vector<64x64xf32>
    %3 = tpu.matmul %1, %2, %cst {dimension_numbers = #tpu.dot_dimension_numbers<[1], [0], [0], [1], [0, 0, 1, 1], [], []>} : vector<64x288xbf16>, vector<288x64xbf16>, vector<64x64xf32> -> vector<64x64xf32>
    %cst_4 = arith.constant dense<0.000000e+00> : vector<64xf32>
    %4 = vector.multi_reduction <add>, %3, %cst_4 [0] : vector<64x64xf32> to vector<64xf32>
    %5 = vector.shape_cast %4 : vector<64xf32> to vector<1x64xf32>
    %6 = arith.mulf %3, %3 : vector<64x64xf32>
    %cst_5 = arith.constant dense<0.000000e+00> : vector<64xf32>
    %7 = vector.multi_reduction <add>, %6, %cst_5 [0] : vector<64x64xf32> to vector<64xf32>
    %8 = vector.shape_cast %7 : vector<64xf32> to vector<1x64xf32>
    %cst_6 = arith.constant 1.562500e-02 : f32
    %9 = vector.broadcast %cst_6 : f32 to vector<1x64xf32>
    %10 = arith.mulf %5, %9 : vector<1x64xf32>
    %cst_7 = arith.constant 1.562500e-02 : f32
    %11 = vector.broadcast %cst_7 : f32 to vector<1x64xf32>
    %12 = arith.mulf %8, %11 : vector<1x64xf32>
    %13 = arith.mulf %10, %10 : vector<1x64xf32>
    %14 = arith.subf %12, %13 : vector<1x64xf32>
    %cst_8 = arith.constant 0.000000e+00 : f32
    %15 = vector.broadcast %cst_8 : f32 to vector<1x64xf32>
    %16 = arith.maximumf %14, %15 : vector<1x64xf32>
    %17 = vector.broadcast %10 : vector<1x64xf32> to vector<64x64xf32>
    %18 = arith.subf %3, %17 : vector<64x64xf32>
    %cst_9 = arith.constant 9.99999974E-6 : f32
    %19 = vector.broadcast %cst_9 : f32 to vector<1x64xf32>
    %20 = arith.addf %16, %19 : vector<1x64xf32>
    %21 = math.rsqrt %20 : vector<1x64xf32>
    %22 = vector.broadcast %21 : vector<1x64xf32> to vector<64x64xf32>
    %23 = arith.mulf %18, %22 : vector<64x64xf32>
    %cst_10 = arith.constant 0.000000e+00 : f32
    %24 = vector.broadcast %cst_10 : f32 to vector<64x64xf32>
    %25 = arith.maximumf %23, %24 : vector<64x64xf32>
    %26 = arith.truncf %25 : vector<64x64xf32> to vector<64x64xbf16>
    %c0_11 = arith.constant 0 : index
    %c0_12 = arith.constant 0 : index
    %c0_13 = arith.constant 0 : index
    %27 = vector.load %arg3[%c0_11, %c0_12, %c0_13] : memref<1x64x64xbf16, #tpu.memory_space<vmem>>, vector<1x64x64xbf16>
    %28 = vector.shape_cast %27 : vector<1x64x64xbf16> to vector<64x64xbf16>
    %29 = vector.shape_cast %26 : vector<64x64xbf16> to vector<1x64x64xbf16>
    tpu.vector_store %arg3[%c0_11, %c0_12, %c0_13], %29 {strides = array<i32>} : memref<1x64x64xbf16, #tpu.memory_space<vmem>>, vector<1x64x64xbf16>,
    return
  }
  func.func @transform_0(%arg0: i32) -> (i32, i32, i32) {
    %c0_i32 = arith.constant 0 : i32
    %c0_i32_0 = arith.constant 0 : i32
    %c0_i32_1 = arith.constant 0 : i32
    return %arg0, %c0_i32, %c0_i32_0 : i32, i32, i32
  }
  func.func @transform_1(%arg0: i32) -> (i32, i32) {
    %c0_i32 = arith.constant 0 : i32
    %c0_i32_0 = arith.constant 0 : i32
    %c0_i32_1 = arith.constant 0 : i32
    return %c0_i32, %c0_i32_0 : i32, i32
  }
  func.func @transform_2(%arg0: i32) -> (i32, i32, i32) {
    %c0_i32 = arith.constant 0 : i32
    %c0_i32_0 = arith.constant 0 : i32
    %c0_i32_1 = arith.constant 0 : i32
    return %arg0, %c0_i32, %c0_i32_0 : i32, i32, i32
  }
}

module attributes {stable_mosaic.version = 11 : i64} {
  func.func @_matmul_in_relu_kernel(%arg0: i32, %arg1: memref<1x16x576xbf16, #tpu.memory_space<vmem>>, %arg2: memref<576x128xbf16, #tpu.memory_space<vmem>>, %arg3: memref<1x16x128xbf16, #tpu.memory_space<vmem>>) attributes {dimension_semantics = [#tpu.dimension_semantics<parallel>], iteration_bounds = array<i64: 2>, scalar_prefetch = 0 : i64, scratch_operands = 0 : i64, tpu.core_type = #tpu.core_type<tc>, window_params = [{transform_indices = @transform_0, window_bounds = array<i64: 1, 16, 576>}, {pipeline_mode = #tpu.pipeline_mode<synchronous>, transform_indices = @transform_1, window_bounds = array<i64: 576, 128>}, {transform_indices = @transform_2, window_bounds = array<i64: 1, 16, 128>}]} {
    %c0 = arith.constant 0 : index
    %c0_0 = arith.constant 0 : index
    %c0_1 = arith.constant 0 : index
    %0 = vector.load %arg1[%c0, %c0_0, %c0_1] : memref<1x16x576xbf16, #tpu.memory_space<vmem>>, vector<1x16x576xbf16>
    %1 = vector.shape_cast %0 : vector<1x16x576xbf16> to vector<16x576xbf16>
    %c0_2 = arith.constant 0 : index
    %c0_3 = arith.constant 0 : index
    %2 = vector.load %arg2[%c0_2, %c0_3] : memref<576x128xbf16, #tpu.memory_space<vmem>>, vector<576x128xbf16>
    %cst = arith.constant dense<0.000000e+00> : vector<16x128xf32>
    %3 = tpu.matmul %1, %2, %cst {dimension_numbers = #tpu.dot_dimension_numbers<[1], [0], [0], [1], [0, 0, 1, 1], [], []>} : vector<16x576xbf16>, vector<576x128xbf16>, vector<16x128xf32> -> vector<16x128xf32>
    %cst_4 = arith.constant dense<0.000000e+00> : vector<128xf32>
    %4 = vector.multi_reduction <add>, %3, %cst_4 [0] : vector<16x128xf32> to vector<128xf32>
    %5 = vector.shape_cast %4 : vector<128xf32> to vector<1x128xf32>
    %6 = arith.mulf %3, %3 : vector<16x128xf32>
    %cst_5 = arith.constant dense<0.000000e+00> : vector<128xf32>
    %7 = vector.multi_reduction <add>, %6, %cst_5 [0] : vector<16x128xf32> to vector<128xf32>
    %8 = vector.shape_cast %7 : vector<128xf32> to vector<1x128xf32>
    %cst_6 = arith.constant 6.250000e-02 : f32
    %9 = vector.broadcast %cst_6 : f32 to vector<1x128xf32>
    %10 = arith.mulf %5, %9 : vector<1x128xf32>
    %cst_7 = arith.constant 6.250000e-02 : f32
    %11 = vector.broadcast %cst_7 : f32 to vector<1x128xf32>
    %12 = arith.mulf %8, %11 : vector<1x128xf32>
    %13 = arith.mulf %10, %10 : vector<1x128xf32>
    %14 = arith.subf %12, %13 : vector<1x128xf32>
    %cst_8 = arith.constant 0.000000e+00 : f32
    %15 = vector.broadcast %cst_8 : f32 to vector<1x128xf32>
    %16 = arith.maximumf %14, %15 : vector<1x128xf32>
    %17 = vector.broadcast %10 : vector<1x128xf32> to vector<16x128xf32>
    %18 = arith.subf %3, %17 : vector<16x128xf32>
    %cst_9 = arith.constant 9.99999974E-6 : f32
    %19 = vector.broadcast %cst_9 : f32 to vector<1x128xf32>
    %20 = arith.addf %16, %19 : vector<1x128xf32>
    %21 = math.rsqrt %20 : vector<1x128xf32>
    %22 = vector.broadcast %21 : vector<1x128xf32> to vector<16x128xf32>
    %23 = arith.mulf %18, %22 : vector<16x128xf32>
    %cst_10 = arith.constant 0.000000e+00 : f32
    %24 = vector.broadcast %cst_10 : f32 to vector<16x128xf32>
    %25 = arith.maximumf %23, %24 : vector<16x128xf32>
    %26 = arith.truncf %25 : vector<16x128xf32> to vector<16x128xbf16>
    %c0_11 = arith.constant 0 : index
    %c0_12 = arith.constant 0 : index
    %c0_13 = arith.constant 0 : index
    %27 = vector.load %arg3[%c0_11, %c0_12, %c0_13] : memref<1x16x128xbf16, #tpu.memory_space<vmem>>, vector<1x16x128xbf16>
    %28 = vector.shape_cast %27 : vector<1x16x128xbf16> to vector<16x128xbf16>
    %29 = vector.shape_cast %26 : vector<16x128xbf16> to vector<1x16x128xbf16>
    tpu.vector_store %arg3[%c0_11, %c0_12, %c0_13], %29 {strides = array<i32>} : memref<1x16x128xbf16, #tpu.memory_space<vmem>>, vector<1x16x128xbf16>,
    return
  }
  func.func @transform_0(%arg0: i32) -> (i32, i32, i32) {
    %c0_i32 = arith.constant 0 : i32
    %c0_i32_0 = arith.constant 0 : i32
    %c0_i32_1 = arith.constant 0 : i32
    return %arg0, %c0_i32, %c0_i32_0 : i32, i32, i32
  }
  func.func @transform_1(%arg0: i32) -> (i32, i32) {
    %c0_i32 = arith.constant 0 : i32
    %c0_i32_0 = arith.constant 0 : i32
    %c0_i32_1 = arith.constant 0 : i32
    return %c0_i32, %c0_i32_0 : i32, i32
  }
  func.func @transform_2(%arg0: i32) -> (i32, i32, i32) {
    %c0_i32 = arith.constant 0 : i32
    %c0_i32_0 = arith.constant 0 : i32
    %c0_i32_1 = arith.constant 0 : i32
    return %arg0, %c0_i32, %c0_i32_0 : i32, i32, i32
  }
}

module attributes {stable_mosaic.version = 11 : i64} {
  func.func @kernel(%arg0: i32, %arg1: memref<1x38x128xbf16, #tpu.memory_space<vmem>>, %arg2: memref<9x128x128xbf16, #tpu.memory_space<vmem>>, %arg3: memref<24x1xf32, #tpu.memory_space<vmem>>, %arg4: memref<1x1x24x128xbf16, #tpu.memory_space<vmem>>) attributes {dimension_semantics = [#tpu.dimension_semantics<parallel>], iteration_bounds = array<i64: 2>, scalar_prefetch = 0 : i64, scratch_operands = 0 : i64, tpu.core_type = #tpu.core_type<tc>, window_params = [{transform_indices = @transform_0, window_bounds = array<i64: 1, 38, 128>}, {pipeline_mode = #tpu.pipeline_mode<synchronous>, transform_indices = @transform_1, window_bounds = array<i64: 9, 128, 128>}, {pipeline_mode = #tpu.pipeline_mode<synchronous>, transform_indices = @transform_2, window_bounds = array<i64: 24, 1>}, {transform_indices = @transform_3, window_bounds = array<i64: 1, 1, 24, 128>}]} {
    %c0 = arith.constant 0 : index
    %c0_0 = arith.constant 0 : index
    %c0_1 = arith.constant 0 : index
    %0 = vector.load %arg1[%c0, %c0_0, %c0_1] : memref<1x38x128xbf16, #tpu.memory_space<vmem>>, vector<1x24x128xbf16>
    %1 = vector.shape_cast %0 : vector<1x24x128xbf16> to vector<24x128xbf16>
    %c0_2 = arith.constant 0 : index
    %c0_3 = arith.constant 0 : index
    %c0_4 = arith.constant 0 : index
    %2 = vector.load %arg2[%c0_2, %c0_3, %c0_4] : memref<9x128x128xbf16, #tpu.memory_space<vmem>>, vector<1x128x128xbf16>
    %3 = vector.shape_cast %2 : vector<1x128x128xbf16> to vector<128x128xbf16>
    %cst = arith.constant dense<0.000000e+00> : vector<24x128xf32>
    %4 = tpu.matmul %1, %3, %cst {dimension_numbers = #tpu.dot_dimension_numbers<[1], [0], [0], [1], [0, 0, 1, 1], [], []>} : vector<24x128xbf16>, vector<128x128xbf16>, vector<24x128xf32> -> vector<24x128xf32>
    %c0_5 = arith.constant 0 : index
    %c1 = arith.constant 1 : index
    %c0_6 = arith.constant 0 : index
    %5 = vector.load %arg1[%c0_5, %c1, %c0_6] : memref<1x38x128xbf16, #tpu.memory_space<vmem>>, vector<1x24x128xbf16>
    %6 = vector.shape_cast %5 : vector<1x24x128xbf16> to vector<24x128xbf16>
    %c1_7 = arith.constant 1 : index
    %c0_8 = arith.constant 0 : index
    %c0_9 = arith.constant 0 : index
    %7 = vector.load %arg2[%c1_7, %c0_8, %c0_9] : memref<9x128x128xbf16, #tpu.memory_space<vmem>>, vector<1x128x128xbf16>
    %8 = vector.shape_cast %7 : vector<1x128x128xbf16> to vector<128x128xbf16>
    %cst_10 = arith.constant dense<0.000000e+00> : vector<24x128xf32>
    %9 = tpu.matmul %6, %8, %cst_10 {dimension_numbers = #tpu.dot_dimension_numbers<[1], [0], [0], [1], [0, 0, 1, 1], [], []>} : vector<24x128xbf16>, vector<128x128xbf16>, vector<24x128xf32> -> vector<24x128xf32>
    %10 = arith.addf %4, %9 : vector<24x128xf32>
    %c0_11 = arith.constant 0 : index
    %c2 = arith.constant 2 : index
    %c0_12 = arith.constant 0 : index
    %11 = vector.load %arg1[%c0_11, %c2, %c0_12] : memref<1x38x128xbf16, #tpu.memory_space<vmem>>, vector<1x24x128xbf16>
    %12 = vector.shape_cast %11 : vector<1x24x128xbf16> to vector<24x128xbf16>
    %c2_13 = arith.constant 2 : index
    %c0_14 = arith.constant 0 : index
    %c0_15 = arith.constant 0 : index
    %13 = vector.load %arg2[%c2_13, %c0_14, %c0_15] : memref<9x128x128xbf16, #tpu.memory_space<vmem>>, vector<1x128x128xbf16>
    %14 = vector.shape_cast %13 : vector<1x128x128xbf16> to vector<128x128xbf16>
    %cst_16 = arith.constant dense<0.000000e+00> : vector<24x128xf32>
    %15 = tpu.matmul %12, %14, %cst_16 {dimension_numbers = #tpu.dot_dimension_numbers<[1], [0], [0], [1], [0, 0, 1, 1], [], []>} : vector<24x128xbf16>, vector<128x128xbf16>, vector<24x128xf32> -> vector<24x128xf32>
    %16 = arith.addf %10, %15 : vector<24x128xf32>
    %c0_17 = arith.constant 0 : index
    %c6 = arith.constant 6 : index
    %c0_18 = arith.constant 0 : index
    %17 = vector.load %arg1[%c0_17, %c6, %c0_18] : memref<1x38x128xbf16, #tpu.memory_space<vmem>>, vector<1x24x128xbf16>
    %18 = vector.shape_cast %17 : vector<1x24x128xbf16> to vector<24x128xbf16>
    %c3 = arith.constant 3 : index
    %c0_19 = arith.constant 0 : index
    %c0_20 = arith.constant 0 : index
    %19 = vector.load %arg2[%c3, %c0_19, %c0_20] : memref<9x128x128xbf16, #tpu.memory_space<vmem>>, vector<1x128x128xbf16>
    %20 = vector.shape_cast %19 : vector<1x128x128xbf16> to vector<128x128xbf16>
    %cst_21 = arith.constant dense<0.000000e+00> : vector<24x128xf32>
    %21 = tpu.matmul %18, %20, %cst_21 {dimension_numbers = #tpu.dot_dimension_numbers<[1], [0], [0], [1], [0, 0, 1, 1], [], []>} : vector<24x128xbf16>, vector<128x128xbf16>, vector<24x128xf32> -> vector<24x128xf32>
    %22 = arith.addf %16, %21 : vector<24x128xf32>
    %c0_22 = arith.constant 0 : index
    %c7 = arith.constant 7 : index
    %c0_23 = arith.constant 0 : index
    %23 = vector.load %arg1[%c0_22, %c7, %c0_23] : memref<1x38x128xbf16, #tpu.memory_space<vmem>>, vector<1x24x128xbf16>
    %24 = vector.shape_cast %23 : vector<1x24x128xbf16> to vector<24x128xbf16>
    %c4 = arith.constant 4 : index
    %c0_24 = arith.constant 0 : index
    %c0_25 = arith.constant 0 : index
    %25 = vector.load %arg2[%c4, %c0_24, %c0_25] : memref<9x128x128xbf16, #tpu.memory_space<vmem>>, vector<1x128x128xbf16>
    %26 = vector.shape_cast %25 : vector<1x128x128xbf16> to vector<128x128xbf16>
    %cst_26 = arith.constant dense<0.000000e+00> : vector<24x128xf32>
    %27 = tpu.matmul %24, %26, %cst_26 {dimension_numbers = #tpu.dot_dimension_numbers<[1], [0], [0], [1], [0, 0, 1, 1], [], []>} : vector<24x128xbf16>, vector<128x128xbf16>, vector<24x128xf32> -> vector<24x128xf32>
    %28 = arith.addf %22, %27 : vector<24x128xf32>
    %c0_27 = arith.constant 0 : index
    %c8 = arith.constant 8 : index
    %c0_28 = arith.constant 0 : index
    %29 = vector.load %arg1[%c0_27, %c8, %c0_28] : memref<1x38x128xbf16, #tpu.memory_space<vmem>>, vector<1x24x128xbf16>
    %30 = vector.shape_cast %29 : vector<1x24x128xbf16> to vector<24x128xbf16>
    %c5 = arith.constant 5 : index
    %c0_29 = arith.constant 0 : index
    %c0_30 = arith.constant 0 : index
    %31 = vector.load %arg2[%c5, %c0_29, %c0_30] : memref<9x128x128xbf16, #tpu.memory_space<vmem>>, vector<1x128x128xbf16>
    %32 = vector.shape_cast %31 : vector<1x128x128xbf16> to vector<128x128xbf16>
    %cst_31 = arith.constant dense<0.000000e+00> : vector<24x128xf32>
    %33 = tpu.matmul %30, %32, %cst_31 {dimension_numbers = #tpu.dot_dimension_numbers<[1], [0], [0], [1], [0, 0, 1, 1], [], []>} : vector<24x128xbf16>, vector<128x128xbf16>, vector<24x128xf32> -> vector<24x128xf32>
    %34 = arith.addf %28, %33 : vector<24x128xf32>
    %c0_32 = arith.constant 0 : index
    %c12 = arith.constant 12 : index
    %c0_33 = arith.constant 0 : index
    %35 = vector.load %arg1[%c0_32, %c12, %c0_33] : memref<1x38x128xbf16, #tpu.memory_space<vmem>>, vector<1x24x128xbf16>
    %36 = vector.shape_cast %35 : vector<1x24x128xbf16> to vector<24x128xbf16>
    %c6_34 = arith.constant 6 : index
    %c0_35 = arith.constant 0 : index
    %c0_36 = arith.constant 0 : index
    %37 = vector.load %arg2[%c6_34, %c0_35, %c0_36] : memref<9x128x128xbf16, #tpu.memory_space<vmem>>, vector<1x128x128xbf16>
    %38 = vector.shape_cast %37 : vector<1x128x128xbf16> to vector<128x128xbf16>
    %cst_37 = arith.constant dense<0.000000e+00> : vector<24x128xf32>
    %39 = tpu.matmul %36, %38, %cst_37 {dimension_numbers = #tpu.dot_dimension_numbers<[1], [0], [0], [1], [0, 0, 1, 1], [], []>} : vector<24x128xbf16>, vector<128x128xbf16>, vector<24x128xf32> -> vector<24x128xf32>
    %40 = arith.addf %34, %39 : vector<24x128xf32>
    %c0_38 = arith.constant 0 : index
    %c13 = arith.constant 13 : index
    %c0_39 = arith.constant 0 : index
    %41 = vector.load %arg1[%c0_38, %c13, %c0_39] : memref<1x38x128xbf16, #tpu.memory_space<vmem>>, vector<1x24x128xbf16>
    %42 = vector.shape_cast %41 : vector<1x24x128xbf16> to vector<24x128xbf16>
    %c7_40 = arith.constant 7 : index
    %c0_41 = arith.constant 0 : index
    %c0_42 = arith.constant 0 : index
    %43 = vector.load %arg2[%c7_40, %c0_41, %c0_42] : memref<9x128x128xbf16, #tpu.memory_space<vmem>>, vector<1x128x128xbf16>
    %44 = vector.shape_cast %43 : vector<1x128x128xbf16> to vector<128x128xbf16>
    %cst_43 = arith.constant dense<0.000000e+00> : vector<24x128xf32>
    %45 = tpu.matmul %42, %44, %cst_43 {dimension_numbers = #tpu.dot_dimension_numbers<[1], [0], [0], [1], [0, 0, 1, 1], [], []>} : vector<24x128xbf16>, vector<128x128xbf16>, vector<24x128xf32> -> vector<24x128xf32>
    %46 = arith.addf %40, %45 : vector<24x128xf32>
    %c0_44 = arith.constant 0 : index
    %c14 = arith.constant 14 : index
    %c0_45 = arith.constant 0 : index
    %47 = vector.load %arg1[%c0_44, %c14, %c0_45] : memref<1x38x128xbf16, #tpu.memory_space<vmem>>, vector<1x24x128xbf16>
    %48 = vector.shape_cast %47 : vector<1x24x128xbf16> to vector<24x128xbf16>
    %c8_46 = arith.constant 8 : index
    %c0_47 = arith.constant 0 : index
    %c0_48 = arith.constant 0 : index
    %49 = vector.load %arg2[%c8_46, %c0_47, %c0_48] : memref<9x128x128xbf16, #tpu.memory_space<vmem>>, vector<1x128x128xbf16>
    %50 = vector.shape_cast %49 : vector<1x128x128xbf16> to vector<128x128xbf16>
    %cst_49 = arith.constant dense<0.000000e+00> : vector<24x128xf32>
    %51 = tpu.matmul %48, %50, %cst_49 {dimension_numbers = #tpu.dot_dimension_numbers<[1], [0], [0], [1], [0, 0, 1, 1], [], []>} : vector<24x128xbf16>, vector<128x128xbf16>, vector<24x128xf32> -> vector<24x128xf32>
    %52 = arith.addf %46, %51 : vector<24x128xf32>
    %c0_50 = arith.constant 0 : index
    %c0_51 = arith.constant 0 : index
    %53 = vector.load %arg3[%c0_50, %c0_51] : memref<24x1xf32, #tpu.memory_space<vmem>>, vector<24x1xf32>
    %54 = vector.broadcast %53 : vector<24x1xf32> to vector<24x128xf32>
    %55 = arith.mulf %52, %54 : vector<24x128xf32>
    %cst_52 = arith.constant dense<0.000000e+00> : vector<128xf32>
    %56 = vector.multi_reduction <add>, %55, %cst_52 [0] : vector<24x128xf32> to vector<128xf32>
    %57 = vector.shape_cast %56 : vector<128xf32> to vector<1x128xf32>
    %58 = arith.mulf %55, %52 : vector<24x128xf32>
    %cst_53 = arith.constant dense<0.000000e+00> : vector<128xf32>
    %59 = vector.multi_reduction <add>, %58, %cst_53 [0] : vector<24x128xf32> to vector<128xf32>
    %60 = vector.shape_cast %59 : vector<128xf32> to vector<1x128xf32>
    %cst_54 = arith.constant 6.250000e-02 : f32
    %61 = vector.broadcast %cst_54 : f32 to vector<1x128xf32>
    %62 = arith.mulf %57, %61 : vector<1x128xf32>
    %cst_55 = arith.constant 6.250000e-02 : f32
    %63 = vector.broadcast %cst_55 : f32 to vector<1x128xf32>
    %64 = arith.mulf %60, %63 : vector<1x128xf32>
    %65 = arith.mulf %62, %62 : vector<1x128xf32>
    %66 = arith.subf %64, %65 : vector<1x128xf32>
    %cst_56 = arith.constant 0.000000e+00 : f32
    %67 = vector.broadcast %cst_56 : f32 to vector<1x128xf32>
    %68 = arith.maximumf %66, %67 : vector<1x128xf32>
    %cst_57 = arith.constant 9.99999974E-6 : f32
    %69 = vector.broadcast %cst_57 : f32 to vector<1x128xf32>
    %70 = arith.addf %68, %69 : vector<1x128xf32>
    %71 = math.rsqrt %70 : vector<1x128xf32>
    %72 = vector.broadcast %62 : vector<1x128xf32> to vector<24x128xf32>
    %73 = arith.subf %52, %72 : vector<24x128xf32>
    %74 = vector.broadcast %71 : vector<1x128xf32> to vector<24x128xf32>
    %75 = arith.mulf %73, %74 : vector<24x128xf32>
    %cst_58 = arith.constant 0.000000e+00 : f32
    %76 = vector.broadcast %cst_58 : f32 to vector<24x128xf32>
    %77 = arith.maximumf %75, %76 : vector<24x128xf32>
    %78 = arith.truncf %77 : vector<24x128xf32> to vector<24x128xbf16>
    %c0_59 = arith.constant 0 : index
    %c0_60 = arith.constant 0 : index
    %c0_61 = arith.constant 0 : index
    %c0_62 = arith.constant 0 : index
    %79 = vector.load %arg4[%c0_59, %c0_60, %c0_61, %c0_62] : memref<1x1x24x128xbf16, #tpu.memory_space<vmem>>, vector<1x1x24x128xbf16>
    %80 = vector.shape_cast %79 : vector<1x1x24x128xbf16> to vector<24x128xbf16>
    %81 = vector.shape_cast %78 : vector<24x128xbf16> to vector<1x1x24x128xbf16>
    tpu.vector_store %arg4[%c0_59, %c0_60, %c0_61, %c0_62], %81 {strides = array<i32>} : memref<1x1x24x128xbf16, #tpu.memory_space<vmem>>, vector<1x1x24x128xbf16>,
    return
  }
  func.func @transform_0(%arg0: i32) -> (i32, i32, i32) {
    %c0_i32 = arith.constant 0 : i32
    %c0_i32_0 = arith.constant 0 : i32
    %c0_i32_1 = arith.constant 0 : i32
    return %arg0, %c0_i32, %c0_i32_0 : i32, i32, i32
  }
  func.func @transform_1(%arg0: i32) -> (i32, i32, i32) {
    %c0_i32 = arith.constant 0 : i32
    %c0_i32_0 = arith.constant 0 : i32
    %c0_i32_1 = arith.constant 0 : i32
    %c0_i32_2 = arith.constant 0 : i32
    return %c0_i32, %c0_i32_0, %c0_i32_1 : i32, i32, i32
  }
  func.func @transform_2(%arg0: i32) -> (i32, i32) {
    %c0_i32 = arith.constant 0 : i32
    %c0_i32_0 = arith.constant 0 : i32
    %c0_i32_1 = arith.constant 0 : i32
    return %c0_i32, %c0_i32_0 : i32, i32
  }
  func.func @transform_3(%arg0: i32) -> (i32, i32, i32, i32) {
    %c0_i32 = arith.constant 0 : i32
    %c0_i32_0 = arith.constant 0 : i32
    %c0_i32_1 = arith.constant 0 : i32
    %c0_i32_2 = arith.constant 0 : i32
    return %arg0, %c0_i32, %c0_i32_0, %c0_i32_1 : i32, i32, i32, i32
  }
}

module attributes {stable_mosaic.version = 11 : i64} {
  func.func @kernel(%arg0: i32, %arg1: memref<1x38x128xbf16, #tpu.memory_space<vmem>>, %arg2: memref<9x128x128xbf16, #tpu.memory_space<vmem>>, %arg3: memref<24x1xf32, #tpu.memory_space<vmem>>, %arg4: memref<1x1x24x128xbf16, #tpu.memory_space<vmem>>, %arg5: memref<1x1x24x128xbf16, #tpu.memory_space<vmem>>) attributes {dimension_semantics = [#tpu.dimension_semantics<parallel>], iteration_bounds = array<i64: 2>, scalar_prefetch = 0 : i64, scratch_operands = 0 : i64, tpu.core_type = #tpu.core_type<tc>, window_params = [{transform_indices = @transform_0, window_bounds = array<i64: 1, 38, 128>}, {pipeline_mode = #tpu.pipeline_mode<synchronous>, transform_indices = @transform_1, window_bounds = array<i64: 9, 128, 128>}, {pipeline_mode = #tpu.pipeline_mode<synchronous>, transform_indices = @transform_2, window_bounds = array<i64: 24, 1>}, {transform_indices = @transform_3, window_bounds = array<i64: 1, 1, 24, 128>}, {transform_indices = @transform_4, window_bounds = array<i64: 1, 1, 24, 128>}]} {
    %c0 = arith.constant 0 : index
    %c0_0 = arith.constant 0 : index
    %c0_1 = arith.constant 0 : index
    %0 = vector.load %arg1[%c0, %c0_0, %c0_1] : memref<1x38x128xbf16, #tpu.memory_space<vmem>>, vector<1x24x128xbf16>
    %1 = vector.shape_cast %0 : vector<1x24x128xbf16> to vector<24x128xbf16>
    %c0_2 = arith.constant 0 : index
    %c0_3 = arith.constant 0 : index
    %c0_4 = arith.constant 0 : index
    %2 = vector.load %arg2[%c0_2, %c0_3, %c0_4] : memref<9x128x128xbf16, #tpu.memory_space<vmem>>, vector<1x128x128xbf16>
    %3 = vector.shape_cast %2 : vector<1x128x128xbf16> to vector<128x128xbf16>
    %cst = arith.constant dense<0.000000e+00> : vector<24x128xf32>
    %4 = tpu.matmul %1, %3, %cst {dimension_numbers = #tpu.dot_dimension_numbers<[1], [0], [0], [1], [0, 0, 1, 1], [], []>} : vector<24x128xbf16>, vector<128x128xbf16>, vector<24x128xf32> -> vector<24x128xf32>
    %c0_5 = arith.constant 0 : index
    %c1 = arith.constant 1 : index
    %c0_6 = arith.constant 0 : index
    %5 = vector.load %arg1[%c0_5, %c1, %c0_6] : memref<1x38x128xbf16, #tpu.memory_space<vmem>>, vector<1x24x128xbf16>
    %6 = vector.shape_cast %5 : vector<1x24x128xbf16> to vector<24x128xbf16>
    %c1_7 = arith.constant 1 : index
    %c0_8 = arith.constant 0 : index
    %c0_9 = arith.constant 0 : index
    %7 = vector.load %arg2[%c1_7, %c0_8, %c0_9] : memref<9x128x128xbf16, #tpu.memory_space<vmem>>, vector<1x128x128xbf16>
    %8 = vector.shape_cast %7 : vector<1x128x128xbf16> to vector<128x128xbf16>
    %cst_10 = arith.constant dense<0.000000e+00> : vector<24x128xf32>
    %9 = tpu.matmul %6, %8, %cst_10 {dimension_numbers = #tpu.dot_dimension_numbers<[1], [0], [0], [1], [0, 0, 1, 1], [], []>} : vector<24x128xbf16>, vector<128x128xbf16>, vector<24x128xf32> -> vector<24x128xf32>
    %10 = arith.addf %4, %9 : vector<24x128xf32>
    %c0_11 = arith.constant 0 : index
    %c2 = arith.constant 2 : index
    %c0_12 = arith.constant 0 : index
    %11 = vector.load %arg1[%c0_11, %c2, %c0_12] : memref<1x38x128xbf16, #tpu.memory_space<vmem>>, vector<1x24x128xbf16>
    %12 = vector.shape_cast %11 : vector<1x24x128xbf16> to vector<24x128xbf16>
    %c2_13 = arith.constant 2 : index
    %c0_14 = arith.constant 0 : index
    %c0_15 = arith.constant 0 : index
    %13 = vector.load %arg2[%c2_13, %c0_14, %c0_15] : memref<9x128x128xbf16, #tpu.memory_space<vmem>>, vector<1x128x128xbf16>
    %14 = vector.shape_cast %13 : vector<1x128x128xbf16> to vector<128x128xbf16>
    %cst_16 = arith.constant dense<0.000000e+00> : vector<24x128xf32>
    %15 = tpu.matmul %12, %14, %cst_16 {dimension_numbers = #tpu.dot_dimension_numbers<[1], [0], [0], [1], [0, 0, 1, 1], [], []>} : vector<24x128xbf16>, vector<128x128xbf16>, vector<24x128xf32> -> vector<24x128xf32>
    %16 = arith.addf %10, %15 : vector<24x128xf32>
    %c0_17 = arith.constant 0 : index
    %c6 = arith.constant 6 : index
    %c0_18 = arith.constant 0 : index
    %17 = vector.load %arg1[%c0_17, %c6, %c0_18] : memref<1x38x128xbf16, #tpu.memory_space<vmem>>, vector<1x24x128xbf16>
    %18 = vector.shape_cast %17 : vector<1x24x128xbf16> to vector<24x128xbf16>
    %c3 = arith.constant 3 : index
    %c0_19 = arith.constant 0 : index
    %c0_20 = arith.constant 0 : index
    %19 = vector.load %arg2[%c3, %c0_19, %c0_20] : memref<9x128x128xbf16, #tpu.memory_space<vmem>>, vector<1x128x128xbf16>
    %20 = vector.shape_cast %19 : vector<1x128x128xbf16> to vector<128x128xbf16>
    %cst_21 = arith.constant dense<0.000000e+00> : vector<24x128xf32>
    %21 = tpu.matmul %18, %20, %cst_21 {dimension_numbers = #tpu.dot_dimension_numbers<[1], [0], [0], [1], [0, 0, 1, 1], [], []>} : vector<24x128xbf16>, vector<128x128xbf16>, vector<24x128xf32> -> vector<24x128xf32>
    %22 = arith.addf %16, %21 : vector<24x128xf32>
    %c0_22 = arith.constant 0 : index
    %c7 = arith.constant 7 : index
    %c0_23 = arith.constant 0 : index
    %23 = vector.load %arg1[%c0_22, %c7, %c0_23] : memref<1x38x128xbf16, #tpu.memory_space<vmem>>, vector<1x24x128xbf16>
    %24 = vector.shape_cast %23 : vector<1x24x128xbf16> to vector<24x128xbf16>
    %c4 = arith.constant 4 : index
    %c0_24 = arith.constant 0 : index
    %c0_25 = arith.constant 0 : index
    %25 = vector.load %arg2[%c4, %c0_24, %c0_25] : memref<9x128x128xbf16, #tpu.memory_space<vmem>>, vector<1x128x128xbf16>
    %26 = vector.shape_cast %25 : vector<1x128x128xbf16> to vector<128x128xbf16>
    %cst_26 = arith.constant dense<0.000000e+00> : vector<24x128xf32>
    %27 = tpu.matmul %24, %26, %cst_26 {dimension_numbers = #tpu.dot_dimension_numbers<[1], [0], [0], [1], [0, 0, 1, 1], [], []>} : vector<24x128xbf16>, vector<128x128xbf16>, vector<24x128xf32> -> vector<24x128xf32>
    %28 = arith.addf %22, %27 : vector<24x128xf32>
    %c0_27 = arith.constant 0 : index
    %c8 = arith.constant 8 : index
    %c0_28 = arith.constant 0 : index
    %29 = vector.load %arg1[%c0_27, %c8, %c0_28] : memref<1x38x128xbf16, #tpu.memory_space<vmem>>, vector<1x24x128xbf16>
    %30 = vector.shape_cast %29 : vector<1x24x128xbf16> to vector<24x128xbf16>
    %c5 = arith.constant 5 : index
    %c0_29 = arith.constant 0 : index
    %c0_30 = arith.constant 0 : index
    %31 = vector.load %arg2[%c5, %c0_29, %c0_30] : memref<9x128x128xbf16, #tpu.memory_space<vmem>>, vector<1x128x128xbf16>
    %32 = vector.shape_cast %31 : vector<1x128x128xbf16> to vector<128x128xbf16>
    %cst_31 = arith.constant dense<0.000000e+00> : vector<24x128xf32>
    %33 = tpu.matmul %30, %32, %cst_31 {dimension_numbers = #tpu.dot_dimension_numbers<[1], [0], [0], [1], [0, 0, 1, 1], [], []>} : vector<24x128xbf16>, vector<128x128xbf16>, vector<24x128xf32> -> vector<24x128xf32>
    %34 = arith.addf %28, %33 : vector<24x128xf32>
    %c0_32 = arith.constant 0 : index
    %c12 = arith.constant 12 : index
    %c0_33 = arith.constant 0 : index
    %35 = vector.load %arg1[%c0_32, %c12, %c0_33] : memref<1x38x128xbf16, #tpu.memory_space<vmem>>, vector<1x24x128xbf16>
    %36 = vector.shape_cast %35 : vector<1x24x128xbf16> to vector<24x128xbf16>
    %c6_34 = arith.constant 6 : index
    %c0_35 = arith.constant 0 : index
    %c0_36 = arith.constant 0 : index
    %37 = vector.load %arg2[%c6_34, %c0_35, %c0_36] : memref<9x128x128xbf16, #tpu.memory_space<vmem>>, vector<1x128x128xbf16>
    %38 = vector.shape_cast %37 : vector<1x128x128xbf16> to vector<128x128xbf16>
    %cst_37 = arith.constant dense<0.000000e+00> : vector<24x128xf32>
    %39 = tpu.matmul %36, %38, %cst_37 {dimension_numbers = #tpu.dot_dimension_numbers<[1], [0], [0], [1], [0, 0, 1, 1], [], []>} : vector<24x128xbf16>, vector<128x128xbf16>, vector<24x128xf32> -> vector<24x128xf32>
    %40 = arith.addf %34, %39 : vector<24x128xf32>
    %c0_38 = arith.constant 0 : index
    %c13 = arith.constant 13 : index
    %c0_39 = arith.constant 0 : index
    %41 = vector.load %arg1[%c0_38, %c13, %c0_39] : memref<1x38x128xbf16, #tpu.memory_space<vmem>>, vector<1x24x128xbf16>
    %42 = vector.shape_cast %41 : vector<1x24x128xbf16> to vector<24x128xbf16>
    %c7_40 = arith.constant 7 : index
    %c0_41 = arith.constant 0 : index
    %c0_42 = arith.constant 0 : index
    %43 = vector.load %arg2[%c7_40, %c0_41, %c0_42] : memref<9x128x128xbf16, #tpu.memory_space<vmem>>, vector<1x128x128xbf16>
    %44 = vector.shape_cast %43 : vector<1x128x128xbf16> to vector<128x128xbf16>
    %cst_43 = arith.constant dense<0.000000e+00> : vector<24x128xf32>
    %45 = tpu.matmul %42, %44, %cst_43 {dimension_numbers = #tpu.dot_dimension_numbers<[1], [0], [0], [1], [0, 0, 1, 1], [], []>} : vector<24x128xbf16>, vector<128x128xbf16>, vector<24x128xf32> -> vector<24x128xf32>
    %46 = arith.addf %40, %45 : vector<24x128xf32>
    %c0_44 = arith.constant 0 : index
    %c14 = arith.constant 14 : index
    %c0_45 = arith.constant 0 : index
    %47 = vector.load %arg1[%c0_44, %c14, %c0_45] : memref<1x38x128xbf16, #tpu.memory_space<vmem>>, vector<1x24x128xbf16>
    %48 = vector.shape_cast %47 : vector<1x24x128xbf16> to vector<24x128xbf16>
    %c8_46 = arith.constant 8 : index
    %c0_47 = arith.constant 0 : index
    %c0_48 = arith.constant 0 : index
    %49 = vector.load %arg2[%c8_46, %c0_47, %c0_48] : memref<9x128x128xbf16, #tpu.memory_space<vmem>>, vector<1x128x128xbf16>
    %50 = vector.shape_cast %49 : vector<1x128x128xbf16> to vector<128x128xbf16>
    %cst_49 = arith.constant dense<0.000000e+00> : vector<24x128xf32>
    %51 = tpu.matmul %48, %50, %cst_49 {dimension_numbers = #tpu.dot_dimension_numbers<[1], [0], [0], [1], [0, 0, 1, 1], [], []>} : vector<24x128xbf16>, vector<128x128xbf16>, vector<24x128xf32> -> vector<24x128xf32>
    %52 = arith.addf %46, %51 : vector<24x128xf32>
    %c0_50 = arith.constant 0 : index
    %c0_51 = arith.constant 0 : index
    %53 = vector.load %arg3[%c0_50, %c0_51] : memref<24x1xf32, #tpu.memory_space<vmem>>, vector<24x1xf32>
    %54 = vector.broadcast %53 : vector<24x1xf32> to vector<24x128xf32>
    %55 = arith.mulf %52, %54 : vector<24x128xf32>
    %cst_52 = arith.constant dense<0.000000e+00> : vector<128xf32>
    %56 = vector.multi_reduction <add>, %55, %cst_52 [0] : vector<24x128xf32> to vector<128xf32>
    %57 = vector.shape_cast %56 : vector<128xf32> to vector<1x128xf32>
    %58 = arith.mulf %55, %52 : vector<24x128xf32>
    %cst_53 = arith.constant dense<0.000000e+00> : vector<128xf32>
    %59 = vector.multi_reduction <add>, %58, %cst_53 [0] : vector<24x128xf32> to vector<128xf32>
    %60 = vector.shape_cast %59 : vector<128xf32> to vector<1x128xf32>
    %cst_54 = arith.constant 6.250000e-02 : f32
    %61 = vector.broadcast %cst_54 : f32 to vector<1x128xf32>
    %62 = arith.mulf %57, %61 : vector<1x128xf32>
    %cst_55 = arith.constant 6.250000e-02 : f32
    %63 = vector.broadcast %cst_55 : f32 to vector<1x128xf32>
    %64 = arith.mulf %60, %63 : vector<1x128xf32>
    %65 = arith.mulf %62, %62 : vector<1x128xf32>
    %66 = arith.subf %64, %65 : vector<1x128xf32>
    %cst_56 = arith.constant 0.000000e+00 : f32
    %67 = vector.broadcast %cst_56 : f32 to vector<1x128xf32>
    %68 = arith.maximumf %66, %67 : vector<1x128xf32>
    %cst_57 = arith.constant 9.99999974E-6 : f32
    %69 = vector.broadcast %cst_57 : f32 to vector<1x128xf32>
    %70 = arith.addf %68, %69 : vector<1x128xf32>
    %71 = math.rsqrt %70 : vector<1x128xf32>
    %72 = vector.broadcast %62 : vector<1x128xf32> to vector<24x128xf32>
    %73 = arith.subf %52, %72 : vector<24x128xf32>
    %74 = vector.broadcast %71 : vector<1x128xf32> to vector<24x128xf32>
    %75 = arith.mulf %73, %74 : vector<24x128xf32>
    %c0_58 = arith.constant 0 : index
    %c0_59 = arith.constant 0 : index
    %c0_60 = arith.constant 0 : index
    %c0_61 = arith.constant 0 : index
    %76 = vector.load %arg4[%c0_58, %c0_59, %c0_60, %c0_61] : memref<1x1x24x128xbf16, #tpu.memory_space<vmem>>, vector<1x1x24x128xbf16>
    %77 = vector.shape_cast %76 : vector<1x1x24x128xbf16> to vector<24x128xbf16>
    %78 = arith.extf %77 : vector<24x128xbf16> to vector<24x128xf32>
    %79 = arith.addf %75, %78 : vector<24x128xf32>
    %80 = arith.truncf %79 : vector<24x128xf32> to vector<24x128xbf16>
    %c0_62 = arith.constant 0 : index
    %c0_63 = arith.constant 0 : index
    %c0_64 = arith.constant 0 : index
    %c0_65 = arith.constant 0 : index
    %81 = vector.load %arg5[%c0_62, %c0_63, %c0_64, %c0_65] : memref<1x1x24x128xbf16, #tpu.memory_space<vmem>>, vector<1x1x24x128xbf16>
    %82 = vector.shape_cast %81 : vector<1x1x24x128xbf16> to vector<24x128xbf16>
    %83 = vector.shape_cast %80 : vector<24x128xbf16> to vector<1x1x24x128xbf16>
    tpu.vector_store %arg5[%c0_62, %c0_63, %c0_64, %c0_65], %83 {strides = array<i32>} : memref<1x1x24x128xbf16, #tpu.memory_space<vmem>>, vector<1x1x24x128xbf16>,
    return
  }
  func.func @transform_0(%arg0: i32) -> (i32, i32, i32) {
    %c0_i32 = arith.constant 0 : i32
    %c0_i32_0 = arith.constant 0 : i32
    %c0_i32_1 = arith.constant 0 : i32
    return %arg0, %c0_i32, %c0_i32_0 : i32, i32, i32
  }
  func.func @transform_1(%arg0: i32) -> (i32, i32, i32) {
    %c0_i32 = arith.constant 0 : i32
    %c0_i32_0 = arith.constant 0 : i32
    %c0_i32_1 = arith.constant 0 : i32
    %c0_i32_2 = arith.constant 0 : i32
    return %c0_i32, %c0_i32_0, %c0_i32_1 : i32, i32, i32
  }
  func.func @transform_2(%arg0: i32) -> (i32, i32) {
    %c0_i32 = arith.constant 0 : i32
    %c0_i32_0 = arith.constant 0 : i32
    %c0_i32_1 = arith.constant 0 : i32
    return %c0_i32, %c0_i32_0 : i32, i32
  }
  func.func @transform_3(%arg0: i32) -> (i32, i32, i32, i32) {
    %c0_i32 = arith.constant 0 : i32
    %c0_i32_0 = arith.constant 0 : i32
    %c0_i32_1 = arith.constant 0 : i32
    %c0_i32_2 = arith.constant 0 : i32
    return %arg0, %c0_i32, %c0_i32_0, %c0_i32_1 : i32, i32, i32, i32
  }
  func.func @transform_4(%arg0: i32) -> (i32, i32, i32, i32) {
    %c0_i32 = arith.constant 0 : i32
    %c0_i32_0 = arith.constant 0 : i32
    %c0_i32_1 = arith.constant 0 : i32
    %c0_i32_2 = arith.constant 0 : i32
    return %arg0, %c0_i32, %c0_i32_0, %c0_i32_1 : i32, i32, i32, i32
  }
}

module attributes {stable_mosaic.version = 11 : i64} {
  func.func @kernel(%arg0: i32, %arg1: memref<1x26x128xbf16, #tpu.memory_space<vmem>>, %arg2: memref<9x128x64xbf16, #tpu.memory_space<vmem>>, %arg3: memref<20x1xf32, #tpu.memory_space<vmem>>, %arg4: memref<1x4x20x64xbf16, #tpu.memory_space<vmem>>) attributes {dimension_semantics = [#tpu.dimension_semantics<parallel>], iteration_bounds = array<i64: 2>, scalar_prefetch = 0 : i64, scratch_operands = 0 : i64, tpu.core_type = #tpu.core_type<tc>, window_params = [{transform_indices = @transform_0, window_bounds = array<i64: 1, 26, 128>}, {pipeline_mode = #tpu.pipeline_mode<synchronous>, transform_indices = @transform_1, window_bounds = array<i64: 9, 128, 64>}, {pipeline_mode = #tpu.pipeline_mode<synchronous>, transform_indices = @transform_2, window_bounds = array<i64: 20, 1>}, {transform_indices = @transform_3, window_bounds = array<i64: 1, 4, 20, 64>}]} {
    %c0 = arith.constant 0 : index
    %c0_0 = arith.constant 0 : index
    %c0_1 = arith.constant 0 : index
    %0 = vector.load %arg1[%c0, %c0_0, %c0_1] : memref<1x26x128xbf16, #tpu.memory_space<vmem>>, vector<1x20x128xbf16>
    %1 = vector.shape_cast %0 : vector<1x20x128xbf16> to vector<20x128xbf16>
    %c4 = arith.constant 4 : index
    %c0_2 = arith.constant 0 : index
    %c0_3 = arith.constant 0 : index
    %2 = vector.load %arg2[%c4, %c0_2, %c0_3] : memref<9x128x64xbf16, #tpu.memory_space<vmem>>, vector<1x128x64xbf16>
    %3 = vector.shape_cast %2 : vector<1x128x64xbf16> to vector<128x64xbf16>
    %cst = arith.constant dense<0.000000e+00> : vector<20x64xf32>
    %4 = tpu.matmul %1, %3, %cst {dimension_numbers = #tpu.dot_dimension_numbers<[1], [0], [0], [1], [0, 0, 1, 1], [], []>} : vector<20x128xbf16>, vector<128x64xbf16>, vector<20x64xf32> -> vector<20x64xf32>
    %c0_4 = arith.constant 0 : index
    %c1 = arith.constant 1 : index
    %c0_5 = arith.constant 0 : index
    %5 = vector.load %arg1[%c0_4, %c1, %c0_5] : memref<1x26x128xbf16, #tpu.memory_space<vmem>>, vector<1x20x128xbf16>
    %6 = vector.shape_cast %5 : vector<1x20x128xbf16> to vector<20x128xbf16>
    %c3 = arith.constant 3 : index
    %c0_6 = arith.constant 0 : index
    %c0_7 = arith.constant 0 : index
    %7 = vector.load %arg2[%c3, %c0_6, %c0_7] : memref<9x128x64xbf16, #tpu.memory_space<vmem>>, vector<1x128x64xbf16>
    %8 = vector.shape_cast %7 : vector<1x128x64xbf16> to vector<128x64xbf16>
    %cst_8 = arith.constant dense<0.000000e+00> : vector<20x64xf32>
    %9 = tpu.matmul %6, %8, %cst_8 {dimension_numbers = #tpu.dot_dimension_numbers<[1], [0], [0], [1], [0, 0, 1, 1], [], []>} : vector<20x128xbf16>, vector<128x64xbf16>, vector<20x64xf32> -> vector<20x64xf32>
    %c0_9 = arith.constant 0 : index
    %c0_10 = arith.constant 0 : index
    %c0_11 = arith.constant 0 : index
    %10 = vector.load %arg1[%c0_9, %c0_10, %c0_11] : memref<1x26x128xbf16, #tpu.memory_space<vmem>>, vector<1x20x128xbf16>
    %11 = vector.shape_cast %10 : vector<1x20x128xbf16> to vector<20x128xbf16>
    %c5 = arith.constant 5 : index
    %c0_12 = arith.constant 0 : index
    %c0_13 = arith.constant 0 : index
    %12 = vector.load %arg2[%c5, %c0_12, %c0_13] : memref<9x128x64xbf16, #tpu.memory_space<vmem>>, vector<1x128x64xbf16>
    %13 = vector.shape_cast %12 : vector<1x128x64xbf16> to vector<128x64xbf16>
    %cst_14 = arith.constant dense<0.000000e+00> : vector<20x64xf32>
    %14 = tpu.matmul %11, %13, %cst_14 {dimension_numbers = #tpu.dot_dimension_numbers<[1], [0], [0], [1], [0, 0, 1, 1], [], []>} : vector<20x128xbf16>, vector<128x64xbf16>, vector<20x64xf32> -> vector<20x64xf32>
    %15 = arith.addf %9, %14 : vector<20x64xf32>
    %c0_15 = arith.constant 0 : index
    %c5_16 = arith.constant 5 : index
    %c0_17 = arith.constant 0 : index
    %16 = vector.load %arg1[%c0_15, %c5_16, %c0_17] : memref<1x26x128xbf16, #tpu.memory_space<vmem>>, vector<1x20x128xbf16>
    %17 = vector.shape_cast %16 : vector<1x20x128xbf16> to vector<20x128xbf16>
    %c1_18 = arith.constant 1 : index
    %c0_19 = arith.constant 0 : index
    %c0_20 = arith.constant 0 : index
    %18 = vector.load %arg2[%c1_18, %c0_19, %c0_20] : memref<9x128x64xbf16, #tpu.memory_space<vmem>>, vector<1x128x64xbf16>
    %19 = vector.shape_cast %18 : vector<1x128x64xbf16> to vector<128x64xbf16>
    %cst_21 = arith.constant dense<0.000000e+00> : vector<20x64xf32>
    %20 = tpu.matmul %17, %19, %cst_21 {dimension_numbers = #tpu.dot_dimension_numbers<[1], [0], [0], [1], [0, 0, 1, 1], [], []>} : vector<20x128xbf16>, vector<128x64xbf16>, vector<20x64xf32> -> vector<20x64xf32>
    %c0_22 = arith.constant 0 : index
    %c0_23 = arith.constant 0 : index
    %c0_24 = arith.constant 0 : index
    %21 = vector.load %arg1[%c0_22, %c0_23, %c0_24] : memref<1x26x128xbf16, #tpu.memory_space<vmem>>, vector<1x20x128xbf16>
    %22 = vector.shape_cast %21 : vector<1x20x128xbf16> to vector<20x128xbf16>
    %c7 = arith.constant 7 : index
    %c0_25 = arith.constant 0 : index
    %c0_26 = arith.constant 0 : index
    %23 = vector.load %arg2[%c7, %c0_25, %c0_26] : memref<9x128x64xbf16, #tpu.memory_space<vmem>>, vector<1x128x64xbf16>
    %24 = vector.shape_cast %23 : vector<1x128x64xbf16> to vector<128x64xbf16>
    %cst_27 = arith.constant dense<0.000000e+00> : vector<20x64xf32>
    %25 = tpu.matmul %22, %24, %cst_27 {dimension_numbers = #tpu.dot_dimension_numbers<[1], [0], [0], [1], [0, 0, 1, 1], [], []>} : vector<20x128xbf16>, vector<128x64xbf16>, vector<20x64xf32> -> vector<20x64xf32>
    %26 = arith.addf %20, %25 : vector<20x64xf32>
    %c0_28 = arith.constant 0 : index
    %c6 = arith.constant 6 : index
    %c0_29 = arith.constant 0 : index
    %27 = vector.load %arg1[%c0_28, %c6, %c0_29] : memref<1x26x128xbf16, #tpu.memory_space<vmem>>, vector<1x20x128xbf16>
    %28 = vector.shape_cast %27 : vector<1x20x128xbf16> to vector<20x128xbf16>
    %c0_30 = arith.constant 0 : index
    %c0_31 = arith.constant 0 : index
    %c0_32 = arith.constant 0 : index
    %29 = vector.load %arg2[%c0_30, %c0_31, %c0_32] : memref<9x128x64xbf16, #tpu.memory_space<vmem>>, vector<1x128x64xbf16>
    %30 = vector.shape_cast %29 : vector<1x128x64xbf16> to vector<128x64xbf16>
    %cst_33 = arith.constant dense<0.000000e+00> : vector<20x64xf32>
    %31 = tpu.matmul %28, %30, %cst_33 {dimension_numbers = #tpu.dot_dimension_numbers<[1], [0], [0], [1], [0, 0, 1, 1], [], []>} : vector<20x128xbf16>, vector<128x64xbf16>, vector<20x64xf32> -> vector<20x64xf32>
    %c0_34 = arith.constant 0 : index
    %c5_35 = arith.constant 5 : index
    %c0_36 = arith.constant 0 : index
    %32 = vector.load %arg1[%c0_34, %c5_35, %c0_36] : memref<1x26x128xbf16, #tpu.memory_space<vmem>>, vector<1x20x128xbf16>
    %33 = vector.shape_cast %32 : vector<1x20x128xbf16> to vector<20x128xbf16>
    %c2 = arith.constant 2 : index
    %c0_37 = arith.constant 0 : index
    %c0_38 = arith.constant 0 : index
    %34 = vector.load %arg2[%c2, %c0_37, %c0_38] : memref<9x128x64xbf16, #tpu.memory_space<vmem>>, vector<1x128x64xbf16>
    %35 = vector.shape_cast %34 : vector<1x128x64xbf16> to vector<128x64xbf16>
    %cst_39 = arith.constant dense<0.000000e+00> : vector<20x64xf32>
    %36 = tpu.matmul %33, %35, %cst_39 {dimension_numbers = #tpu.dot_dimension_numbers<[1], [0], [0], [1], [0, 0, 1, 1], [], []>} : vector<20x128xbf16>, vector<128x64xbf16>, vector<20x64xf32> -> vector<20x64xf32>
    %37 = arith.addf %31, %36 : vector<20x64xf32>
    %c0_40 = arith.constant 0 : index
    %c1_41 = arith.constant 1 : index
    %c0_42 = arith.constant 0 : index
    %38 = vector.load %arg1[%c0_40, %c1_41, %c0_42] : memref<1x26x128xbf16, #tpu.memory_space<vmem>>, vector<1x20x128xbf16>
    %39 = vector.shape_cast %38 : vector<1x20x128xbf16> to vector<20x128xbf16>
    %c6_43 = arith.constant 6 : index
    %c0_44 = arith.constant 0 : index
    %c0_45 = arith.constant 0 : index
    %40 = vector.load %arg2[%c6_43, %c0_44, %c0_45] : memref<9x128x64xbf16, #tpu.memory_space<vmem>>, vector<1x128x64xbf16>
    %41 = vector.shape_cast %40 : vector<1x128x64xbf16> to vector<128x64xbf16>
    %cst_46 = arith.constant dense<0.000000e+00> : vector<20x64xf32>
    %42 = tpu.matmul %39, %41, %cst_46 {dimension_numbers = #tpu.dot_dimension_numbers<[1], [0], [0], [1], [0, 0, 1, 1], [], []>} : vector<20x128xbf16>, vector<128x64xbf16>, vector<20x64xf32> -> vector<20x64xf32>
    %43 = arith.addf %37, %42 : vector<20x64xf32>
    %c0_47 = arith.constant 0 : index
    %c0_48 = arith.constant 0 : index
    %c0_49 = arith.constant 0 : index
    %44 = vector.load %arg1[%c0_47, %c0_48, %c0_49] : memref<1x26x128xbf16, #tpu.memory_space<vmem>>, vector<1x20x128xbf16>
    %45 = vector.shape_cast %44 : vector<1x20x128xbf16> to vector<20x128xbf16>
    %c8 = arith.constant 8 : index
    %c0_50 = arith.constant 0 : index
    %c0_51 = arith.constant 0 : index
    %46 = vector.load %arg2[%c8, %c0_50, %c0_51] : memref<9x128x64xbf16, #tpu.memory_space<vmem>>, vector<1x128x64xbf16>
    %47 = vector.shape_cast %46 : vector<1x128x64xbf16> to vector<128x64xbf16>
    %cst_52 = arith.constant dense<0.000000e+00> : vector<20x64xf32>
    %48 = tpu.matmul %45, %47, %cst_52 {dimension_numbers = #tpu.dot_dimension_numbers<[1], [0], [0], [1], [0, 0, 1, 1], [], []>} : vector<20x128xbf16>, vector<128x64xbf16>, vector<20x64xf32> -> vector<20x64xf32>
    %49 = arith.addf %43, %48 : vector<20x64xf32>
    %c0_53 = arith.constant 0 : index
    %c0_54 = arith.constant 0 : index
    %50 = vector.load %arg3[%c0_53, %c0_54] : memref<20x1xf32, #tpu.memory_space<vmem>>, vector<20x1xf32>
    %51 = vector.broadcast %50 : vector<20x1xf32> to vector<20x64xf32>
    %52 = arith.mulf %4, %51 : vector<20x64xf32>
    %cst_55 = arith.constant dense<0.000000e+00> : vector<64xf32>
    %53 = vector.multi_reduction <add>, %52, %cst_55 [0] : vector<20x64xf32> to vector<64xf32>
    %54 = vector.shape_cast %53 : vector<64xf32> to vector<1x64xf32>
    %55 = arith.mulf %52, %4 : vector<20x64xf32>
    %cst_56 = arith.constant dense<0.000000e+00> : vector<64xf32>
    %56 = vector.multi_reduction <add>, %55, %cst_56 [0] : vector<20x64xf32> to vector<64xf32>
    %57 = vector.shape_cast %56 : vector<64xf32> to vector<1x64xf32>
    %58 = vector.broadcast %50 : vector<20x1xf32> to vector<20x64xf32>
    %59 = arith.mulf %15, %58 : vector<20x64xf32>
    %cst_57 = arith.constant dense<0.000000e+00> : vector<64xf32>
    %60 = vector.multi_reduction <add>, %59, %cst_57 [0] : vector<20x64xf32> to vector<64xf32>
    %61 = vector.shape_cast %60 : vector<64xf32> to vector<1x64xf32>
    %62 = arith.mulf %59, %15 : vector<20x64xf32>
    %cst_58 = arith.constant dense<0.000000e+00> : vector<64xf32>
    %63 = vector.multi_reduction <add>, %62, %cst_58 [0] : vector<20x64xf32> to vector<64xf32>
    %64 = vector.shape_cast %63 : vector<64xf32> to vector<1x64xf32>
    %65 = arith.addf %54, %61 : vector<1x64xf32>
    %66 = arith.addf %57, %64 : vector<1x64xf32>
    %67 = vector.broadcast %50 : vector<20x1xf32> to vector<20x64xf32>
    %68 = arith.mulf %26, %67 : vector<20x64xf32>
    %cst_59 = arith.constant dense<0.000000e+00> : vector<64xf32>
    %69 = vector.multi_reduction <add>, %68, %cst_59 [0] : vector<20x64xf32> to vector<64xf32>
    %70 = vector.shape_cast %69 : vector<64xf32> to vector<1x64xf32>
    %71 = arith.mulf %68, %26 : vector<20x64xf32>
    %cst_60 = arith.constant dense<0.000000e+00> : vector<64xf32>
    %72 = vector.multi_reduction <add>, %71, %cst_60 [0] : vector<20x64xf32> to vector<64xf32>
    %73 = vector.shape_cast %72 : vector<64xf32> to vector<1x64xf32>
    %74 = arith.addf %65, %70 : vector<1x64xf32>
    %75 = arith.addf %66, %73 : vector<1x64xf32>
    %76 = vector.broadcast %50 : vector<20x1xf32> to vector<20x64xf32>
    %77 = arith.mulf %49, %76 : vector<20x64xf32>
    %cst_61 = arith.constant dense<0.000000e+00> : vector<64xf32>
    %78 = vector.multi_reduction <add>, %77, %cst_61 [0] : vector<20x64xf32> to vector<64xf32>
    %79 = vector.shape_cast %78 : vector<64xf32> to vector<1x64xf32>
    %80 = arith.mulf %77, %49 : vector<20x64xf32>
    %cst_62 = arith.constant dense<0.000000e+00> : vector<64xf32>
    %81 = vector.multi_reduction <add>, %80, %cst_62 [0] : vector<20x64xf32> to vector<64xf32>
    %82 = vector.shape_cast %81 : vector<64xf32> to vector<1x64xf32>
    %83 = arith.addf %74, %79 : vector<1x64xf32>
    %84 = arith.addf %75, %82 : vector<1x64xf32>
    %cst_63 = arith.constant 1.562500e-02 : f32
    %85 = vector.broadcast %cst_63 : f32 to vector<1x64xf32>
    %86 = arith.mulf %83, %85 : vector<1x64xf32>
    %cst_64 = arith.constant 1.562500e-02 : f32
    %87 = vector.broadcast %cst_64 : f32 to vector<1x64xf32>
    %88 = arith.mulf %84, %87 : vector<1x64xf32>
    %89 = arith.mulf %86, %86 : vector<1x64xf32>
    %90 = arith.subf %88, %89 : vector<1x64xf32>
    %cst_65 = arith.constant 0.000000e+00 : f32
    %91 = vector.broadcast %cst_65 : f32 to vector<1x64xf32>
    %92 = arith.maximumf %90, %91 : vector<1x64xf32>
    %cst_66 = arith.constant 9.99999974E-6 : f32
    %93 = vector.broadcast %cst_66 : f32 to vector<1x64xf32>
    %94 = arith.addf %92, %93 : vector<1x64xf32>
    %95 = math.rsqrt %94 : vector<1x64xf32>
    %96 = vector.broadcast %86 : vector<1x64xf32> to vector<20x64xf32>
    %97 = arith.subf %4, %96 : vector<20x64xf32>
    %98 = vector.broadcast %95 : vector<1x64xf32> to vector<20x64xf32>
    %99 = arith.mulf %97, %98 : vector<20x64xf32>
    %cst_67 = arith.constant 0.000000e+00 : f32
    %100 = vector.broadcast %cst_67 : f32 to vector<20x64xf32>
    %101 = arith.maximumf %99, %100 : vector<20x64xf32>
    %102 = arith.truncf %101 : vector<20x64xf32> to vector<20x64xbf16>
    %c0_68 = arith.constant 0 : index
    %c0_69 = arith.constant 0 : index
    %c0_70 = arith.constant 0 : index
    %c0_71 = arith.constant 0 : index
    %103 = vector.load %arg4[%c0_68, %c0_69, %c0_70, %c0_71] : memref<1x4x20x64xbf16, #tpu.memory_space<vmem>>, vector<1x1x20x64xbf16>
    %104 = vector.shape_cast %103 : vector<1x1x20x64xbf16> to vector<20x64xbf16>
    %105 = vector.shape_cast %102 : vector<20x64xbf16> to vector<1x1x20x64xbf16>
    tpu.vector_store %arg4[%c0_68, %c0_69, %c0_70, %c0_71], %105 {strides = array<i32>} : memref<1x4x20x64xbf16, #tpu.memory_space<vmem>>, vector<1x1x20x64xbf16>,
    %106 = vector.broadcast %86 : vector<1x64xf32> to vector<20x64xf32>
    %107 = arith.subf %15, %106 : vector<20x64xf32>
    %108 = vector.broadcast %95 : vector<1x64xf32> to vector<20x64xf32>
    %109 = arith.mulf %107, %108 : vector<20x64xf32>
    %cst_72 = arith.constant 0.000000e+00 : f32
    %110 = vector.broadcast %cst_72 : f32 to vector<20x64xf32>
    %111 = arith.maximumf %109, %110 : vector<20x64xf32>
    %112 = arith.truncf %111 : vector<20x64xf32> to vector<20x64xbf16>
    %c0_73 = arith.constant 0 : index
    %c1_74 = arith.constant 1 : index
    %c0_75 = arith.constant 0 : index
    %c0_76 = arith.constant 0 : index
    %113 = vector.load %arg4[%c0_73, %c1_74, %c0_75, %c0_76] : memref<1x4x20x64xbf16, #tpu.memory_space<vmem>>, vector<1x1x20x64xbf16>
    %114 = vector.shape_cast %113 : vector<1x1x20x64xbf16> to vector<20x64xbf16>
    %115 = vector.shape_cast %112 : vector<20x64xbf16> to vector<1x1x20x64xbf16>
    tpu.vector_store %arg4[%c0_73, %c1_74, %c0_75, %c0_76], %115 {strides = array<i32>} : memref<1x4x20x64xbf16, #tpu.memory_space<vmem>>, vector<1x1x20x64xbf16>,
    %116 = vector.broadcast %86 : vector<1x64xf32> to vector<20x64xf32>
    %117 = arith.subf %26, %116 : vector<20x64xf32>
    %118 = vector.broadcast %95 : vector<1x64xf32> to vector<20x64xf32>
    %119 = arith.mulf %117, %118 : vector<20x64xf32>
    %cst_77 = arith.constant 0.000000e+00 : f32
    %120 = vector.broadcast %cst_77 : f32 to vector<20x64xf32>
    %121 = arith.maximumf %119, %120 : vector<20x64xf32>
    %122 = arith.truncf %121 : vector<20x64xf32> to vector<20x64xbf16>
    %c0_78 = arith.constant 0 : index
    %c2_79 = arith.constant 2 : index
    %c0_80 = arith.constant 0 : index
    %c0_81 = arith.constant 0 : index
    %123 = vector.load %arg4[%c0_78, %c2_79, %c0_80, %c0_81] : memref<1x4x20x64xbf16, #tpu.memory_space<vmem>>, vector<1x1x20x64xbf16>
    %124 = vector.shape_cast %123 : vector<1x1x20x64xbf16> to vector<20x64xbf16>
    %125 = vector.shape_cast %122 : vector<20x64xbf16> to vector<1x1x20x64xbf16>
    tpu.vector_store %arg4[%c0_78, %c2_79, %c0_80, %c0_81], %125 {strides = array<i32>} : memref<1x4x20x64xbf16, #tpu.memory_space<vmem>>, vector<1x1x20x64xbf16>,
    %126 = vector.broadcast %86 : vector<1x64xf32> to vector<20x64xf32>
    %127 = arith.subf %49, %126 : vector<20x64xf32>
    %128 = vector.broadcast %95 : vector<1x64xf32> to vector<20x64xf32>
    %129 = arith.mulf %127, %128 : vector<20x64xf32>
    %cst_82 = arith.constant 0.000000e+00 : f32
    %130 = vector.broadcast %cst_82 : f32 to vector<20x64xf32>
    %131 = arith.maximumf %129, %130 : vector<20x64xf32>
    %132 = arith.truncf %131 : vector<20x64xf32> to vector<20x64xbf16>
    %c0_83 = arith.constant 0 : index
    %c3_84 = arith.constant 3 : index
    %c0_85 = arith.constant 0 : index
    %c0_86 = arith.constant 0 : index
    %133 = vector.load %arg4[%c0_83, %c3_84, %c0_85, %c0_86] : memref<1x4x20x64xbf16, #tpu.memory_space<vmem>>, vector<1x1x20x64xbf16>
    %134 = vector.shape_cast %133 : vector<1x1x20x64xbf16> to vector<20x64xbf16>
    %135 = vector.shape_cast %132 : vector<20x64xbf16> to vector<1x1x20x64xbf16>
    tpu.vector_store %arg4[%c0_83, %c3_84, %c0_85, %c0_86], %135 {strides = array<i32>} : memref<1x4x20x64xbf16, #tpu.memory_space<vmem>>, vector<1x1x20x64xbf16>,
    return
  }
  func.func @transform_0(%arg0: i32) -> (i32, i32, i32) {
    %c0_i32 = arith.constant 0 : i32
    %c0_i32_0 = arith.constant 0 : i32
    %c0_i32_1 = arith.constant 0 : i32
    return %arg0, %c0_i32, %c0_i32_0 : i32, i32, i32
  }
  func.func @transform_1(%arg0: i32) -> (i32, i32, i32) {
    %c0_i32 = arith.constant 0 : i32
    %c0_i32_0 = arith.constant 0 : i32
    %c0_i32_1 = arith.constant 0 : i32
    %c0_i32_2 = arith.constant 0 : i32
    return %c0_i32, %c0_i32_0, %c0_i32_1 : i32, i32, i32
  }
  func.func @transform_2(%arg0: i32) -> (i32, i32) {
    %c0_i32 = arith.constant 0 : i32
    %c0_i32_0 = arith.constant 0 : i32
    %c0_i32_1 = arith.constant 0 : i32
    return %c0_i32, %c0_i32_0 : i32, i32
  }
  func.func @transform_3(%arg0: i32) -> (i32, i32, i32, i32) {
    %c0_i32 = arith.constant 0 : i32
    %c0_i32_0 = arith.constant 0 : i32
    %c0_i32_1 = arith.constant 0 : i32
    %c0_i32_2 = arith.constant 0 : i32
    return %arg0, %c0_i32, %c0_i32_0, %c0_i32_1 : i32, i32, i32, i32
  }
}

module attributes {stable_mosaic.version = 11 : i64} {
  func.func @kernel(%arg0: i32, %arg1: memref<1x82x64xbf16, #tpu.memory_space<vmem>>, %arg2: memref<9x64x32xbf16, #tpu.memory_space<vmem>>, %arg3: memref<72x1xf32, #tpu.memory_space<vmem>>, %arg4: memref<1x4x72x32xbf16, #tpu.memory_space<vmem>>) attributes {dimension_semantics = [#tpu.dimension_semantics<parallel>], iteration_bounds = array<i64: 2>, scalar_prefetch = 0 : i64, scratch_operands = 0 : i64, tpu.core_type = #tpu.core_type<tc>, window_params = [{transform_indices = @transform_0, window_bounds = array<i64: 1, 82, 64>}, {pipeline_mode = #tpu.pipeline_mode<synchronous>, transform_indices = @transform_1, window_bounds = array<i64: 9, 64, 32>}, {pipeline_mode = #tpu.pipeline_mode<synchronous>, transform_indices = @transform_2, window_bounds = array<i64: 72, 1>}, {transform_indices = @transform_3, window_bounds = array<i64: 1, 4, 72, 32>}]} {
    %c0 = arith.constant 0 : index
    %c0_0 = arith.constant 0 : index
    %c0_1 = arith.constant 0 : index
    %0 = vector.load %arg1[%c0, %c0_0, %c0_1] : memref<1x82x64xbf16, #tpu.memory_space<vmem>>, vector<1x72x64xbf16>
    %1 = vector.shape_cast %0 : vector<1x72x64xbf16> to vector<72x64xbf16>
    %c4 = arith.constant 4 : index
    %c0_2 = arith.constant 0 : index
    %c0_3 = arith.constant 0 : index
    %2 = vector.load %arg2[%c4, %c0_2, %c0_3] : memref<9x64x32xbf16, #tpu.memory_space<vmem>>, vector<1x64x32xbf16>
    %3 = vector.shape_cast %2 : vector<1x64x32xbf16> to vector<64x32xbf16>
    %cst = arith.constant dense<0.000000e+00> : vector<72x32xf32>
    %4 = tpu.matmul %1, %3, %cst {dimension_numbers = #tpu.dot_dimension_numbers<[1], [0], [0], [1], [0, 0, 1, 1], [], []>} : vector<72x64xbf16>, vector<64x32xbf16>, vector<72x32xf32> -> vector<72x32xf32>
    %c0_4 = arith.constant 0 : index
    %c1 = arith.constant 1 : index
    %c0_5 = arith.constant 0 : index
    %5 = vector.load %arg1[%c0_4, %c1, %c0_5] : memref<1x82x64xbf16, #tpu.memory_space<vmem>>, vector<1x72x64xbf16>
    %6 = vector.shape_cast %5 : vector<1x72x64xbf16> to vector<72x64xbf16>
    %c3 = arith.constant 3 : index
    %c0_6 = arith.constant 0 : index
    %c0_7 = arith.constant 0 : index
    %7 = vector.load %arg2[%c3, %c0_6, %c0_7] : memref<9x64x32xbf16, #tpu.memory_space<vmem>>, vector<1x64x32xbf16>
    %8 = vector.shape_cast %7 : vector<1x64x32xbf16> to vector<64x32xbf16>
    %cst_8 = arith.constant dense<0.000000e+00> : vector<72x32xf32>
    %9 = tpu.matmul %6, %8, %cst_8 {dimension_numbers = #tpu.dot_dimension_numbers<[1], [0], [0], [1], [0, 0, 1, 1], [], []>} : vector<72x64xbf16>, vector<64x32xbf16>, vector<72x32xf32> -> vector<72x32xf32>
    %c0_9 = arith.constant 0 : index
    %c0_10 = arith.constant 0 : index
    %c0_11 = arith.constant 0 : index
    %10 = vector.load %arg1[%c0_9, %c0_10, %c0_11] : memref<1x82x64xbf16, #tpu.memory_space<vmem>>, vector<1x72x64xbf16>
    %11 = vector.shape_cast %10 : vector<1x72x64xbf16> to vector<72x64xbf16>
    %c5 = arith.constant 5 : index
    %c0_12 = arith.constant 0 : index
    %c0_13 = arith.constant 0 : index
    %12 = vector.load %arg2[%c5, %c0_12, %c0_13] : memref<9x64x32xbf16, #tpu.memory_space<vmem>>, vector<1x64x32xbf16>
    %13 = vector.shape_cast %12 : vector<1x64x32xbf16> to vector<64x32xbf16>
    %cst_14 = arith.constant dense<0.000000e+00> : vector<72x32xf32>
    %14 = tpu.matmul %11, %13, %cst_14 {dimension_numbers = #tpu.dot_dimension_numbers<[1], [0], [0], [1], [0, 0, 1, 1], [], []>} : vector<72x64xbf16>, vector<64x32xbf16>, vector<72x32xf32> -> vector<72x32xf32>
    %15 = arith.addf %9, %14 : vector<72x32xf32>
    %c0_15 = arith.constant 0 : index
    %c9 = arith.constant 9 : index
    %c0_16 = arith.constant 0 : index
    %16 = vector.load %arg1[%c0_15, %c9, %c0_16] : memref<1x82x64xbf16, #tpu.memory_space<vmem>>, vector<1x72x64xbf16>
    %17 = vector.shape_cast %16 : vector<1x72x64xbf16> to vector<72x64xbf16>
    %c1_17 = arith.constant 1 : index
    %c0_18 = arith.constant 0 : index
    %c0_19 = arith.constant 0 : index
    %18 = vector.load %arg2[%c1_17, %c0_18, %c0_19] : memref<9x64x32xbf16, #tpu.memory_space<vmem>>, vector<1x64x32xbf16>
    %19 = vector.shape_cast %18 : vector<1x64x32xbf16> to vector<64x32xbf16>
    %cst_20 = arith.constant dense<0.000000e+00> : vector<72x32xf32>
    %20 = tpu.matmul %17, %19, %cst_20 {dimension_numbers = #tpu.dot_dimension_numbers<[1], [0], [0], [1], [0, 0, 1, 1], [], []>} : vector<72x64xbf16>, vector<64x32xbf16>, vector<72x32xf32> -> vector<72x32xf32>
    %c0_21 = arith.constant 0 : index
    %c0_22 = arith.constant 0 : index
    %c0_23 = arith.constant 0 : index
    %21 = vector.load %arg1[%c0_21, %c0_22, %c0_23] : memref<1x82x64xbf16, #tpu.memory_space<vmem>>, vector<1x72x64xbf16>
    %22 = vector.shape_cast %21 : vector<1x72x64xbf16> to vector<72x64xbf16>
    %c7 = arith.constant 7 : index
    %c0_24 = arith.constant 0 : index
    %c0_25 = arith.constant 0 : index
    %23 = vector.load %arg2[%c7, %c0_24, %c0_25] : memref<9x64x32xbf16, #tpu.memory_space<vmem>>, vector<1x64x32xbf16>
    %24 = vector.shape_cast %23 : vector<1x64x32xbf16> to vector<64x32xbf16>
    %cst_26 = arith.constant dense<0.000000e+00> : vector<72x32xf32>
    %25 = tpu.matmul %22, %24, %cst_26 {dimension_numbers = #tpu.dot_dimension_numbers<[1], [0], [0], [1], [0, 0, 1, 1], [], []>} : vector<72x64xbf16>, vector<64x32xbf16>, vector<72x32xf32> -> vector<72x32xf32>
    %26 = arith.addf %20, %25 : vector<72x32xf32>
    %c0_27 = arith.constant 0 : index
    %c10 = arith.constant 10 : index
    %c0_28 = arith.constant 0 : index
    %27 = vector.load %arg1[%c0_27, %c10, %c0_28] : memref<1x82x64xbf16, #tpu.memory_space<vmem>>, vector<1x72x64xbf16>
    %28 = vector.shape_cast %27 : vector<1x72x64xbf16> to vector<72x64xbf16>
    %c0_29 = arith.constant 0 : index
    %c0_30 = arith.constant 0 : index
    %c0_31 = arith.constant 0 : index
    %29 = vector.load %arg2[%c0_29, %c0_30, %c0_31] : memref<9x64x32xbf16, #tpu.memory_space<vmem>>, vector<1x64x32xbf16>
    %30 = vector.shape_cast %29 : vector<1x64x32xbf16> to vector<64x32xbf16>
    %cst_32 = arith.constant dense<0.000000e+00> : vector<72x32xf32>
    %31 = tpu.matmul %28, %30, %cst_32 {dimension_numbers = #tpu.dot_dimension_numbers<[1], [0], [0], [1], [0, 0, 1, 1], [], []>} : vector<72x64xbf16>, vector<64x32xbf16>, vector<72x32xf32> -> vector<72x32xf32>
    %c0_33 = arith.constant 0 : index
    %c9_34 = arith.constant 9 : index
    %c0_35 = arith.constant 0 : index
    %32 = vector.load %arg1[%c0_33, %c9_34, %c0_35] : memref<1x82x64xbf16, #tpu.memory_space<vmem>>, vector<1x72x64xbf16>
    %33 = vector.shape_cast %32 : vector<1x72x64xbf16> to vector<72x64xbf16>
    %c2 = arith.constant 2 : index
    %c0_36 = arith.constant 0 : index
    %c0_37 = arith.constant 0 : index
    %34 = vector.load %arg2[%c2, %c0_36, %c0_37] : memref<9x64x32xbf16, #tpu.memory_space<vmem>>, vector<1x64x32xbf16>
    %35 = vector.shape_cast %34 : vector<1x64x32xbf16> to vector<64x32xbf16>
    %cst_38 = arith.constant dense<0.000000e+00> : vector<72x32xf32>
    %36 = tpu.matmul %33, %35, %cst_38 {dimension_numbers = #tpu.dot_dimension_numbers<[1], [0], [0], [1], [0, 0, 1, 1], [], []>} : vector<72x64xbf16>, vector<64x32xbf16>, vector<72x32xf32> -> vector<72x32xf32>
    %37 = arith.addf %31, %36 : vector<72x32xf32>
    %c0_39 = arith.constant 0 : index
    %c1_40 = arith.constant 1 : index
    %c0_41 = arith.constant 0 : index
    %38 = vector.load %arg1[%c0_39, %c1_40, %c0_41] : memref<1x82x64xbf16, #tpu.memory_space<vmem>>, vector<1x72x64xbf16>
    %39 = vector.shape_cast %38 : vector<1x72x64xbf16> to vector<72x64xbf16>
    %c6 = arith.constant 6 : index
    %c0_42 = arith.constant 0 : index
    %c0_43 = arith.constant 0 : index
    %40 = vector.load %arg2[%c6, %c0_42, %c0_43] : memref<9x64x32xbf16, #tpu.memory_space<vmem>>, vector<1x64x32xbf16>
    %41 = vector.shape_cast %40 : vector<1x64x32xbf16> to vector<64x32xbf16>
    %cst_44 = arith.constant dense<0.000000e+00> : vector<72x32xf32>
    %42 = tpu.matmul %39, %41, %cst_44 {dimension_numbers = #tpu.dot_dimension_numbers<[1], [0], [0], [1], [0, 0, 1, 1], [], []>} : vector<72x64xbf16>, vector<64x32xbf16>, vector<72x32xf32> -> vector<72x32xf32>
    %43 = arith.addf %37, %42 : vector<72x32xf32>
    %c0_45 = arith.constant 0 : index
    %c0_46 = arith.constant 0 : index
    %c0_47 = arith.constant 0 : index
    %44 = vector.load %arg1[%c0_45, %c0_46, %c0_47] : memref<1x82x64xbf16, #tpu.memory_space<vmem>>, vector<1x72x64xbf16>
    %45 = vector.shape_cast %44 : vector<1x72x64xbf16> to vector<72x64xbf16>
    %c8 = arith.constant 8 : index
    %c0_48 = arith.constant 0 : index
    %c0_49 = arith.constant 0 : index
    %46 = vector.load %arg2[%c8, %c0_48, %c0_49] : memref<9x64x32xbf16, #tpu.memory_space<vmem>>, vector<1x64x32xbf16>
    %47 = vector.shape_cast %46 : vector<1x64x32xbf16> to vector<64x32xbf16>
    %cst_50 = arith.constant dense<0.000000e+00> : vector<72x32xf32>
    %48 = tpu.matmul %45, %47, %cst_50 {dimension_numbers = #tpu.dot_dimension_numbers<[1], [0], [0], [1], [0, 0, 1, 1], [], []>} : vector<72x64xbf16>, vector<64x32xbf16>, vector<72x32xf32> -> vector<72x32xf32>
    %49 = arith.addf %43, %48 : vector<72x32xf32>
    %c0_51 = arith.constant 0 : index
    %c0_52 = arith.constant 0 : index
    %50 = vector.load %arg3[%c0_51, %c0_52] : memref<72x1xf32, #tpu.memory_space<vmem>>, vector<72x1xf32>
    %51 = vector.broadcast %50 : vector<72x1xf32> to vector<72x32xf32>
    %52 = arith.mulf %4, %51 : vector<72x32xf32>
    %cst_53 = arith.constant dense<0.000000e+00> : vector<32xf32>
    %53 = vector.multi_reduction <add>, %52, %cst_53 [0] : vector<72x32xf32> to vector<32xf32>
    %54 = vector.shape_cast %53 : vector<32xf32> to vector<1x32xf32>
    %55 = arith.mulf %52, %4 : vector<72x32xf32>
    %cst_54 = arith.constant dense<0.000000e+00> : vector<32xf32>
    %56 = vector.multi_reduction <add>, %55, %cst_54 [0] : vector<72x32xf32> to vector<32xf32>
    %57 = vector.shape_cast %56 : vector<32xf32> to vector<1x32xf32>
    %58 = vector.broadcast %50 : vector<72x1xf32> to vector<72x32xf32>
    %59 = arith.mulf %15, %58 : vector<72x32xf32>
    %cst_55 = arith.constant dense<0.000000e+00> : vector<32xf32>
    %60 = vector.multi_reduction <add>, %59, %cst_55 [0] : vector<72x32xf32> to vector<32xf32>
    %61 = vector.shape_cast %60 : vector<32xf32> to vector<1x32xf32>
    %62 = arith.mulf %59, %15 : vector<72x32xf32>
    %cst_56 = arith.constant dense<0.000000e+00> : vector<32xf32>
    %63 = vector.multi_reduction <add>, %62, %cst_56 [0] : vector<72x32xf32> to vector<32xf32>
    %64 = vector.shape_cast %63 : vector<32xf32> to vector<1x32xf32>
    %65 = arith.addf %54, %61 : vector<1x32xf32>
    %66 = arith.addf %57, %64 : vector<1x32xf32>
    %67 = vector.broadcast %50 : vector<72x1xf32> to vector<72x32xf32>
    %68 = arith.mulf %26, %67 : vector<72x32xf32>
    %cst_57 = arith.constant dense<0.000000e+00> : vector<32xf32>
    %69 = vector.multi_reduction <add>, %68, %cst_57 [0] : vector<72x32xf32> to vector<32xf32>
    %70 = vector.shape_cast %69 : vector<32xf32> to vector<1x32xf32>
    %71 = arith.mulf %68, %26 : vector<72x32xf32>
    %cst_58 = arith.constant dense<0.000000e+00> : vector<32xf32>
    %72 = vector.multi_reduction <add>, %71, %cst_58 [0] : vector<72x32xf32> to vector<32xf32>
    %73 = vector.shape_cast %72 : vector<32xf32> to vector<1x32xf32>
    %74 = arith.addf %65, %70 : vector<1x32xf32>
    %75 = arith.addf %66, %73 : vector<1x32xf32>
    %76 = vector.broadcast %50 : vector<72x1xf32> to vector<72x32xf32>
    %77 = arith.mulf %49, %76 : vector<72x32xf32>
    %cst_59 = arith.constant dense<0.000000e+00> : vector<32xf32>
    %78 = vector.multi_reduction <add>, %77, %cst_59 [0] : vector<72x32xf32> to vector<32xf32>
    %79 = vector.shape_cast %78 : vector<32xf32> to vector<1x32xf32>
    %80 = arith.mulf %77, %49 : vector<72x32xf32>
    %cst_60 = arith.constant dense<0.000000e+00> : vector<32xf32>
    %81 = vector.multi_reduction <add>, %80, %cst_60 [0] : vector<72x32xf32> to vector<32xf32>
    %82 = vector.shape_cast %81 : vector<32xf32> to vector<1x32xf32>
    %83 = arith.addf %74, %79 : vector<1x32xf32>
    %84 = arith.addf %75, %82 : vector<1x32xf32>
    %cst_61 = arith.constant 3.906250e-03 : f32
    %85 = vector.broadcast %cst_61 : f32 to vector<1x32xf32>
    %86 = arith.mulf %83, %85 : vector<1x32xf32>
    %cst_62 = arith.constant 3.906250e-03 : f32
    %87 = vector.broadcast %cst_62 : f32 to vector<1x32xf32>
    %88 = arith.mulf %84, %87 : vector<1x32xf32>
    %89 = arith.mulf %86, %86 : vector<1x32xf32>
    %90 = arith.subf %88, %89 : vector<1x32xf32>
    %cst_63 = arith.constant 0.000000e+00 : f32
    %91 = vector.broadcast %cst_63 : f32 to vector<1x32xf32>
    %92 = arith.maximumf %90, %91 : vector<1x32xf32>
    %cst_64 = arith.constant 9.99999974E-6 : f32
    %93 = vector.broadcast %cst_64 : f32 to vector<1x32xf32>
    %94 = arith.addf %92, %93 : vector<1x32xf32>
    %95 = math.rsqrt %94 : vector<1x32xf32>
    %96 = vector.broadcast %86 : vector<1x32xf32> to vector<72x32xf32>
    %97 = arith.subf %4, %96 : vector<72x32xf32>
    %98 = vector.broadcast %95 : vector<1x32xf32> to vector<72x32xf32>
    %99 = arith.mulf %97, %98 : vector<72x32xf32>
    %cst_65 = arith.constant 0.000000e+00 : f32
    %100 = vector.broadcast %cst_65 : f32 to vector<72x32xf32>
    %101 = arith.maximumf %99, %100 : vector<72x32xf32>
    %102 = arith.truncf %101 : vector<72x32xf32> to vector<72x32xbf16>
    %c0_66 = arith.constant 0 : index
    %c0_67 = arith.constant 0 : index
    %c0_68 = arith.constant 0 : index
    %c0_69 = arith.constant 0 : index
    %103 = vector.load %arg4[%c0_66, %c0_67, %c0_68, %c0_69] : memref<1x4x72x32xbf16, #tpu.memory_space<vmem>>, vector<1x1x72x32xbf16>
    %104 = vector.shape_cast %103 : vector<1x1x72x32xbf16> to vector<72x32xbf16>
    %105 = vector.shape_cast %102 : vector<72x32xbf16> to vector<1x1x72x32xbf16>
    tpu.vector_store %arg4[%c0_66, %c0_67, %c0_68, %c0_69], %105 {strides = array<i32>} : memref<1x4x72x32xbf16, #tpu.memory_space<vmem>>, vector<1x1x72x32xbf16>,
    %106 = vector.broadcast %86 : vector<1x32xf32> to vector<72x32xf32>
    %107 = arith.subf %15, %106 : vector<72x32xf32>
    %108 = vector.broadcast %95 : vector<1x32xf32> to vector<72x32xf32>
    %109 = arith.mulf %107, %108 : vector<72x32xf32>
    %cst_70 = arith.constant 0.000000e+00 : f32
    %110 = vector.broadcast %cst_70 : f32 to vector<72x32xf32>
    %111 = arith.maximumf %109, %110 : vector<72x32xf32>
    %112 = arith.truncf %111 : vector<72x32xf32> to vector<72x32xbf16>
    %c0_71 = arith.constant 0 : index
    %c1_72 = arith.constant 1 : index
    %c0_73 = arith.constant 0 : index
    %c0_74 = arith.constant 0 : index
    %113 = vector.load %arg4[%c0_71, %c1_72, %c0_73, %c0_74] : memref<1x4x72x32xbf16, #tpu.memory_space<vmem>>, vector<1x1x72x32xbf16>
    %114 = vector.shape_cast %113 : vector<1x1x72x32xbf16> to vector<72x32xbf16>
    %115 = vector.shape_cast %112 : vector<72x32xbf16> to vector<1x1x72x32xbf16>
    tpu.vector_store %arg4[%c0_71, %c1_72, %c0_73, %c0_74], %115 {strides = array<i32>} : memref<1x4x72x32xbf16, #tpu.memory_space<vmem>>, vector<1x1x72x32xbf16>,
    %116 = vector.broadcast %86 : vector<1x32xf32> to vector<72x32xf32>
    %117 = arith.subf %26, %116 : vector<72x32xf32>
    %118 = vector.broadcast %95 : vector<1x32xf32> to vector<72x32xf32>
    %119 = arith.mulf %117, %118 : vector<72x32xf32>
    %cst_75 = arith.constant 0.000000e+00 : f32
    %120 = vector.broadcast %cst_75 : f32 to vector<72x32xf32>
    %121 = arith.maximumf %119, %120 : vector<72x32xf32>
    %122 = arith.truncf %121 : vector<72x32xf32> to vector<72x32xbf16>
    %c0_76 = arith.constant 0 : index
    %c2_77 = arith.constant 2 : index
    %c0_78 = arith.constant 0 : index
    %c0_79 = arith.constant 0 : index
    %123 = vector.load %arg4[%c0_76, %c2_77, %c0_78, %c0_79] : memref<1x4x72x32xbf16, #tpu.memory_space<vmem>>, vector<1x1x72x32xbf16>
    %124 = vector.shape_cast %123 : vector<1x1x72x32xbf16> to vector<72x32xbf16>
    %125 = vector.shape_cast %122 : vector<72x32xbf16> to vector<1x1x72x32xbf16>
    tpu.vector_store %arg4[%c0_76, %c2_77, %c0_78, %c0_79], %125 {strides = array<i32>} : memref<1x4x72x32xbf16, #tpu.memory_space<vmem>>, vector<1x1x72x32xbf16>,
    %126 = vector.broadcast %86 : vector<1x32xf32> to vector<72x32xf32>
    %127 = arith.subf %49, %126 : vector<72x32xf32>
    %128 = vector.broadcast %95 : vector<1x32xf32> to vector<72x32xf32>
    %129 = arith.mulf %127, %128 : vector<72x32xf32>
    %cst_80 = arith.constant 0.000000e+00 : f32
    %130 = vector.broadcast %cst_80 : f32 to vector<72x32xf32>
    %131 = arith.maximumf %129, %130 : vector<72x32xf32>
    %132 = arith.truncf %131 : vector<72x32xf32> to vector<72x32xbf16>
    %c0_81 = arith.constant 0 : index
    %c3_82 = arith.constant 3 : index
    %c0_83 = arith.constant 0 : index
    %c0_84 = arith.constant 0 : index
    %133 = vector.load %arg4[%c0_81, %c3_82, %c0_83, %c0_84] : memref<1x4x72x32xbf16, #tpu.memory_space<vmem>>, vector<1x1x72x32xbf16>
    %134 = vector.shape_cast %133 : vector<1x1x72x32xbf16> to vector<72x32xbf16>
    %135 = vector.shape_cast %132 : vector<72x32xbf16> to vector<1x1x72x32xbf16>
    tpu.vector_store %arg4[%c0_81, %c3_82, %c0_83, %c0_84], %135 {strides = array<i32>} : memref<1x4x72x32xbf16, #tpu.memory_space<vmem>>, vector<1x1x72x32xbf16>,
    return
  }
  func.func @transform_0(%arg0: i32) -> (i32, i32, i32) {
    %c0_i32 = arith.constant 0 : i32
    %c0_i32_0 = arith.constant 0 : i32
    %c0_i32_1 = arith.constant 0 : i32
    return %arg0, %c0_i32, %c0_i32_0 : i32, i32, i32
  }
  func.func @transform_1(%arg0: i32) -> (i32, i32, i32) {
    %c0_i32 = arith.constant 0 : i32
    %c0_i32_0 = arith.constant 0 : i32
    %c0_i32_1 = arith.constant 0 : i32
    %c0_i32_2 = arith.constant 0 : i32
    return %c0_i32, %c0_i32_0, %c0_i32_1 : i32, i32, i32
  }
  func.func @transform_2(%arg0: i32) -> (i32, i32) {
    %c0_i32 = arith.constant 0 : i32
    %c0_i32_0 = arith.constant 0 : i32
    %c0_i32_1 = arith.constant 0 : i32
    return %c0_i32, %c0_i32_0 : i32, i32
  }
  func.func @transform_3(%arg0: i32) -> (i32, i32, i32, i32) {
    %c0_i32 = arith.constant 0 : i32
    %c0_i32_0 = arith.constant 0 : i32
    %c0_i32_1 = arith.constant 0 : i32
    %c0_i32_2 = arith.constant 0 : i32
    return %arg0, %c0_i32, %c0_i32_0, %c0_i32_1 : i32, i32, i32, i32
  }
}

</mosaic_0001>

<llo_original>
// kernel: generator_forward.23
$region0: #{generator_forward.23}
  #allocation0 [shape = 'u32[]', space=smem, size = 0x4, offset = 0x4, fixed_abs, tag = 'smem constant byte address 0x4 - core index']
  #allocation1 [shape = 'u32[144,128]{1,0:T(1,128)}', space=vmem, size = 0x12000, scoped, tag = 'internal scratch']
  %s0 = inlined_call_operand.vmem [shape: bf16[2,256,147], index: 0, kind: input, shape index: {}]
  %s1 = inlined_call_operand.vmem [shape: bf16[147,32], index: 1, kind: input, shape index: {}]
  %s2 = inlined_call_operand.vmem [shape: bf16[2,256,32], index: 2, kind: output, shape index: {}]
  %s3 = sld [smem:[#allocation0]]
  $region41: #{generator_forward.23} parent=0
    _
  %s5 = ssub.s32 1, %s3
  %s6 = scalar_select 0, %s5, %s3
  loop: start=0, step=1, limit=4
  $region2: #{generator_forward.23} parent=0 // loop_pre_header
    _
  $region3: #{generator_forward.23} parent=0 // loop_header
    %s8 = sphi 0, %s12
    %p9 = scmp.ge.s32.totalorder %s8, 4
    %s18 = sphi 0, %s20
    %s21 = sphi 0, %s18
    %s22 = sphi 0, %s21
    %s38 = sphi 0, %s22
    %s42 = sphi 0, %s42
    %s44 = sphi 0, %s42
    %s45 = sphi 0, %s44
    %s59 = sphi 0, %s45
    %s65 = sphi 0, %s67
    %s68 = sphi 0, %s65
    %s69 = sphi 0, %s68
    %s85 = sphi 0, %s69
  $region4: #{generator_forward.23} parent=0 // loop_header_branch
    %11 = sbr.rel (%p9) target = $region8
  $region5: #{generator_forward.23} parent=0 // loop_body
    %s13 = ssub.s32 %s8, 1
    %s14 = ssub.s32 %s8, 2
    %s15 = sadd.s32 %s8, 1
    %s16 = ssub.s32 %s8, %s15
    %p17 = scmp.eq.s32.totalorder %s16, 0
    %s19 = sadd.s32 %s18, 1
    %s20 = scalar_select %p17, %s18, %s19
    %p23 = pneg %p17
    %p24 = scmp.eq.s32.totalorder %s8, 1
    %p25 = por %p23, %p24
    %p26 = scmp.ne.s32.totalorder %s18, %s21
    %p27 = scmp.eq.s32.totalorder %s8, 0
    %p28 = por %p26, %p27
    %p29 = scmp.ne.s32.totalorder %s18, %s21
    %p30 = scmp.eq.s32.totalorder %s13, 1
    %p31 = por %p29, %p30
    %p32 = scmp.ne.s32.totalorder %s21, %s22
    %p33 = scmp.eq.s32.totalorder %s13, 0
    %p34 = por %p32, %p33
    %p35 = scmp.ne.s32.totalorder %s21, %s22
    %p36 = scmp.eq.s32.totalorder %s14, 1
    %p37 = por %p35, %p36
    %p39 = scmp.ne.s32.totalorder %s22, %s38
    %p40 = scmp.eq.s32.totalorder %s14, 0
    %p41 = por %p39, %p40
    %s43 = sadd.s32 %s42, 1
    %p46 = scmp.eq.s32.totalorder %s8, 1
    %p47 = scmp.ne.s32.totalorder %s42, %s44
    %p48 = scmp.eq.s32.totalorder %s8, 0
    %p49 = por %p47, %p48
    %p50 = scmp.ne.s32.totalorder %s42, %s44
    %p51 = scmp.eq.s32.totalorder %s13, 1
    %p52 = por %p50, %p51
    %p53 = scmp.ne.s32.totalorder %s44, %s45
    %p54 = scmp.eq.s32.totalorder %s13, 0
    %p55 = por %p53, %p54
    %p56 = scmp.ne.s32.totalorder %s44, %s45
    %p57 = scmp.eq.s32.totalorder %s14, 1
    %p58 = por %p56, %p57
    %p60 = scmp.ne.s32.totalorder %s45, %s59
    %p61 = scmp.eq.s32.totalorder %s14, 0
    %p62 = por %p60, %p61
    %s63 = ssub.s32 %s8, %s15
    %p64 = scmp.eq.s32.totalorder %s63, 0
    %s66 = sadd.s32 %s65, 1
    %s67 = scalar_select %p64, %s65, %s66
    %p70 = pneg %p64
    %p71 = scmp.eq.s32.totalorder %s8, 1
    %p72 = por %p70, %p71
    %p73 = scmp.ne.s32.totalorder %s65, %s68
    %p74 = scmp.eq.s32.totalorder %s8, 0
    %p75 = por %p73, %p74
    %p76 = scmp.ne.s32.totalorder %s65, %s68
    %p77 = scmp.eq.s32.totalorder %s13, 1
    %p78 = por %p76, %p77
    %p79 = scmp.ne.s32.totalorder %s68, %s69
    %p80 = scmp.eq.s32.totalorder %s13, 0
    %p81 = por %p79, %p80
    %p82 = scmp.ne.s32.totalorder %s68, %s69
    %p83 = scmp.eq.s32.totalorder %s14, 1
    %p84 = por %p82, %p83
    %p86 = scmp.ne.s32.totalorder %s69, %s85
    %p87 = scmp.eq.s32.totalorder %s14, 0
    %p88 = por %p86, %p87
    %p89 = scmp.le.s32.totalorder 1, %s8
    %p90 = scmp.lt.s32.totalorder %s8, 3
    %p91 = pnand %p89, %p90
    %p92 = pneg %p91
    // Predicated region
    $region9: #{generator_forward.23} parent=5 // pred_check
      _
    $region10: #{generator_forward.23} parent=5 // pred_check_branch
      %94 = sbr.rel (%p91) target = $region12
    $region11: #{generator_forward.23} parent=5 // pred_region
      %s95 = ssub.s32 %s8, 1
      // Predicated region
      $region13: #{generator_forward.23} parent=11 // pred_check
        %p96 = pneg %p55
      $region14: #{generator_forward.23} parent=11 // pred_check_branch
        %98 = sbr.rel (%p96) target = $region16
      $region15: #{generator_forward.23} parent=11 // pred_region
        _
      $region16: #{generator_forward.23} parent=11 // pred_fallthru
        _
    $region12: #{generator_forward.23} parent=5 // pred_fallthru
      _
    %p99 = scmp.lt.s32.totalorder %s8, 2
    // Predicated region
    $region17: #{generator_forward.23} parent=5 // pred_check
      %p100 = pneg %p99
    $region18: #{generator_forward.23} parent=5 // pred_check_branch
      %102 = sbr.rel (%p100) target = $region20
    $region19: #{generator_forward.23} parent=5 // pred_region
      // Predicated region
      $region21: #{generator_forward.23} parent=19 // pred_check
        %p103 = pneg %p28
      $region22: #{generator_forward.23} parent=19 // pred_check_branch
        %105 = sbr.rel (%p103) target = $region24
      $region23: #{generator_forward.23} parent=19 // pred_region
        %p106 = scmp.lt.s32.totalorder %s8, 1
        %s107 = scalar_select %p106, %s8, 1
        %s108 = smul.addr %s107, 64
        %s109 = smul.addr %s108, 4
        %s110 = scalar_lea.vmem %s0, %s109
      $region24: #{generator_forward.23} parent=19 // pred_fallthru
        _
    $region20: #{generator_forward.23} parent=5 // pred_fallthru
      _
    %p111 = scmp.le.s32.totalorder 1, %s8
    %p112 = scmp.lt.s32.totalorder %s8, 3
    %p113 = pnand %p111, %p112
    %p114 = pneg %p113
    // Predicated region
    $region25: #{generator_forward.23} parent=5 // pred_check
      _
    $region26: #{generator_forward.23} parent=5 // pred_check_branch
      %116 = sbr.rel (%p113) target = $region28
    $region27: #{generator_forward.23} parent=5 // pred_region
      %s117 = ssub.s32 %s8, 1
      %p118 = scmp.lt.s32.totalorder %s13, 1
      %s119 = scalar_select %p118, %s13, 1
      %s120 = smul.addr %s119, 64
      %s121 = smul.addr %s120, 4
      %s122 = scalar_lea.vmem %s0, %s121
      %p123 = pneg %p34
      %p124 = pneg %p31
      %p125 = pneg %p55
      %p126 = pneg %p52
      %p127 = pneg %p81
      %p128 = pneg %p78
      %p129 = scmp.lt.s32.totalorder %s13, 1
      %s130 = scalar_select %p129, %s13, 1
      %s131 = smul.addr %s130, 32
      %s132 = smul.addr %s131, 4
      %s133 = scalar_lea.vmem %s2, %s132
      %p134 = scmp.lt.s32.totalorder %s13, 1
      %s135 = scalar_select %p134, %s13, 1
      %s136 = smul.addr %s135, 64
      %s137 = smul.addr %s136, 4
      %s138 = scalar_lea.vmem %s0, %s137
      %p139 = scmp.lt.s32.totalorder %s13, 1
      %s140 = scalar_select %p139, %s13, 1
      %s141 = smul.addr %s140, 32
      %s142 = smul.addr %s141, 4
      %s143 = scalar_lea.vmem %s2, %s142
      %v145 = vld [vmem:[%s138] sm:$0xff]
      %v146 = vld [vmem:[%s138 + $0x8] sm:$0xff]
      %v147 = vld [vmem:[%s138 + $0x10] sm:$0xff]
      %v148 = vld [vmem:[%s138 + $0x18] sm:$0xff]
      %v149 = vld [vmem:[%s138 + $0x20] sm:$0xff]
      %v150 = vld [vmem:[%s138 + $0x28] sm:$0xff]
      %v151 = vld [vmem:[%s138 + $0x30] sm:$0xff]
      %v152 = vld [vmem:[%s138 + $0x38] sm:$0xff]
      %v153 = vld [vmem:[%s138 + $0x40] sm:$0xff]
      %v154 = vld [vmem:[%s138 + $0x48] sm:$0xff]
      %v155 = vld [vmem:[%s138 + $0x50] sm:$0xff]
      %v156 = vld [vmem:[%s138 + $0x58] sm:$0xff]
      %v157 = vld [vmem:[%s138 + $0x60] sm:$0xff]
      %v158 = vld [vmem:[%s138 + $0x68] sm:$0xff]
      %v159 = vld [vmem:[%s138 + $0x70] sm:$0xff]
      %v160 = vld [vmem:[%s138 + $0x78] sm:$0xff]
      %v161 = vld [vmem:[%s138 + $0x80] sm:$0xff]
      %v162 = vld [vmem:[%s138 + $0x88] sm:$0xff]
      %v163 = vld [vmem:[%s138 + $0x90] sm:$0xff]
      %v164 = vld [vmem:[%s138 + $0x98] sm:$0xff]
      %v165 = vld [vmem:[%s138 + $0xa0] sm:$0xff]
      %v166 = vld [vmem:[%s138 + $0xa8] sm:$0xff]
      %v167 = vld [vmem:[%s138 + $0xb0] sm:$0xff]
      %v168 = vld [vmem:[%s138 + $0xb8] sm:$0xff]
      %v169 = vld [vmem:[%s138 + $0xc0] sm:$0xff]
      %v170 = vld [vmem:[%s138 + $0xc8] sm:$0xff]
      %v171 = vld [vmem:[%s138 + $0xd0] sm:$0xff]
      %v172 = vld [vmem:[%s138 + $0xd8] sm:$0xff]
      %v173 = vld [vmem:[%s138 + $0xe0] sm:$0xff]
      %v174 = vld [vmem:[%s138 + $0xe8] sm:$0xff]
      %v175 = vld [vmem:[%s138 + $0xf0] sm:$0xff]
      %v176 = vld [vmem:[%s138 + $0xf8] sm:$0xff]
      %v177 = vld [vmem:[%s1] sm:$0xf]
      %v178 = vld [vmem:[%s1 + $0x4] sm:$0xf]
      %v179 = vld [vmem:[%s1 + $0x8] sm:$0xf]
      %v180 = vld [vmem:[%s1 + $0xc] sm:$0xf]
      %v181 = vld [vmem:[%s1 + $0x10] sm:$0xf]
      %v182 = vld [vmem:[%s1 + $0x14] sm:$0xf]
      %v183 = vld [vmem:[%s1 + $0x18] sm:$0xf]
      %v184 = vld [vmem:[%s1 + $0x1c] sm:$0xf]
      %v185 = vld [vmem:[%s1 + $0x20] sm:$0xf]
      %v186 = vld [vmem:[%s1 + $0x24] sm:$0xf]
      %v187 = vld [vmem:[%s1 + $0x28] sm:$0xf]
      %v188 = vld [vmem:[%s1 + $0x2c] sm:$0xf]
      %v189 = vld [vmem:[%s1 + $0x30] sm:$0xf]
      %v190 = vld [vmem:[%s1 + $0x34] sm:$0xf]
      %v191 = vld [vmem:[%s1 + $0x38] sm:$0xf]
      %v192 = vld [vmem:[%s1 + $0x3c] sm:$0xf]
      %v193 = vld [vmem:[%s1 + $0x40] sm:$0xf]
      %v194 = vld [vmem:[%s1 + $0x44] sm:$0xf]
      %v195 = vld [vmem:[%s1 + $0x48] sm:$0x3]
      %v228 = vunpack.c.l.b16 %v145
      %v229 = vunpack.c.h.b16 %v145
      %v230 = vunpack.c.l.b16 %v146
      %v231 = vunpack.c.h.b16 %v146
      %v232 = vunpack.c.l.b16 %v147
      %v233 = vunpack.c.h.b16 %v147
      %v234 = vunpack.c.l.b16 %v148
      %v235 = vunpack.c.h.b16 %v148
      %v236 = vunpack.c.l.b16 %v149
      %v237 = vunpack.c.h.b16 %v149
      %v238 = vunpack.c.l.b16 %v150
      %v239 = vunpack.c.h.b16 %v150
      %v240 = vunpack.c.l.b16 %v151
      %v241 = vunpack.c.h.b16 %v151
      %v242 = vunpack.c.l.b16 %v152
      %v243 = vunpack.c.h.b16 %v152
      %v244 = vunpack.c.l.b16 %v153
      %v245 = vunpack.c.h.b16 %v153
      %v246 = vunpack.c.l.b16 %v154
      %v247 = vunpack.c.h.b16 %v154
      %v248 = vunpack.c.l.b16 %v155
      %v249 = vunpack.c.h.b16 %v155
      %v250 = vunpack.c.l.b16 %v156
      %v251 = vunpack.c.h.b16 %v156
      %v252 = vunpack.c.l.b16 %v157
      %v253 = vunpack.c.h.b16 %v157
      %v254 = vunpack.c.l.b16 %v158
      %v255 = vunpack.c.h.b16 %v158
      %v256 = vunpack.c.l.b16 %v159
      %v257 = vunpack.c.h.b16 %v159
      %v258 = vunpack.c.l.b16 %v160
      %v259 = vunpack.c.h.b16 %v160
      %v260 = vunpack.c.l.b16 %v161
      %v261 = vunpack.c.h.b16 %v161
      %v262 = vunpack.c.l.b16 %v162
      %v263 = vunpack.c.h.b16 %v162
      %v264 = vunpack.c.l.b16 %v163
      %v265 = vunpack.c.h.b16 %v163
      %v266 = vunpack.c.l.b16 %v164
      %v267 = vunpack.c.h.b16 %v164
      %v268 = vunpack.c.l.b16 %v165
      %v269 = vunpack.c.h.b16 %v165
      %v270 = vunpack.c.l.b16 %v166
      %v271 = vunpack.c.h.b16 %v166
      %v272 = vunpack.c.l.b16 %v167
      %v273 = vunpack.c.h.b16 %v167
      %v274 = vunpack.c.l.b16 %v168
      %v275 = vunpack.c.h.b16 %v168
      %v276 = vunpack.c.l.b16 %v169
      %v277 = vunpack.c.h.b16 %v169
      %v278 = vunpack.c.l.b16 %v170
      %v279 = vunpack.c.h.b16 %v170
      %v280 = vunpack.c.l.b16 %v171
      %v281 = vunpack.c.h.b16 %v171
      %v282 = vunpack.c.l.b16 %v172
      %v283 = vunpack.c.h.b16 %v172
      %v284 = vunpack.c.l.b16 %v173
      %v285 = vunpack.c.h.b16 %v173
      %v286 = vunpack.c.l.b16 %v174
      %v287 = vunpack.c.h.b16 %v174
      %v288 = vunpack.c.l.b16 %v175
      %v289 = vunpack.c.h.b16 %v175
      %v290 = vunpack.c.l.b16 %v176
      %v291 = vunpack.c.h.b16 %v176
      %v292 = vpack.c.b16 %v230, %v228
      %v293 = vpack.c.b16 %v231, %v229
      %v294 = vpack.c.b16 %v234, %v232
      %v295 = vpack.c.b16 %v235, %v233
      %v296 = vpack.c.b16 %v238, %v236
      %v297 = vpack.c.b16 %v239, %v237
      %v298 = vpack.c.b16 %v242, %v240
      %v299 = vpack.c.b16 %v243, %v241
      %v300 = vpack.c.b16 %v246, %v244
      %v301 = vpack.c.b16 %v247, %v245
      %v302 = vpack.c.b16 %v250, %v248
      %v303 = vpack.c.b16 %v251, %v249
      %v304 = vpack.c.b16 %v254, %v252
      %v305 = vpack.c.b16 %v255, %v253
      %v306 = vpack.c.b16 %v258, %v256
      %v307 = vpack.c.b16 %v259, %v257
      %v308 = vpack.c.b16 %v262, %v260
      %v309 = vpack.c.b16 %v263, %v261
      %v310 = vpack.c.b16 %v266, %v264
      %v311 = vpack.c.b16 %v267, %v265
      %v312 = vpack.c.b16 %v270, %v268
      %v313 = vpack.c.b16 %v271, %v269
      %v314 = vpack.c.b16 %v274, %v272
      %v315 = vpack.c.b16 %v275, %v273
      %v316 = vpack.c.b16 %v278, %v276
      %v317 = vpack.c.b16 %v279, %v277
      %v318 = vpack.c.b16 %v282, %v280
      %v319 = vpack.c.b16 %v283, %v281
      %v320 = vpack.c.b16 %v286, %v284
      %v321 = vpack.c.b16 %v287, %v285
      %v322 = vpack.c.b16 %v290, %v288
      %v323 = vpack.c.b16 %v291, %v289
      %v359 = vunpack.c.l.b16 %v177
      %v360 = vunpack.c.l.b16 %v178
      %v361 = vunpack.c.l.b16 %v179
      %v362 = vunpack.c.l.b16 %v180
      %v363 = vunpack.c.l.b16 %v181
      %v364 = vunpack.c.l.b16 %v182
      %v365 = vunpack.c.l.b16 %v183
      %v366 = vunpack.c.l.b16 %v184
      %v367 = vunpack.c.l.b16 %v185
      %v368 = vunpack.c.l.b16 %v186
      %v369 = vunpack.c.l.b16 %v187
      %v370 = vunpack.c.l.b16 %v188
      %v371 = vunpack.c.l.b16 %v189
      %v372 = vunpack.c.l.b16 %v190
      %v373 = vunpack.c.l.b16 %v191
      %v374 = vunpack.c.l.b16 %v192
      %v375 = vunpack.c.l.b16 %v193
      %v376 = vunpack.c.l.b16 %v194
      %v377 = vunpack.c.l.b16 %v195
      %v378 = vpack.c.b16 %v360, %v359
      %v379 = vpack.c.b16 %v362, %v361
      %v380 = vpack.c.b16 %v364, %v363
      %v381 = vpack.c.b16 %v366, %v365
      %v382 = vpack.c.b16 %v368, %v367
      %v383 = vpack.c.b16 %v370, %v369
      %v384 = vpack.c.b16 %v372, %v371
      %v385 = vpack.c.b16 %v374, %v373
      %v386 = vpack.c.b16 %v376, %v375
      %v387 = vpack.c.b16 %v377, %v377
      %vm397 = vcmask 154624
      %v399 = vsel %vm397, %v293, 0
      %v402 = vsel %vm397, %v295, 0
      %v405 = vsel %vm397, %v297, 0
      %v408 = vsel %vm397, %v299, 0
      %v411 = vsel %vm397, %v301, 0
      %v414 = vsel %vm397, %v303, 0
      %v417 = vsel %vm397, %v305, 0
      %v420 = vsel %vm397, %v307, 0
      %v423 = vsel %vm397, %v309, 0
      %v426 = vsel %vm397, %v311, 0
      %v429 = vsel %vm397, %v313, 0
      %v432 = vsel %vm397, %v315, 0
      %v435 = vsel %vm397, %v317, 0
      %v438 = vsel %vm397, %v319, 0
      %v441 = vsel %vm397, %v321, 0
      %v444 = vsel %vm397, %v323, 0
      %vm446 = vcmask 1040384
      %vm447 = vcmask 1041408
      %v448 = vsel %vm446, 4294967295, 65535
      %v449 = vsel %vm447, %v448, 0
      %v451 = vand.u32 %v387, %v449
      %453 = vmatprep.subr.bf16.mxu0 0
      %454 = vmatpush1.bf16.msra.mxu0 %v378
      %455 = vmatprep.subr.bf16.mxu0 0
      %456 = vmatpush1.bf16.msra.mxu0 %v379
      %457 = vmatprep.subr.bf16.mxu0 0
      %458 = vmatpush1.bf16.msra.mxu0 %v380
      %459 = vmatprep.subr.bf16.mxu0 0
      %460 = vmatpush1.bf16.msra.mxu0 %v381
      %461 = vmatprep.subr.bf16.mxu0 0
      %462 = vmatpush1.bf16.msra.mxu0 %v382
      %463 = vmatprep.subr.bf16.mxu0 0
      %464 = vmatpush1.bf16.msra.mxu0 %v383
      %465 = vmatprep.subr.bf16.mxu0 0
      %466 = vmatpush1.bf16.msra.mxu0 %v384
      %467 = vmatprep.subr.bf16.mxu0 0
      %468 = vmatpush1.bf16.msra.mxu0 %v385
      %469 = vmatprep.subr.bf16.mxu0 0
      %470 = vmatpush1.bf16.msra.mxu0 %v386
      %471 = vmatprep.subr.bf16.mxu0 0
      %472 = vmatpush1.bf16.msra.mxu0 %v451
      %473 = vmatprep.subr.bf16.mxu0 0
      %474 = vmatpush1.bf16.msra.mxu0 0
      %475 = vmatprep.subr.bf16.mxu0 0
      %476 = vmatpush1.bf16.msra.mxu0 0
      %477 = vmatprep.subr.bf16.mxu0 0
      %478 = vmatpush1.bf16.msra.mxu0 0
      %479 = vmatprep.subr.bf16.mxu0 0
      %480 = vmatpush1.bf16.msra.mxu0 0
      %481 = vmatprep.subr.bf16.mxu0 0
      %482 = vmatpush1.bf16.msra.mxu0 0
      %483 = vmatprep.subr.bf16.mxu0 0
      %484 = vmatpush1.bf16.msra.mxu0 0
      %485 = vmatprep.mubr.bf16.mxu0 %v399
      %486 = vmatmul.mubr.bf16.gmra.mrb[0].mxu0 %v292
      %v487 = vpop.f32.mrb[0].mxu0
      %v488 = vadd.f32 0.0, %v487
      %v489 = vpop.f32.mrb[0].mxu0
      %v490 = vpop.f32.mrb[0].mxu0
      %v491 = vadd.f32 0.0, %v490
      %v492 = vpop.f32.mrb[0].mxu0
      %493 = vmatprep.mubr.bf16.mxu0 %v402
      %494 = vmatmul.mubr.bf16.gmra.mrb[0].mxu0 %v294
      %v495 = vpop.f32.mrb[0].mxu0
      %v496 = vadd.f32 0.0, %v495
      %v497 = vpop.f32.mrb[0].mxu0
      %v498 = vpop.f32.mrb[0].mxu0
      %v499 = vadd.f32 0.0, %v498
      %v500 = vpop.f32.mrb[0].mxu0
      %501 = vmatprep.mubr.bf16.mxu0 %v405
      %502 = vmatmul.mubr.bf16.gmra.mrb[0].mxu0 %v296
      %v503 = vpop.f32.mrb[0].mxu0
      %v504 = vadd.f32 0.0, %v503
      %v505 = vpop.f32.mrb[0].mxu0
      %v506 = vpop.f32.mrb[0].mxu0
      %v507 = vadd.f32 0.0, %v506
      %v508 = vpop.f32.mrb[0].mxu0
      %509 = vmatprep.mubr.bf16.mxu0 %v408
      %510 = vmatmul.mubr.bf16.gmra.mrb[0].mxu0 %v298
      %v511 = vpop.f32.mrb[0].mxu0
      %v512 = vadd.f32 0.0, %v511
      %v513 = vpop.f32.mrb[0].mxu0
      %v514 = vpop.f32.mrb[0].mxu0
      %v515 = vadd.f32 0.0, %v514
      %v516 = vpop.f32.mrb[0].mxu0
      %517 = vmatprep.mubr.bf16.mxu0 %v411
      %518 = vmatmul.mubr.bf16.gmra.mrb[0].mxu0 %v300
      %v519 = vpop.f32.mrb[0].mxu0
      %v520 = vadd.f32 0.0, %v519
      %v521 = vpop.f32.mrb[0].mxu0
      %v522 = vpop.f32.mrb[0].mxu0
      %v523 = vadd.f32 0.0, %v522
      %v524 = vpop.f32.mrb[0].mxu0
      %525 = vmatprep.mubr.bf16.mxu0 %v414
      %526 = vmatmul.mubr.bf16.gmra.mrb[0].mxu0 %v302
      %v527 = vpop.f32.mrb[0].mxu0
      %v528 = vadd.f32 0.0, %v527
      %v529 = vpop.f32.mrb[0].mxu0
      %v530 = vpop.f32.mrb[0].mxu0
      %v531 = vadd.f32 0.0, %v530
      %v532 = vpop.f32.mrb[0].mxu0
      %533 = vmatprep.mubr.bf16.mxu0 %v417
      %534 = vmatmul.mubr.bf16.gmra.mrb[0].mxu0 %v304
      %v535 = vpop.f32.mrb[0].mxu0
      %v536 = vadd.f32 0.0, %v535
      %v537 = vpop.f32.mrb[0].mxu0
      %v538 = vpop.f32.mrb[0].mxu0
      %v539 = vadd.f32 0.0, %v538
      %v540 = vpop.f32.mrb[0].mxu0
      %541 = vmatprep.mubr.bf16.mxu0 %v420
      %542 = vmatmul.mubr.bf16.gmra.mrb[0].mxu0 %v306
      %v543 = vpop.f32.mrb[0].mxu0
      %v544 = vadd.f32 0.0, %v543
      %v545 = vpop.f32.mrb[0].mxu0
      %v546 = vpop.f32.mrb[0].mxu0
      %v547 = vadd.f32 0.0, %v546
      %v548 = vpop.f32.mrb[0].mxu0
      %549 = vmatprep.mubr.bf16.mxu0 %v423
      %550 = vmatmul.mubr.bf16.gmra.mrb[0].mxu0 %v308
      %v551 = vpop.f32.mrb[0].mxu0
      %v552 = vadd.f32 0.0, %v551
      %v553 = vpop.f32.mrb[0].mxu0
      %v554 = vpop.f32.mrb[0].mxu0
      %v555 = vadd.f32 0.0, %v554
      %v556 = vpop.f32.mrb[0].mxu0
      %557 = vmatprep.mubr.bf16.mxu0 %v426
      %558 = vmatmul.mubr.bf16.gmra.mrb[0].mxu0 %v310
      %v559 = vpop.f32.mrb[0].mxu0
      %v560 = vadd.f32 0.0, %v559
      %v561 = vpop.f32.mrb[0].mxu0
      %v562 = vpop.f32.mrb[0].mxu0
      %v563 = vadd.f32 0.0, %v562
      %v564 = vpop.f32.mrb[0].mxu0
      %565 = vmatprep.mubr.bf16.mxu0 %v429
      %566 = vmatmul.mubr.bf16.gmra.mrb[0].mxu0 %v312
      %v567 = vpop.f32.mrb[0].mxu0
      %v568 = vadd.f32 0.0, %v567
      %v569 = vpop.f32.mrb[0].mxu0
      %v570 = vpop.f32.mrb[0].mxu0
      %v571 = vadd.f32 0.0, %v570
      %v572 = vpop.f32.mrb[0].mxu0
      %573 = vmatprep.mubr.bf16.mxu0 %v432
      %574 = vmatmul.mubr.bf16.gmra.mrb[0].mxu0 %v314
      %v575 = vpop.f32.mrb[0].mxu0
      %v576 = vadd.f32 0.0, %v575
      %v577 = vpop.f32.mrb[0].mxu0
      %v578 = vpop.f32.mrb[0].mxu0
      %v579 = vadd.f32 0.0, %v578
      %v580 = vpop.f32.mrb[0].mxu0
      %581 = vmatprep.mubr.bf16.mxu0 %v435
      %582 = vmatmul.mubr.bf16.gmra.mrb[0].mxu0 %v316
      %v583 = vpop.f32.mrb[0].mxu0
      %v584 = vadd.f32 0.0, %v583
      %v585 = vpop.f32.mrb[0].mxu0
      %v586 = vpop.f32.mrb[0].mxu0
      %v587 = vadd.f32 0.0, %v586
      %v588 = vpop.f32.mrb[0].mxu0
      %589 = vmatprep.mubr.bf16.mxu0 %v438
      %590 = vmatmul.mubr.bf16.gmra.mrb[0].mxu0 %v318
      %v591 = vpop.f32.mrb[0].mxu0
      %v592 = vadd.f32 0.0, %v591
      %v593 = vpop.f32.mrb[0].mxu0
      %v594 = vpop.f32.mrb[0].mxu0
      %v595 = vadd.f32 0.0, %v594
      %v596 = vpop.f32.mrb[0].mxu0
      %597 = vmatprep.mubr.bf16.mxu0 %v441
      %598 = vmatmul.mubr.bf16.gmra.mrb[0].mxu0 %v320
      %v599 = vpop.f32.mrb[0].mxu0
      %v600 = vadd.f32 0.0, %v599
      %v601 = vpop.f32.mrb[0].mxu0
      %v602 = vpop.f32.mrb[0].mxu0
      %v603 = vadd.f32 0.0, %v602
      %v604 = vpop.f32.mrb[0].mxu0
      %605 = vmatprep.mubr.bf16.mxu0 %v444
      %606 = vmatmul.mubr.bf16.gmra.mrb[0].mxu0 %v322
      %v607 = vpop.f32.mrb[0].mxu0
      %v608 = vadd.f32 0.0, %v607
      %v609 = vpop.f32.mrb[0].mxu0
      %v610 = vpop.f32.mrb[0].mxu0
      %v611 = vadd.f32 0.0, %v610
      %v612 = vpop.f32.mrb[0].mxu0
      %613 = vdwg.mxu0
      %vm614 = vcmask 261120
      %v615 = vsel %vm614, %v488, 0.0
      %v616 = vsel %vm614, %v491, 0.0
      %v617 = vadd.f32 %v615, %v616
      %v618 = vsel %vm614, %v496, 0.0
      %v619 = vadd.f32 %v617, %v618
      %v620 = vsel %vm614, %v499, 0.0
      %v621 = vadd.f32 %v619, %v620
      %v622 = vsel %vm614, %v504, 0.0
      %v623 = vadd.f32 %v621, %v622
      %v624 = vsel %vm614, %v507, 0.0
      %v625 = vadd.f32 %v623, %v624
      %v626 = vsel %vm614, %v512, 0.0
      %v627 = vadd.f32 %v625, %v626
      %v628 = vsel %vm614, %v515, 0.0
      %v629 = vadd.f32 %v627, %v628
      %v630 = vsel %vm614, %v520, 0.0
      %v631 = vadd.f32 %v629, %v630
      %v632 = vsel %vm614, %v523, 0.0
      %v633 = vadd.f32 %v631, %v632
      %v634 = vsel %vm614, %v528, 0.0
      %v635 = vadd.f32 %v633, %v634
      %v636 = vsel %vm614, %v531, 0.0
      %v637 = vadd.f32 %v635, %v636
      %v638 = vsel %vm614, %v536, 0.0
      %v639 = vadd.f32 %v637, %v638
      %v640 = vsel %vm614, %v539, 0.0
      %v641 = vadd.f32 %v639, %v640
      %v642 = vsel %vm614, %v544, 0.0
      %v643 = vadd.f32 %v641, %v642
      %v644 = vsel %vm614, %v547, 0.0
      %v645 = vadd.f32 %v643, %v644
      %v646 = vsel %vm614, %v552, 0.0
      %v647 = vadd.f32 %v645, %v646
      %v648 = vsel %vm614, %v555, 0.0
      %v649 = vadd.f32 %v647, %v648
      %v650 = vsel %vm614, %v560, 0.0
      %v651 = vadd.f32 %v649, %v650
      %v652 = vsel %vm614, %v563, 0.0
      %v653 = vadd.f32 %v651, %v652
      %v654 = vsel %vm614, %v568, 0.0
      %v655 = vadd.f32 %v653, %v654
      %v656 = vsel %vm614, %v571, 0.0
      %v657 = vadd.f32 %v655, %v656
      %v658 = vsel %vm614, %v576, 0.0
      %v659 = vadd.f32 %v657, %v658
      %v660 = vsel %vm614, %v579, 0.0
      %v661 = vadd.f32 %v659, %v660
      %v662 = vsel %vm614, %v584, 0.0
      %v663 = vadd.f32 %v661, %v662
      %v664 = vsel %vm614, %v587, 0.0
      %v665 = vadd.f32 %v663, %v664
      %v666 = vsel %vm614, %v592, 0.0
      %v667 = vadd.f32 %v665, %v666
      %v668 = vsel %vm614, %v595, 0.0
      %v669 = vadd.f32 %v667, %v668
      %v670 = vsel %vm614, %v600, 0.0
      %v671 = vadd.f32 %v669, %v670
      %v672 = vsel %vm614, %v603, 0.0
      %v673 = vadd.f32 %v671, %v672
      %v674 = vsel %vm614, %v608, 0.0
      %v675 = vadd.f32 %v673, %v674
      %v676 = vsel %vm614, %v611, 0.0
      %v677 = vadd.f32 %v675, %v676
      %v678 = vrot.slane %v677, 4
      %v679 = vadd.f32 %v677, %v678
      %v680 = vrot.slane %v679, 2
      %v681 = vadd.f32 %v679, %v680
      %v682 = vrot.slane %v681, 1
      %v683 = vadd.f32 %v681, %v682
      %v684 = vmul.f32 %v488, %v488
      %v685 = vmul.f32 %v491, %v491
      %v686 = vmul.f32 %v496, %v496
      %v687 = vmul.f32 %v499, %v499
      %v688 = vmul.f32 %v504, %v504
      %v689 = vmul.f32 %v507, %v507
      %v690 = vmul.f32 %v512, %v512
      %v691 = vmul.f32 %v515, %v515
      %v692 = vmul.f32 %v520, %v520
      %v693 = vmul.f32 %v523, %v523
      %v694 = vmul.f32 %v528, %v528
      %v695 = vmul.f32 %v531, %v531
      %v696 = vmul.f32 %v536, %v536
      %v697 = vmul.f32 %v539, %v539
      %v698 = vmul.f32 %v544, %v544
      %v699 = vmul.f32 %v547, %v547
      %v700 = vmul.f32 %v552, %v552
      %v701 = vmul.f32 %v555, %v555
      %v702 = vmul.f32 %v560, %v560
      %v703 = vmul.f32 %v563, %v563
      %v704 = vmul.f32 %v568, %v568
      %v705 = vmul.f32 %v571, %v571
      %v706 = vmul.f32 %v576, %v576
      %v707 = vmul.f32 %v579, %v579
      %v708 = vmul.f32 %v584, %v584
      %v709 = vmul.f32 %v587, %v587
      %v710 = vmul.f32 %v592, %v592
      %v711 = vmul.f32 %v595, %v595
      %v712 = vmul.f32 %v600, %v600
      %v713 = vmul.f32 %v603, %v603
      %v714 = vmul.f32 %v608, %v608
      %v715 = vmul.f32 %v611, %v611
      %v716 = vsel %vm614, %v684, 0.0
      %v717 = vsel %vm614, %v685, 0.0
      %v718 = vadd.f32 %v716, %v717
      %v719 = vsel %vm614, %v686, 0.0
      %v720 = vadd.f32 %v718, %v719
      %v721 = vsel %vm614, %v687, 0.0
      %v722 = vadd.f32 %v720, %v721
      %v723 = vsel %vm614, %v688, 0.0
      %v724 = vadd.f32 %v722, %v723
      %v725 = vsel %vm614, %v689, 0.0
      %v726 = vadd.f32 %v724, %v725
      %v727 = vsel %vm614, %v690, 0.0
      %v728 = vadd.f32 %v726, %v727
      %v729 = vsel %vm614, %v691, 0.0
      %v730 = vadd.f32 %v728, %v729
      %v731 = vsel %vm614, %v692, 0.0
      %v732 = vadd.f32 %v730, %v731
      %v733 = vsel %vm614, %v693, 0.0
      %v734 = vadd.f32 %v732, %v733
      %v735 = vsel %vm614, %v694, 0.0
      %v736 = vadd.f32 %v734, %v735
      %v737 = vsel %vm614, %v695, 0.0
      %v738 = vadd.f32 %v736, %v737
      %v739 = vsel %vm614, %v696, 0.0
      %v740 = vadd.f32 %v738, %v739
      %v741 = vsel %vm614, %v697, 0.0
      %v742 = vadd.f32 %v740, %v741
      %v743 = vsel %vm614, %v698, 0.0
      %v744 = vadd.f32 %v742, %v743
      %v745 = vsel %vm614, %v699, 0.0
      %v746 = vadd.f32 %v744, %v745
      %v747 = vsel %vm614, %v700, 0.0
      %v748 = vadd.f32 %v746, %v747
      %v749 = vsel %vm614, %v701, 0.0
      %v750 = vadd.f32 %v748, %v749
      %v751 = vsel %vm614, %v702, 0.0
      %v752 = vadd.f32 %v750, %v751
      %v753 = vsel %vm614, %v703, 0.0
      %v754 = vadd.f32 %v752, %v753
      %v755 = vsel %vm614, %v704, 0.0
      %v756 = vadd.f32 %v754, %v755
      %v757 = vsel %vm614, %v705, 0.0
      %v758 = vadd.f32 %v756, %v757
      %v759 = vsel %vm614, %v706, 0.0
      %v760 = vadd.f32 %v758, %v759
      %v761 = vsel %vm614, %v707, 0.0
      %v762 = vadd.f32 %v760, %v761
      %v763 = vsel %vm614, %v708, 0.0
      %v764 = vadd.f32 %v762, %v763
      %v765 = vsel %vm614, %v709, 0.0
      %v766 = vadd.f32 %v764, %v765
      %v767 = vsel %vm614, %v710, 0.0
      %v768 = vadd.f32 %v766, %v767
      %v769 = vsel %vm614, %v711, 0.0
      %v770 = vadd.f32 %v768, %v769
      %v771 = vsel %vm614, %v712, 0.0
      %v772 = vadd.f32 %v770, %v771
      %v773 = vsel %vm614, %v713, 0.0
      %v774 = vadd.f32 %v772, %v773
      %v775 = vsel %vm614, %v714, 0.0
      %v776 = vadd.f32 %v774, %v775
      %v777 = vsel %vm614, %v715, 0.0
      %v778 = vadd.f32 %v776, %v777
      %v779 = vrot.slane %v778, 4
      %v780 = vadd.f32 %v778, %v779
      %v781 = vrot.slane %v780, 2
      %v782 = vadd.f32 %v780, %v781
      %v783 = vrot.slane %v782, 1
      %v784 = vadd.f32 %v782, %v783
      %v785 = vmul.f32 %v683, 0.00390625
      %v786 = vmul.f32 %v784, 0.00390625
      %v787 = vmul.f32 %v785, %v785
      %v788 = vsub.f32 %v786, %v787
      %v789 = vmax.f32 %v788, 0.0
      %v790 = vsub.f32 %v488, %v785
      %v791 = vsub.f32 %v491, %v785
      %v792 = vsub.f32 %v496, %v785
      %v793 = vsub.f32 %v499, %v785
      %v794 = vsub.f32 %v504, %v785
      %v795 = vsub.f32 %v507, %v785
      %v796 = vsub.f32 %v512, %v785
      %v797 = vsub.f32 %v515, %v785
      %v798 = vsub.f32 %v520, %v785
      %v799 = vsub.f32 %v523, %v785
      %v800 = vsub.f32 %v528, %v785
      %v801 = vsub.f32 %v531, %v785
      %v802 = vsub.f32 %v536, %v785
      %v803 = vsub.f32 %v539, %v785
      %v804 = vsub.f32 %v544, %v785
      %v805 = vsub.f32 %v547, %v785
      %v806 = vsub.f32 %v552, %v785
      %v807 = vsub.f32 %v555, %v785
      %v808 = vsub.f32 %v560, %v785
      %v809 = vsub.f32 %v563, %v785
      %v810 = vsub.f32 %v568, %v785
      %v811 = vsub.f32 %v571, %v785
      %v812 = vsub.f32 %v576, %v785
      %v813 = vsub.f32 %v579, %v785
      %v814 = vsub.f32 %v584, %v785
      %v815 = vsub.f32 %v587, %v785
      %v816 = vsub.f32 %v592, %v785
      %v817 = vsub.f32 %v595, %v785
      %v818 = vsub.f32 %v600, %v785
      %v819 = vsub.f32 %v603, %v785
      %v820 = vsub.f32 %v608, %v785
      %v821 = vsub.f32 %v611, %v785
      %v822 = vadd.f32 %v789, 1e-05
      %v823 = vrsqrt.pop %v822
      %v824 = vmul.f32 %v790, %v823
      %v825 = vmul.f32 %v791, %v823
      %v826 = vmul.f32 %v792, %v823
      %v827 = vmul.f32 %v793, %v823
      %v828 = vmul.f32 %v794, %v823
      %v829 = vmul.f32 %v795, %v823
      %v830 = vmul.f32 %v796, %v823
      %v831 = vmul.f32 %v797, %v823
      %v832 = vmul.f32 %v798, %v823
      %v833 = vmul.f32 %v799, %v823
      %v834 = vmul.f32 %v800, %v823
      %v835 = vmul.f32 %v801, %v823
      %v836 = vmul.f32 %v802, %v823
      %v837 = vmul.f32 %v803, %v823
      %v838 = vmul.f32 %v804, %v823
      %v839 = vmul.f32 %v805, %v823
      %v840 = vmul.f32 %v806, %v823
      %v841 = vmul.f32 %v807, %v823
      %v842 = vmul.f32 %v808, %v823
      %v843 = vmul.f32 %v809, %v823
      %v844 = vmul.f32 %v810, %v823
      %v845 = vmul.f32 %v811, %v823
      %v846 = vmul.f32 %v812, %v823
      %v847 = vmul.f32 %v813, %v823
      %v848 = vmul.f32 %v814, %v823
      %v849 = vmul.f32 %v815, %v823
      %v850 = vmul.f32 %v816, %v823
      %v851 = vmul.f32 %v817, %v823
      %v852 = vmul.f32 %v818, %v823
      %v853 = vmul.f32 %v819, %v823
      %v854 = vmul.f32 %v820, %v823
      %v855 = vmul.f32 %v821, %v823
      %v856 = vmax.f32 %v824, 0.0
      %v857 = vmax.f32 %v825, 0.0
      %v858 = vmax.f32 %v826, 0.0
      %v859 = vmax.f32 %v827, 0.0
      %v860 = vmax.f32 %v828, 0.0
      %v861 = vmax.f32 %v829, 0.0
      %v862 = vmax.f32 %v830, 0.0
      %v863 = vmax.f32 %v831, 0.0
      %v864 = vmax.f32 %v832, 0.0
      %v865 = vmax.f32 %v833, 0.0
      %v866 = vmax.f32 %v834, 0.0
      %v867 = vmax.f32 %v835, 0.0
      %v868 = vmax.f32 %v836, 0.0
      %v869 = vmax.f32 %v837, 0.0
      %v870 = vmax.f32 %v838, 0.0
      %v871 = vmax.f32 %v839, 0.0
      %v872 = vmax.f32 %v840, 0.0
      %v873 = vmax.f32 %v841, 0.0
      %v874 = vmax.f32 %v842, 0.0
      %v875 = vmax.f32 %v843, 0.0
      %v876 = vmax.f32 %v844, 0.0
      %v877 = vmax.f32 %v845, 0.0
      %v878 = vmax.f32 %v846, 0.0
      %v879 = vmax.f32 %v847, 0.0
      %v880 = vmax.f32 %v848, 0.0
      %v881 = vmax.f32 %v849, 0.0
      %v882 = vmax.f32 %v850, 0.0
      %v883 = vmax.f32 %v851, 0.0
      %v884 = vmax.f32 %v852, 0.0
      %v885 = vmax.f32 %v853, 0.0
      %v886 = vmax.f32 %v854, 0.0
      %v887 = vmax.f32 %v855, 0.0
      %v888 = vpack.c.bf16 %v857, %v856
      %v889 = vpack.c.bf16 %v859, %v858
      %v890 = vpack.c.bf16 %v861, %v860
      %v891 = vpack.c.bf16 %v863, %v862
      %v892 = vpack.c.bf16 %v865, %v864
      %v893 = vpack.c.bf16 %v867, %v866
      %v894 = vpack.c.bf16 %v869, %v868
      %v895 = vpack.c.bf16 %v871, %v870
      %v896 = vpack.c.bf16 %v873, %v872
      %v897 = vpack.c.bf16 %v875, %v874
      %v898 = vpack.c.bf16 %v877, %v876
      %v899 = vpack.c.bf16 %v879, %v878
      %v900 = vpack.c.bf16 %v881, %v880
      %v901 = vpack.c.bf16 %v883, %v882
      %v902 = vpack.c.bf16 %v885, %v884
      %v903 = vpack.c.bf16 %v887, %v886
      %v920 = vunpack.c.l.b16 %v888
      %v921 = vunpack.c.h.b16 %v888
      %v922 = vunpack.c.l.b16 %v889
      %v923 = vunpack.c.h.b16 %v889
      %v924 = vunpack.c.l.b16 %v890
      %v925 = vunpack.c.h.b16 %v890
      %v926 = vunpack.c.l.b16 %v891
      %v927 = vunpack.c.h.b16 %v891
      %v928 = vunpack.c.l.b16 %v892
      %v929 = vunpack.c.h.b16 %v892
      %v930 = vunpack.c.l.b16 %v893
      %v931 = vunpack.c.h.b16 %v893
      %v932 = vunpack.c.l.b16 %v894
      %v933 = vunpack.c.h.b16 %v894
      %v934 = vunpack.c.l.b16 %v895
      %v935 = vunpack.c.h.b16 %v895
      %v936 = vunpack.c.l.b16 %v896
      %v937 = vunpack.c.h.b16 %v896
      %v938 = vunpack.c.l.b16 %v897
      %v939 = vunpack.c.h.b16 %v897
      %v940 = vunpack.c.l.b16 %v898
      %v941 = vunpack.c.h.b16 %v898
      %v942 = vunpack.c.l.b16 %v899
      %v943 = vunpack.c.h.b16 %v899
      %v944 = vunpack.c.l.b16 %v900
      %v945 = vunpack.c.h.b16 %v900
      %v946 = vunpack.c.l.b16 %v901
      %v947 = vunpack.c.h.b16 %v901
      %v948 = vunpack.c.l.b16 %v902
      %v949 = vunpack.c.h.b16 %v902
      %v950 = vunpack.c.l.b16 %v903
      %v951 = vunpack.c.h.b16 %v903
      %v952 = vpack.c.b16 %v920, %v920
      %v953 = vpack.c.b16 %v921, %v921
      %v954 = vpack.c.b16 %v922, %v922
      %v955 = vpack.c.b16 %v923, %v923
      %v956 = vpack.c.b16 %v924, %v924
      %v957 = vpack.c.b16 %v925, %v925
      %v958 = vpack.c.b16 %v926, %v926
      %v959 = vpack.c.b16 %v927, %v927
      %v960 = vpack.c.b16 %v928, %v928
      %v961 = vpack.c.b16 %v929, %v929
      %v962 = vpack.c.b16 %v930, %v930
      %v963 = vpack.c.b16 %v931, %v931
      %v964 = vpack.c.b16 %v932, %v932
      %v965 = vpack.c.b16 %v933, %v933
      %v966 = vpack.c.b16 %v934, %v934
      %v967 = vpack.c.b16 %v935, %v935
      %v968 = vpack.c.b16 %v936, %v936
      %v969 = vpack.c.b16 %v937, %v937
      %v970 = vpack.c.b16 %v938, %v938
      %v971 = vpack.c.b16 %v939, %v939
      %v972 = vpack.c.b16 %v940, %v940
      %v973 = vpack.c.b16 %v941, %v941
      %v974 = vpack.c.b16 %v942, %v942
      %v975 = vpack.c.b16 %v943, %v943
      %v976 = vpack.c.b16 %v944, %v944
      %v977 = vpack.c.b16 %v945, %v945
      %v978 = vpack.c.b16 %v946, %v946
      %v979 = vpack.c.b16 %v947, %v947
      %v980 = vpack.c.b16 %v948, %v948
      %v981 = vpack.c.b16 %v949, %v949
      %v982 = vpack.c.b16 %v950, %v950
      %v983 = vpack.c.b16 %v951, %v951
      %vm1016 = vcmask 257024
      %1017 = vst.msk [vmem:[%s143] sm:$0xf] %vm1016, %v952
      %1018 = vst.msk [vmem:[%s143 + $0x4] sm:$0xf] %vm1016, %v953
      %1019 = vst.msk [vmem:[%s143 + $0x8] sm:$0xf] %vm1016, %v954
      %1020 = vst.msk [vmem:[%s143 + $0xc] sm:$0xf] %vm1016, %v955
      %1021 = vst.msk [vmem:[%s143 + $0x10] sm:$0xf] %vm1016, %v956
      %1022 = vst.msk [vmem:[%s143 + $0x14] sm:$0xf] %vm1016, %v957
      %1023 = vst.msk [vmem:[%s143 + $0x18] sm:$0xf] %vm1016, %v958
      %1024 = vst.msk [vmem:[%s143 + $0x1c] sm:$0xf] %vm1016, %v959
      %1025 = vst.msk [vmem:[%s143 + $0x20] sm:$0xf] %vm1016, %v960
      %1026 = vst.msk [vmem:[%s143 + $0x24] sm:$0xf] %vm1016, %v961
      %1027 = vst.msk [vmem:[%s143 + $0x28] sm:$0xf] %vm1016, %v962
      %1028 = vst.msk [vmem:[%s143 + $0x2c] sm:$0xf] %vm1016, %v963
      %1029 = vst.msk [vmem:[%s143 + $0x30] sm:$0xf] %vm1016, %v964
      %1030 = vst.msk [vmem:[%s143 + $0x34] sm:$0xf] %vm1016, %v965
      %1031 = vst.msk [vmem:[%s143 + $0x38] sm:$0xf] %vm1016, %v966
      %1032 = vst.msk [vmem:[%s143 + $0x3c] sm:$0xf] %vm1016, %v967
      %1033 = vst.msk [vmem:[%s143 + $0x40] sm:$0xf] %vm1016, %v968
      %1034 = vst.msk [vmem:[%s143 + $0x44] sm:$0xf] %vm1016, %v969
      %1035 = vst.msk [vmem:[%s143 + $0x48] sm:$0xf] %vm1016, %v970
      %1036 = vst.msk [vmem:[%s143 + $0x4c] sm:$0xf] %vm1016, %v971
      %1037 = vst.msk [vmem:[%s143 + $0x50] sm:$0xf] %vm1016, %v972
      %1038 = vst.msk [vmem:[%s143 + $0x54] sm:$0xf] %vm1016, %v973
      %1039 = vst.msk [vmem:[%s143 + $0x58] sm:$0xf] %vm1016, %v974
      %1040 = vst.msk [vmem:[%s143 + $0x5c] sm:$0xf] %vm1016, %v975
      %1041 = vst.msk [vmem:[%s143 + $0x60] sm:$0xf] %vm1016, %v976
      %1042 = vst.msk [vmem:[%s143 + $0x64] sm:$0xf] %vm1016, %v977
      %1043 = vst.msk [vmem:[%s143 + $0x68] sm:$0xf] %vm1016, %v978
      %1044 = vst.msk [vmem:[%s143 + $0x6c] sm:$0xf] %vm1016, %v979
      %1045 = vst.msk [vmem:[%s143 + $0x70] sm:$0xf] %vm1016, %v980
      %1046 = vst.msk [vmem:[%s143 + $0x74] sm:$0xf] %vm1016, %v981
      %1047 = vst.msk [vmem:[%s143 + $0x78] sm:$0xf] %vm1016, %v982
      %1048 = vst.msk [vmem:[%s143 + $0x7c] sm:$0xf] %vm1016, %v983
      %p1049 = scmp.lt.s32.totalorder %s13, 1
      %s1050 = scalar_select %p1049, %s13, 1
      %s1051 = smul.addr %s1050, 32
      %s1052 = smul.addr %s1051, 4
      %s1053 = scalar_lea.vmem %s2, %s1052
      // Predicated region
      $region29: #{generator_forward.23} parent=27 // pred_check
        %p1054 = pneg %p78
      $region30: #{generator_forward.23} parent=27 // pred_check_branch
        %1056 = sbr.rel (%p1054) target = $region32
      $region31: #{generator_forward.23} parent=27 // pred_region
        _
      $region32: #{generator_forward.23} parent=27 // pred_fallthru
        _
    $region28: #{generator_forward.23} parent=5 // pred_fallthru
      _
    %p1057 = scmp.le.s32.totalorder 2, %s8
    // Predicated region
    $region33: #{generator_forward.23} parent=5 // pred_check
      %p1058 = pneg %p1057
    $region34: #{generator_forward.23} parent=5 // pred_check_branch
      %1060 = sbr.rel (%p1058) target = $region36
    $region35: #{generator_forward.23} parent=5 // pred_region
      %s1061 = ssub.s32 %s8, 2
      // Predicated region
      $region37: #{generator_forward.23} parent=35 // pred_check
        %p1062 = pneg %p84
      $region38: #{generator_forward.23} parent=35 // pred_check_branch
        %1064 = sbr.rel (%p1062) target = $region40
      $region39: #{generator_forward.23} parent=35 // pred_region
        %p1065 = scmp.lt.s32.totalorder %s14, 1
        %s1066 = scalar_select %p1065, %s14, 1
        %s1067 = smul.addr %s1066, 32
        %s1068 = smul.addr %s1067, 4
        %s1069 = scalar_lea.vmem %s2, %s1068
      $region40: #{generator_forward.23} parent=35 // pred_fallthru
        _
    $region36: #{generator_forward.23} parent=5 // pred_fallthru
      _
  $region6: #{generator_forward.23} parent=0 // loop_footer
    %s12 = sadd.s32 1, %s8
  $region7: #{generator_forward.23} parent=0 // loop_footer_branch
    %7 = sbr.rel target = $region3
  $region8: #{generator_forward.23} parent=0 // loop_exit
    _

// kernel: generator_forward.24
$region0: #{generator_forward.24}
  #allocation0 [shape = 'u32[]', space=smem, size = 0x4, offset = 0x4, fixed_abs, tag = 'smem constant byte address 0x4 - core index']
  #allocation1 [shape = 'u32[144,128]{1,0:T(1,128)}', space=vmem, size = 0x12000, scoped, tag = 'internal scratch']
  %s0 = inlined_call_operand.vmem [shape: bf16[2,64,288], index: 0, kind: input, shape index: {}]
  %s1 = inlined_call_operand.vmem [shape: bf16[288,64], index: 1, kind: input, shape index: {}]
  %s2 = inlined_call_operand.vmem [shape: bf16[2,64,64], index: 2, kind: output, shape index: {}]
  %s3 = sld [smem:[#allocation0]]
  $region41: #{generator_forward.24} parent=0
    _
  %s5 = ssub.s32 1, %s3
  %s6 = scalar_select 0, %s5, %s3
  loop: start=0, step=1, limit=4
  $region2: #{generator_forward.24} parent=0 // loop_pre_header
    _
  $region3: #{generator_forward.24} parent=0 // loop_header
    %s8 = sphi 0, %s12
    %p9 = scmp.ge.s32.totalorder %s8, 4
    %s18 = sphi 0, %s20
    %s21 = sphi 0, %s18
    %s22 = sphi 0, %s21
    %s38 = sphi 0, %s22
    %s42 = sphi 0, %s42
    %s44 = sphi 0, %s42
    %s45 = sphi 0, %s44
    %s59 = sphi 0, %s45
    %s65 = sphi 0, %s67
    %s68 = sphi 0, %s65
    %s69 = sphi 0, %s68
    %s85 = sphi 0, %s69
  $region4: #{generator_forward.24} parent=0 // loop_header_branch
    %11 = sbr.rel (%p9) target = $region8
  $region5: #{generator_forward.24} parent=0 // loop_body
    %s13 = ssub.s32 %s8, 1
    %s14 = ssub.s32 %s8, 2
    %s15 = sadd.s32 %s8, 1
    %s16 = ssub.s32 %s8, %s15
    %p17 = scmp.eq.s32.totalorder %s16, 0
    %s19 = sadd.s32 %s18, 1
    %s20 = scalar_select %p17, %s18, %s19
    %p23 = pneg %p17
    %p24 = scmp.eq.s32.totalorder %s8, 1
    %p25 = por %p23, %p24
    %p26 = scmp.ne.s32.totalorder %s18, %s21
    %p27 = scmp.eq.s32.totalorder %s8, 0
    %p28 = por %p26, %p27
    %p29 = scmp.ne.s32.totalorder %s18, %s21
    %p30 = scmp.eq.s32.totalorder %s13, 1
    %p31 = por %p29, %p30
    %p32 = scmp.ne.s32.totalorder %s21, %s22
    %p33 = scmp.eq.s32.totalorder %s13, 0
    %p34 = por %p32, %p33
    %p35 = scmp.ne.s32.totalorder %s21, %s22
    %p36 = scmp.eq.s32.totalorder %s14, 1
    %p37 = por %p35, %p36
    %p39 = scmp.ne.s32.totalorder %s22, %s38
    %p40 = scmp.eq.s32.totalorder %s14, 0
    %p41 = por %p39, %p40
    %s43 = sadd.s32 %s42, 1
    %p46 = scmp.eq.s32.totalorder %s8, 1
    %p47 = scmp.ne.s32.totalorder %s42, %s44
    %p48 = scmp.eq.s32.totalorder %s8, 0
    %p49 = por %p47, %p48
    %p50 = scmp.ne.s32.totalorder %s42, %s44
    %p51 = scmp.eq.s32.totalorder %s13, 1
    %p52 = por %p50, %p51
    %p53 = scmp.ne.s32.totalorder %s44, %s45
    %p54 = scmp.eq.s32.totalorder %s13, 0
    %p55 = por %p53, %p54
    %p56 = scmp.ne.s32.totalorder %s44, %s45
    %p57 = scmp.eq.s32.totalorder %s14, 1
    %p58 = por %p56, %p57
    %p60 = scmp.ne.s32.totalorder %s45, %s59
    %p61 = scmp.eq.s32.totalorder %s14, 0
    %p62 = por %p60, %p61
    %s63 = ssub.s32 %s8, %s15
    %p64 = scmp.eq.s32.totalorder %s63, 0
    %s66 = sadd.s32 %s65, 1
    %s67 = scalar_select %p64, %s65, %s66
    %p70 = pneg %p64
    %p71 = scmp.eq.s32.totalorder %s8, 1
    %p72 = por %p70, %p71
    %p73 = scmp.ne.s32.totalorder %s65, %s68
    %p74 = scmp.eq.s32.totalorder %s8, 0
    %p75 = por %p73, %p74
    %p76 = scmp.ne.s32.totalorder %s65, %s68
    %p77 = scmp.eq.s32.totalorder %s13, 1
    %p78 = por %p76, %p77
    %p79 = scmp.ne.s32.totalorder %s68, %s69
    %p80 = scmp.eq.s32.totalorder %s13, 0
    %p81 = por %p79, %p80
    %p82 = scmp.ne.s32.totalorder %s68, %s69
    %p83 = scmp.eq.s32.totalorder %s14, 1
    %p84 = por %p82, %p83
    %p86 = scmp.ne.s32.totalorder %s69, %s85
    %p87 = scmp.eq.s32.totalorder %s14, 0
    %p88 = por %p86, %p87
    %p89 = scmp.le.s32.totalorder 1, %s8
    %p90 = scmp.lt.s32.totalorder %s8, 3
    %p91 = pnand %p89, %p90
    %p92 = pneg %p91
    // Predicated region
    $region9: #{generator_forward.24} parent=5 // pred_check
      _
    $region10: #{generator_forward.24} parent=5 // pred_check_branch
      %94 = sbr.rel (%p91) target = $region12
    $region11: #{generator_forward.24} parent=5 // pred_region
      %s95 = ssub.s32 %s8, 1
      // Predicated region
      $region13: #{generator_forward.24} parent=11 // pred_check
        %p96 = pneg %p55
      $region14: #{generator_forward.24} parent=11 // pred_check_branch
        %98 = sbr.rel (%p96) target = $region16
      $region15: #{generator_forward.24} parent=11 // pred_region
        _
      $region16: #{generator_forward.24} parent=11 // pred_fallthru
        _
    $region12: #{generator_forward.24} parent=5 // pred_fallthru
      _
    %p99 = scmp.lt.s32.totalorder %s8, 2
    // Predicated region
    $region17: #{generator_forward.24} parent=5 // pred_check
      %p100 = pneg %p99
    $region18: #{generator_forward.24} parent=5 // pred_check_branch
      %102 = sbr.rel (%p100) target = $region20
    $region19: #{generator_forward.24} parent=5 // pred_region
      // Predicated region
      $region21: #{generator_forward.24} parent=19 // pred_check
        %p103 = pneg %p28
      $region22: #{generator_forward.24} parent=19 // pred_check_branch
        %105 = sbr.rel (%p103) target = $region24
      $region23: #{generator_forward.24} parent=19 // pred_region
        %p106 = scmp.lt.s32.totalorder %s8, 1
        %s107 = scalar_select %p106, %s8, 1
        %s108 = smul.addr %s107, 24
        %s109 = smul.addr %s108, 4
        %s110 = scalar_lea.vmem %s0, %s109
      $region24: #{generator_forward.24} parent=19 // pred_fallthru
        _
    $region20: #{generator_forward.24} parent=5 // pred_fallthru
      _
    %p111 = scmp.le.s32.totalorder 1, %s8
    %p112 = scmp.lt.s32.totalorder %s8, 3
    %p113 = pnand %p111, %p112
    %p114 = pneg %p113
    // Predicated region
    $region25: #{generator_forward.24} parent=5 // pred_check
      _
    $region26: #{generator_forward.24} parent=5 // pred_check_branch
      %116 = sbr.rel (%p113) target = $region28
    $region27: #{generator_forward.24} parent=5 // pred_region
      %s117 = ssub.s32 %s8, 1
      %p118 = scmp.lt.s32.totalorder %s13, 1
      %s119 = scalar_select %p118, %s13, 1
      %s120 = smul.addr %s119, 24
      %s121 = smul.addr %s120, 4
      %s122 = scalar_lea.vmem %s0, %s121
      %p123 = pneg %p34
      %p124 = pneg %p31
      %p125 = pneg %p55
      %p126 = pneg %p52
      %p127 = pneg %p81
      %p128 = pneg %p78
      %p129 = scmp.lt.s32.totalorder %s13, 1
      %s130 = scalar_select %p129, %s13, 1
      %s131 = smul.addr %s130, 8
      %s132 = smul.addr %s131, 4
      %s133 = scalar_lea.vmem %s2, %s132
      %p134 = scmp.lt.s32.totalorder %s13, 1
      %s135 = scalar_select %p134, %s13, 1
      %s136 = smul.addr %s135, 24
      %s137 = smul.addr %s136, 4
      %s138 = scalar_lea.vmem %s0, %s137
      %p139 = scmp.lt.s32.totalorder %s13, 1
      %s140 = scalar_select %p139, %s13, 1
      %s141 = smul.addr %s140, 8
      %s142 = smul.addr %s141, 4
      %s143 = scalar_lea.vmem %s2, %s142
      %v145 = vld [vmem:[%s138] sm:$0xff]
      %v146 = vld [vmem:[%s138 + $0x8] sm:$0xf]
      %v147 = vld [vmem:[%s138 + $0xc] sm:$0xff]
      %v148 = vld [vmem:[%s138 + $0x14] sm:$0xf]
      %v149 = vld [vmem:[%s138 + $0x18] sm:$0xff]
      %v150 = vld [vmem:[%s138 + $0x20] sm:$0xf]
      %v151 = vld [vmem:[%s138 + $0x24] sm:$0xff]
      %v152 = vld [vmem:[%s138 + $0x2c] sm:$0xf]
      %v153 = vld [vmem:[%s138 + $0x30] sm:$0xff]
      %v154 = vld [vmem:[%s138 + $0x38] sm:$0xf]
      %v155 = vld [vmem:[%s138 + $0x3c] sm:$0xff]
      %v156 = vld [vmem:[%s138 + $0x44] sm:$0xf]
      %v157 = vld [vmem:[%s138 + $0x48] sm:$0xff]
      %v158 = vld [vmem:[%s138 + $0x50] sm:$0xf]
      %v159 = vld [vmem:[%s138 + $0x54] sm:$0xff]
      %v160 = vld [vmem:[%s138 + $0x5c] sm:$0xf]
      %v161 = vld [vmem:[%s1] sm:$0xf]
      %v162 = vld [vmem:[%s1 + $0x4] sm:$0xf]
      %v163 = vld [vmem:[%s1 + $0x8] sm:$0xf]
      %v164 = vld [vmem:[%s1 + $0xc] sm:$0xf]
      %v165 = vld [vmem:[%s1 + $0x10] sm:$0xf]
      %v166 = vld [vmem:[%s1 + $0x14] sm:$0xf]
      %v167 = vld [vmem:[%s1 + $0x18] sm:$0xf]
      %v168 = vld [vmem:[%s1 + $0x1c] sm:$0xf]
      %v169 = vld [vmem:[%s1 + $0x20] sm:$0xf]
      %v170 = vld [vmem:[%s1 + $0x24] sm:$0xf]
      %v171 = vld [vmem:[%s1 + $0x28] sm:$0xf]
      %v172 = vld [vmem:[%s1 + $0x2c] sm:$0xf]
      %v173 = vld [vmem:[%s1 + $0x30] sm:$0xf]
      %v174 = vld [vmem:[%s1 + $0x34] sm:$0xf]
      %v175 = vld [vmem:[%s1 + $0x38] sm:$0xf]
      %v176 = vld [vmem:[%s1 + $0x3c] sm:$0xf]
      %v177 = vld [vmem:[%s1 + $0x40] sm:$0xf]
      %v178 = vld [vmem:[%s1 + $0x44] sm:$0xf]
      %v179 = vld [vmem:[%s1 + $0x48] sm:$0xf]
      %v180 = vld [vmem:[%s1 + $0x4c] sm:$0xf]
      %v181 = vld [vmem:[%s1 + $0x50] sm:$0xf]
      %v182 = vld [vmem:[%s1 + $0x54] sm:$0xf]
      %v183 = vld [vmem:[%s1 + $0x58] sm:$0xf]
      %v184 = vld [vmem:[%s1 + $0x5c] sm:$0xf]
      %v185 = vld [vmem:[%s1 + $0x60] sm:$0xf]
      %v186 = vld [vmem:[%s1 + $0x64] sm:$0xf]
      %v187 = vld [vmem:[%s1 + $0x68] sm:$0xf]
      %v188 = vld [vmem:[%s1 + $0x6c] sm:$0xf]
      %v189 = vld [vmem:[%s1 + $0x70] sm:$0xf]
      %v190 = vld [vmem:[%s1 + $0x74] sm:$0xf]
      %v191 = vld [vmem:[%s1 + $0x78] sm:$0xf]
      %v192 = vld [vmem:[%s1 + $0x7c] sm:$0xf]
      %v193 = vld [vmem:[%s1 + $0x80] sm:$0xf]
      %v194 = vld [vmem:[%s1 + $0x84] sm:$0xf]
      %v195 = vld [vmem:[%s1 + $0x88] sm:$0xf]
      %v196 = vld [vmem:[%s1 + $0x8c] sm:$0xf]
      %v213 = vunpack.c.l.b16 %v145
      %v214 = vunpack.c.h.b16 %v145
      %v215 = vunpack.c.l.b16 %v146
      %v216 = vunpack.c.l.b16 %v147
      %v217 = vunpack.c.h.b16 %v147
      %v218 = vunpack.c.l.b16 %v148
      %v219 = vunpack.c.l.b16 %v149
      %v220 = vunpack.c.h.b16 %v149
      %v221 = vunpack.c.l.b16 %v150
      %v222 = vunpack.c.l.b16 %v151
      %v223 = vunpack.c.h.b16 %v151
      %v224 = vunpack.c.l.b16 %v152
      %v225 = vunpack.c.l.b16 %v153
      %v226 = vunpack.c.h.b16 %v153
      %v227 = vunpack.c.l.b16 %v154
      %v228 = vunpack.c.l.b16 %v155
      %v229 = vunpack.c.h.b16 %v155
      %v230 = vunpack.c.l.b16 %v156
      %v231 = vunpack.c.l.b16 %v157
      %v232 = vunpack.c.h.b16 %v157
      %v233 = vunpack.c.l.b16 %v158
      %v234 = vunpack.c.l.b16 %v159
      %v235 = vunpack.c.h.b16 %v159
      %v236 = vunpack.c.l.b16 %v160
      %v237 = vpack.c.b16 %v216, %v213
      %v238 = vpack.c.b16 %v217, %v214
      %v239 = vpack.c.b16 %v218, %v215
      %v240 = vpack.c.b16 %v222, %v219
      %v241 = vpack.c.b16 %v223, %v220
      %v242 = vpack.c.b16 %v224, %v221
      %v243 = vpack.c.b16 %v228, %v225
      %v244 = vpack.c.b16 %v229, %v226
      %v245 = vpack.c.b16 %v230, %v227
      %v246 = vpack.c.b16 %v234, %v231
      %v247 = vpack.c.b16 %v235, %v232
      %v248 = vpack.c.b16 %v236, %v233
      %v293 = vunpack.c.l.b16 %v161
      %v294 = vunpack.c.l.b16 %v162
      %v295 = vunpack.c.l.b16 %v163
      %v296 = vunpack.c.l.b16 %v164
      %v297 = vunpack.c.l.b16 %v165
      %v298 = vunpack.c.l.b16 %v166
      %v299 = vunpack.c.l.b16 %v167
      %v300 = vunpack.c.l.b16 %v168
      %v301 = vunpack.c.l.b16 %v169
      %v302 = vunpack.c.l.b16 %v170
      %v303 = vunpack.c.l.b16 %v171
      %v304 = vunpack.c.l.b16 %v172
      %v305 = vunpack.c.l.b16 %v173
      %v306 = vunpack.c.l.b16 %v174
      %v307 = vunpack.c.l.b16 %v175
      %v308 = vunpack.c.l.b16 %v176
      %v309 = vunpack.c.l.b16 %v177
      %v310 = vunpack.c.l.b16 %v178
      %v311 = vunpack.c.l.b16 %v179
      %v312 = vunpack.c.l.b16 %v180
      %v313 = vunpack.c.l.b16 %v181
      %v314 = vunpack.c.l.b16 %v182
      %v315 = vunpack.c.l.b16 %v183
      %v316 = vunpack.c.l.b16 %v184
      %v317 = vunpack.c.l.b16 %v185
      %v318 = vunpack.c.l.b16 %v186
      %v319 = vunpack.c.l.b16 %v187
      %v320 = vunpack.c.l.b16 %v188
      %v321 = vunpack.c.l.b16 %v189
      %v322 = vunpack.c.l.b16 %v190
      %v323 = vunpack.c.l.b16 %v191
      %v324 = vunpack.c.l.b16 %v192
      %v325 = vunpack.c.l.b16 %v193
      %v326 = vunpack.c.l.b16 %v194
      %v327 = vunpack.c.l.b16 %v195
      %v328 = vunpack.c.l.b16 %v196
      %v329 = vpack.c.b16 %v294, %v293
      %v330 = vpack.c.b16 %v296, %v295
      %v331 = vpack.c.b16 %v298, %v297
      %v332 = vpack.c.b16 %v300, %v299
      %v333 = vpack.c.b16 %v302, %v301
      %v334 = vpack.c.b16 %v304, %v303
      %v335 = vpack.c.b16 %v306, %v305
      %v336 = vpack.c.b16 %v308, %v307
      %v337 = vpack.c.b16 %v310, %v309
      %v338 = vpack.c.b16 %v312, %v311
      %v339 = vpack.c.b16 %v314, %v313
      %v340 = vpack.c.b16 %v316, %v315
      %v341 = vpack.c.b16 %v318, %v317
      %v342 = vpack.c.b16 %v320, %v319
      %v343 = vpack.c.b16 %v322, %v321
      %v344 = vpack.c.b16 %v324, %v323
      %v345 = vpack.c.b16 %v326, %v325
      %v346 = vpack.c.b16 %v328, %v327
      %vm365 = vcmask 261120
      %v367 = vsel %vm365, %v239, 0
      %v370 = vsel %vm365, %v242, 0
      %v373 = vsel %vm365, %v245, 0
      %v376 = vsel %vm365, %v248, 0
      %378 = vmatprep.subr.bf16.mxu0 0
      %379 = vmatpush1.bf16.msra.mxu0 %v329
      %380 = vmatprep.subr.bf16.mxu0 0
      %381 = vmatpush1.bf16.msra.mxu0 %v330
      %382 = vmatprep.subr.bf16.mxu0 0
      %383 = vmatpush1.bf16.msra.mxu0 %v331
      %384 = vmatprep.subr.bf16.mxu0 0
      %385 = vmatpush1.bf16.msra.mxu0 %v332
      %386 = vmatprep.subr.bf16.mxu0 0
      %387 = vmatpush1.bf16.msra.mxu0 %v333
      %388 = vmatprep.subr.bf16.mxu0 0
      %389 = vmatpush1.bf16.msra.mxu0 %v334
      %390 = vmatprep.subr.bf16.mxu0 0
      %391 = vmatpush1.bf16.msra.mxu0 %v335
      %392 = vmatprep.subr.bf16.mxu0 0
      %393 = vmatpush1.bf16.msra.mxu0 %v336
      %394 = vmatprep.subr.bf16.mxu0 0
      %395 = vmatpush1.bf16.msra.mxu0 %v337
      %396 = vmatprep.subr.bf16.mxu0 0
      %397 = vmatpush1.bf16.msra.mxu0 %v338
      %398 = vmatprep.subr.bf16.mxu0 0
      %399 = vmatpush1.bf16.msra.mxu0 %v339
      %400 = vmatprep.subr.bf16.mxu0 0
      %401 = vmatpush1.bf16.msra.mxu0 %v340
      %402 = vmatprep.subr.bf16.mxu0 0
      %403 = vmatpush1.bf16.msra.mxu0 %v341
      %404 = vmatprep.subr.bf16.mxu0 0
      %405 = vmatpush1.bf16.msra.mxu0 %v342
      %406 = vmatprep.subr.bf16.mxu0 0
      %407 = vmatpush1.bf16.msra.mxu0 %v343
      %408 = vmatprep.subr.bf16.mxu0 0
      %409 = vmatpush1.bf16.msra.mxu0 %v344
      %410 = vmatprep.mubr.bf16.mxu0 %v238
      %411 = vmatmul.mubr.bf16.gmra.mrb[0].mxu0 %v237
      %v412 = vpop.f32.mrb[0].mxu0
      %v413 = vadd.f32 0.0, %v412
      %v414 = vpop.f32.mrb[0].mxu0
      %v415 = vpop.f32.mrb[0].mxu0
      %v416 = vadd.f32 0.0, %v415
      %v417 = vpop.f32.mrb[0].mxu0
      %418 = vmatprep.mubr.bf16.mxu0 %v241
      %419 = vmatmul.mubr.bf16.gmra.mrb[0].mxu0 %v240
      %v420 = vpop.f32.mrb[0].mxu0
      %v421 = vadd.f32 0.0, %v420
      %v422 = vpop.f32.mrb[0].mxu0
      %v423 = vpop.f32.mrb[0].mxu0
      %v424 = vadd.f32 0.0, %v423
      %v425 = vpop.f32.mrb[0].mxu0
      %426 = vmatprep.mubr.bf16.mxu0 %v244
      %427 = vmatmul.mubr.bf16.gmra.mrb[0].mxu0 %v243
      %v428 = vpop.f32.mrb[0].mxu0
      %v429 = vadd.f32 0.0, %v428
      %v430 = vpop.f32.mrb[0].mxu0
      %v431 = vpop.f32.mrb[0].mxu0
      %v432 = vadd.f32 0.0, %v431
      %v433 = vpop.f32.mrb[0].mxu0
      %434 = vmatprep.mubr.bf16.mxu0 %v247
      %435 = vmatmul.mubr.bf16.gmra.mrb[0].mxu0 %v246
      %v436 = vpop.f32.mrb[0].mxu0
      %v437 = vadd.f32 0.0, %v436
      %v438 = vpop.f32.mrb[0].mxu0
      %v439 = vpop.f32.mrb[0].mxu0
      %v440 = vadd.f32 0.0, %v439
      %v441 = vpop.f32.mrb[0].mxu0
      %442 = vdwg.mxu0
      %443 = vmatprep.subr.bf16.mxu0 0
      %444 = vmatpush1.bf16.msra.mxu0 %v345
      %445 = vmatprep.subr.bf16.mxu0 0
      %446 = vmatpush1.bf16.msra.mxu0 %v346
      %447 = vmatprep.subr.bf16.mxu0 0
      %448 = vmatpush1.bf16.msra.mxu0 0
      %449 = vmatprep.subr.bf16.mxu0 0
      %450 = vmatpush1.bf16.msra.mxu0 0
      %451 = vmatprep.subr.bf16.mxu0 0
      %452 = vmatpush1.bf16.msra.mxu0 0
      %453 = vmatprep.subr.bf16.mxu0 0
      %454 = vmatpush1.bf16.msra.mxu0 0
      %455 = vmatprep.subr.bf16.mxu0 0
      %456 = vmatpush1.bf16.msra.mxu0 0
      %457 = vmatprep.subr.bf16.mxu0 0
      %458 = vmatpush1.bf16.msra.mxu0 0
      %459 = vmatprep.subr.bf16.mxu0 0
      %460 = vmatpush1.bf16.msra.mxu0 0
      %461 = vmatprep.subr.bf16.mxu0 0
      %462 = vmatpush1.bf16.msra.mxu0 0
      %463 = vmatprep.subr.bf16.mxu0 0
      %464 = vmatpush1.bf16.msra.mxu0 0
      %465 = vmatprep.subr.bf16.mxu0 0
      %466 = vmatpush1.bf16.msra.mxu0 0
      %467 = vmatprep.subr.bf16.mxu0 0
      %468 = vmatpush1.bf16.msra.mxu0 0
      %469 = vmatprep.subr.bf16.mxu0 0
      %470 = vmatpush1.bf16.msra.mxu0 0
      %471 = vmatprep.subr.bf16.mxu0 0
      %472 = vmatpush1.bf16.msra.mxu0 0
      %473 = vmatprep.subr.bf16.mxu0 0
      %474 = vmatpush1.bf16.msra.mxu0 0
      %475 = vmatprep.mubr.bf16.mxu0 0
      %476 = vmatmul.mubr.bf16.gmra.mrb[0].mxu0 %v367
      %v477 = vpop.f32.mrb[0].mxu0
      %v478 = vadd.f32 %v413, %v477
      %v479 = vpop.f32.mrb[0].mxu0
      %v480 = vpop.f32.mrb[0].mxu0
      %v481 = vadd.f32 %v416, %v480
      %v482 = vpop.f32.mrb[0].mxu0
      %483 = vmatprep.mubr.bf16.mxu0 0
      %484 = vmatmul.mubr.bf16.gmra.mrb[0].mxu0 %v370
      %v485 = vpop.f32.mrb[0].mxu0
      %v486 = vadd.f32 %v421, %v485
      %v487 = vpop.f32.mrb[0].mxu0
      %v488 = vpop.f32.mrb[0].mxu0
      %v489 = vadd.f32 %v424, %v488
      %v490 = vpop.f32.mrb[0].mxu0
      %491 = vmatprep.mubr.bf16.mxu0 0
      %492 = vmatmul.mubr.bf16.gmra.mrb[0].mxu0 %v373
      %v493 = vpop.f32.mrb[0].mxu0
      %v494 = vadd.f32 %v429, %v493
      %v495 = vpop.f32.mrb[0].mxu0
      %v496 = vpop.f32.mrb[0].mxu0
      %v497 = vadd.f32 %v432, %v496
      %v498 = vpop.f32.mrb[0].mxu0
      %499 = vmatprep.mubr.bf16.mxu0 0
      %500 = vmatmul.mubr.bf16.gmra.mrb[0].mxu0 %v376
      %v501 = vpop.f32.mrb[0].mxu0
      %v502 = vadd.f32 %v437, %v501
      %v503 = vpop.f32.mrb[0].mxu0
      %v504 = vpop.f32.mrb[0].mxu0
      %v505 = vadd.f32 %v440, %v504
      %v506 = vpop.f32.mrb[0].mxu0
      %507 = vdwg.mxu0
      %vm508 = vcmask 523264
      %v509 = vsel %vm508, %v478, 0.0
      %v510 = vsel %vm508, %v481, 0.0
      %v511 = vadd.f32 %v509, %v510
      %v512 = vsel %vm508, %v486, 0.0
      %v513 = vadd.f32 %v511, %v512
      %v514 = vsel %vm508, %v489, 0.0
      %v515 = vadd.f32 %v513, %v514
      %v516 = vsel %vm508, %v494, 0.0
      %v517 = vadd.f32 %v515, %v516
      %v518 = vsel %vm508, %v497, 0.0
      %v519 = vadd.f32 %v517, %v518
      %v520 = vsel %vm508, %v502, 0.0
      %v521 = vadd.f32 %v519, %v520
      %v522 = vsel %vm508, %v505, 0.0
      %v523 = vadd.f32 %v521, %v522
      %v524 = vrot.slane %v523, 4
      %v525 = vadd.f32 %v523, %v524
      %v526 = vrot.slane %v525, 2
      %v527 = vadd.f32 %v525, %v526
      %v528 = vrot.slane %v527, 1
      %v529 = vadd.f32 %v527, %v528
      %v530 = vmul.f32 %v478, %v478
      %v531 = vmul.f32 %v481, %v481
      %v532 = vmul.f32 %v486, %v486
      %v533 = vmul.f32 %v489, %v489
      %v534 = vmul.f32 %v494, %v494
      %v535 = vmul.f32 %v497, %v497
      %v536 = vmul.f32 %v502, %v502
      %v537 = vmul.f32 %v505, %v505
      %v538 = vsel %vm508, %v530, 0.0
      %v539 = vsel %vm508, %v531, 0.0
      %v540 = vadd.f32 %v538, %v539
      %v541 = vsel %vm508, %v532, 0.0
      %v542 = vadd.f32 %v540, %v541
      %v543 = vsel %vm508, %v533, 0.0
      %v544 = vadd.f32 %v542, %v543
      %v545 = vsel %vm508, %v534, 0.0
      %v546 = vadd.f32 %v544, %v545
      %v547 = vsel %vm508, %v535, 0.0
      %v548 = vadd.f32 %v546, %v547
      %v549 = vsel %vm508, %v536, 0.0
      %v550 = vadd.f32 %v548, %v549
      %v551 = vsel %vm508, %v537, 0.0
      %v552 = vadd.f32 %v550, %v551
      %v553 = vrot.slane %v552, 4
      %v554 = vadd.f32 %v552, %v553
      %v555 = vrot.slane %v554, 2
      %v556 = vadd.f32 %v554, %v555
      %v557 = vrot.slane %v556, 1
      %v558 = vadd.f32 %v556, %v557
      %v559 = vmul.f32 %v529, 0.015625
      %v560 = vmul.f32 %v558, 0.015625
      %v561 = vmul.f32 %v559, %v559
      %v562 = vsub.f32 %v560, %v561
      %v563 = vmax.f32 %v562, 0.0
      %v564 = vsub.f32 %v478, %v559
      %v565 = vsub.f32 %v481, %v559
      %v566 = vsub.f32 %v486, %v559
      %v567 = vsub.f32 %v489, %v559
      %v568 = vsub.f32 %v494, %v559
      %v569 = vsub.f32 %v497, %v559
      %v570 = vsub.f32 %v502, %v559
      %v571 = vsub.f32 %v505, %v559
      %v572 = vadd.f32 %v563, 1e-05
      %v573 = vrsqrt.pop %v572
      %v574 = vmul.f32 %v564, %v573
      %v575 = vmul.f32 %v565, %v573
      %v576 = vmul.f32 %v566, %v573
      %v577 = vmul.f32 %v567, %v573
      %v578 = vmul.f32 %v568, %v573
      %v579 = vmul.f32 %v569, %v573
      %v580 = vmul.f32 %v570, %v573
      %v581 = vmul.f32 %v571, %v573
      %v582 = vmax.f32 %v574, 0.0
      %v583 = vmax.f32 %v575, 0.0
      %v584 = vmax.f32 %v576, 0.0
      %v585 = vmax.f32 %v577, 0.0
      %v586 = vmax.f32 %v578, 0.0
      %v587 = vmax.f32 %v579, 0.0
      %v588 = vmax.f32 %v580, 0.0
      %v589 = vmax.f32 %v581, 0.0
      %v590 = vpack.c.bf16 %v583, %v582
      %v591 = vpack.c.bf16 %v585, %v584
      %v592 = vpack.c.bf16 %v587, %v586
      %v593 = vpack.c.bf16 %v589, %v588
      %v598 = vunpack.c.l.b16 %v590
      %v599 = vunpack.c.h.b16 %v590
      %v600 = vunpack.c.l.b16 %v591
      %v601 = vunpack.c.h.b16 %v591
      %v602 = vunpack.c.l.b16 %v592
      %v603 = vunpack.c.h.b16 %v592
      %v604 = vunpack.c.l.b16 %v593
      %v605 = vunpack.c.h.b16 %v593
      %v606 = vpack.c.b16 %v598, %v598
      %v607 = vpack.c.b16 %v599, %v599
      %v608 = vpack.c.b16 %v600, %v600
      %v609 = vpack.c.b16 %v601, %v601
      %v610 = vpack.c.b16 %v602, %v602
      %v611 = vpack.c.b16 %v603, %v603
      %v612 = vpack.c.b16 %v604, %v604
      %v613 = vpack.c.b16 %v605, %v605
      %vm622 = vcmask 519168
      %623 = vst.msk [vmem:[%s143] sm:$0xf] %vm622, %v606
      %624 = vst.msk [vmem:[%s143 + $0x4] sm:$0xf] %vm622, %v607
      %625 = vst.msk [vmem:[%s143 + $0x8] sm:$0xf] %vm622, %v608
      %626 = vst.msk [vmem:[%s143 + $0xc] sm:$0xf] %vm622, %v609
      %627 = vst.msk [vmem:[%s143 + $0x10] sm:$0xf] %vm622, %v610
      %628 = vst.msk [vmem:[%s143 + $0x14] sm:$0xf] %vm622, %v611
      %629 = vst.msk [vmem:[%s143 + $0x18] sm:$0xf] %vm622, %v612
      %630 = vst.msk [vmem:[%s143 + $0x1c] sm:$0xf] %vm622, %v613
      %p631 = scmp.lt.s32.totalorder %s13, 1
      %s632 = scalar_select %p631, %s13, 1
      %s633 = smul.addr %s632, 8
      %s634 = smul.addr %s633, 4
      %s635 = scalar_lea.vmem %s2, %s634
      // Predicated region
      $region29: #{generator_forward.24} parent=27 // pred_check
        %p636 = pneg %p78
      $region30: #{generator_forward.24} parent=27 // pred_check_branch
        %638 = sbr.rel (%p636) target = $region32
      $region31: #{generator_forward.24} parent=27 // pred_region
        _
      $region32: #{generator_forward.24} parent=27 // pred_fallthru
        _
    $region28: #{generator_forward.24} parent=5 // pred_fallthru
      _
    %p639 = scmp.le.s32.totalorder 2, %s8
    // Predicated region
    $region33: #{generator_forward.24} parent=5 // pred_check
      %p640 = pneg %p639
    $region34: #{generator_forward.24} parent=5 // pred_check_branch
      %642 = sbr.rel (%p640) target = $region36
    $region35: #{generator_forward.24} parent=5 // pred_region
      %s643 = ssub.s32 %s8, 2
      // Predicated region
      $region37: #{generator_forward.24} parent=35 // pred_check
        %p644 = pneg %p84
      $region38: #{generator_forward.24} parent=35 // pred_check_branch
        %646 = sbr.rel (%p644) target = $region40
      $region39: #{generator_forward.24} parent=35 // pred_region
        %p647 = scmp.lt.s32.totalorder %s14, 1
        %s648 = scalar_select %p647, %s14, 1
        %s649 = smul.addr %s648, 8
        %s650 = smul.addr %s649, 4
        %s651 = scalar_lea.vmem %s2, %s650
      $region40: #{generator_forward.24} parent=35 // pred_fallthru
        _
    $region36: #{generator_forward.24} parent=5 // pred_fallthru
      _
  $region6: #{generator_forward.24} parent=0 // loop_footer
    %s12 = sadd.s32 1, %s8
  $region7: #{generator_forward.24} parent=0 // loop_footer_branch
    %7 = sbr.rel target = $region3
  $region8: #{generator_forward.24} parent=0 // loop_exit
    _

// kernel: generator_forward.25
$region0: #{generator_forward.25}
  #allocation0 [shape = 'u32[]', space=smem, size = 0x4, offset = 0x4, fixed_abs, tag = 'smem constant byte address 0x4 - core index']
  #allocation1 [shape = 'u32[144,128]{1,0:T(1,128)}', space=vmem, size = 0x12000, scoped, tag = 'internal scratch']
  %s0 = inlined_call_operand.vmem [shape: bf16[2,16,576], index: 0, kind: input, shape index: {}]
  %s1 = inlined_call_operand.vmem [shape: bf16[576,128], index: 1, kind: input, shape index: {}]
  %s2 = inlined_call_operand.vmem [shape: bf16[2,16,128], index: 2, kind: output, shape index: {}]
  %s3 = sld [smem:[#allocation0]]
  $region41: #{generator_forward.25} parent=0
    _
  %s5 = ssub.s32 1, %s3
  %s6 = scalar_select 0, %s5, %s3
  loop: start=0, step=1, limit=4
  $region2: #{generator_forward.25} parent=0 // loop_pre_header
    _
  $region3: #{generator_forward.25} parent=0 // loop_header
    %s8 = sphi 0, %s12
    %p9 = scmp.ge.s32.totalorder %s8, 4
    %s18 = sphi 0, %s20
    %s21 = sphi 0, %s18
    %s22 = sphi 0, %s21
    %s38 = sphi 0, %s22
    %s42 = sphi 0, %s42
    %s44 = sphi 0, %s42
    %s45 = sphi 0, %s44
    %s59 = sphi 0, %s45
    %s65 = sphi 0, %s67
    %s68 = sphi 0, %s65
    %s69 = sphi 0, %s68
    %s85 = sphi 0, %s69
  $region4: #{generator_forward.25} parent=0 // loop_header_branch
    %11 = sbr.rel (%p9) target = $region8
  $region5: #{generator_forward.25} parent=0 // loop_body
    %s13 = ssub.s32 %s8, 1
    %s14 = ssub.s32 %s8, 2
    %s15 = sadd.s32 %s8, 1
    %s16 = ssub.s32 %s8, %s15
    %p17 = scmp.eq.s32.totalorder %s16, 0
    %s19 = sadd.s32 %s18, 1
    %s20 = scalar_select %p17, %s18, %s19
    %p23 = pneg %p17
    %p24 = scmp.eq.s32.totalorder %s8, 1
    %p25 = por %p23, %p24
    %p26 = scmp.ne.s32.totalorder %s18, %s21
    %p27 = scmp.eq.s32.totalorder %s8, 0
    %p28 = por %p26, %p27
    %p29 = scmp.ne.s32.totalorder %s18, %s21
    %p30 = scmp.eq.s32.totalorder %s13, 1
    %p31 = por %p29, %p30
    %p32 = scmp.ne.s32.totalorder %s21, %s22
    %p33 = scmp.eq.s32.totalorder %s13, 0
    %p34 = por %p32, %p33
    %p35 = scmp.ne.s32.totalorder %s21, %s22
    %p36 = scmp.eq.s32.totalorder %s14, 1
    %p37 = por %p35, %p36
    %p39 = scmp.ne.s32.totalorder %s22, %s38
    %p40 = scmp.eq.s32.totalorder %s14, 0
    %p41 = por %p39, %p40
    %s43 = sadd.s32 %s42, 1
    %p46 = scmp.eq.s32.totalorder %s8, 1
    %p47 = scmp.ne.s32.totalorder %s42, %s44
    %p48 = scmp.eq.s32.totalorder %s8, 0
    %p49 = por %p47, %p48
    %p50 = scmp.ne.s32.totalorder %s42, %s44
    %p51 = scmp.eq.s32.totalorder %s13, 1
    %p52 = por %p50, %p51
    %p53 = scmp.ne.s32.totalorder %s44, %s45
    %p54 = scmp.eq.s32.totalorder %s13, 0
    %p55 = por %p53, %p54
    %p56 = scmp.ne.s32.totalorder %s44, %s45
    %p57 = scmp.eq.s32.totalorder %s14, 1
    %p58 = por %p56, %p57
    %p60 = scmp.ne.s32.totalorder %s45, %s59
    %p61 = scmp.eq.s32.totalorder %s14, 0
    %p62 = por %p60, %p61
    %s63 = ssub.s32 %s8, %s15
    %p64 = scmp.eq.s32.totalorder %s63, 0
    %s66 = sadd.s32 %s65, 1
    %s67 = scalar_select %p64, %s65, %s66
    %p70 = pneg %p64
    %p71 = scmp.eq.s32.totalorder %s8, 1
    %p72 = por %p70, %p71
    %p73 = scmp.ne.s32.totalorder %s65, %s68
    %p74 = scmp.eq.s32.totalorder %s8, 0
    %p75 = por %p73, %p74
    %p76 = scmp.ne.s32.totalorder %s65, %s68
    %p77 = scmp.eq.s32.totalorder %s13, 1
    %p78 = por %p76, %p77
    %p79 = scmp.ne.s32.totalorder %s68, %s69
    %p80 = scmp.eq.s32.totalorder %s13, 0
    %p81 = por %p79, %p80
    %p82 = scmp.ne.s32.totalorder %s68, %s69
    %p83 = scmp.eq.s32.totalorder %s14, 1
    %p84 = por %p82, %p83
    %p86 = scmp.ne.s32.totalorder %s69, %s85
    %p87 = scmp.eq.s32.totalorder %s14, 0
    %p88 = por %p86, %p87
    %p89 = scmp.le.s32.totalorder 1, %s8
    %p90 = scmp.lt.s32.totalorder %s8, 3
    %p91 = pnand %p89, %p90
    %p92 = pneg %p91
    // Predicated region
    $region9: #{generator_forward.25} parent=5 // pred_check
      _
    $region10: #{generator_forward.25} parent=5 // pred_check_branch
      %94 = sbr.rel (%p91) target = $region12
    $region11: #{generator_forward.25} parent=5 // pred_region
      %s95 = ssub.s32 %s8, 1
      // Predicated region
      $region13: #{generator_forward.25} parent=11 // pred_check
        %p96 = pneg %p55
      $region14: #{generator_forward.25} parent=11 // pred_check_branch
        %98 = sbr.rel (%p96) target = $region16
      $region15: #{generator_forward.25} parent=11 // pred_region
        _
      $region16: #{generator_forward.25} parent=11 // pred_fallthru
        _
    $region12: #{generator_forward.25} parent=5 // pred_fallthru
      _
    %p99 = scmp.lt.s32.totalorder %s8, 2
    // Predicated region
    $region17: #{generator_forward.25} parent=5 // pred_check
      %p100 = pneg %p99
    $region18: #{generator_forward.25} parent=5 // pred_check_branch
      %102 = sbr.rel (%p100) target = $region20
    $region19: #{generator_forward.25} parent=5 // pred_region
      // Predicated region
      $region21: #{generator_forward.25} parent=19 // pred_check
        %p103 = pneg %p28
      $region22: #{generator_forward.25} parent=19 // pred_check_branch
        %105 = sbr.rel (%p103) target = $region24
      $region23: #{generator_forward.25} parent=19 // pred_region
        %p106 = scmp.lt.s32.totalorder %s8, 1
        %s107 = scalar_select %p106, %s8, 1
        %s108 = smul.addr %s107, 10
        %s109 = smul.addr %s108, 4
        %s110 = scalar_lea.vmem %s0, %s109
      $region24: #{generator_forward.25} parent=19 // pred_fallthru
        _
    $region20: #{generator_forward.25} parent=5 // pred_fallthru
      _
    %p111 = scmp.le.s32.totalorder 1, %s8
    %p112 = scmp.lt.s32.totalorder %s8, 3
    %p113 = pnand %p111, %p112
    %p114 = pneg %p113
    // Predicated region
    $region25: #{generator_forward.25} parent=5 // pred_check
      _
    $region26: #{generator_forward.25} parent=5 // pred_check_branch
      %116 = sbr.rel (%p113) target = $region28
    $region27: #{generator_forward.25} parent=5 // pred_region
      %s117 = ssub.s32 %s8, 1
      %p118 = scmp.lt.s32.totalorder %s13, 1
      %s119 = scalar_select %p118, %s13, 1
      %s120 = smul.addr %s119, 10
      %s121 = smul.addr %s120, 4
      %s122 = scalar_lea.vmem %s0, %s121
      %p123 = pneg %p34
      %p124 = pneg %p31
      %p125 = pneg %p55
      %p126 = pneg %p52
      %p127 = pneg %p81
      %p128 = pneg %p78
      %p129 = scmp.lt.s32.totalorder %s13, 1
      %s130 = scalar_select %p129, %s13, 1
      %s131 = smul.addr %s130, 2
      %s132 = smul.addr %s131, 4
      %s133 = scalar_lea.vmem %s2, %s132
      %p134 = scmp.lt.s32.totalorder %s13, 1
      %s135 = scalar_select %p134, %s13, 1
      %s136 = smul.addr %s135, 10
      %s137 = smul.addr %s136, 4
      %s138 = scalar_lea.vmem %s0, %s137
      %p139 = scmp.lt.s32.totalorder %s13, 1
      %s140 = scalar_select %p139, %s13, 1
      %s141 = smul.addr %s140, 2
      %s142 = smul.addr %s141, 4
      %s143 = scalar_lea.vmem %s2, %s142
      %v145 = vld [vmem:[%s138] sm:$0xff]
      %v146 = vld [vmem:[%s138 + $0x8] sm:$0xff]
      %v147 = vld [vmem:[%s138 + $0x10] sm:$0xf]
      %v148 = vld [vmem:[%s138 + $0x14] sm:$0xff]
      %v149 = vld [vmem:[%s138 + $0x1c] sm:$0xff]
      %v150 = vld [vmem:[%s138 + $0x24] sm:$0xf]
      %v151 = vld [vmem:[%s1] sm:$0xf]
      %v152 = vld [vmem:[%s1 + $0x4] sm:$0xf]
      %v153 = vld [vmem:[%s1 + $0x8] sm:$0xf]
      %v154 = vld [vmem:[%s1 + $0xc] sm:$0xf]
      %v155 = vld [vmem:[%s1 + $0x10] sm:$0xf]
      %v156 = vld [vmem:[%s1 + $0x14] sm:$0xf]
      %v157 = vld [vmem:[%s1 + $0x18] sm:$0xf]
      %v158 = vld [vmem:[%s1 + $0x1c] sm:$0xf]
      %v159 = vld [vmem:[%s1 + $0x20] sm:$0xf]
      %v160 = vld [vmem:[%s1 + $0x24] sm:$0xf]
      %v161 = vld [vmem:[%s1 + $0x28] sm:$0xf]
      %v162 = vld [vmem:[%s1 + $0x2c] sm:$0xf]
      %v163 = vld [vmem:[%s1 + $0x30] sm:$0xf]
      %v164 = vld [vmem:[%s1 + $0x34] sm:$0xf]
      %v165 = vld [vmem:[%s1 + $0x38] sm:$0xf]
      %v166 = vld [vmem:[%s1 + $0x3c] sm:$0xf]
      %v167 = vld [vmem:[%s1 + $0x40] sm:$0xf]
      %v168 = vld [vmem:[%s1 + $0x44] sm:$0xf]
      %v169 = vld [vmem:[%s1 + $0x48] sm:$0xf]
      %v170 = vld [vmem:[%s1 + $0x4c] sm:$0xf]
      %v171 = vld [vmem:[%s1 + $0x50] sm:$0xf]
      %v172 = vld [vmem:[%s1 + $0x54] sm:$0xf]
      %v173 = vld [vmem:[%s1 + $0x58] sm:$0xf]
      %v174 = vld [vmem:[%s1 + $0x5c] sm:$0xf]
      %v175 = vld [vmem:[%s1 + $0x60] sm:$0xf]
      %v176 = vld [vmem:[%s1 + $0x64] sm:$0xf]
      %v177 = vld [vmem:[%s1 + $0x68] sm:$0xf]
      %v178 = vld [vmem:[%s1 + $0x6c] sm:$0xf]
      %v179 = vld [vmem:[%s1 + $0x70] sm:$0xf]
      %v180 = vld [vmem:[%s1 + $0x74] sm:$0xf]
      %v181 = vld [vmem:[%s1 + $0x78] sm:$0xf]
      %v182 = vld [vmem:[%s1 + $0x7c] sm:$0xf]
      %v183 = vld [vmem:[%s1 + $0x80] sm:$0xf]
      %v184 = vld [vmem:[%s1 + $0x84] sm:$0xf]
      %v185 = vld [vmem:[%s1 + $0x88] sm:$0xf]
      %v186 = vld [vmem:[%s1 + $0x8c] sm:$0xf]
      %v187 = vld [vmem:[%s1 + $0x90] sm:$0xf]
      %v188 = vld [vmem:[%s1 + $0x94] sm:$0xf]
      %v189 = vld [vmem:[%s1 + $0x98] sm:$0xf]
      %v190 = vld [vmem:[%s1 + $0x9c] sm:$0xf]
      %v191 = vld [vmem:[%s1 + $0xa0] sm:$0xf]
      %v192 = vld [vmem:[%s1 + $0xa4] sm:$0xf]
      %v193 = vld [vmem:[%s1 + $0xa8] sm:$0xf]
      %v194 = vld [vmem:[%s1 + $0xac] sm:$0xf]
      %v195 = vld [vmem:[%s1 + $0xb0] sm:$0xf]
      %v196 = vld [vmem:[%s1 + $0xb4] sm:$0xf]
      %v197 = vld [vmem:[%s1 + $0xb8] sm:$0xf]
      %v198 = vld [vmem:[%s1 + $0xbc] sm:$0xf]
      %v199 = vld [vmem:[%s1 + $0xc0] sm:$0xf]
      %v200 = vld [vmem:[%s1 + $0xc4] sm:$0xf]
      %v201 = vld [vmem:[%s1 + $0xc8] sm:$0xf]
      %v202 = vld [vmem:[%s1 + $0xcc] sm:$0xf]
      %v203 = vld [vmem:[%s1 + $0xd0] sm:$0xf]
      %v204 = vld [vmem:[%s1 + $0xd4] sm:$0xf]
      %v205 = vld [vmem:[%s1 + $0xd8] sm:$0xf]
      %v206 = vld [vmem:[%s1 + $0xdc] sm:$0xf]
      %v207 = vld [vmem:[%s1 + $0xe0] sm:$0xf]
      %v208 = vld [vmem:[%s1 + $0xe4] sm:$0xf]
      %v209 = vld [vmem:[%s1 + $0xe8] sm:$0xf]
      %v210 = vld [vmem:[%s1 + $0xec] sm:$0xf]
      %v211 = vld [vmem:[%s1 + $0xf0] sm:$0xf]
      %v212 = vld [vmem:[%s1 + $0xf4] sm:$0xf]
      %v213 = vld [vmem:[%s1 + $0xf8] sm:$0xf]
      %v214 = vld [vmem:[%s1 + $0xfc] sm:$0xf]
      %v215 = vld [vmem:[%s1 + $0x100] sm:$0xf]
      %v216 = vld [vmem:[%s1 + $0x104] sm:$0xf]
      %v217 = vld [vmem:[%s1 + $0x108] sm:$0xf]
      %v218 = vld [vmem:[%s1 + $0x10c] sm:$0xf]
      %v219 = vld [vmem:[%s1 + $0x110] sm:$0xf]
      %v220 = vld [vmem:[%s1 + $0x114] sm:$0xf]
      %v221 = vld [vmem:[%s1 + $0x118] sm:$0xf]
      %v222 = vld [vmem:[%s1 + $0x11c] sm:$0xf]
      %v229 = vunpack.c.l.b16 %v145
      %v230 = vunpack.c.h.b16 %v145
      %v231 = vunpack.c.l.b16 %v146
      %v232 = vunpack.c.h.b16 %v146
      %v233 = vunpack.c.l.b16 %v147
      %v234 = vunpack.c.l.b16 %v148
      %v235 = vunpack.c.h.b16 %v148
      %v236 = vunpack.c.l.b16 %v149
      %v237 = vunpack.c.h.b16 %v149
      %v238 = vunpack.c.l.b16 %v150
      %v239 = vpack.c.b16 %v234, %v229
      %v240 = vpack.c.b16 %v235, %v230
      %v241 = vpack.c.b16 %v236, %v231
      %v242 = vpack.c.b16 %v237, %v232
      %v243 = vpack.c.b16 %v238, %v233
      %v320 = vunpack.c.l.b16 %v151
      %v321 = vunpack.c.l.b16 %v152
      %v322 = vunpack.c.l.b16 %v153
      %v323 = vunpack.c.l.b16 %v154
      %v324 = vunpack.c.l.b16 %v155
      %v325 = vunpack.c.l.b16 %v156
      %v326 = vunpack.c.l.b16 %v157
      %v327 = vunpack.c.l.b16 %v158
      %v328 = vunpack.c.l.b16 %v159
      %v329 = vunpack.c.l.b16 %v160
      %v330 = vunpack.c.l.b16 %v161
      %v331 = vunpack.c.l.b16 %v162
      %v332 = vunpack.c.l.b16 %v163
      %v333 = vunpack.c.l.b16 %v164
      %v334 = vunpack.c.l.b16 %v165
      %v335 = vunpack.c.l.b16 %v166
      %v336 = vunpack.c.l.b16 %v167
      %v337 = vunpack.c.l.b16 %v168
      %v338 = vunpack.c.l.b16 %v169
      %v339 = vunpack.c.l.b16 %v170
      %v340 = vunpack.c.l.b16 %v171
      %v341 = vunpack.c.l.b16 %v172
      %v342 = vunpack.c.l.b16 %v173
      %v343 = vunpack.c.l.b16 %v174
      %v344 = vunpack.c.l.b16 %v175
      %v345 = vunpack.c.l.b16 %v176
      %v346 = vunpack.c.l.b16 %v177
      %v347 = vunpack.c.l.b16 %v178
      %v348 = vunpack.c.l.b16 %v179
      %v349 = vunpack.c.l.b16 %v180
      %v350 = vunpack.c.l.b16 %v181
      %v351 = vunpack.c.l.b16 %v182
      %v352 = vunpack.c.l.b16 %v183
      %v353 = vunpack.c.l.b16 %v184
      %v354 = vunpack.c.l.b16 %v185
      %v355 = vunpack.c.l.b16 %v186
      %v356 = vunpack.c.l.b16 %v187
      %v357 = vunpack.c.l.b16 %v188
      %v358 = vunpack.c.l.b16 %v189
      %v359 = vunpack.c.l.b16 %v190
      %v360 = vunpack.c.l.b16 %v191
      %v361 = vunpack.c.l.b16 %v192
      %v362 = vunpack.c.l.b16 %v193
      %v363 = vunpack.c.l.b16 %v194
      %v364 = vunpack.c.l.b16 %v195
      %v365 = vunpack.c.l.b16 %v196
      %v366 = vunpack.c.l.b16 %v197
      %v367 = vunpack.c.l.b16 %v198
      %v368 = vunpack.c.l.b16 %v199
      %v369 = vunpack.c.l.b16 %v200
      %v370 = vunpack.c.l.b16 %v201
      %v371 = vunpack.c.l.b16 %v202
      %v372 = vunpack.c.l.b16 %v203
      %v373 = vunpack.c.l.b16 %v204
      %v374 = vunpack.c.l.b16 %v205
      %v375 = vunpack.c.l.b16 %v206
      %v376 = vunpack.c.l.b16 %v207
      %v377 = vunpack.c.l.b16 %v208
      %v378 = vunpack.c.l.b16 %v209
      %v379 = vunpack.c.l.b16 %v210
      %v380 = vunpack.c.l.b16 %v211
      %v381 = vunpack.c.l.b16 %v212
      %v382 = vunpack.c.l.b16 %v213
      %v383 = vunpack.c.l.b16 %v214
      %v384 = vunpack.c.l.b16 %v215
      %v385 = vunpack.c.l.b16 %v216
      %v386 = vunpack.c.l.b16 %v217
      %v387 = vunpack.c.l.b16 %v218
      %v388 = vunpack.c.l.b16 %v219
      %v389 = vunpack.c.l.b16 %v220
      %v390 = vunpack.c.l.b16 %v221
      %v391 = vunpack.c.l.b16 %v222
      %v392 = vpack.c.b16 %v321, %v320
      %v393 = vpack.c.b16 %v323, %v322
      %v394 = vpack.c.b16 %v325, %v324
      %v395 = vpack.c.b16 %v327, %v326
      %v396 = vpack.c.b16 %v329, %v328
      %v397 = vpack.c.b16 %v331, %v330
      %v398 = vpack.c.b16 %v333, %v332
      %v399 = vpack.c.b16 %v335, %v334
      %v400 = vpack.c.b16 %v337, %v336
      %v401 = vpack.c.b16 %v339, %v338
      %v402 = vpack.c.b16 %v341, %v340
      %v403 = vpack.c.b16 %v343, %v342
      %v404 = vpack.c.b16 %v345, %v344
      %v405 = vpack.c.b16 %v347, %v346
      %v406 = vpack.c.b16 %v349, %v348
      %v407 = vpack.c.b16 %v351, %v350
      %v408 = vpack.c.b16 %v353, %v352
      %v409 = vpack.c.b16 %v355, %v354
      %v410 = vpack.c.b16 %v357, %v356
      %v411 = vpack.c.b16 %v359, %v358
      %v412 = vpack.c.b16 %v361, %v360
      %v413 = vpack.c.b16 %v363, %v362
      %v414 = vpack.c.b16 %v365, %v364
      %v415 = vpack.c.b16 %v367, %v366
      %v416 = vpack.c.b16 %v369, %v368
      %v417 = vpack.c.b16 %v371, %v370
      %v418 = vpack.c.b16 %v373, %v372
      %v419 = vpack.c.b16 %v375, %v374
      %v420 = vpack.c.b16 %v377, %v376
      %v421 = vpack.c.b16 %v379, %v378
      %v422 = vpack.c.b16 %v381, %v380
      %v423 = vpack.c.b16 %v383, %v382
      %v424 = vpack.c.b16 %v385, %v384
      %v425 = vpack.c.b16 %v387, %v386
      %v426 = vpack.c.b16 %v389, %v388
      %v427 = vpack.c.b16 %v391, %v390
      %vm464 = vcmask 523264
      %v466 = vsel %vm464, %v243, 0
      %468 = vmatprep.subr.bf16.mxu0 0
      %469 = vmatpush1.bf16.msra.mxu0 %v392
      %470 = vmatprep.subr.bf16.mxu0 0
      %471 = vmatpush1.bf16.msra.mxu0 %v393
      %472 = vmatprep.subr.bf16.mxu0 0
      %473 = vmatpush1.bf16.msra.mxu0 %v394
      %474 = vmatprep.subr.bf16.mxu0 0
      %475 = vmatpush1.bf16.msra.mxu0 %v395
      %476 = vmatprep.subr.bf16.mxu0 0
      %477 = vmatpush1.bf16.msra.mxu0 %v396
      %478 = vmatprep.subr.bf16.mxu0 0
      %479 = vmatpush1.bf16.msra.mxu0 %v397
      %480 = vmatprep.subr.bf16.mxu0 0
      %481 = vmatpush1.bf16.msra.mxu0 %v398
      %482 = vmatprep.subr.bf16.mxu0 0
      %483 = vmatpush1.bf16.msra.mxu0 %v399
      %484 = vmatprep.subr.bf16.mxu0 0
      %485 = vmatpush1.bf16.msra.mxu0 %v400
      %486 = vmatprep.subr.bf16.mxu0 0
      %487 = vmatpush1.bf16.msra.mxu0 %v401
      %488 = vmatprep.subr.bf16.mxu0 0
      %489 = vmatpush1.bf16.msra.mxu0 %v402
      %490 = vmatprep.subr.bf16.mxu0 0
      %491 = vmatpush1.bf16.msra.mxu0 %v403
      %492 = vmatprep.subr.bf16.mxu0 0
      %493 = vmatpush1.bf16.msra.mxu0 %v404
      %494 = vmatprep.subr.bf16.mxu0 0
      %495 = vmatpush1.bf16.msra.mxu0 %v405
      %496 = vmatprep.subr.bf16.mxu0 0
      %497 = vmatpush1.bf16.msra.mxu0 %v406
      %498 = vmatprep.subr.bf16.mxu0 0
      %499 = vmatpush1.bf16.msra.mxu0 %v407
      %500 = vmatprep.mubr.bf16.mxu0 %v240
      %501 = vmatmul.mubr.bf16.gmra.mrb[0].mxu0 %v239
      %v502 = vpop.f32.mrb[0].mxu0
      %v503 = vadd.f32 0.0, %v502
      %v504 = vpop.f32.mrb[0].mxu0
      %v505 = vpop.f32.mrb[0].mxu0
      %v506 = vadd.f32 0.0, %v505
      %v507 = vpop.f32.mrb[0].mxu0
      %508 = vdwg.mxu0
      %509 = vmatprep.subr.bf16.mxu0 0
      %510 = vmatpush1.bf16.msra.mxu0 %v408
      %511 = vmatprep.subr.bf16.mxu0 0
      %512 = vmatpush1.bf16.msra.mxu0 %v409
      %513 = vmatprep.subr.bf16.mxu0 0
      %514 = vmatpush1.bf16.msra.mxu0 %v410
      %515 = vmatprep.subr.bf16.mxu0 0
      %516 = vmatpush1.bf16.msra.mxu0 %v411
      %517 = vmatprep.subr.bf16.mxu0 0
      %518 = vmatpush1.bf16.msra.mxu0 %v412
      %519 = vmatprep.subr.bf16.mxu0 0
      %520 = vmatpush1.bf16.msra.mxu0 %v413
      %521 = vmatprep.subr.bf16.mxu0 0
      %522 = vmatpush1.bf16.msra.mxu0 %v414
      %523 = vmatprep.subr.bf16.mxu0 0
      %524 = vmatpush1.bf16.msra.mxu0 %v415
      %525 = vmatprep.subr.bf16.mxu0 0
      %526 = vmatpush1.bf16.msra.mxu0 %v416
      %527 = vmatprep.subr.bf16.mxu0 0
      %528 = vmatpush1.bf16.msra.mxu0 %v417
      %529 = vmatprep.subr.bf16.mxu0 0
      %530 = vmatpush1.bf16.msra.mxu0 %v418
      %531 = vmatprep.subr.bf16.mxu0 0
      %532 = vmatpush1.bf16.msra.mxu0 %v419
      %533 = vmatprep.subr.bf16.mxu0 0
      %534 = vmatpush1.bf16.msra.mxu0 %v420
      %535 = vmatprep.subr.bf16.mxu0 0
      %536 = vmatpush1.bf16.msra.mxu0 %v421
      %537 = vmatprep.subr.bf16.mxu0 0
      %538 = vmatpush1.bf16.msra.mxu0 %v422
      %539 = vmatprep.subr.bf16.mxu0 0
      %540 = vmatpush1.bf16.msra.mxu0 %v423
      %541 = vmatprep.mubr.bf16.mxu0 %v242
      %542 = vmatmul.mubr.bf16.gmra.mrb[0].mxu0 %v241
      %v543 = vpop.f32.mrb[0].mxu0
      %v544 = vadd.f32 %v503, %v543
      %v545 = vpop.f32.mrb[0].mxu0
      %v546 = vpop.f32.mrb[0].mxu0
      %v547 = vadd.f32 %v506, %v546
      %v548 = vpop.f32.mrb[0].mxu0
      %549 = vdwg.mxu0
      %550 = vmatprep.subr.bf16.mxu0 0
      %551 = vmatpush1.bf16.msra.mxu0 %v424
      %552 = vmatprep.subr.bf16.mxu0 0
      %553 = vmatpush1.bf16.msra.mxu0 %v425
      %554 = vmatprep.subr.bf16.mxu0 0
      %555 = vmatpush1.bf16.msra.mxu0 %v426
      %556 = vmatprep.subr.bf16.mxu0 0
      %557 = vmatpush1.bf16.msra.mxu0 %v427
      %558 = vmatprep.subr.bf16.mxu0 0
      %559 = vmatpush1.bf16.msra.mxu0 0
      %560 = vmatprep.subr.bf16.mxu0 0
      %561 = vmatpush1.bf16.msra.mxu0 0
      %562 = vmatprep.subr.bf16.mxu0 0
      %563 = vmatpush1.bf16.msra.mxu0 0
      %564 = vmatprep.subr.bf16.mxu0 0
      %565 = vmatpush1.bf16.msra.mxu0 0
      %566 = vmatprep.subr.bf16.mxu0 0
      %567 = vmatpush1.bf16.msra.mxu0 0
      %568 = vmatprep.subr.bf16.mxu0 0
      %569 = vmatpush1.bf16.msra.mxu0 0
      %570 = vmatprep.subr.bf16.mxu0 0
      %571 = vmatpush1.bf16.msra.mxu0 0
      %572 = vmatprep.subr.bf16.mxu0 0
      %573 = vmatpush1.bf16.msra.mxu0 0
      %574 = vmatprep.subr.bf16.mxu0 0
      %575 = vmatpush1.bf16.msra.mxu0 0
      %576 = vmatprep.subr.bf16.mxu0 0
      %577 = vmatpush1.bf16.msra.mxu0 0
      %578 = vmatprep.subr.bf16.mxu0 0
      %579 = vmatpush1.bf16.msra.mxu0 0
      %580 = vmatprep.subr.bf16.mxu0 0
      %581 = vmatpush1.bf16.msra.mxu0 0
      %582 = vmatprep.mubr.bf16.mxu0 0
      %583 = vmatmul.mubr.bf16.gmra.mrb[0].mxu0 %v466
      %v584 = vpop.f32.mrb[0].mxu0
      %v585 = vadd.f32 %v544, %v584
      %v586 = vpop.f32.mrb[0].mxu0
      %v587 = vpop.f32.mrb[0].mxu0
      %v588 = vadd.f32 %v547, %v587
      %v589 = vpop.f32.mrb[0].mxu0
      %590 = vdwg.mxu0
      %v591 = vadd.f32 %v585, %v588
      %v592 = vrot.slane %v591, 4
      %v593 = vadd.f32 %v591, %v592
      %v594 = vrot.slane %v593, 2
      %v595 = vadd.f32 %v593, %v594
      %v596 = vrot.slane %v595, 1
      %v597 = vadd.f32 %v595, %v596
      %v598 = vmul.f32 %v585, %v585
      %v599 = vmul.f32 %v588, %v588
      %v600 = vadd.f32 %v598, %v599
      %v601 = vrot.slane %v600, 4
      %v602 = vadd.f32 %v600, %v601
      %v603 = vrot.slane %v602, 2
      %v604 = vadd.f32 %v602, %v603
      %v605 = vrot.slane %v604, 1
      %v606 = vadd.f32 %v604, %v605
      %v607 = vmul.f32 %v597, 0.0625
      %v608 = vmul.f32 %v606, 0.0625
      %v609 = vmul.f32 %v607, %v607
      %v610 = vsub.f32 %v608, %v609
      %v611 = vmax.f32 %v610, 0.0
      %v612 = vsub.f32 %v585, %v607
      %v613 = vsub.f32 %v588, %v607
      %v614 = vadd.f32 %v611, 1e-05
      %v615 = vrsqrt.pop %v614
      %v616 = vmul.f32 %v612, %v615
      %v617 = vmul.f32 %v613, %v615
      %v618 = vmax.f32 %v616, 0.0
      %v619 = vmax.f32 %v617, 0.0
      %v620 = vpack.c.bf16 %v619, %v618
      %v622 = vunpack.c.l.b16 %v620
      %v623 = vunpack.c.h.b16 %v620
      %v624 = vpack.c.b16 %v622, %v622
      %v625 = vpack.c.b16 %v623, %v623
      %628 = vst [vmem:[%s143] sm:$0xf] %v624
      %629 = vst [vmem:[%s143 + $0x4] sm:$0xf] %v625
      %p630 = scmp.lt.s32.totalorder %s13, 1
      %s631 = scalar_select %p630, %s13, 1
      %s632 = smul.addr %s631, 2
      %s633 = smul.addr %s632, 4
      %s634 = scalar_lea.vmem %s2, %s633
      // Predicated region
      $region29: #{generator_forward.25} parent=27 // pred_check
        %p635 = pneg %p78
      $region30: #{generator_forward.25} parent=27 // pred_check_branch
        %637 = sbr.rel (%p635) target = $region32
      $region31: #{generator_forward.25} parent=27 // pred_region
        _
      $region32: #{generator_forward.25} parent=27 // pred_fallthru
        _
    $region28: #{generator_forward.25} parent=5 // pred_fallthru
      _
    %p638 = scmp.le.s32.totalorder 2, %s8
    // Predicated region
    $region33: #{generator_forward.25} parent=5 // pred_check
      %p639 = pneg %p638
    $region34: #{generator_forward.25} parent=5 // pred_check_branch
      %641 = sbr.rel (%p639) target = $region36
    $region35: #{generator_forward.25} parent=5 // pred_region
      %s642 = ssub.s32 %s8, 2
      // Predicated region
      $region37: #{generator_forward.25} parent=35 // pred_check
        %p643 = pneg %p84
      $region38: #{generator_forward.25} parent=35 // pred_check_branch
        %645 = sbr.rel (%p643) target = $region40
      $region39: #{generator_forward.25} parent=35 // pred_region
        %p646 = scmp.lt.s32.totalorder %s14, 1
        %s647 = scalar_select %p646, %s14, 1
        %s648 = smul.addr %s647, 2
        %s649 = smul.addr %s648, 4
        %s650 = scalar_lea.vmem %s2, %s649
      $region40: #{generator_forward.25} parent=35 // pred_fallthru
        _
    $region36: #{generator_forward.25} parent=5 // pred_fallthru
      _
  $region6: #{generator_forward.25} parent=0 // loop_footer
    %s12 = sadd.s32 1, %s8
  $region7: #{generator_forward.25} parent=0 // loop_footer_branch
    %7 = sbr.rel target = $region3
  $region8: #{generator_forward.25} parent=0 // loop_exit
    _

// kernel: generator_forward.26
$region0: #{generator_forward.26}
  #allocation0 [shape = 'u32[]', space=smem, size = 0x4, offset = 0x4, fixed_abs, tag = 'smem constant byte address 0x4 - core index']
  #allocation1 [shape = 'u32[144,128]{1,0:T(1,128)}', space=vmem, size = 0x12000, scoped, tag = 'internal scratch']
  %s0 = inlined_call_operand.vmem [shape: bf16[2,38,128], index: 0, kind: input, shape index: {}]
  %s1 = inlined_call_operand.vmem [shape: bf16[9,128,128], index: 1, kind: input, shape index: {}]
  %s2 = inlined_call_operand.vmem [shape: f32[24,1], index: 2, kind: input, shape index: {}]
  %s3 = inlined_call_operand.vmem [shape: bf16[2,1,24,128], index: 3, kind: output, shape index: {}]
  %s4 = sld [smem:[#allocation0]]
  $region45: #{generator_forward.26} parent=0
    _
  %s6 = ssub.s32 1, %s4
  %s7 = scalar_select 0, %s6, %s4
  loop: start=0, step=1, limit=4
  $region2: #{generator_forward.26} parent=0 // loop_pre_header
    _
  $region3: #{generator_forward.26} parent=0 // loop_header
    %s9 = sphi 0, %s13
    %p10 = scmp.ge.s32.totalorder %s9, 4
    %s19 = sphi 0, %s21
    %s22 = sphi 0, %s19
    %s23 = sphi 0, %s22
    %s39 = sphi 0, %s23
    %s43 = sphi 0, %s43
    %s45 = sphi 0, %s43
    %s46 = sphi 0, %s45
    %s60 = sphi 0, %s46
    %s64 = sphi 0, %s64
    %s66 = sphi 0, %s64
    %s67 = sphi 0, %s66
    %s81 = sphi 0, %s67
    %s87 = sphi 0, %s89
    %s90 = sphi 0, %s87
    %s91 = sphi 0, %s90
    %s107 = sphi 0, %s91
  $region4: #{generator_forward.26} parent=0 // loop_header_branch
    %12 = sbr.rel (%p10) target = $region8
  $region5: #{generator_forward.26} parent=0 // loop_body
    %s14 = ssub.s32 %s9, 1
    %s15 = ssub.s32 %s9, 2
    %s16 = sadd.s32 %s9, 1
    %s17 = ssub.s32 %s9, %s16
    %p18 = scmp.eq.s32.totalorder %s17, 0
    %s20 = sadd.s32 %s19, 1
    %s21 = scalar_select %p18, %s19, %s20
    %p24 = pneg %p18
    %p25 = scmp.eq.s32.totalorder %s9, 1
    %p26 = por %p24, %p25
    %p27 = scmp.ne.s32.totalorder %s19, %s22
    %p28 = scmp.eq.s32.totalorder %s9, 0
    %p29 = por %p27, %p28
    %p30 = scmp.ne.s32.totalorder %s19, %s22
    %p31 = scmp.eq.s32.totalorder %s14, 1
    %p32 = por %p30, %p31
    %p33 = scmp.ne.s32.totalorder %s22, %s23
    %p34 = scmp.eq.s32.totalorder %s14, 0
    %p35 = por %p33, %p34
    %p36 = scmp.ne.s32.totalorder %s22, %s23
    %p37 = scmp.eq.s32.totalorder %s15, 1
    %p38 = por %p36, %p37
    %p40 = scmp.ne.s32.totalorder %s23, %s39
    %p41 = scmp.eq.s32.totalorder %s15, 0
    %p42 = por %p40, %p41
    %s44 = sadd.s32 %s43, 1
    %p47 = scmp.eq.s32.totalorder %s9, 1
    %p48 = scmp.ne.s32.totalorder %s43, %s45
    %p49 = scmp.eq.s32.totalorder %s9, 0
    %p50 = por %p48, %p49
    %p51 = scmp.ne.s32.totalorder %s43, %s45
    %p52 = scmp.eq.s32.totalorder %s14, 1
    %p53 = por %p51, %p52
    %p54 = scmp.ne.s32.totalorder %s45, %s46
    %p55 = scmp.eq.s32.totalorder %s14, 0
    %p56 = por %p54, %p55
    %p57 = scmp.ne.s32.totalorder %s45, %s46
    %p58 = scmp.eq.s32.totalorder %s15, 1
    %p59 = por %p57, %p58
    %p61 = scmp.ne.s32.totalorder %s46, %s60
    %p62 = scmp.eq.s32.totalorder %s15, 0
    %p63 = por %p61, %p62
    %s65 = sadd.s32 %s64, 1
    %p68 = scmp.eq.s32.totalorder %s9, 1
    %p69 = scmp.ne.s32.totalorder %s64, %s66
    %p70 = scmp.eq.s32.totalorder %s9, 0
    %p71 = por %p69, %p70
    %p72 = scmp.ne.s32.totalorder %s64, %s66
    %p73 = scmp.eq.s32.totalorder %s14, 1
    %p74 = por %p72, %p73
    %p75 = scmp.ne.s32.totalorder %s66, %s67
    %p76 = scmp.eq.s32.totalorder %s14, 0
    %p77 = por %p75, %p76
    %p78 = scmp.ne.s32.totalorder %s66, %s67
    %p79 = scmp.eq.s32.totalorder %s15, 1
    %p80 = por %p78, %p79
    %p82 = scmp.ne.s32.totalorder %s67, %s81
    %p83 = scmp.eq.s32.totalorder %s15, 0
    %p84 = por %p82, %p83
    %s85 = ssub.s32 %s9, %s16
    %p86 = scmp.eq.s32.totalorder %s85, 0
    %s88 = sadd.s32 %s87, 1
    %s89 = scalar_select %p86, %s87, %s88
    %p92 = pneg %p86
    %p93 = scmp.eq.s32.totalorder %s9, 1
    %p94 = por %p92, %p93
    %p95 = scmp.ne.s32.totalorder %s87, %s90
    %p96 = scmp.eq.s32.totalorder %s9, 0
    %p97 = por %p95, %p96
    %p98 = scmp.ne.s32.totalorder %s87, %s90
    %p99 = scmp.eq.s32.totalorder %s14, 1
    %p100 = por %p98, %p99
    %p101 = scmp.ne.s32.totalorder %s90, %s91
    %p102 = scmp.eq.s32.totalorder %s14, 0
    %p103 = por %p101, %p102
    %p104 = scmp.ne.s32.totalorder %s90, %s91
    %p105 = scmp.eq.s32.totalorder %s15, 1
    %p106 = por %p104, %p105
    %p108 = scmp.ne.s32.totalorder %s91, %s107
    %p109 = scmp.eq.s32.totalorder %s15, 0
    %p110 = por %p108, %p109
    %p111 = scmp.le.s32.totalorder 1, %s9
    %p112 = scmp.lt.s32.totalorder %s9, 3
    %p113 = pnand %p111, %p112
    %p114 = pneg %p113
    // Predicated region
    $region9: #{generator_forward.26} parent=5 // pred_check
      _
    $region10: #{generator_forward.26} parent=5 // pred_check_branch
      %116 = sbr.rel (%p113) target = $region12
    $region11: #{generator_forward.26} parent=5 // pred_region
      %s117 = ssub.s32 %s9, 1
      // Predicated region
      $region13: #{generator_forward.26} parent=11 // pred_check
        %p118 = pneg %p56
      $region14: #{generator_forward.26} parent=11 // pred_check_branch
        %120 = sbr.rel (%p118) target = $region16
      $region15: #{generator_forward.26} parent=11 // pred_region
        _
      $region16: #{generator_forward.26} parent=11 // pred_fallthru
        _
      // Predicated region
      $region17: #{generator_forward.26} parent=11 // pred_check
        %p121 = pneg %p77
      $region18: #{generator_forward.26} parent=11 // pred_check_branch
        %123 = sbr.rel (%p121) target = $region20
      $region19: #{generator_forward.26} parent=11 // pred_region
        _
      $region20: #{generator_forward.26} parent=11 // pred_fallthru
        _
    $region12: #{generator_forward.26} parent=5 // pred_fallthru
      _
    %p124 = scmp.lt.s32.totalorder %s9, 2
    // Predicated region
    $region21: #{generator_forward.26} parent=5 // pred_check
      %p125 = pneg %p124
    $region22: #{generator_forward.26} parent=5 // pred_check_branch
      %127 = sbr.rel (%p125) target = $region24
    $region23: #{generator_forward.26} parent=5 // pred_region
      // Predicated region
      $region25: #{generator_forward.26} parent=23 // pred_check
        %p128 = pneg %p29
      $region26: #{generator_forward.26} parent=23 // pred_check_branch
        %130 = sbr.rel (%p128) target = $region28
      $region27: #{generator_forward.26} parent=23 // pred_region
        %p131 = scmp.lt.s32.totalorder %s9, 1
        %s132 = scalar_select %p131, %s9, 1
        %s133 = smul.addr %s132, 5
        %s134 = smul.addr %s133, 4
        %s135 = scalar_lea.vmem %s0, %s134
      $region28: #{generator_forward.26} parent=23 // pred_fallthru
        _
    $region24: #{generator_forward.26} parent=5 // pred_fallthru
      _
    %p136 = scmp.le.s32.totalorder 1, %s9
    %p137 = scmp.lt.s32.totalorder %s9, 3
    %p138 = pnand %p136, %p137
    %p139 = pneg %p138
    // Predicated region
    $region29: #{generator_forward.26} parent=5 // pred_check
      _
    $region30: #{generator_forward.26} parent=5 // pred_check_branch
      %141 = sbr.rel (%p138) target = $region32
    $region31: #{generator_forward.26} parent=5 // pred_region
      %s142 = ssub.s32 %s9, 1
      %p143 = scmp.lt.s32.totalorder %s14, 1
      %s144 = scalar_select %p143, %s14, 1
      %s145 = smul.addr %s144, 5
      %s146 = smul.addr %s145, 4
      %s147 = scalar_lea.vmem %s0, %s146
      %p148 = pneg %p35
      %p149 = pneg %p32
      %p150 = pneg %p56
      %p151 = pneg %p53
      %p152 = pneg %p77
      %p153 = pneg %p74
      %p154 = pneg %p103
      %p155 = pneg %p100
      %p156 = scmp.lt.s32.totalorder %s14, 1
      %s157 = scalar_select %p156, %s14, 1
      %s158 = smul.addr %s157, 3
      %s159 = smul.addr %s158, 4
      %s160 = scalar_lea.vmem %s3, %s159
      %p161 = scmp.lt.s32.totalorder %s14, 1
      %s162 = scalar_select %p161, %s14, 1
      %s163 = smul.addr %s162, 5
      %s164 = smul.addr %s163, 4
      %s165 = scalar_lea.vmem %s0, %s164
      %p166 = scmp.lt.s32.totalorder %s14, 1
      %s167 = scalar_select %p166, %s14, 1
      %s168 = smul.addr %s167, 3
      %s169 = smul.addr %s168, 4
      %s170 = scalar_lea.vmem %s3, %s169
      %v172 = vld [vmem:[%s165] sm:$0xf]
      %v173 = vld [vmem:[%s165 + $0x4] sm:$0xf]
      %v174 = vld [vmem:[%s165 + $0x8] sm:$0xf]
      %v175 = vld [vmem:[%s1] sm:$0xf]
      %v176 = vld [vmem:[%s1 + $0x4] sm:$0xf]
      %v177 = vld [vmem:[%s1 + $0x8] sm:$0xf]
      %v178 = vld [vmem:[%s1 + $0xc] sm:$0xf]
      %v179 = vld [vmem:[%s1 + $0x10] sm:$0xf]
      %v180 = vld [vmem:[%s1 + $0x14] sm:$0xf]
      %v181 = vld [vmem:[%s1 + $0x18] sm:$0xf]
      %v182 = vld [vmem:[%s1 + $0x1c] sm:$0xf]
      %v183 = vld [vmem:[%s1 + $0x20] sm:$0xf]
      %v184 = vld [vmem:[%s1 + $0x24] sm:$0xf]
      %v185 = vld [vmem:[%s1 + $0x28] sm:$0xf]
      %v186 = vld [vmem:[%s1 + $0x2c] sm:$0xf]
      %v187 = vld [vmem:[%s1 + $0x30] sm:$0xf]
      %v188 = vld [vmem:[%s1 + $0x34] sm:$0xf]
      %v189 = vld [vmem:[%s1 + $0x38] sm:$0xf]
      %v190 = vld [vmem:[%s1 + $0x3c] sm:$0xf]
      %v191 = vld [vmem:[%s165 + $0xc] sm:$0x1]
      %s192 = scalar_lea.vmem %s1, 64
      %v193 = vld [vmem:[%s192] sm:$0xf]
      %v194 = vld [vmem:[%s192 + $0x4] sm:$0xf]
      %v195 = vld [vmem:[%s192 + $0x8] sm:$0xf]
      %v196 = vld [vmem:[%s192 + $0xc] sm:$0xf]
      %v197 = vld [vmem:[%s192 + $0x10] sm:$0xf]
      %v198 = vld [vmem:[%s192 + $0x14] sm:$0xf]
      %v199 = vld [vmem:[%s192 + $0x18] sm:$0xf]
      %v200 = vld [vmem:[%s192 + $0x1c] sm:$0xf]
      %v201 = vld [vmem:[%s192 + $0x20] sm:$0xf]
      %v202 = vld [vmem:[%s192 + $0x24] sm:$0xf]
      %v203 = vld [vmem:[%s192 + $0x28] sm:$0xf]
      %v204 = vld [vmem:[%s192 + $0x2c] sm:$0xf]
      %v205 = vld [vmem:[%s192 + $0x30] sm:$0xf]
      %v206 = vld [vmem:[%s192 + $0x34] sm:$0xf]
      %v207 = vld [vmem:[%s192 + $0x38] sm:$0xf]
      %v208 = vld [vmem:[%s192 + $0x3c] sm:$0xf]
      %v213 = vunpack.c.l.b16 %v172
      %v214 = vunpack.c.l.b16 %v173
      %v215 = vunpack.c.l.b16 %v174
      %v216 = vunpack.c.l.b16 %v191
      %v217 = vpack.c.b16 %v214, %v213
      %v218 = vpack.c.b16 %v216, %v215
      %vm219 = vsmask.f32 7424
      %v221 = vshrl.u32 %v217, 16
      %v223 = vshll.u32 %v217, 16
      %v225 = vrot.slane %v223, 1
      %v226 = vor.u32 %v221, %v225
      %v228 = vshll.u32 %v218, 16
      %v230 = vrot.slane %v228, 1
      %v231 = vsel %vm219, %v226, %v230
      %v232 = vshrl.u32 %v218, 16
      %v234 = vor.u32 %v232, %v230
      %v253 = vunpack.c.l.b16 %v193
      %v254 = vunpack.c.l.b16 %v194
      %v255 = vunpack.c.l.b16 %v195
      %v256 = vunpack.c.l.b16 %v196
      %v257 = vunpack.c.l.b16 %v197
      %v258 = vunpack.c.l.b16 %v198
      %v259 = vunpack.c.l.b16 %v199
      %v260 = vunpack.c.l.b16 %v200
      %v261 = vunpack.c.l.b16 %v201
      %v262 = vunpack.c.l.b16 %v202
      %v263 = vunpack.c.l.b16 %v203
      %v264 = vunpack.c.l.b16 %v204
      %v265 = vunpack.c.l.b16 %v205
      %v266 = vunpack.c.l.b16 %v206
      %v267 = vunpack.c.l.b16 %v207
      %v268 = vunpack.c.l.b16 %v208
      %v269 = vpack.c.b16 %v254, %v253
      %v270 = vpack.c.b16 %v256, %v255
      %v271 = vpack.c.b16 %v258, %v257
      %v272 = vpack.c.b16 %v260, %v259
      %v273 = vpack.c.b16 %v262, %v261
      %v274 = vpack.c.b16 %v264, %v263
      %v275 = vpack.c.b16 %v266, %v265
      %v276 = vpack.c.b16 %v268, %v267
      %285 = vmatprep.subr.bf16.mxu0 0
      %286 = vmatpush1.bf16.msra.mxu0 %v269
      %287 = vmatprep.subr.bf16.mxu0 0
      %288 = vmatpush1.bf16.msra.mxu0 %v270
      %289 = vmatprep.subr.bf16.mxu0 0
      %290 = vmatpush1.bf16.msra.mxu0 %v271
      %291 = vmatprep.subr.bf16.mxu0 0
      %292 = vmatpush1.bf16.msra.mxu0 %v272
      %293 = vmatprep.subr.bf16.mxu0 0
      %294 = vmatpush1.bf16.msra.mxu0 %v273
      %295 = vmatprep.subr.bf16.mxu0 0
      %296 = vmatpush1.bf16.msra.mxu0 %v274
      %297 = vmatprep.subr.bf16.mxu0 0
      %298 = vmatpush1.bf16.msra.mxu0 %v275
      %299 = vmatprep.subr.bf16.mxu0 0
      %300 = vmatpush1.bf16.msra.mxu0 %v276
      %301 = vmatprep.subr.bf16.mxu0 0
      %302 = vmatpush1.bf16.msra.mxu0 0
      %303 = vmatprep.subr.bf16.mxu0 0
      %304 = vmatpush1.bf16.msra.mxu0 0
      %305 = vmatprep.subr.bf16.mxu0 0
      %306 = vmatpush1.bf16.msra.mxu0 0
      %307 = vmatprep.subr.bf16.mxu0 0
      %308 = vmatpush1.bf16.msra.mxu0 0
      %309 = vmatprep.subr.bf16.mxu0 0
      %310 = vmatpush1.bf16.msra.mxu0 0
      %311 = vmatprep.subr.bf16.mxu0 0
      %312 = vmatpush1.bf16.msra.mxu0 0
      %313 = vmatprep.subr.bf16.mxu0 0
      %314 = vmatpush1.bf16.msra.mxu0 0
      %315 = vmatprep.subr.bf16.mxu0 0
      %316 = vmatpush1.bf16.msra.mxu0 0
      %317 = vmatprep.mubr.bf16.mxu0 0
      %318 = vmatmul.mubr.bf16.gmra.mrb[0].mxu0 %v231
      %v319 = vpop.f32.mrb[0].mxu0
      %v320 = vadd.f32 0.0, %v319
      %v321 = vpop.f32.mrb[0].mxu0
      %v322 = vpop.f32.mrb[0].mxu0
      %v323 = vadd.f32 0.0, %v322
      %v324 = vpop.f32.mrb[0].mxu0
      %325 = vmatprep.mubr.bf16.mxu0 0
      %326 = vmatmul.mubr.bf16.gmra.mrb[0].mxu0 %v234
      %v327 = vpop.f32.mrb[0].mxu0
      %v328 = vadd.f32 0.0, %v327
      %v329 = vpop.f32.mrb[0].mxu0
      %v330 = vpop.f32.mrb[0].mxu0
      %v331 = vpop.f32.mrb[0].mxu0
      %332 = vdwg.mxu0
      %v333 = vpack.c.b16 %v215, %v215
      %v352 = vunpack.c.l.b16 %v175
      %v353 = vunpack.c.l.b16 %v176
      %v354 = vunpack.c.l.b16 %v177
      %v355 = vunpack.c.l.b16 %v178
      %v356 = vunpack.c.l.b16 %v179
      %v357 = vunpack.c.l.b16 %v180
      %v358 = vunpack.c.l.b16 %v181
      %v359 = vunpack.c.l.b16 %v182
      %v360 = vunpack.c.l.b16 %v183
      %v361 = vunpack.c.l.b16 %v184
      %v362 = vunpack.c.l.b16 %v185
      %v363 = vunpack.c.l.b16 %v186
      %v364 = vunpack.c.l.b16 %v187
      %v365 = vunpack.c.l.b16 %v188
      %v366 = vunpack.c.l.b16 %v189
      %v367 = vunpack.c.l.b16 %v190
      %v368 = vpack.c.b16 %v353, %v352
      %v369 = vpack.c.b16 %v355, %v354
      %v370 = vpack.c.b16 %v357, %v356
      %v371 = vpack.c.b16 %v359, %v358
      %v372 = vpack.c.b16 %v361, %v360
      %v373 = vpack.c.b16 %v363, %v362
      %v374 = vpack.c.b16 %v365, %v364
      %v375 = vpack.c.b16 %v367, %v366
      %384 = vmatprep.subr.bf16.mxu0 0
      %385 = vmatpush1.bf16.msra.mxu0 %v368
      %386 = vmatprep.subr.bf16.mxu0 0
      %387 = vmatpush1.bf16.msra.mxu0 %v369
      %388 = vmatprep.subr.bf16.mxu0 0
      %389 = vmatpush1.bf16.msra.mxu0 %v370
      %390 = vmatprep.subr.bf16.mxu0 0
      %391 = vmatpush1.bf16.msra.mxu0 %v371
      %392 = vmatprep.subr.bf16.mxu0 0
      %393 = vmatpush1.bf16.msra.mxu0 %v372
      %394 = vmatprep.subr.bf16.mxu0 0
      %395 = vmatpush1.bf16.msra.mxu0 %v373
      %396 = vmatprep.subr.bf16.mxu0 0
      %397 = vmatpush1.bf16.msra.mxu0 %v374
      %398 = vmatprep.subr.bf16.mxu0 0
      %399 = vmatpush1.bf16.msra.mxu0 %v375
      %400 = vmatprep.subr.bf16.mxu0 0
      %401 = vmatpush1.bf16.msra.mxu0 0
      %402 = vmatprep.subr.bf16.mxu0 0
      %403 = vmatpush1.bf16.msra.mxu0 0
      %404 = vmatprep.subr.bf16.mxu0 0
      %405 = vmatpush1.bf16.msra.mxu0 0
      %406 = vmatprep.subr.bf16.mxu0 0
      %407 = vmatpush1.bf16.msra.mxu0 0
      %408 = vmatprep.subr.bf16.mxu0 0
      %409 = vmatpush1.bf16.msra.mxu0 0
      %410 = vmatprep.subr.bf16.mxu0 0
      %411 = vmatpush1.bf16.msra.mxu0 0
      %412 = vmatprep.subr.bf16.mxu0 0
      %413 = vmatpush1.bf16.msra.mxu0 0
      %414 = vmatprep.subr.bf16.mxu0 0
      %415 = vmatpush1.bf16.msra.mxu0 0
      %416 = vmatprep.mubr.bf16.mxu0 0
      %417 = vmatmul.mubr.bf16.gmra.mrb[0].mxu0 %v217
      %v418 = vpop.f32.mrb[0].mxu0
      %v419 = vadd.f32 %v320, %v418
      %v420 = vpop.f32.mrb[0].mxu0
      %v421 = vpop.f32.mrb[0].mxu0
      %v422 = vadd.f32 %v323, %v421
      %v423 = vpop.f32.mrb[0].mxu0
      %424 = vmatprep.mubr.bf16.mxu0 0
      %425 = vmatmul.mubr.bf16.gmra.mrb[0].mxu0 %v333
      %v426 = vpop.f32.mrb[0].mxu0
      %v427 = vadd.f32 %v328, %v426
      %v428 = vpop.f32.mrb[0].mxu0
      %v429 = vpop.f32.mrb[0].mxu0
      %v430 = vpop.f32.mrb[0].mxu0
      %431 = vdwg.mxu0
      %v432 = vld [vmem:[%s165] sm:$0xe]
      %s433 = scalar_lea.vmem %s1, 128
      %v434 = vld [vmem:[%s433] sm:$0xf]
      %v435 = vld [vmem:[%s433 + $0x4] sm:$0xf]
      %v436 = vld [vmem:[%s433 + $0x8] sm:$0xf]
      %v437 = vld [vmem:[%s433 + $0xc] sm:$0xf]
      %v438 = vld [vmem:[%s433 + $0x10] sm:$0xf]
      %v439 = vld [vmem:[%s433 + $0x14] sm:$0xf]
      %v440 = vld [vmem:[%s433 + $0x18] sm:$0xf]
      %v441 = vld [vmem:[%s433 + $0x1c] sm:$0xf]
      %v442 = vld [vmem:[%s433 + $0x20] sm:$0xf]
      %v443 = vld [vmem:[%s433 + $0x24] sm:$0xf]
      %v444 = vld [vmem:[%s433 + $0x28] sm:$0xf]
      %v445 = vld [vmem:[%s433 + $0x2c] sm:$0xf]
      %v446 = vld [vmem:[%s433 + $0x30] sm:$0xf]
      %v447 = vld [vmem:[%s433 + $0x34] sm:$0xf]
      %v448 = vld [vmem:[%s433 + $0x38] sm:$0xf]
      %v449 = vld [vmem:[%s433 + $0x3c] sm:$0xf]
      %v451 = vunpack.c.l.b16 %v432
      %v452 = vpack.c.b16 %v214, %v451
      %vm453 = vcmask 1046528
      %v454 = vrot.slane %v452, 1
      %v455 = vrot.slane %v218, 1
      %v456 = vsel %vm453, %v454, %v455
      %v475 = vunpack.c.l.b16 %v434
      %v476 = vunpack.c.l.b16 %v435
      %v477 = vunpack.c.l.b16 %v436
      %v478 = vunpack.c.l.b16 %v437
      %v479 = vunpack.c.l.b16 %v438
      %v480 = vunpack.c.l.b16 %v439
      %v481 = vunpack.c.l.b16 %v440
      %v482 = vunpack.c.l.b16 %v441
      %v483 = vunpack.c.l.b16 %v442
      %v484 = vunpack.c.l.b16 %v443
      %v485 = vunpack.c.l.b16 %v444
      %v486 = vunpack.c.l.b16 %v445
      %v487 = vunpack.c.l.b16 %v446
      %v488 = vunpack.c.l.b16 %v447
      %v489 = vunpack.c.l.b16 %v448
      %v490 = vunpack.c.l.b16 %v449
      %v491 = vpack.c.b16 %v476, %v475
      %v492 = vpack.c.b16 %v478, %v477
      %v493 = vpack.c.b16 %v480, %v479
      %v494 = vpack.c.b16 %v482, %v481
      %v495 = vpack.c.b16 %v484, %v483
      %v496 = vpack.c.b16 %v486, %v485
      %v497 = vpack.c.b16 %v488, %v487
      %v498 = vpack.c.b16 %v490, %v489
      %507 = vmatprep.subr.bf16.mxu0 0
      %508 = vmatpush1.bf16.msra.mxu0 %v491
      %509 = vmatprep.subr.bf16.mxu0 0
      %510 = vmatpush1.bf16.msra.mxu0 %v492
      %511 = vmatprep.subr.bf16.mxu0 0
      %512 = vmatpush1.bf16.msra.mxu0 %v493
      %513 = vmatprep.subr.bf16.mxu0 0
      %514 = vmatpush1.bf16.msra.mxu0 %v494
      %515 = vmatprep.subr.bf16.mxu0 0
      %516 = vmatpush1.bf16.msra.mxu0 %v495
      %517 = vmatprep.subr.bf16.mxu0 0
      %518 = vmatpush1.bf16.msra.mxu0 %v496
      %519 = vmatprep.subr.bf16.mxu0 0
      %520 = vmatpush1.bf16.msra.mxu0 %v497
      %521 = vmatprep.subr.bf16.mxu0 0
      %522 = vmatpush1.bf16.msra.mxu0 %v498
      %523 = vmatprep.subr.bf16.mxu0 0
      %524 = vmatpush1.bf16.msra.mxu0 0
      %525 = vmatprep.subr.bf16.mxu0 0
      %526 = vmatpush1.bf16.msra.mxu0 0
      %527 = vmatprep.subr.bf16.mxu0 0
      %528 = vmatpush1.bf16.msra.mxu0 0
      %529 = vmatprep.subr.bf16.mxu0 0
      %530 = vmatpush1.bf16.msra.mxu0 0
      %531 = vmatprep.subr.bf16.mxu0 0
      %532 = vmatpush1.bf16.msra.mxu0 0
      %533 = vmatprep.subr.bf16.mxu0 0
      %534 = vmatpush1.bf16.msra.mxu0 0
      %535 = vmatprep.subr.bf16.mxu0 0
      %536 = vmatpush1.bf16.msra.mxu0 0
      %537 = vmatprep.subr.bf16.mxu0 0
      %538 = vmatpush1.bf16.msra.mxu0 0
      %539 = vmatprep.mubr.bf16.mxu0 0
      %540 = vmatmul.mubr.bf16.gmra.mrb[0].mxu0 %v456
      %v541 = vpop.f32.mrb[0].mxu0
      %v542 = vadd.f32 0.0, %v541
      %v543 = vpop.f32.mrb[0].mxu0
      %v544 = vpop.f32.mrb[0].mxu0
      %v545 = vadd.f32 0.0, %v544
      %v546 = vpop.f32.mrb[0].mxu0
      %547 = vmatprep.mubr.bf16.mxu0 0
      %548 = vmatmul.mubr.bf16.gmra.mrb[0].mxu0 %v455
      %v549 = vpop.f32.mrb[0].mxu0
      %v550 = vadd.f32 0.0, %v549
      %v551 = vpop.f32.mrb[0].mxu0
      %v552 = vpop.f32.mrb[0].mxu0
      %v553 = vpop.f32.mrb[0].mxu0
      %554 = vdwg.mxu0
      %v555 = vadd.f32 %v419, %v542
      %v556 = vadd.f32 %v422, %v545
      %v557 = vadd.f32 %v427, %v550
      %v558 = vld [vmem:[%s165] sm:$0x8]
      %v559 = vld [vmem:[%s165 + $0xc] sm:$0x7]
      %s560 = scalar_lea.vmem %s1, 192
      %v561 = vld [vmem:[%s560] sm:$0xf]
      %v562 = vld [vmem:[%s560 + $0x4] sm:$0xf]
      %v563 = vld [vmem:[%s560 + $0x8] sm:$0xf]
      %v564 = vld [vmem:[%s560 + $0xc] sm:$0xf]
      %v565 = vld [vmem:[%s560 + $0x10] sm:$0xf]
      %v566 = vld [vmem:[%s560 + $0x14] sm:$0xf]
      %v567 = vld [vmem:[%s560 + $0x18] sm:$0xf]
      %v568 = vld [vmem:[%s560 + $0x1c] sm:$0xf]
      %v569 = vld [vmem:[%s560 + $0x20] sm:$0xf]
      %v570 = vld [vmem:[%s560 + $0x24] sm:$0xf]
      %v571 = vld [vmem:[%s560 + $0x28] sm:$0xf]
      %v572 = vld [vmem:[%s560 + $0x2c] sm:$0xf]
      %v573 = vld [vmem:[%s560 + $0x30] sm:$0xf]
      %v574 = vld [vmem:[%s560 + $0x34] sm:$0xf]
      %v575 = vld [vmem:[%s560 + $0x38] sm:$0xf]
      %v576 = vld [vmem:[%s560 + $0x3c] sm:$0xf]
      %v579 = vunpack.c.l.b16 %v558
      %v580 = vunpack.c.l.b16 %v559
      %v581 = vpack.c.b16 %v214, %v579
      %v582 = vpack.c.b16 %v580, %v215
      %vm583 = vcmask 1044480
      %v584 = vrot.slane %v581, 3
      %v585 = vrot.slane %v582, 3
      %v586 = vsel %vm583, %v584, %v585
      %v605 = vunpack.c.l.b16 %v561
      %v606 = vunpack.c.l.b16 %v562
      %v607 = vunpack.c.l.b16 %v563
      %v608 = vunpack.c.l.b16 %v564
      %v609 = vunpack.c.l.b16 %v565
      %v610 = vunpack.c.l.b16 %v566
      %v611 = vunpack.c.l.b16 %v567
      %v612 = vunpack.c.l.b16 %v568
      %v613 = vunpack.c.l.b16 %v569
      %v614 = vunpack.c.l.b16 %v570
      %v615 = vunpack.c.l.b16 %v571
      %v616 = vunpack.c.l.b16 %v572
      %v617 = vunpack.c.l.b16 %v573
      %v618 = vunpack.c.l.b16 %v574
      %v619 = vunpack.c.l.b16 %v575
      %v620 = vunpack.c.l.b16 %v576
      %v621 = vpack.c.b16 %v606, %v605
      %v622 = vpack.c.b16 %v608, %v607
      %v623 = vpack.c.b16 %v610, %v609
      %v624 = vpack.c.b16 %v612, %v611
      %v625 = vpack.c.b16 %v614, %v613
      %v626 = vpack.c.b16 %v616, %v615
      %v627 = vpack.c.b16 %v618, %v617
      %v628 = vpack.c.b16 %v620, %v619
      %637 = vmatprep.subr.bf16.mxu0 0
      %638 = vmatpush1.bf16.msra.mxu0 %v621
      %639 = vmatprep.subr.bf16.mxu0 0
      %640 = vmatpush1.bf16.msra.mxu0 %v622
      %641 = vmatprep.subr.bf16.mxu0 0
      %642 = vmatpush1.bf16.msra.mxu0 %v623
      %643 = vmatprep.subr.bf16.mxu0 0
      %644 = vmatpush1.bf16.msra.mxu0 %v624
      %645 = vmatprep.subr.bf16.mxu0 0
      %646 = vmatpush1.bf16.msra.mxu0 %v625
      %647 = vmatprep.subr.bf16.mxu0 0
      %648 = vmatpush1.bf16.msra.mxu0 %v626
      %649 = vmatprep.subr.bf16.mxu0 0
      %650 = vmatpush1.bf16.msra.mxu0 %v627
      %651 = vmatprep.subr.bf16.mxu0 0
      %652 = vmatpush1.bf16.msra.mxu0 %v628
      %653 = vmatprep.subr.bf16.mxu0 0
      %654 = vmatpush1.bf16.msra.mxu0 0
      %655 = vmatprep.subr.bf16.mxu0 0
      %656 = vmatpush1.bf16.msra.mxu0 0
      %657 = vmatprep.subr.bf16.mxu0 0
      %658 = vmatpush1.bf16.msra.mxu0 0
      %659 = vmatprep.subr.bf16.mxu0 0
      %660 = vmatpush1.bf16.msra.mxu0 0
      %661 = vmatprep.subr.bf16.mxu0 0
      %662 = vmatpush1.bf16.msra.mxu0 0
      %663 = vmatprep.subr.bf16.mxu0 0
      %664 = vmatpush1.bf16.msra.mxu0 0
      %665 = vmatprep.subr.bf16.mxu0 0
      %666 = vmatpush1.bf16.msra.mxu0 0
      %667 = vmatprep.subr.bf16.mxu0 0
      %668 = vmatpush1.bf16.msra.mxu0 0
      %669 = vmatprep.mubr.bf16.mxu0 0
      %670 = vmatmul.mubr.bf16.gmra.mrb[0].mxu0 %v586
      %v671 = vpop.f32.mrb[0].mxu0
      %v672 = vadd.f32 0.0, %v671
      %v673 = vpop.f32.mrb[0].mxu0
      %v674 = vpop.f32.mrb[0].mxu0
      %v675 = vadd.f32 0.0, %v674
      %v676 = vpop.f32.mrb[0].mxu0
      %677 = vmatprep.mubr.bf16.mxu0 0
      %678 = vmatmul.mubr.bf16.gmra.mrb[0].mxu0 %v585
      %v679 = vpop.f32.mrb[0].mxu0
      %v680 = vadd.f32 0.0, %v679
      %v681 = vpop.f32.mrb[0].mxu0
      %v682 = vpop.f32.mrb[0].mxu0
      %v683 = vpop.f32.mrb[0].mxu0
      %684 = vdwg.mxu0
      %v685 = vadd.f32 %v555, %v672
      %v686 = vadd.f32 %v556, %v675
      %v687 = vadd.f32 %v557, %v680
      %v688 = vld [vmem:[%s165 + $0xc] sm:$0xf]
      %s689 = scalar_lea.vmem %s1, 256
      %v690 = vld [vmem:[%s689] sm:$0xf]
      %v691 = vld [vmem:[%s689 + $0x4] sm:$0xf]
      %v692 = vld [vmem:[%s689 + $0x8] sm:$0xf]
      %v693 = vld [vmem:[%s689 + $0xc] sm:$0xf]
      %v694 = vld [vmem:[%s689 + $0x10] sm:$0xf]
      %v695 = vld [vmem:[%s689 + $0x14] sm:$0xf]
      %v696 = vld [vmem:[%s689 + $0x18] sm:$0xf]
      %v697 = vld [vmem:[%s689 + $0x1c] sm:$0xf]
      %v698 = vld [vmem:[%s689 + $0x20] sm:$0xf]
      %v699 = vld [vmem:[%s689 + $0x24] sm:$0xf]
      %v700 = vld [vmem:[%s689 + $0x28] sm:$0xf]
      %v701 = vld [vmem:[%s689 + $0x2c] sm:$0xf]
      %v702 = vld [vmem:[%s689 + $0x30] sm:$0xf]
      %v703 = vld [vmem:[%s689 + $0x34] sm:$0xf]
      %v704 = vld [vmem:[%s689 + $0x38] sm:$0xf]
      %v705 = vld [vmem:[%s689 + $0x3c] sm:$0xf]
      %v707 = vunpack.c.l.b16 %v688
      %v708 = vpack.c.b16 %v707, %v215
      %vm709 = vsmask.f32 4352
      %v711 = vshrl.u32 %v581, 16
      %v713 = vrot.slane %v711, 3
      %v714 = vshll.u32 %v581, 16
      %v716 = vrot.slane %v714, 4
      %v717 = vor.u32 %v713, %v716
      %v719 = vshrl.u32 %v708, 16
      %v721 = vrot.slane %v719, 3
      %v722 = vshll.u32 %v708, 16
      %v724 = vrot.slane %v722, 4
      %v725 = vor.u32 %v721, %v724
      %v726 = vsel %vm709, %v717, %v725
      %v745 = vunpack.c.l.b16 %v690
      %v746 = vunpack.c.l.b16 %v691
      %v747 = vunpack.c.l.b16 %v692
      %v748 = vunpack.c.l.b16 %v693
      %v749 = vunpack.c.l.b16 %v694
      %v750 = vunpack.c.l.b16 %v695
      %v751 = vunpack.c.l.b16 %v696
      %v752 = vunpack.c.l.b16 %v697
      %v753 = vunpack.c.l.b16 %v698
      %v754 = vunpack.c.l.b16 %v699
      %v755 = vunpack.c.l.b16 %v700
      %v756 = vunpack.c.l.b16 %v701
      %v757 = vunpack.c.l.b16 %v702
      %v758 = vunpack.c.l.b16 %v703
      %v759 = vunpack.c.l.b16 %v704
      %v760 = vunpack.c.l.b16 %v705
      %v761 = vpack.c.b16 %v746, %v745
      %v762 = vpack.c.b16 %v748, %v747
      %v763 = vpack.c.b16 %v750, %v749
      %v764 = vpack.c.b16 %v752, %v751
      %v765 = vpack.c.b16 %v754, %v753
      %v766 = vpack.c.b16 %v756, %v755
      %v767 = vpack.c.b16 %v758, %v757
      %v768 = vpack.c.b16 %v760, %v759
      %777 = vmatprep.subr.bf16.mxu0 0
      %778 = vmatpush1.bf16.msra.mxu0 %v761
      %779 = vmatprep.subr.bf16.mxu0 0
      %780 = vmatpush1.bf16.msra.mxu0 %v762
      %781 = vmatprep.subr.bf16.mxu0 0
      %782 = vmatpush1.bf16.msra.mxu0 %v763
      %783 = vmatprep.subr.bf16.mxu0 0
      %784 = vmatpush1.bf16.msra.mxu0 %v764
      %785 = vmatprep.subr.bf16.mxu0 0
      %786 = vmatpush1.bf16.msra.mxu0 %v765
      %787 = vmatprep.subr.bf16.mxu0 0
      %788 = vmatpush1.bf16.msra.mxu0 %v766
      %789 = vmatprep.subr.bf16.mxu0 0
      %790 = vmatpush1.bf16.msra.mxu0 %v767
      %791 = vmatprep.subr.bf16.mxu0 0
      %792 = vmatpush1.bf16.msra.mxu0 %v768
      %793 = vmatprep.subr.bf16.mxu0 0
      %794 = vmatpush1.bf16.msra.mxu0 0
      %795 = vmatprep.subr.bf16.mxu0 0
      %796 = vmatpush1.bf16.msra.mxu0 0
      %797 = vmatprep.subr.bf16.mxu0 0
      %798 = vmatpush1.bf16.msra.mxu0 0
      %799 = vmatprep.subr.bf16.mxu0 0
      %800 = vmatpush1.bf16.msra.mxu0 0
      %801 = vmatprep.subr.bf16.mxu0 0
      %802 = vmatpush1.bf16.msra.mxu0 0
      %803 = vmatprep.subr.bf16.mxu0 0
      %804 = vmatpush1.bf16.msra.mxu0 0
      %805 = vmatprep.subr.bf16.mxu0 0
      %806 = vmatpush1.bf16.msra.mxu0 0
      %807 = vmatprep.subr.bf16.mxu0 0
      %808 = vmatpush1.bf16.msra.mxu0 0
      %809 = vmatprep.mubr.bf16.mxu0 0
      %810 = vmatmul.mubr.bf16.gmra.mrb[0].mxu0 %v726
      %v811 = vpop.f32.mrb[0].mxu0
      %v812 = vadd.f32 0.0, %v811
      %v813 = vpop.f32.mrb[0].mxu0
      %v814 = vpop.f32.mrb[0].mxu0
      %v815 = vadd.f32 0.0, %v814
      %v816 = vpop.f32.mrb[0].mxu0
      %817 = vmatprep.mubr.bf16.mxu0 0
      %818 = vmatmul.mubr.bf16.gmra.mrb[0].mxu0 %v725
      %v819 = vpop.f32.mrb[0].mxu0
      %v820 = vadd.f32 0.0, %v819
      %v821 = vpop.f32.mrb[0].mxu0
      %v822 = vpop.f32.mrb[0].mxu0
      %v823 = vpop.f32.mrb[0].mxu0
      %824 = vdwg.mxu0
      %v825 = vadd.f32 %v685, %v812
      %v826 = vadd.f32 %v686, %v815
      %v827 = vadd.f32 %v687, %v820
      %s828 = scalar_lea.vmem %s1, 320
      %v829 = vld [vmem:[%s828] sm:$0xf]
      %v830 = vld [vmem:[%s828 + $0x4] sm:$0xf]
      %v831 = vld [vmem:[%s828 + $0x8] sm:$0xf]
      %v832 = vld [vmem:[%s828 + $0xc] sm:$0xf]
      %v833 = vld [vmem:[%s828 + $0x10] sm:$0xf]
      %v834 = vld [vmem:[%s828 + $0x14] sm:$0xf]
      %v835 = vld [vmem:[%s828 + $0x18] sm:$0xf]
      %v836 = vld [vmem:[%s828 + $0x1c] sm:$0xf]
      %v837 = vld [vmem:[%s828 + $0x20] sm:$0xf]
      %v838 = vld [vmem:[%s828 + $0x24] sm:$0xf]
      %v839 = vld [vmem:[%s828 + $0x28] sm:$0xf]
      %v840 = vld [vmem:[%s828 + $0x2c] sm:$0xf]
      %v841 = vld [vmem:[%s828 + $0x30] sm:$0xf]
      %v842 = vld [vmem:[%s828 + $0x34] sm:$0xf]
      %v843 = vld [vmem:[%s828 + $0x38] sm:$0xf]
      %v844 = vld [vmem:[%s828 + $0x3c] sm:$0xf]
      %v845 = vpack.c.b16 %v215, %v214
      %v846 = vpack.c.b16 %v707, %v707
      %v865 = vunpack.c.l.b16 %v829
      %v866 = vunpack.c.l.b16 %v830
      %v867 = vunpack.c.l.b16 %v831
      %v868 = vunpack.c.l.b16 %v832
      %v869 = vunpack.c.l.b16 %v833
      %v870 = vunpack.c.l.b16 %v834
      %v871 = vunpack.c.l.b16 %v835
      %v872 = vunpack.c.l.b16 %v836
      %v873 = vunpack.c.l.b16 %v837
      %v874 = vunpack.c.l.b16 %v838
      %v875 = vunpack.c.l.b16 %v839
      %v876 = vunpack.c.l.b16 %v840
      %v877 = vunpack.c.l.b16 %v841
      %v878 = vunpack.c.l.b16 %v842
      %v879 = vunpack.c.l.b16 %v843
      %v880 = vunpack.c.l.b16 %v844
      %v881 = vpack.c.b16 %v866, %v865
      %v882 = vpack.c.b16 %v868, %v867
      %v883 = vpack.c.b16 %v870, %v869
      %v884 = vpack.c.b16 %v872, %v871
      %v885 = vpack.c.b16 %v874, %v873
      %v886 = vpack.c.b16 %v876, %v875
      %v887 = vpack.c.b16 %v878, %v877
      %v888 = vpack.c.b16 %v880, %v879
      %897 = vmatprep.subr.bf16.mxu0 0
      %898 = vmatpush1.bf16.msra.mxu0 %v881
      %899 = vmatprep.subr.bf16.mxu0 0
      %900 = vmatpush1.bf16.msra.mxu0 %v882
      %901 = vmatprep.subr.bf16.mxu0 0
      %902 = vmatpush1.bf16.msra.mxu0 %v883
      %903 = vmatprep.subr.bf16.mxu0 0
      %904 = vmatpush1.bf16.msra.mxu0 %v884
      %905 = vmatprep.subr.bf16.mxu0 0
      %906 = vmatpush1.bf16.msra.mxu0 %v885
      %907 = vmatprep.subr.bf16.mxu0 0
      %908 = vmatpush1.bf16.msra.mxu0 %v886
      %909 = vmatprep.subr.bf16.mxu0 0
      %910 = vmatpush1.bf16.msra.mxu0 %v887
      %911 = vmatprep.subr.bf16.mxu0 0
      %912 = vmatpush1.bf16.msra.mxu0 %v888
      %913 = vmatprep.subr.bf16.mxu0 0
      %914 = vmatpush1.bf16.msra.mxu0 0
      %915 = vmatprep.subr.bf16.mxu0 0
      %916 = vmatpush1.bf16.msra.mxu0 0
      %917 = vmatprep.subr.bf16.mxu0 0
      %918 = vmatpush1.bf16.msra.mxu0 0
      %919 = vmatprep.subr.bf16.mxu0 0
      %920 = vmatpush1.bf16.msra.mxu0 0
      %921 = vmatprep.subr.bf16.mxu0 0
      %922 = vmatpush1.bf16.msra.mxu0 0
      %923 = vmatprep.subr.bf16.mxu0 0
      %924 = vmatpush1.bf16.msra.mxu0 0
      %925 = vmatprep.subr.bf16.mxu0 0
      %926 = vmatpush1.bf16.msra.mxu0 0
      %927 = vmatprep.subr.bf16.mxu0 0
      %928 = vmatpush1.bf16.msra.mxu0 0
      %929 = vmatprep.mubr.bf16.mxu0 0
      %930 = vmatmul.mubr.bf16.gmra.mrb[0].mxu0 %v845
      %v931 = vpop.f32.mrb[0].mxu0
      %v932 = vadd.f32 0.0, %v931
      %v933 = vpop.f32.mrb[0].mxu0
      %v934 = vpop.f32.mrb[0].mxu0
      %v935 = vadd.f32 0.0, %v934
      %v936 = vpop.f32.mrb[0].mxu0
      %937 = vmatprep.mubr.bf16.mxu0 0
      %938 = vmatmul.mubr.bf16.gmra.mrb[0].mxu0 %v846
      %v939 = vpop.f32.mrb[0].mxu0
      %v940 = vadd.f32 0.0, %v939
      %v941 = vpop.f32.mrb[0].mxu0
      %v942 = vpop.f32.mrb[0].mxu0
      %v943 = vpop.f32.mrb[0].mxu0
      %944 = vdwg.mxu0
      %v945 = vadd.f32 %v825, %v932
      %v946 = vadd.f32 %v826, %v935
      %v947 = vadd.f32 %v827, %v940
      %v948 = vld [vmem:[%s165 + $0x4] sm:$0xc]
      %v949 = vld [vmem:[%s165 + $0x8] sm:$0xf]
      %v950 = vld [vmem:[%s165 + $0xc] sm:$0xf]
      %v951 = vld [vmem:[%s165 + $0x10] sm:$0x3]
      %s952 = scalar_lea.vmem %s1, 384
      %v953 = vld [vmem:[%s952] sm:$0xf]
      %v954 = vld [vmem:[%s952 + $0x4] sm:$0xf]
      %v955 = vld [vmem:[%s952 + $0x8] sm:$0xf]
      %v956 = vld [vmem:[%s952 + $0xc] sm:$0xf]
      %v957 = vld [vmem:[%s952 + $0x10] sm:$0xf]
      %v958 = vld [vmem:[%s952 + $0x14] sm:$0xf]
      %v959 = vld [vmem:[%s952 + $0x18] sm:$0xf]
      %v960 = vld [vmem:[%s952 + $0x1c] sm:$0xf]
      %v961 = vld [vmem:[%s952 + $0x20] sm:$0xf]
      %v962 = vld [vmem:[%s952 + $0x24] sm:$0xf]
      %v963 = vld [vmem:[%s952 + $0x28] sm:$0xf]
      %v964 = vld [vmem:[%s952 + $0x2c] sm:$0xf]
      %v965 = vld [vmem:[%s952 + $0x30] sm:$0xf]
      %v966 = vld [vmem:[%s952 + $0x34] sm:$0xf]
      %v967 = vld [vmem:[%s952 + $0x38] sm:$0xf]
      %v968 = vld [vmem:[%s952 + $0x3c] sm:$0xf]
      %v973 = vunpack.c.l.b16 %v948
      %v974 = vunpack.c.l.b16 %v949
      %v975 = vunpack.c.l.b16 %v950
      %v976 = vunpack.c.l.b16 %v951
      %v977 = vpack.c.b16 %v974, %v973
      %v978 = vpack.c.b16 %v976, %v975
      %vm979 = vcmask 1045504
      %v980 = vrot.slane %v977, 2
      %v981 = vrot.slane %v978, 2
      %v982 = vsel %vm979, %v980, %v981
      %v1001 = vunpack.c.l.b16 %v953
      %v1002 = vunpack.c.l.b16 %v954
      %v1003 = vunpack.c.l.b16 %v955
      %v1004 = vunpack.c.l.b16 %v956
      %v1005 = vunpack.c.l.b16 %v957
      %v1006 = vunpack.c.l.b16 %v958
      %v1007 = vunpack.c.l.b16 %v959
      %v1008 = vunpack.c.l.b16 %v960
      %v1009 = vunpack.c.l.b16 %v961
      %v1010 = vunpack.c.l.b16 %v962
      %v1011 = vunpack.c.l.b16 %v963
      %v1012 = vunpack.c.l.b16 %v964
      %v1013 = vunpack.c.l.b16 %v965
      %v1014 = vunpack.c.l.b16 %v966
      %v1015 = vunpack.c.l.b16 %v967
      %v1016 = vunpack.c.l.b16 %v968
      %v1017 = vpack.c.b16 %v1002, %v1001
      %v1018 = vpack.c.b16 %v1004, %v1003
      %v1019 = vpack.c.b16 %v1006, %v1005
      %v1020 = vpack.c.b16 %v1008, %v1007
      %v1021 = vpack.c.b16 %v1010, %v1009
      %v1022 = vpack.c.b16 %v1012, %v1011
      %v1023 = vpack.c.b16 %v1014, %v1013
      %v1024 = vpack.c.b16 %v1016, %v1015
      %1033 = vmatprep.subr.bf16.mxu0 0
      %1034 = vmatpush1.bf16.msra.mxu0 %v1017
      %1035 = vmatprep.subr.bf16.mxu0 0
      %1036 = vmatpush1.bf16.msra.mxu0 %v1018
      %1037 = vmatprep.subr.bf16.mxu0 0
      %1038 = vmatpush1.bf16.msra.mxu0 %v1019
      %1039 = vmatprep.subr.bf16.mxu0 0
      %1040 = vmatpush1.bf16.msra.mxu0 %v1020
      %1041 = vmatprep.subr.bf16.mxu0 0
      %1042 = vmatpush1.bf16.msra.mxu0 %v1021
      %1043 = vmatprep.subr.bf16.mxu0 0
      %1044 = vmatpush1.bf16.msra.mxu0 %v1022
      %1045 = vmatprep.subr.bf16.mxu0 0
      %1046 = vmatpush1.bf16.msra.mxu0 %v1023
      %1047 = vmatprep.subr.bf16.mxu0 0
      %1048 = vmatpush1.bf16.msra.mxu0 %v1024
      %1049 = vmatprep.subr.bf16.mxu0 0
      %1050 = vmatpush1.bf16.msra.mxu0 0
      %1051 = vmatprep.subr.bf16.mxu0 0
      %1052 = vmatpush1.bf16.msra.mxu0 0
      %1053 = vmatprep.subr.bf16.mxu0 0
      %1054 = vmatpush1.bf16.msra.mxu0 0
      %1055 = vmatprep.subr.bf16.mxu0 0
      %1056 = vmatpush1.bf16.msra.mxu0 0
      %1057 = vmatprep.subr.bf16.mxu0 0
      %1058 = vmatpush1.bf16.msra.mxu0 0
      %1059 = vmatprep.subr.bf16.mxu0 0
      %1060 = vmatpush1.bf16.msra.mxu0 0
      %1061 = vmatprep.subr.bf16.mxu0 0
      %1062 = vmatpush1.bf16.msra.mxu0 0
      %1063 = vmatprep.subr.bf16.mxu0 0
      %1064 = vmatpush1.bf16.msra.mxu0 0
      %1065 = vmatprep.mubr.bf16.mxu0 0
      %1066 = vmatmul.mubr.bf16.gmra.mrb[0].mxu0 %v982
      %v1067 = vpop.f32.mrb[0].mxu0
      %v1068 = vadd.f32 0.0, %v1067
      %v1069 = vpop.f32.mrb[0].mxu0
      %v1070 = vpop.f32.mrb[0].mxu0
      %v1071 = vadd.f32 0.0, %v1070
      %v1072 = vpop.f32.mrb[0].mxu0
      %1073 = vmatprep.mubr.bf16.mxu0 0
      %1074 = vmatmul.mubr.bf16.gmra.mrb[0].mxu0 %v981
      %v1075 = vpop.f32.mrb[0].mxu0
      %v1076 = vadd.f32 0.0, %v1075
      %v1077 = vpop.f32.mrb[0].mxu0
      %v1078 = vpop.f32.mrb[0].mxu0
      %v1079 = vpop.f32.mrb[0].mxu0
      %1080 = vdwg.mxu0
      %v1081 = vadd.f32 %v945, %v1068
      %v1082 = vadd.f32 %v946, %v1071
      %v1083 = vadd.f32 %v947, %v1076
      %v1084 = vld [vmem:[%s165 + $0x10] sm:$0x7]
      %s1085 = scalar_lea.vmem %s1, 448
      %v1086 = vld [vmem:[%s1085] sm:$0xf]
      %v1087 = vld [vmem:[%s1085 + $0x4] sm:$0xf]
      %v1088 = vld [vmem:[%s1085 + $0x8] sm:$0xf]
      %v1089 = vld [vmem:[%s1085 + $0xc] sm:$0xf]
      %v1090 = vld [vmem:[%s1085 + $0x10] sm:$0xf]
      %v1091 = vld [vmem:[%s1085 + $0x14] sm:$0xf]
      %v1092 = vld [vmem:[%s1085 + $0x18] sm:$0xf]
      %v1093 = vld [vmem:[%s1085 + $0x1c] sm:$0xf]
      %v1094 = vld [vmem:[%s1085 + $0x20] sm:$0xf]
      %v1095 = vld [vmem:[%s1085 + $0x24] sm:$0xf]
      %v1096 = vld [vmem:[%s1085 + $0x28] sm:$0xf]
      %v1097 = vld [vmem:[%s1085 + $0x2c] sm:$0xf]
      %v1098 = vld [vmem:[%s1085 + $0x30] sm:$0xf]
      %v1099 = vld [vmem:[%s1085 + $0x34] sm:$0xf]
      %v1100 = vld [vmem:[%s1085 + $0x38] sm:$0xf]
      %v1101 = vld [vmem:[%s1085 + $0x3c] sm:$0xf]
      %v1103 = vunpack.c.l.b16 %v1084
      %v1104 = vpack.c.b16 %v1103, %v975
      %vm1105 = vsmask.f32 5376
      %v1107 = vshrl.u32 %v977, 16
      %v1109 = vrot.slane %v1107, 2
      %v1110 = vshll.u32 %v977, 16
      %v1112 = vrot.slane %v1110, 3
      %v1113 = vor.u32 %v1109, %v1112
      %v1115 = vshrl.u32 %v1104, 16
      %v1117 = vrot.slane %v1115, 2
      %v1118 = vshll.u32 %v1104, 16
      %v1120 = vrot.slane %v1118, 3
      %v1121 = vor.u32 %v1117, %v1120
      %v1122 = vsel %vm1105, %v1113, %v1121
      %v1141 = vunpack.c.l.b16 %v1086
      %v1142 = vunpack.c.l.b16 %v1087
      %v1143 = vunpack.c.l.b16 %v1088
      %v1144 = vunpack.c.l.b16 %v1089
      %v1145 = vunpack.c.l.b16 %v1090
      %v1146 = vunpack.c.l.b16 %v1091
      %v1147 = vunpack.c.l.b16 %v1092
      %v1148 = vunpack.c.l.b16 %v1093
      %v1149 = vunpack.c.l.b16 %v1094
      %v1150 = vunpack.c.l.b16 %v1095
      %v1151 = vunpack.c.l.b16 %v1096
      %v1152 = vunpack.c.l.b16 %v1097
      %v1153 = vunpack.c.l.b16 %v1098
      %v1154 = vunpack.c.l.b16 %v1099
      %v1155 = vunpack.c.l.b16 %v1100
      %v1156 = vunpack.c.l.b16 %v1101
      %v1157 = vpack.c.b16 %v1142, %v1141
      %v1158 = vpack.c.b16 %v1144, %v1143
      %v1159 = vpack.c.b16 %v1146, %v1145
      %v1160 = vpack.c.b16 %v1148, %v1147
      %v1161 = vpack.c.b16 %v1150, %v1149
      %v1162 = vpack.c.b16 %v1152, %v1151
      %v1163 = vpack.c.b16 %v1154, %v1153
      %v1164 = vpack.c.b16 %v1156, %v1155
      %1173 = vmatprep.subr.bf16.mxu0 0
      %1174 = vmatpush1.bf16.msra.mxu0 %v1157
      %1175 = vmatprep.subr.bf16.mxu0 0
      %1176 = vmatpush1.bf16.msra.mxu0 %v1158
      %1177 = vmatprep.subr.bf16.mxu0 0
      %1178 = vmatpush1.bf16.msra.mxu0 %v1159
      %1179 = vmatprep.subr.bf16.mxu0 0
      %1180 = vmatpush1.bf16.msra.mxu0 %v1160
      %1181 = vmatprep.subr.bf16.mxu0 0
      %1182 = vmatpush1.bf16.msra.mxu0 %v1161
      %1183 = vmatprep.subr.bf16.mxu0 0
      %1184 = vmatpush1.bf16.msra.mxu0 %v1162
      %1185 = vmatprep.subr.bf16.mxu0 0
      %1186 = vmatpush1.bf16.msra.mxu0 %v1163
      %1187 = vmatprep.subr.bf16.mxu0 0
      %1188 = vmatpush1.bf16.msra.mxu0 %v1164
      %1189 = vmatprep.subr.bf16.mxu0 0
      %1190 = vmatpush1.bf16.msra.mxu0 0
      %1191 = vmatprep.subr.bf16.mxu0 0
      %1192 = vmatpush1.bf16.msra.mxu0 0
      %1193 = vmatprep.subr.bf16.mxu0 0
      %1194 = vmatpush1.bf16.msra.mxu0 0
      %1195 = vmatprep.subr.bf16.mxu0 0
      %1196 = vmatpush1.bf16.msra.mxu0 0
      %1197 = vmatprep.subr.bf16.mxu0 0
      %1198 = vmatpush1.bf16.msra.mxu0 0
      %1199 = vmatprep.subr.bf16.mxu0 0
      %1200 = vmatpush1.bf16.msra.mxu0 0
      %1201 = vmatprep.subr.bf16.mxu0 0
      %1202 = vmatpush1.bf16.msra.mxu0 0
      %1203 = vmatprep.subr.bf16.mxu0 0
      %1204 = vmatpush1.bf16.msra.mxu0 0
      %1205 = vmatprep.mubr.bf16.mxu0 0
      %1206 = vmatmul.mubr.bf16.gmra.mrb[0].mxu0 %v1122
      %v1207 = vpop.f32.mrb[0].mxu0
      %v1208 = vadd.f32 0.0, %v1207
      %v1209 = vpop.f32.mrb[0].mxu0
      %v1210 = vpop.f32.mrb[0].mxu0
      %v1211 = vadd.f32 0.0, %v1210
      %v1212 = vpop.f32.mrb[0].mxu0
      %1213 = vmatprep.mubr.bf16.mxu0 0
      %1214 = vmatmul.mubr.bf16.gmra.mrb[0].mxu0 %v1121
      %v1215 = vpop.f32.mrb[0].mxu0
      %v1216 = vadd.f32 0.0, %v1215
      %v1217 = vpop.f32.mrb[0].mxu0
      %v1218 = vpop.f32.mrb[0].mxu0
      %v1219 = vpop.f32.mrb[0].mxu0
      %1220 = vdwg.mxu0
      %v1221 = vadd.f32 %v1081, %v1208
      %v1222 = vadd.f32 %v1082, %v1211
      %v1223 = vadd.f32 %v1083, %v1216
      %v1224 = vld [vmem:[%s165 + $0x4] sm:$0x8]
      %s1225 = scalar_lea.vmem %s1, 512
      %v1226 = vld [vmem:[%s1225] sm:$0xf]
      %v1227 = vld [vmem:[%s1225 + $0x4] sm:$0xf]
      %v1228 = vld [vmem:[%s1225 + $0x8] sm:$0xf]
      %v1229 = vld [vmem:[%s1225 + $0xc] sm:$0xf]
      %v1230 = vld [vmem:[%s1225 + $0x10] sm:$0xf]
      %v1231 = vld [vmem:[%s1225 + $0x14] sm:$0xf]
      %v1232 = vld [vmem:[%s1225 + $0x18] sm:$0xf]
      %v1233 = vld [vmem:[%s1225 + $0x1c] sm:$0xf]
      %v1234 = vld [vmem:[%s1225 + $0x20] sm:$0xf]
      %v1235 = vld [vmem:[%s1225 + $0x24] sm:$0xf]
      %v1236 = vld [vmem:[%s1225 + $0x28] sm:$0xf]
      %v1237 = vld [vmem:[%s1225 + $0x2c] sm:$0xf]
      %v1238 = vld [vmem:[%s1225 + $0x30] sm:$0xf]
      %v1239 = vld [vmem:[%s1225 + $0x34] sm:$0xf]
      %v1240 = vld [vmem:[%s1225 + $0x38] sm:$0xf]
      %v1241 = vld [vmem:[%s1225 + $0x3c] sm:$0xf]
      %v1243 = vunpack.c.l.b16 %v1224
      %v1244 = vpack.c.b16 %v974, %v1243
      %v1245 = vrot.slane %v1244, 3
      %v1246 = vrot.slane %v1104, 3
      %v1247 = vsel %vm583, %v1245, %v1246
      %v1266 = vunpack.c.l.b16 %v1226
      %v1267 = vunpack.c.l.b16 %v1227
      %v1268 = vunpack.c.l.b16 %v1228
      %v1269 = vunpack.c.l.b16 %v1229
      %v1270 = vunpack.c.l.b16 %v1230
      %v1271 = vunpack.c.l.b16 %v1231
      %v1272 = vunpack.c.l.b16 %v1232
      %v1273 = vunpack.c.l.b16 %v1233
      %v1274 = vunpack.c.l.b16 %v1234
      %v1275 = vunpack.c.l.b16 %v1235
      %v1276 = vunpack.c.l.b16 %v1236
      %v1277 = vunpack.c.l.b16 %v1237
      %v1278 = vunpack.c.l.b16 %v1238
      %v1279 = vunpack.c.l.b16 %v1239
      %v1280 = vunpack.c.l.b16 %v1240
      %v1281 = vunpack.c.l.b16 %v1241
      %v1282 = vpack.c.b16 %v1267, %v1266
      %v1283 = vpack.c.b16 %v1269, %v1268
      %v1284 = vpack.c.b16 %v1271, %v1270
      %v1285 = vpack.c.b16 %v1273, %v1272
      %v1286 = vpack.c.b16 %v1275, %v1274
      %v1287 = vpack.c.b16 %v1277, %v1276
      %v1288 = vpack.c.b16 %v1279, %v1278
      %v1289 = vpack.c.b16 %v1281, %v1280
      %1298 = vmatprep.subr.bf16.mxu0 0
      %1299 = vmatpush1.bf16.msra.mxu0 %v1282
      %1300 = vmatprep.subr.bf16.mxu0 0
      %1301 = vmatpush1.bf16.msra.mxu0 %v1283
      %1302 = vmatprep.subr.bf16.mxu0 0
      %1303 = vmatpush1.bf16.msra.mxu0 %v1284
      %1304 = vmatprep.subr.bf16.mxu0 0
      %1305 = vmatpush1.bf16.msra.mxu0 %v1285
      %1306 = vmatprep.subr.bf16.mxu0 0
      %1307 = vmatpush1.bf16.msra.mxu0 %v1286
      %1308 = vmatprep.subr.bf16.mxu0 0
      %1309 = vmatpush1.bf16.msra.mxu0 %v1287
      %1310 = vmatprep.subr.bf16.mxu0 0
      %1311 = vmatpush1.bf16.msra.mxu0 %v1288
      %1312 = vmatprep.subr.bf16.mxu0 0
      %1313 = vmatpush1.bf16.msra.mxu0 %v1289
      %1314 = vmatprep.subr.bf16.mxu0 0
      %1315 = vmatpush1.bf16.msra.mxu0 0
      %1316 = vmatprep.subr.bf16.mxu0 0
      %1317 = vmatpush1.bf16.msra.mxu0 0
      %1318 = vmatprep.subr.bf16.mxu0 0
      %1319 = vmatpush1.bf16.msra.mxu0 0
      %1320 = vmatprep.subr.bf16.mxu0 0
      %1321 = vmatpush1.bf16.msra.mxu0 0
      %1322 = vmatprep.subr.bf16.mxu0 0
      %1323 = vmatpush1.bf16.msra.mxu0 0
      %1324 = vmatprep.subr.bf16.mxu0 0
      %1325 = vmatpush1.bf16.msra.mxu0 0
      %1326 = vmatprep.subr.bf16.mxu0 0
      %1327 = vmatpush1.bf16.msra.mxu0 0
      %1328 = vmatprep.subr.bf16.mxu0 0
      %1329 = vmatpush1.bf16.msra.mxu0 0
      %1330 = vmatprep.mubr.bf16.mxu0 0
      %1331 = vmatmul.mubr.bf16.gmra.mrb[0].mxu0 %v1247
      %v1332 = vpop.f32.mrb[0].mxu0
      %v1333 = vadd.f32 0.0, %v1332
      %v1334 = vpop.f32.mrb[0].mxu0
      %v1335 = vpop.f32.mrb[0].mxu0
      %v1336 = vadd.f32 0.0, %v1335
      %v1337 = vpop.f32.mrb[0].mxu0
      %1338 = vmatprep.mubr.bf16.mxu0 0
      %1339 = vmatmul.mubr.bf16.gmra.mrb[0].mxu0 %v1246
      %v1340 = vpop.f32.mrb[0].mxu0
      %v1341 = vadd.f32 0.0, %v1340
      %v1342 = vpop.f32.mrb[0].mxu0
      %v1343 = vpop.f32.mrb[0].mxu0
      %v1344 = vpop.f32.mrb[0].mxu0
      %1345 = vdwg.mxu0
      %v1346 = vadd.f32 %v1221, %v1333
      %v1347 = vadd.f32 %v1222, %v1336
      %v1348 = vadd.f32 %v1223, %v1341
      %v1349 = vld [vmem:[%s2] sm:$0xff]
      %v1350 = vld [vmem:[%s2 + $0x8] sm:$0xff]
      %v1351 = vld [vmem:[%s2 + $0x10] sm:$0xff]
      %1353 = vset.pattern.permute.xlu0 0
      %1354 = vperm.xlu0 %1353, %v1349
      %v1355 = vpop.permute.xlu0 %1354
      %1358 = vset.pattern.permute.xlu0 0
      %1359 = vperm.xlu0 %1358, %v1350
      %v1360 = vpop.permute.xlu0 %1359
      %1363 = vset.pattern.permute.xlu0 0
      %1364 = vperm.xlu0 %1363, %v1351
      %v1365 = vpop.permute.xlu0 %1364
      %v1367 = vmul.f32 %v1346, %v1355
      %v1368 = vmul.f32 %v1347, %v1360
      %v1369 = vmul.f32 %v1348, %v1365
      %v1370 = vadd.f32 %v1367, %v1368
      %v1371 = vadd.f32 %v1370, %v1369
      %v1372 = vrot.slane %v1371, 4
      %v1373 = vadd.f32 %v1371, %v1372
      %v1374 = vrot.slane %v1373, 2
      %v1375 = vadd.f32 %v1373, %v1374
      %v1376 = vrot.slane %v1375, 1
      %v1377 = vadd.f32 %v1375, %v1376
      %v1378 = vmul.f32 %v1367, %v1346
      %v1379 = vmul.f32 %v1368, %v1347
      %v1380 = vmul.f32 %v1369, %v1348
      %v1381 = vadd.f32 %v1378, %v1379
      %v1382 = vadd.f32 %v1381, %v1380
      %v1383 = vrot.slane %v1382, 4
      %v1384 = vadd.f32 %v1382, %v1383
      %v1385 = vrot.slane %v1384, 2
      %v1386 = vadd.f32 %v1384, %v1385
      %v1387 = vrot.slane %v1386, 1
      %v1388 = vadd.f32 %v1386, %v1387
      %v1389 = vmul.f32 %v1377, 0.0625
      %v1390 = vmul.f32 %v1388, 0.0625
      %v1391 = vmul.f32 %v1389, %v1389
      %v1392 = vsub.f32 %v1390, %v1391
      %v1393 = vmax.f32 %v1392, 0.0
      %v1394 = vadd.f32 %v1393, 1e-05
      %v1395 = vrsqrt.pop %v1394
      %v1396 = vsub.f32 %v1346, %v1389
      %v1397 = vsub.f32 %v1347, %v1389
      %v1398 = vsub.f32 %v1348, %v1389
      %v1399 = vmul.f32 %v1396, %v1395
      %v1400 = vmul.f32 %v1397, %v1395
      %v1401 = vmul.f32 %v1398, %v1395
      %v1402 = vmax.f32 %v1399, 0.0
      %v1403 = vmax.f32 %v1400, 0.0
      %v1404 = vmax.f32 %v1401, 0.0
      %v1405 = vpack.c.bf16 %v1403, %v1402
      %v1406 = vpack.c.bf16 %v1404, %v1404
      %v1409 = vunpack.c.l.b16 %v1405
      %v1410 = vunpack.c.h.b16 %v1405
      %v1411 = vunpack.c.l.b16 %v1406
      %v1412 = vpack.c.b16 %v1409, %v1409
      %v1413 = vpack.c.b16 %v1410, %v1410
      %v1414 = vpack.c.b16 %v1411, %v1411
      %1418 = vst [vmem:[%s170] sm:$0xf] %v1412
      %1419 = vst [vmem:[%s170 + $0x4] sm:$0xf] %v1413
      %1420 = vst [vmem:[%s170 + $0x8] sm:$0xf] %v1414
      %p1421 = scmp.lt.s32.totalorder %s14, 1
      %s1422 = scalar_select %p1421, %s14, 1
      %s1423 = smul.addr %s1422, 3
      %s1424 = smul.addr %s1423, 4
      %s1425 = scalar_lea.vmem %s3, %s1424
      // Predicated region
      $region33: #{generator_forward.26} parent=31 // pred_check
        %p1426 = pneg %p100
      $region34: #{generator_forward.26} parent=31 // pred_check_branch
        %1428 = sbr.rel (%p1426) target = $region36
      $region35: #{generator_forward.26} parent=31 // pred_region
        _
      $region36: #{generator_forward.26} parent=31 // pred_fallthru
        _
    $region32: #{generator_forward.26} parent=5 // pred_fallthru
      _
    %p1429 = scmp.le.s32.totalorder 2, %s9
    // Predicated region
    $region37: #{generator_forward.26} parent=5 // pred_check
      %p1430 = pneg %p1429
    $region38: #{generator_forward.26} parent=5 // pred_check_branch
      %1432 = sbr.rel (%p1430) target = $region40
    $region39: #{generator_forward.26} parent=5 // pred_region
      %s1433 = ssub.s32 %s9, 2
      // Predicated region
      $region41: #{generator_forward.26} parent=39 // pred_check
        %p1434 = pneg %p106
      $region42: #{generator_forward.26} parent=39 // pred_check_branch
        %1436 = sbr.rel (%p1434) target = $region44
      $region43: #{generator_forward.26} parent=39 // pred_region
        %p1437 = scmp.lt.s32.totalorder %s15, 1
        %s1438 = scalar_select %p1437, %s15, 1
        %s1439 = smul.addr %s1438, 3
        %s1440 = smul.addr %s1439, 4
        %s1441 = scalar_lea.vmem %s3, %s1440
      $region44: #{generator_forward.26} parent=39 // pred_fallthru
        _
    $region40: #{generator_forward.26} parent=5 // pred_fallthru
      _
  $region6: #{generator_forward.26} parent=0 // loop_footer
    %s13 = sadd.s32 1, %s9
  $region7: #{generator_forward.26} parent=0 // loop_footer_branch
    %8 = sbr.rel target = $region3
  $region8: #{generator_forward.26} parent=0 // loop_exit
    _

// kernel: generator_forward.27
$region0: #{generator_forward.27}
  #allocation0 [shape = 'u32[]', space=smem, size = 0x4, offset = 0x4, fixed_abs, tag = 'smem constant byte address 0x4 - core index']
  #allocation1 [shape = 'u32[144,128]{1,0:T(1,128)}', space=vmem, size = 0x12000, scoped, tag = 'internal scratch']
  %s0 = inlined_call_operand.vmem [shape: bf16[2,38,128], index: 0, kind: input, shape index: {}]
  %s1 = inlined_call_operand.vmem [shape: bf16[9,128,128], index: 1, kind: input, shape index: {}]
  %s2 = inlined_call_operand.vmem [shape: f32[24,1], index: 2, kind: input, shape index: {}]
  %s3 = inlined_call_operand.vmem [shape: bf16[2,1,24,128], index: 3, kind: input, shape index: {}]
  %s4 = inlined_call_operand.vmem [shape: bf16[2,1,24,128], index: 4, kind: output, shape index: {}]
  %s5 = sld [smem:[#allocation0]]
  $region49: #{generator_forward.27} parent=0
    _
  %s7 = ssub.s32 1, %s5
  %s8 = scalar_select 0, %s7, %s5
  loop: start=0, step=1, limit=4
  $region2: #{generator_forward.27} parent=0 // loop_pre_header
    _
  $region3: #{generator_forward.27} parent=0 // loop_header
    %s10 = sphi 0, %s14
    %p11 = scmp.ge.s32.totalorder %s10, 4
    %s20 = sphi 0, %s22
    %s23 = sphi 0, %s20
    %s24 = sphi 0, %s23
    %s40 = sphi 0, %s24
    %s44 = sphi 0, %s44
    %s46 = sphi 0, %s44
    %s47 = sphi 0, %s46
    %s61 = sphi 0, %s47
    %s65 = sphi 0, %s65
    %s67 = sphi 0, %s65
    %s68 = sphi 0, %s67
    %s82 = sphi 0, %s68
    %s88 = sphi 0, %s90
    %s91 = sphi 0, %s88
    %s92 = sphi 0, %s91
    %s108 = sphi 0, %s92
    %s114 = sphi 0, %s116
    %s117 = sphi 0, %s114
    %s118 = sphi 0, %s117
    %s134 = sphi 0, %s118
  $region4: #{generator_forward.27} parent=0 // loop_header_branch
    %13 = sbr.rel (%p11) target = $region8
  $region5: #{generator_forward.27} parent=0 // loop_body
    %s15 = ssub.s32 %s10, 1
    %s16 = ssub.s32 %s10, 2
    %s17 = sadd.s32 %s10, 1
    %s18 = ssub.s32 %s10, %s17
    %p19 = scmp.eq.s32.totalorder %s18, 0
    %s21 = sadd.s32 %s20, 1
    %s22 = scalar_select %p19, %s20, %s21
    %p25 = pneg %p19
    %p26 = scmp.eq.s32.totalorder %s10, 1
    %p27 = por %p25, %p26
    %p28 = scmp.ne.s32.totalorder %s20, %s23
    %p29 = scmp.eq.s32.totalorder %s10, 0
    %p30 = por %p28, %p29
    %p31 = scmp.ne.s32.totalorder %s20, %s23
    %p32 = scmp.eq.s32.totalorder %s15, 1
    %p33 = por %p31, %p32
    %p34 = scmp.ne.s32.totalorder %s23, %s24
    %p35 = scmp.eq.s32.totalorder %s15, 0
    %p36 = por %p34, %p35
    %p37 = scmp.ne.s32.totalorder %s23, %s24
    %p38 = scmp.eq.s32.totalorder %s16, 1
    %p39 = por %p37, %p38
    %p41 = scmp.ne.s32.totalorder %s24, %s40
    %p42 = scmp.eq.s32.totalorder %s16, 0
    %p43 = por %p41, %p42
    %s45 = sadd.s32 %s44, 1
    %p48 = scmp.eq.s32.totalorder %s10, 1
    %p49 = scmp.ne.s32.totalorder %s44, %s46
    %p50 = scmp.eq.s32.totalorder %s10, 0
    %p51 = por %p49, %p50
    %p52 = scmp.ne.s32.totalorder %s44, %s46
    %p53 = scmp.eq.s32.totalorder %s15, 1
    %p54 = por %p52, %p53
    %p55 = scmp.ne.s32.totalorder %s46, %s47
    %p56 = scmp.eq.s32.totalorder %s15, 0
    %p57 = por %p55, %p56
    %p58 = scmp.ne.s32.totalorder %s46, %s47
    %p59 = scmp.eq.s32.totalorder %s16, 1
    %p60 = por %p58, %p59
    %p62 = scmp.ne.s32.totalorder %s47, %s61
    %p63 = scmp.eq.s32.totalorder %s16, 0
    %p64 = por %p62, %p63
    %s66 = sadd.s32 %s65, 1
    %p69 = scmp.eq.s32.totalorder %s10, 1
    %p70 = scmp.ne.s32.totalorder %s65, %s67
    %p71 = scmp.eq.s32.totalorder %s10, 0
    %p72 = por %p70, %p71
    %p73 = scmp.ne.s32.totalorder %s65, %s67
    %p74 = scmp.eq.s32.totalorder %s15, 1
    %p75 = por %p73, %p74
    %p76 = scmp.ne.s32.totalorder %s67, %s68
    %p77 = scmp.eq.s32.totalorder %s15, 0
    %p78 = por %p76, %p77
    %p79 = scmp.ne.s32.totalorder %s67, %s68
    %p80 = scmp.eq.s32.totalorder %s16, 1
    %p81 = por %p79, %p80
    %p83 = scmp.ne.s32.totalorder %s68, %s82
    %p84 = scmp.eq.s32.totalorder %s16, 0
    %p85 = por %p83, %p84
    %s86 = ssub.s32 %s10, %s17
    %p87 = scmp.eq.s32.totalorder %s86, 0
    %s89 = sadd.s32 %s88, 1
    %s90 = scalar_select %p87, %s88, %s89
    %p93 = pneg %p87
    %p94 = scmp.eq.s32.totalorder %s10, 1
    %p95 = por %p93, %p94
    %p96 = scmp.ne.s32.totalorder %s88, %s91
    %p97 = scmp.eq.s32.totalorder %s10, 0
    %p98 = por %p96, %p97
    %p99 = scmp.ne.s32.totalorder %s88, %s91
    %p100 = scmp.eq.s32.totalorder %s15, 1
    %p101 = por %p99, %p100
    %p102 = scmp.ne.s32.totalorder %s91, %s92
    %p103 = scmp.eq.s32.totalorder %s15, 0
    %p104 = por %p102, %p103
    %p105 = scmp.ne.s32.totalorder %s91, %s92
    %p106 = scmp.eq.s32.totalorder %s16, 1
    %p107 = por %p105, %p106
    %p109 = scmp.ne.s32.totalorder %s92, %s108
    %p110 = scmp.eq.s32.totalorder %s16, 0
    %p111 = por %p109, %p110
    %s112 = ssub.s32 %s10, %s17
    %p113 = scmp.eq.s32.totalorder %s112, 0
    %s115 = sadd.s32 %s114, 1
    %s116 = scalar_select %p113, %s114, %s115
    %p119 = pneg %p113
    %p120 = scmp.eq.s32.totalorder %s10, 1
    %p121 = por %p119, %p120
    %p122 = scmp.ne.s32.totalorder %s114, %s117
    %p123 = scmp.eq.s32.totalorder %s10, 0
    %p124 = por %p122, %p123
    %p125 = scmp.ne.s32.totalorder %s114, %s117
    %p126 = scmp.eq.s32.totalorder %s15, 1
    %p127 = por %p125, %p126
    %p128 = scmp.ne.s32.totalorder %s117, %s118
    %p129 = scmp.eq.s32.totalorder %s15, 0
    %p130 = por %p128, %p129
    %p131 = scmp.ne.s32.totalorder %s117, %s118
    %p132 = scmp.eq.s32.totalorder %s16, 1
    %p133 = por %p131, %p132
    %p135 = scmp.ne.s32.totalorder %s118, %s134
    %p136 = scmp.eq.s32.totalorder %s16, 0
    %p137 = por %p135, %p136
    %p138 = scmp.le.s32.totalorder 1, %s10
    %p139 = scmp.lt.s32.totalorder %s10, 3
    %p140 = pnand %p138, %p139
    %p141 = pneg %p140
    // Predicated region
    $region9: #{generator_forward.27} parent=5 // pred_check
      _
    $region10: #{generator_forward.27} parent=5 // pred_check_branch
      %143 = sbr.rel (%p140) target = $region12
    $region11: #{generator_forward.27} parent=5 // pred_region
      %s144 = ssub.s32 %s10, 1
      // Predicated region
      $region13: #{generator_forward.27} parent=11 // pred_check
        %p145 = pneg %p57
      $region14: #{generator_forward.27} parent=11 // pred_check_branch
        %147 = sbr.rel (%p145) target = $region16
      $region15: #{generator_forward.27} parent=11 // pred_region
        _
      $region16: #{generator_forward.27} parent=11 // pred_fallthru
        _
      // Predicated region
      $region17: #{generator_forward.27} parent=11 // pred_check
        %p148 = pneg %p78
      $region18: #{generator_forward.27} parent=11 // pred_check_branch
        %150 = sbr.rel (%p148) target = $region20
      $region19: #{generator_forward.27} parent=11 // pred_region
        _
      $region20: #{generator_forward.27} parent=11 // pred_fallthru
        _
    $region12: #{generator_forward.27} parent=5 // pred_fallthru
      _
    %p151 = scmp.lt.s32.totalorder %s10, 2
    // Predicated region
    $region21: #{generator_forward.27} parent=5 // pred_check
      %p152 = pneg %p151
    $region22: #{generator_forward.27} parent=5 // pred_check_branch
      %154 = sbr.rel (%p152) target = $region24
    $region23: #{generator_forward.27} parent=5 // pred_region
      // Predicated region
      $region25: #{generator_forward.27} parent=23 // pred_check
        %p155 = pneg %p30
      $region26: #{generator_forward.27} parent=23 // pred_check_branch
        %157 = sbr.rel (%p155) target = $region28
      $region27: #{generator_forward.27} parent=23 // pred_region
        %p158 = scmp.lt.s32.totalorder %s10, 1
        %s159 = scalar_select %p158, %s10, 1
        %s160 = smul.addr %s159, 5
        %s161 = smul.addr %s160, 4
        %s162 = scalar_lea.vmem %s0, %s161
      $region28: #{generator_forward.27} parent=23 // pred_fallthru
        _
      // Predicated region
      $region29: #{generator_forward.27} parent=23 // pred_check
        %p163 = pneg %p98
      $region30: #{generator_forward.27} parent=23 // pred_check_branch
        %165 = sbr.rel (%p163) target = $region32
      $region31: #{generator_forward.27} parent=23 // pred_region
        %p166 = scmp.lt.s32.totalorder %s10, 1
        %s167 = scalar_select %p166, %s10, 1
        %s168 = smul.addr %s167, 3
        %s169 = smul.addr %s168, 4
        %s170 = scalar_lea.vmem %s3, %s169
      $region32: #{generator_forward.27} parent=23 // pred_fallthru
        _
    $region24: #{generator_forward.27} parent=5 // pred_fallthru
      _
    %p171 = scmp.le.s32.totalorder 1, %s10
    %p172 = scmp.lt.s32.totalorder %s10, 3
    %p173 = pnand %p171, %p172
    %p174 = pneg %p173
    // Predicated region
    $region33: #{generator_forward.27} parent=5 // pred_check
      _
    $region34: #{generator_forward.27} parent=5 // pred_check_branch
      %176 = sbr.rel (%p173) target = $region36
    $region35: #{generator_forward.27} parent=5 // pred_region
      %s177 = ssub.s32 %s10, 1
      %p178 = scmp.lt.s32.totalorder %s15, 1
      %s179 = scalar_select %p178, %s15, 1
      %s180 = smul.addr %s179, 5
      %s181 = smul.addr %s180, 4
      %s182 = scalar_lea.vmem %s0, %s181
      %p183 = pneg %p36
      %p184 = pneg %p33
      %p185 = pneg %p57
      %p186 = pneg %p54
      %p187 = pneg %p78
      %p188 = pneg %p75
      %p189 = scmp.lt.s32.totalorder %s15, 1
      %s190 = scalar_select %p189, %s15, 1
      %s191 = smul.addr %s190, 3
      %s192 = smul.addr %s191, 4
      %s193 = scalar_lea.vmem %s3, %s192
      %p194 = pneg %p104
      %p195 = pneg %p101
      %p196 = pneg %p130
      %p197 = pneg %p127
      %p198 = scmp.lt.s32.totalorder %s15, 1
      %s199 = scalar_select %p198, %s15, 1
      %s200 = smul.addr %s199, 3
      %s201 = smul.addr %s200, 4
      %s202 = scalar_lea.vmem %s4, %s201
      %p203 = scmp.lt.s32.totalorder %s15, 1
      %s204 = scalar_select %p203, %s15, 1
      %s205 = smul.addr %s204, 5
      %s206 = smul.addr %s205, 4
      %s207 = scalar_lea.vmem %s0, %s206
      %p208 = scmp.lt.s32.totalorder %s15, 1
      %s209 = scalar_select %p208, %s15, 1
      %s210 = smul.addr %s209, 3
      %s211 = smul.addr %s210, 4
      %s212 = scalar_lea.vmem %s3, %s211
      %p213 = scmp.lt.s32.totalorder %s15, 1
      %s214 = scalar_select %p213, %s15, 1
      %s215 = smul.addr %s214, 3
      %s216 = smul.addr %s215, 4
      %s217 = scalar_lea.vmem %s4, %s216
      %v219 = vld [vmem:[%s207] sm:$0xf]
      %v220 = vld [vmem:[%s207 + $0x4] sm:$0xf]
      %v221 = vld [vmem:[%s207 + $0x8] sm:$0xf]
      %v222 = vld [vmem:[%s1] sm:$0xf]
      %v223 = vld [vmem:[%s1 + $0x4] sm:$0xf]
      %v224 = vld [vmem:[%s1 + $0x8] sm:$0xf]
      %v225 = vld [vmem:[%s1 + $0xc] sm:$0xf]
      %v226 = vld [vmem:[%s1 + $0x10] sm:$0xf]
      %v227 = vld [vmem:[%s1 + $0x14] sm:$0xf]
      %v228 = vld [vmem:[%s1 + $0x18] sm:$0xf]
      %v229 = vld [vmem:[%s1 + $0x1c] sm:$0xf]
      %v230 = vld [vmem:[%s1 + $0x20] sm:$0xf]
      %v231 = vld [vmem:[%s1 + $0x24] sm:$0xf]
      %v232 = vld [vmem:[%s1 + $0x28] sm:$0xf]
      %v233 = vld [vmem:[%s1 + $0x2c] sm:$0xf]
      %v234 = vld [vmem:[%s1 + $0x30] sm:$0xf]
      %v235 = vld [vmem:[%s1 + $0x34] sm:$0xf]
      %v236 = vld [vmem:[%s1 + $0x38] sm:$0xf]
      %v237 = vld [vmem:[%s1 + $0x3c] sm:$0xf]
      %v238 = vld [vmem:[%s207 + $0xc] sm:$0x1]
      %s239 = scalar_lea.vmem %s1, 64
      %v240 = vld [vmem:[%s239] sm:$0xf]
      %v241 = vld [vmem:[%s239 + $0x4] sm:$0xf]
      %v242 = vld [vmem:[%s239 + $0x8] sm:$0xf]
      %v243 = vld [vmem:[%s239 + $0xc] sm:$0xf]
      %v244 = vld [vmem:[%s239 + $0x10] sm:$0xf]
      %v245 = vld [vmem:[%s239 + $0x14] sm:$0xf]
      %v246 = vld [vmem:[%s239 + $0x18] sm:$0xf]
      %v247 = vld [vmem:[%s239 + $0x1c] sm:$0xf]
      %v248 = vld [vmem:[%s239 + $0x20] sm:$0xf]
      %v249 = vld [vmem:[%s239 + $0x24] sm:$0xf]
      %v250 = vld [vmem:[%s239 + $0x28] sm:$0xf]
      %v251 = vld [vmem:[%s239 + $0x2c] sm:$0xf]
      %v252 = vld [vmem:[%s239 + $0x30] sm:$0xf]
      %v253 = vld [vmem:[%s239 + $0x34] sm:$0xf]
      %v254 = vld [vmem:[%s239 + $0x38] sm:$0xf]
      %v255 = vld [vmem:[%s239 + $0x3c] sm:$0xf]
      %v260 = vunpack.c.l.b16 %v219
      %v261 = vunpack.c.l.b16 %v220
      %v262 = vunpack.c.l.b16 %v221
      %v263 = vunpack.c.l.b16 %v238
      %v264 = vpack.c.b16 %v261, %v260
      %v265 = vpack.c.b16 %v263, %v262
      %vm266 = vsmask.f32 7424
      %v268 = vshrl.u32 %v264, 16
      %v270 = vshll.u32 %v264, 16
      %v272 = vrot.slane %v270, 1
      %v273 = vor.u32 %v268, %v272
      %v275 = vshll.u32 %v265, 16
      %v277 = vrot.slane %v275, 1
      %v278 = vsel %vm266, %v273, %v277
      %v279 = vshrl.u32 %v265, 16
      %v281 = vor.u32 %v279, %v277
      %v300 = vunpack.c.l.b16 %v240
      %v301 = vunpack.c.l.b16 %v241
      %v302 = vunpack.c.l.b16 %v242
      %v303 = vunpack.c.l.b16 %v243
      %v304 = vunpack.c.l.b16 %v244
      %v305 = vunpack.c.l.b16 %v245
      %v306 = vunpack.c.l.b16 %v246
      %v307 = vunpack.c.l.b16 %v247
      %v308 = vunpack.c.l.b16 %v248
      %v309 = vunpack.c.l.b16 %v249
      %v310 = vunpack.c.l.b16 %v250
      %v311 = vunpack.c.l.b16 %v251
      %v312 = vunpack.c.l.b16 %v252
      %v313 = vunpack.c.l.b16 %v253
      %v314 = vunpack.c.l.b16 %v254
      %v315 = vunpack.c.l.b16 %v255
      %v316 = vpack.c.b16 %v301, %v300
      %v317 = vpack.c.b16 %v303, %v302
      %v318 = vpack.c.b16 %v305, %v304
      %v319 = vpack.c.b16 %v307, %v306
      %v320 = vpack.c.b16 %v309, %v308
      %v321 = vpack.c.b16 %v311, %v310
      %v322 = vpack.c.b16 %v313, %v312
      %v323 = vpack.c.b16 %v315, %v314
      %332 = vmatprep.subr.bf16.mxu0 0
      %333 = vmatpush1.bf16.msra.mxu0 %v316
      %334 = vmatprep.subr.bf16.mxu0 0
      %335 = vmatpush1.bf16.msra.mxu0 %v317
      %336 = vmatprep.subr.bf16.mxu0 0
      %337 = vmatpush1.bf16.msra.mxu0 %v318
      %338 = vmatprep.subr.bf16.mxu0 0
      %339 = vmatpush1.bf16.msra.mxu0 %v319
      %340 = vmatprep.subr.bf16.mxu0 0
      %341 = vmatpush1.bf16.msra.mxu0 %v320
      %342 = vmatprep.subr.bf16.mxu0 0
      %343 = vmatpush1.bf16.msra.mxu0 %v321
      %344 = vmatprep.subr.bf16.mxu0 0
      %345 = vmatpush1.bf16.msra.mxu0 %v322
      %346 = vmatprep.subr.bf16.mxu0 0
      %347 = vmatpush1.bf16.msra.mxu0 %v323
      %348 = vmatprep.subr.bf16.mxu0 0
      %349 = vmatpush1.bf16.msra.mxu0 0
      %350 = vmatprep.subr.bf16.mxu0 0
      %351 = vmatpush1.bf16.msra.mxu0 0
      %352 = vmatprep.subr.bf16.mxu0 0
      %353 = vmatpush1.bf16.msra.mxu0 0
      %354 = vmatprep.subr.bf16.mxu0 0
      %355 = vmatpush1.bf16.msra.mxu0 0
      %356 = vmatprep.subr.bf16.mxu0 0
      %357 = vmatpush1.bf16.msra.mxu0 0
      %358 = vmatprep.subr.bf16.mxu0 0
      %359 = vmatpush1.bf16.msra.mxu0 0
      %360 = vmatprep.subr.bf16.mxu0 0
      %361 = vmatpush1.bf16.msra.mxu0 0
      %362 = vmatprep.subr.bf16.mxu0 0
      %363 = vmatpush1.bf16.msra.mxu0 0
      %364 = vmatprep.mubr.bf16.mxu0 0
      %365 = vmatmul.mubr.bf16.gmra.mrb[0].mxu0 %v278
      %v366 = vpop.f32.mrb[0].mxu0
      %v367 = vadd.f32 0.0, %v366
      %v368 = vpop.f32.mrb[0].mxu0
      %v369 = vpop.f32.mrb[0].mxu0
      %v370 = vadd.f32 0.0, %v369
      %v371 = vpop.f32.mrb[0].mxu0
      %372 = vmatprep.mubr.bf16.mxu0 0
      %373 = vmatmul.mubr.bf16.gmra.mrb[0].mxu0 %v281
      %v374 = vpop.f32.mrb[0].mxu0
      %v375 = vadd.f32 0.0, %v374
      %v376 = vpop.f32.mrb[0].mxu0
      %v377 = vpop.f32.mrb[0].mxu0
      %v378 = vpop.f32.mrb[0].mxu0
      %379 = vdwg.mxu0
      %v380 = vpack.c.b16 %v262, %v262
      %v399 = vunpack.c.l.b16 %v222
      %v400 = vunpack.c.l.b16 %v223
      %v401 = vunpack.c.l.b16 %v224
      %v402 = vunpack.c.l.b16 %v225
      %v403 = vunpack.c.l.b16 %v226
      %v404 = vunpack.c.l.b16 %v227
      %v405 = vunpack.c.l.b16 %v228
      %v406 = vunpack.c.l.b16 %v229
      %v407 = vunpack.c.l.b16 %v230
      %v408 = vunpack.c.l.b16 %v231
      %v409 = vunpack.c.l.b16 %v232
      %v410 = vunpack.c.l.b16 %v233
      %v411 = vunpack.c.l.b16 %v234
      %v412 = vunpack.c.l.b16 %v235
      %v413 = vunpack.c.l.b16 %v236
      %v414 = vunpack.c.l.b16 %v237
      %v415 = vpack.c.b16 %v400, %v399
      %v416 = vpack.c.b16 %v402, %v401
      %v417 = vpack.c.b16 %v404, %v403
      %v418 = vpack.c.b16 %v406, %v405
      %v419 = vpack.c.b16 %v408, %v407
      %v420 = vpack.c.b16 %v410, %v409
      %v421 = vpack.c.b16 %v412, %v411
      %v422 = vpack.c.b16 %v414, %v413
      %431 = vmatprep.subr.bf16.mxu0 0
      %432 = vmatpush1.bf16.msra.mxu0 %v415
      %433 = vmatprep.subr.bf16.mxu0 0
      %434 = vmatpush1.bf16.msra.mxu0 %v416
      %435 = vmatprep.subr.bf16.mxu0 0
      %436 = vmatpush1.bf16.msra.mxu0 %v417
      %437 = vmatprep.subr.bf16.mxu0 0
      %438 = vmatpush1.bf16.msra.mxu0 %v418
      %439 = vmatprep.subr.bf16.mxu0 0
      %440 = vmatpush1.bf16.msra.mxu0 %v419
      %441 = vmatprep.subr.bf16.mxu0 0
      %442 = vmatpush1.bf16.msra.mxu0 %v420
      %443 = vmatprep.subr.bf16.mxu0 0
      %444 = vmatpush1.bf16.msra.mxu0 %v421
      %445 = vmatprep.subr.bf16.mxu0 0
      %446 = vmatpush1.bf16.msra.mxu0 %v422
      %447 = vmatprep.subr.bf16.mxu0 0
      %448 = vmatpush1.bf16.msra.mxu0 0
      %449 = vmatprep.subr.bf16.mxu0 0
      %450 = vmatpush1.bf16.msra.mxu0 0
      %451 = vmatprep.subr.bf16.mxu0 0
      %452 = vmatpush1.bf16.msra.mxu0 0
      %453 = vmatprep.subr.bf16.mxu0 0
      %454 = vmatpush1.bf16.msra.mxu0 0
      %455 = vmatprep.subr.bf16.mxu0 0
      %456 = vmatpush1.bf16.msra.mxu0 0
      %457 = vmatprep.subr.bf16.mxu0 0
      %458 = vmatpush1.bf16.msra.mxu0 0
      %459 = vmatprep.subr.bf16.mxu0 0
      %460 = vmatpush1.bf16.msra.mxu0 0
      %461 = vmatprep.subr.bf16.mxu0 0
      %462 = vmatpush1.bf16.msra.mxu0 0
      %463 = vmatprep.mubr.bf16.mxu0 0
      %464 = vmatmul.mubr.bf16.gmra.mrb[0].mxu0 %v264
      %v465 = vpop.f32.mrb[0].mxu0
      %v466 = vadd.f32 %v367, %v465
      %v467 = vpop.f32.mrb[0].mxu0
      %v468 = vpop.f32.mrb[0].mxu0
      %v469 = vadd.f32 %v370, %v468
      %v470 = vpop.f32.mrb[0].mxu0
      %471 = vmatprep.mubr.bf16.mxu0 0
      %472 = vmatmul.mubr.bf16.gmra.mrb[0].mxu0 %v380
      %v473 = vpop.f32.mrb[0].mxu0
      %v474 = vadd.f32 %v375, %v473
      %v475 = vpop.f32.mrb[0].mxu0
      %v476 = vpop.f32.mrb[0].mxu0
      %v477 = vpop.f32.mrb[0].mxu0
      %478 = vdwg.mxu0
      %v479 = vld [vmem:[%s207] sm:$0xe]
      %s480 = scalar_lea.vmem %s1, 128
      %v481 = vld [vmem:[%s480] sm:$0xf]
      %v482 = vld [vmem:[%s480 + $0x4] sm:$0xf]
      %v483 = vld [vmem:[%s480 + $0x8] sm:$0xf]
      %v484 = vld [vmem:[%s480 + $0xc] sm:$0xf]
      %v485 = vld [vmem:[%s480 + $0x10] sm:$0xf]
      %v486 = vld [vmem:[%s480 + $0x14] sm:$0xf]
      %v487 = vld [vmem:[%s480 + $0x18] sm:$0xf]
      %v488 = vld [vmem:[%s480 + $0x1c] sm:$0xf]
      %v489 = vld [vmem:[%s480 + $0x20] sm:$0xf]
      %v490 = vld [vmem:[%s480 + $0x24] sm:$0xf]
      %v491 = vld [vmem:[%s480 + $0x28] sm:$0xf]
      %v492 = vld [vmem:[%s480 + $0x2c] sm:$0xf]
      %v493 = vld [vmem:[%s480 + $0x30] sm:$0xf]
      %v494 = vld [vmem:[%s480 + $0x34] sm:$0xf]
      %v495 = vld [vmem:[%s480 + $0x38] sm:$0xf]
      %v496 = vld [vmem:[%s480 + $0x3c] sm:$0xf]
      %v498 = vunpack.c.l.b16 %v479
      %v499 = vpack.c.b16 %v261, %v498
      %vm500 = vcmask 1046528
      %v501 = vrot.slane %v499, 1
      %v502 = vrot.slane %v265, 1
      %v503 = vsel %vm500, %v501, %v502
      %v522 = vunpack.c.l.b16 %v481
      %v523 = vunpack.c.l.b16 %v482
      %v524 = vunpack.c.l.b16 %v483
      %v525 = vunpack.c.l.b16 %v484
      %v526 = vunpack.c.l.b16 %v485
      %v527 = vunpack.c.l.b16 %v486
      %v528 = vunpack.c.l.b16 %v487
      %v529 = vunpack.c.l.b16 %v488
      %v530 = vunpack.c.l.b16 %v489
      %v531 = vunpack.c.l.b16 %v490
      %v532 = vunpack.c.l.b16 %v491
      %v533 = vunpack.c.l.b16 %v492
      %v534 = vunpack.c.l.b16 %v493
      %v535 = vunpack.c.l.b16 %v494
      %v536 = vunpack.c.l.b16 %v495
      %v537 = vunpack.c.l.b16 %v496
      %v538 = vpack.c.b16 %v523, %v522
      %v539 = vpack.c.b16 %v525, %v524
      %v540 = vpack.c.b16 %v527, %v526
      %v541 = vpack.c.b16 %v529, %v528
      %v542 = vpack.c.b16 %v531, %v530
      %v543 = vpack.c.b16 %v533, %v532
      %v544 = vpack.c.b16 %v535, %v534
      %v545 = vpack.c.b16 %v537, %v536
      %554 = vmatprep.subr.bf16.mxu0 0
      %555 = vmatpush1.bf16.msra.mxu0 %v538
      %556 = vmatprep.subr.bf16.mxu0 0
      %557 = vmatpush1.bf16.msra.mxu0 %v539
      %558 = vmatprep.subr.bf16.mxu0 0
      %559 = vmatpush1.bf16.msra.mxu0 %v540
      %560 = vmatprep.subr.bf16.mxu0 0
      %561 = vmatpush1.bf16.msra.mxu0 %v541
      %562 = vmatprep.subr.bf16.mxu0 0
      %563 = vmatpush1.bf16.msra.mxu0 %v542
      %564 = vmatprep.subr.bf16.mxu0 0
      %565 = vmatpush1.bf16.msra.mxu0 %v543
      %566 = vmatprep.subr.bf16.mxu0 0
      %567 = vmatpush1.bf16.msra.mxu0 %v544
      %568 = vmatprep.subr.bf16.mxu0 0
      %569 = vmatpush1.bf16.msra.mxu0 %v545
      %570 = vmatprep.subr.bf16.mxu0 0
      %571 = vmatpush1.bf16.msra.mxu0 0
      %572 = vmatprep.subr.bf16.mxu0 0
      %573 = vmatpush1.bf16.msra.mxu0 0
      %574 = vmatprep.subr.bf16.mxu0 0
      %575 = vmatpush1.bf16.msra.mxu0 0
      %576 = vmatprep.subr.bf16.mxu0 0
      %577 = vmatpush1.bf16.msra.mxu0 0
      %578 = vmatprep.subr.bf16.mxu0 0
      %579 = vmatpush1.bf16.msra.mxu0 0
      %580 = vmatprep.subr.bf16.mxu0 0
      %581 = vmatpush1.bf16.msra.mxu0 0
      %582 = vmatprep.subr.bf16.mxu0 0
      %583 = vmatpush1.bf16.msra.mxu0 0
      %584 = vmatprep.subr.bf16.mxu0 0
      %585 = vmatpush1.bf16.msra.mxu0 0
      %586 = vmatprep.mubr.bf16.mxu0 0
      %587 = vmatmul.mubr.bf16.gmra.mrb[0].mxu0 %v503
      %v588 = vpop.f32.mrb[0].mxu0
      %v589 = vadd.f32 0.0, %v588
      %v590 = vpop.f32.mrb[0].mxu0
      %v591 = vpop.f32.mrb[0].mxu0
      %v592 = vadd.f32 0.0, %v591
      %v593 = vpop.f32.mrb[0].mxu0
      %594 = vmatprep.mubr.bf16.mxu0 0
      %595 = vmatmul.mubr.bf16.gmra.mrb[0].mxu0 %v502
      %v596 = vpop.f32.mrb[0].mxu0
      %v597 = vadd.f32 0.0, %v596
      %v598 = vpop.f32.mrb[0].mxu0
      %v599 = vpop.f32.mrb[0].mxu0
      %v600 = vpop.f32.mrb[0].mxu0
      %601 = vdwg.mxu0
      %v602 = vadd.f32 %v466, %v589
      %v603 = vadd.f32 %v469, %v592
      %v604 = vadd.f32 %v474, %v597
      %v605 = vld [vmem:[%s207] sm:$0x8]
      %v606 = vld [vmem:[%s207 + $0xc] sm:$0x7]
      %s607 = scalar_lea.vmem %s1, 192
      %v608 = vld [vmem:[%s607] sm:$0xf]
      %v609 = vld [vmem:[%s607 + $0x4] sm:$0xf]
      %v610 = vld [vmem:[%s607 + $0x8] sm:$0xf]
      %v611 = vld [vmem:[%s607 + $0xc] sm:$0xf]
      %v612 = vld [vmem:[%s607 + $0x10] sm:$0xf]
      %v613 = vld [vmem:[%s607 + $0x14] sm:$0xf]
      %v614 = vld [vmem:[%s607 + $0x18] sm:$0xf]
      %v615 = vld [vmem:[%s607 + $0x1c] sm:$0xf]
      %v616 = vld [vmem:[%s607 + $0x20] sm:$0xf]
      %v617 = vld [vmem:[%s607 + $0x24] sm:$0xf]
      %v618 = vld [vmem:[%s607 + $0x28] sm:$0xf]
      %v619 = vld [vmem:[%s607 + $0x2c] sm:$0xf]
      %v620 = vld [vmem:[%s607 + $0x30] sm:$0xf]
      %v621 = vld [vmem:[%s607 + $0x34] sm:$0xf]
      %v622 = vld [vmem:[%s607 + $0x38] sm:$0xf]
      %v623 = vld [vmem:[%s607 + $0x3c] sm:$0xf]
      %v626 = vunpack.c.l.b16 %v605
      %v627 = vunpack.c.l.b16 %v606
      %v628 = vpack.c.b16 %v261, %v626
      %v629 = vpack.c.b16 %v627, %v262
      %vm630 = vcmask 1044480
      %v631 = vrot.slane %v628, 3
      %v632 = vrot.slane %v629, 3
      %v633 = vsel %vm630, %v631, %v632
      %v652 = vunpack.c.l.b16 %v608
      %v653 = vunpack.c.l.b16 %v609
      %v654 = vunpack.c.l.b16 %v610
      %v655 = vunpack.c.l.b16 %v611
      %v656 = vunpack.c.l.b16 %v612
      %v657 = vunpack.c.l.b16 %v613
      %v658 = vunpack.c.l.b16 %v614
      %v659 = vunpack.c.l.b16 %v615
      %v660 = vunpack.c.l.b16 %v616
      %v661 = vunpack.c.l.b16 %v617
      %v662 = vunpack.c.l.b16 %v618
      %v663 = vunpack.c.l.b16 %v619
      %v664 = vunpack.c.l.b16 %v620
      %v665 = vunpack.c.l.b16 %v621
      %v666 = vunpack.c.l.b16 %v622
      %v667 = vunpack.c.l.b16 %v623
      %v668 = vpack.c.b16 %v653, %v652
      %v669 = vpack.c.b16 %v655, %v654
      %v670 = vpack.c.b16 %v657, %v656
      %v671 = vpack.c.b16 %v659, %v658
      %v672 = vpack.c.b16 %v661, %v660
      %v673 = vpack.c.b16 %v663, %v662
      %v674 = vpack.c.b16 %v665, %v664
      %v675 = vpack.c.b16 %v667, %v666
      %684 = vmatprep.subr.bf16.mxu0 0
      %685 = vmatpush1.bf16.msra.mxu0 %v668
      %686 = vmatprep.subr.bf16.mxu0 0
      %687 = vmatpush1.bf16.msra.mxu0 %v669
      %688 = vmatprep.subr.bf16.mxu0 0
      %689 = vmatpush1.bf16.msra.mxu0 %v670
      %690 = vmatprep.subr.bf16.mxu0 0
      %691 = vmatpush1.bf16.msra.mxu0 %v671
      %692 = vmatprep.subr.bf16.mxu0 0
      %693 = vmatpush1.bf16.msra.mxu0 %v672
      %694 = vmatprep.subr.bf16.mxu0 0
      %695 = vmatpush1.bf16.msra.mxu0 %v673
      %696 = vmatprep.subr.bf16.mxu0 0
      %697 = vmatpush1.bf16.msra.mxu0 %v674
      %698 = vmatprep.subr.bf16.mxu0 0
      %699 = vmatpush1.bf16.msra.mxu0 %v675
      %700 = vmatprep.subr.bf16.mxu0 0
      %701 = vmatpush1.bf16.msra.mxu0 0
      %702 = vmatprep.subr.bf16.mxu0 0
      %703 = vmatpush1.bf16.msra.mxu0 0
      %704 = vmatprep.subr.bf16.mxu0 0
      %705 = vmatpush1.bf16.msra.mxu0 0
      %706 = vmatprep.subr.bf16.mxu0 0
      %707 = vmatpush1.bf16.msra.mxu0 0
      %708 = vmatprep.subr.bf16.mxu0 0
      %709 = vmatpush1.bf16.msra.mxu0 0
      %710 = vmatprep.subr.bf16.mxu0 0
      %711 = vmatpush1.bf16.msra.mxu0 0
      %712 = vmatprep.subr.bf16.mxu0 0
      %713 = vmatpush1.bf16.msra.mxu0 0
      %714 = vmatprep.subr.bf16.mxu0 0
      %715 = vmatpush1.bf16.msra.mxu0 0
      %716 = vmatprep.mubr.bf16.mxu0 0
      %717 = vmatmul.mubr.bf16.gmra.mrb[0].mxu0 %v633
      %v718 = vpop.f32.mrb[0].mxu0
      %v719 = vadd.f32 0.0, %v718
      %v720 = vpop.f32.mrb[0].mxu0
      %v721 = vpop.f32.mrb[0].mxu0
      %v722 = vadd.f32 0.0, %v721
      %v723 = vpop.f32.mrb[0].mxu0
      %724 = vmatprep.mubr.bf16.mxu0 0
      %725 = vmatmul.mubr.bf16.gmra.mrb[0].mxu0 %v632
      %v726 = vpop.f32.mrb[0].mxu0
      %v727 = vadd.f32 0.0, %v726
      %v728 = vpop.f32.mrb[0].mxu0
      %v729 = vpop.f32.mrb[0].mxu0
      %v730 = vpop.f32.mrb[0].mxu0
      %731 = vdwg.mxu0
      %v732 = vadd.f32 %v602, %v719
      %v733 = vadd.f32 %v603, %v722
      %v734 = vadd.f32 %v604, %v727
      %v735 = vld [vmem:[%s207 + $0xc] sm:$0xf]
      %s736 = scalar_lea.vmem %s1, 256
      %v737 = vld [vmem:[%s736] sm:$0xf]
      %v738 = vld [vmem:[%s736 + $0x4] sm:$0xf]
      %v739 = vld [vmem:[%s736 + $0x8] sm:$0xf]
      %v740 = vld [vmem:[%s736 + $0xc] sm:$0xf]
      %v741 = vld [vmem:[%s736 + $0x10] sm:$0xf]
      %v742 = vld [vmem:[%s736 + $0x14] sm:$0xf]
      %v743 = vld [vmem:[%s736 + $0x18] sm:$0xf]
      %v744 = vld [vmem:[%s736 + $0x1c] sm:$0xf]
      %v745 = vld [vmem:[%s736 + $0x20] sm:$0xf]
      %v746 = vld [vmem:[%s736 + $0x24] sm:$0xf]
      %v747 = vld [vmem:[%s736 + $0x28] sm:$0xf]
      %v748 = vld [vmem:[%s736 + $0x2c] sm:$0xf]
      %v749 = vld [vmem:[%s736 + $0x30] sm:$0xf]
      %v750 = vld [vmem:[%s736 + $0x34] sm:$0xf]
      %v751 = vld [vmem:[%s736 + $0x38] sm:$0xf]
      %v752 = vld [vmem:[%s736 + $0x3c] sm:$0xf]
      %v754 = vunpack.c.l.b16 %v735
      %v755 = vpack.c.b16 %v754, %v262
      %vm756 = vsmask.f32 4352
      %v758 = vshrl.u32 %v628, 16
      %v760 = vrot.slane %v758, 3
      %v761 = vshll.u32 %v628, 16
      %v763 = vrot.slane %v761, 4
      %v764 = vor.u32 %v760, %v763
      %v766 = vshrl.u32 %v755, 16
      %v768 = vrot.slane %v766, 3
      %v769 = vshll.u32 %v755, 16
      %v771 = vrot.slane %v769, 4
      %v772 = vor.u32 %v768, %v771
      %v773 = vsel %vm756, %v764, %v772
      %v792 = vunpack.c.l.b16 %v737
      %v793 = vunpack.c.l.b16 %v738
      %v794 = vunpack.c.l.b16 %v739
      %v795 = vunpack.c.l.b16 %v740
      %v796 = vunpack.c.l.b16 %v741
      %v797 = vunpack.c.l.b16 %v742
      %v798 = vunpack.c.l.b16 %v743
      %v799 = vunpack.c.l.b16 %v744
      %v800 = vunpack.c.l.b16 %v745
      %v801 = vunpack.c.l.b16 %v746
      %v802 = vunpack.c.l.b16 %v747
      %v803 = vunpack.c.l.b16 %v748
      %v804 = vunpack.c.l.b16 %v749
      %v805 = vunpack.c.l.b16 %v750
      %v806 = vunpack.c.l.b16 %v751
      %v807 = vunpack.c.l.b16 %v752
      %v808 = vpack.c.b16 %v793, %v792
      %v809 = vpack.c.b16 %v795, %v794
      %v810 = vpack.c.b16 %v797, %v796
      %v811 = vpack.c.b16 %v799, %v798
      %v812 = vpack.c.b16 %v801, %v800
      %v813 = vpack.c.b16 %v803, %v802
      %v814 = vpack.c.b16 %v805, %v804
      %v815 = vpack.c.b16 %v807, %v806
      %824 = vmatprep.subr.bf16.mxu0 0
      %825 = vmatpush1.bf16.msra.mxu0 %v808
      %826 = vmatprep.subr.bf16.mxu0 0
      %827 = vmatpush1.bf16.msra.mxu0 %v809
      %828 = vmatprep.subr.bf16.mxu0 0
      %829 = vmatpush1.bf16.msra.mxu0 %v810
      %830 = vmatprep.subr.bf16.mxu0 0
      %831 = vmatpush1.bf16.msra.mxu0 %v811
      %832 = vmatprep.subr.bf16.mxu0 0
      %833 = vmatpush1.bf16.msra.mxu0 %v812
      %834 = vmatprep.subr.bf16.mxu0 0
      %835 = vmatpush1.bf16.msra.mxu0 %v813
      %836 = vmatprep.subr.bf16.mxu0 0
      %837 = vmatpush1.bf16.msra.mxu0 %v814
      %838 = vmatprep.subr.bf16.mxu0 0
      %839 = vmatpush1.bf16.msra.mxu0 %v815
      %840 = vmatprep.subr.bf16.mxu0 0
      %841 = vmatpush1.bf16.msra.mxu0 0
      %842 = vmatprep.subr.bf16.mxu0 0
      %843 = vmatpush1.bf16.msra.mxu0 0
      %844 = vmatprep.subr.bf16.mxu0 0
      %845 = vmatpush1.bf16.msra.mxu0 0
      %846 = vmatprep.subr.bf16.mxu0 0
      %847 = vmatpush1.bf16.msra.mxu0 0
      %848 = vmatprep.subr.bf16.mxu0 0
      %849 = vmatpush1.bf16.msra.mxu0 0
      %850 = vmatprep.subr.bf16.mxu0 0
      %851 = vmatpush1.bf16.msra.mxu0 0
      %852 = vmatprep.subr.bf16.mxu0 0
      %853 = vmatpush1.bf16.msra.mxu0 0
      %854 = vmatprep.subr.bf16.mxu0 0
      %855 = vmatpush1.bf16.msra.mxu0 0
      %856 = vmatprep.mubr.bf16.mxu0 0
      %857 = vmatmul.mubr.bf16.gmra.mrb[0].mxu0 %v773
      %v858 = vpop.f32.mrb[0].mxu0
      %v859 = vadd.f32 0.0, %v858
      %v860 = vpop.f32.mrb[0].mxu0
      %v861 = vpop.f32.mrb[0].mxu0
      %v862 = vadd.f32 0.0, %v861
      %v863 = vpop.f32.mrb[0].mxu0
      %864 = vmatprep.mubr.bf16.mxu0 0
      %865 = vmatmul.mubr.bf16.gmra.mrb[0].mxu0 %v772
      %v866 = vpop.f32.mrb[0].mxu0
      %v867 = vadd.f32 0.0, %v866
      %v868 = vpop.f32.mrb[0].mxu0
      %v869 = vpop.f32.mrb[0].mxu0
      %v870 = vpop.f32.mrb[0].mxu0
      %871 = vdwg.mxu0
      %v872 = vadd.f32 %v732, %v859
      %v873 = vadd.f32 %v733, %v862
      %v874 = vadd.f32 %v734, %v867
      %s875 = scalar_lea.vmem %s1, 320
      %v876 = vld [vmem:[%s875] sm:$0xf]
      %v877 = vld [vmem:[%s875 + $0x4] sm:$0xf]
      %v878 = vld [vmem:[%s875 + $0x8] sm:$0xf]
      %v879 = vld [vmem:[%s875 + $0xc] sm:$0xf]
      %v880 = vld [vmem:[%s875 + $0x10] sm:$0xf]
      %v881 = vld [vmem:[%s875 + $0x14] sm:$0xf]
      %v882 = vld [vmem:[%s875 + $0x18] sm:$0xf]
      %v883 = vld [vmem:[%s875 + $0x1c] sm:$0xf]
      %v884 = vld [vmem:[%s875 + $0x20] sm:$0xf]
      %v885 = vld [vmem:[%s875 + $0x24] sm:$0xf]
      %v886 = vld [vmem:[%s875 + $0x28] sm:$0xf]
      %v887 = vld [vmem:[%s875 + $0x2c] sm:$0xf]
      %v888 = vld [vmem:[%s875 + $0x30] sm:$0xf]
      %v889 = vld [vmem:[%s875 + $0x34] sm:$0xf]
      %v890 = vld [vmem:[%s875 + $0x38] sm:$0xf]
      %v891 = vld [vmem:[%s875 + $0x3c] sm:$0xf]
      %v892 = vpack.c.b16 %v262, %v261
      %v893 = vpack.c.b16 %v754, %v754
      %v912 = vunpack.c.l.b16 %v876
      %v913 = vunpack.c.l.b16 %v877
      %v914 = vunpack.c.l.b16 %v878
      %v915 = vunpack.c.l.b16 %v879
      %v916 = vunpack.c.l.b16 %v880
      %v917 = vunpack.c.l.b16 %v881
      %v918 = vunpack.c.l.b16 %v882
      %v919 = vunpack.c.l.b16 %v883
      %v920 = vunpack.c.l.b16 %v884
      %v921 = vunpack.c.l.b16 %v885
      %v922 = vunpack.c.l.b16 %v886
      %v923 = vunpack.c.l.b16 %v887
      %v924 = vunpack.c.l.b16 %v888
      %v925 = vunpack.c.l.b16 %v889
      %v926 = vunpack.c.l.b16 %v890
      %v927 = vunpack.c.l.b16 %v891
      %v928 = vpack.c.b16 %v913, %v912
      %v929 = vpack.c.b16 %v915, %v914
      %v930 = vpack.c.b16 %v917, %v916
      %v931 = vpack.c.b16 %v919, %v918
      %v932 = vpack.c.b16 %v921, %v920
      %v933 = vpack.c.b16 %v923, %v922
      %v934 = vpack.c.b16 %v925, %v924
      %v935 = vpack.c.b16 %v927, %v926
      %944 = vmatprep.subr.bf16.mxu0 0
      %945 = vmatpush1.bf16.msra.mxu0 %v928
      %946 = vmatprep.subr.bf16.mxu0 0
      %947 = vmatpush1.bf16.msra.mxu0 %v929
      %948 = vmatprep.subr.bf16.mxu0 0
      %949 = vmatpush1.bf16.msra.mxu0 %v930
      %950 = vmatprep.subr.bf16.mxu0 0
      %951 = vmatpush1.bf16.msra.mxu0 %v931
      %952 = vmatprep.subr.bf16.mxu0 0
      %953 = vmatpush1.bf16.msra.mxu0 %v932
      %954 = vmatprep.subr.bf16.mxu0 0
      %955 = vmatpush1.bf16.msra.mxu0 %v933
      %956 = vmatprep.subr.bf16.mxu0 0
      %957 = vmatpush1.bf16.msra.mxu0 %v934
      %958 = vmatprep.subr.bf16.mxu0 0
      %959 = vmatpush1.bf16.msra.mxu0 %v935
      %960 = vmatprep.subr.bf16.mxu0 0
      %961 = vmatpush1.bf16.msra.mxu0 0
      %962 = vmatprep.subr.bf16.mxu0 0
      %963 = vmatpush1.bf16.msra.mxu0 0
      %964 = vmatprep.subr.bf16.mxu0 0
      %965 = vmatpush1.bf16.msra.mxu0 0
      %966 = vmatprep.subr.bf16.mxu0 0
      %967 = vmatpush1.bf16.msra.mxu0 0
      %968 = vmatprep.subr.bf16.mxu0 0
      %969 = vmatpush1.bf16.msra.mxu0 0
      %970 = vmatprep.subr.bf16.mxu0 0
      %971 = vmatpush1.bf16.msra.mxu0 0
      %972 = vmatprep.subr.bf16.mxu0 0
      %973 = vmatpush1.bf16.msra.mxu0 0
      %974 = vmatprep.subr.bf16.mxu0 0
      %975 = vmatpush1.bf16.msra.mxu0 0
      %976 = vmatprep.mubr.bf16.mxu0 0
      %977 = vmatmul.mubr.bf16.gmra.mrb[0].mxu0 %v892
      %v978 = vpop.f32.mrb[0].mxu0
      %v979 = vadd.f32 0.0, %v978
      %v980 = vpop.f32.mrb[0].mxu0
      %v981 = vpop.f32.mrb[0].mxu0
      %v982 = vadd.f32 0.0, %v981
      %v983 = vpop.f32.mrb[0].mxu0
      %984 = vmatprep.mubr.bf16.mxu0 0
      %985 = vmatmul.mubr.bf16.gmra.mrb[0].mxu0 %v893
      %v986 = vpop.f32.mrb[0].mxu0
      %v987 = vadd.f32 0.0, %v986
      %v988 = vpop.f32.mrb[0].mxu0
      %v989 = vpop.f32.mrb[0].mxu0
      %v990 = vpop.f32.mrb[0].mxu0
      %991 = vdwg.mxu0
      %v992 = vadd.f32 %v872, %v979
      %v993 = vadd.f32 %v873, %v982
      %v994 = vadd.f32 %v874, %v987
      %v995 = vld [vmem:[%s207 + $0x4] sm:$0xc]
      %v996 = vld [vmem:[%s207 + $0x8] sm:$0xf]
      %v997 = vld [vmem:[%s207 + $0xc] sm:$0xf]
      %v998 = vld [vmem:[%s207 + $0x10] sm:$0x3]
      %s999 = scalar_lea.vmem %s1, 384
      %v1000 = vld [vmem:[%s999] sm:$0xf]
      %v1001 = vld [vmem:[%s999 + $0x4] sm:$0xf]
      %v1002 = vld [vmem:[%s999 + $0x8] sm:$0xf]
      %v1003 = vld [vmem:[%s999 + $0xc] sm:$0xf]
      %v1004 = vld [vmem:[%s999 + $0x10] sm:$0xf]
      %v1005 = vld [vmem:[%s999 + $0x14] sm:$0xf]
      %v1006 = vld [vmem:[%s999 + $0x18] sm:$0xf]
      %v1007 = vld [vmem:[%s999 + $0x1c] sm:$0xf]
      %v1008 = vld [vmem:[%s999 + $0x20] sm:$0xf]
      %v1009 = vld [vmem:[%s999 + $0x24] sm:$0xf]
      %v1010 = vld [vmem:[%s999 + $0x28] sm:$0xf]
      %v1011 = vld [vmem:[%s999 + $0x2c] sm:$0xf]
      %v1012 = vld [vmem:[%s999 + $0x30] sm:$0xf]
      %v1013 = vld [vmem:[%s999 + $0x34] sm:$0xf]
      %v1014 = vld [vmem:[%s999 + $0x38] sm:$0xf]
      %v1015 = vld [vmem:[%s999 + $0x3c] sm:$0xf]
      %v1020 = vunpack.c.l.b16 %v995
      %v1021 = vunpack.c.l.b16 %v996
      %v1022 = vunpack.c.l.b16 %v997
      %v1023 = vunpack.c.l.b16 %v998
      %v1024 = vpack.c.b16 %v1021, %v1020
      %v1025 = vpack.c.b16 %v1023, %v1022
      %vm1026 = vcmask 1045504
      %v1027 = vrot.slane %v1024, 2
      %v1028 = vrot.slane %v1025, 2
      %v1029 = vsel %vm1026, %v1027, %v1028
      %v1048 = vunpack.c.l.b16 %v1000
      %v1049 = vunpack.c.l.b16 %v1001
      %v1050 = vunpack.c.l.b16 %v1002
      %v1051 = vunpack.c.l.b16 %v1003
      %v1052 = vunpack.c.l.b16 %v1004
      %v1053 = vunpack.c.l.b16 %v1005
      %v1054 = vunpack.c.l.b16 %v1006
      %v1055 = vunpack.c.l.b16 %v1007
      %v1056 = vunpack.c.l.b16 %v1008
      %v1057 = vunpack.c.l.b16 %v1009
      %v1058 = vunpack.c.l.b16 %v1010
      %v1059 = vunpack.c.l.b16 %v1011
      %v1060 = vunpack.c.l.b16 %v1012
      %v1061 = vunpack.c.l.b16 %v1013
      %v1062 = vunpack.c.l.b16 %v1014
      %v1063 = vunpack.c.l.b16 %v1015
      %v1064 = vpack.c.b16 %v1049, %v1048
      %v1065 = vpack.c.b16 %v1051, %v1050
      %v1066 = vpack.c.b16 %v1053, %v1052
      %v1067 = vpack.c.b16 %v1055, %v1054
      %v1068 = vpack.c.b16 %v1057, %v1056
      %v1069 = vpack.c.b16 %v1059, %v1058
      %v1070 = vpack.c.b16 %v1061, %v1060
      %v1071 = vpack.c.b16 %v1063, %v1062
      %1080 = vmatprep.subr.bf16.mxu0 0
      %1081 = vmatpush1.bf16.msra.mxu0 %v1064
      %1082 = vmatprep.subr.bf16.mxu0 0
      %1083 = vmatpush1.bf16.msra.mxu0 %v1065
      %1084 = vmatprep.subr.bf16.mxu0 0
      %1085 = vmatpush1.bf16.msra.mxu0 %v1066
      %1086 = vmatprep.subr.bf16.mxu0 0
      %1087 = vmatpush1.bf16.msra.mxu0 %v1067
      %1088 = vmatprep.subr.bf16.mxu0 0
      %1089 = vmatpush1.bf16.msra.mxu0 %v1068
      %1090 = vmatprep.subr.bf16.mxu0 0
      %1091 = vmatpush1.bf16.msra.mxu0 %v1069
      %1092 = vmatprep.subr.bf16.mxu0 0
      %1093 = vmatpush1.bf16.msra.mxu0 %v1070
      %1094 = vmatprep.subr.bf16.mxu0 0
      %1095 = vmatpush1.bf16.msra.mxu0 %v1071
      %1096 = vmatprep.subr.bf16.mxu0 0
      %1097 = vmatpush1.bf16.msra.mxu0 0
      %1098 = vmatprep.subr.bf16.mxu0 0
      %1099 = vmatpush1.bf16.msra.mxu0 0
      %1100 = vmatprep.subr.bf16.mxu0 0
      %1101 = vmatpush1.bf16.msra.mxu0 0
      %1102 = vmatprep.subr.bf16.mxu0 0
      %1103 = vmatpush1.bf16.msra.mxu0 0
      %1104 = vmatprep.subr.bf16.mxu0 0
      %1105 = vmatpush1.bf16.msra.mxu0 0
      %1106 = vmatprep.subr.bf16.mxu0 0
      %1107 = vmatpush1.bf16.msra.mxu0 0
      %1108 = vmatprep.subr.bf16.mxu0 0
      %1109 = vmatpush1.bf16.msra.mxu0 0
      %1110 = vmatprep.subr.bf16.mxu0 0
      %1111 = vmatpush1.bf16.msra.mxu0 0
      %1112 = vmatprep.mubr.bf16.mxu0 0
      %1113 = vmatmul.mubr.bf16.gmra.mrb[0].mxu0 %v1029
      %v1114 = vpop.f32.mrb[0].mxu0
      %v1115 = vadd.f32 0.0, %v1114
      %v1116 = vpop.f32.mrb[0].mxu0
      %v1117 = vpop.f32.mrb[0].mxu0
      %v1118 = vadd.f32 0.0, %v1117
      %v1119 = vpop.f32.mrb[0].mxu0
      %1120 = vmatprep.mubr.bf16.mxu0 0
      %1121 = vmatmul.mubr.bf16.gmra.mrb[0].mxu0 %v1028
      %v1122 = vpop.f32.mrb[0].mxu0
      %v1123 = vadd.f32 0.0, %v1122
      %v1124 = vpop.f32.mrb[0].mxu0
      %v1125 = vpop.f32.mrb[0].mxu0
      %v1126 = vpop.f32.mrb[0].mxu0
      %1127 = vdwg.mxu0
      %v1128 = vadd.f32 %v992, %v1115
      %v1129 = vadd.f32 %v993, %v1118
      %v1130 = vadd.f32 %v994, %v1123
      %v1131 = vld [vmem:[%s207 + $0x10] sm:$0x7]
      %s1132 = scalar_lea.vmem %s1, 448
      %v1133 = vld [vmem:[%s1132] sm:$0xf]
      %v1134 = vld [vmem:[%s1132 + $0x4] sm:$0xf]
      %v1135 = vld [vmem:[%s1132 + $0x8] sm:$0xf]
      %v1136 = vld [vmem:[%s1132 + $0xc] sm:$0xf]
      %v1137 = vld [vmem:[%s1132 + $0x10] sm:$0xf]
      %v1138 = vld [vmem:[%s1132 + $0x14] sm:$0xf]
      %v1139 = vld [vmem:[%s1132 + $0x18] sm:$0xf]
      %v1140 = vld [vmem:[%s1132 + $0x1c] sm:$0xf]
      %v1141 = vld [vmem:[%s1132 + $0x20] sm:$0xf]
      %v1142 = vld [vmem:[%s1132 + $0x24] sm:$0xf]
      %v1143 = vld [vmem:[%s1132 + $0x28] sm:$0xf]
      %v1144 = vld [vmem:[%s1132 + $0x2c] sm:$0xf]
      %v1145 = vld [vmem:[%s1132 + $0x30] sm:$0xf]
      %v1146 = vld [vmem:[%s1132 + $0x34] sm:$0xf]
      %v1147 = vld [vmem:[%s1132 + $0x38] sm:$0xf]
      %v1148 = vld [vmem:[%s1132 + $0x3c] sm:$0xf]
      %v1150 = vunpack.c.l.b16 %v1131
      %v1151 = vpack.c.b16 %v1150, %v1022
      %vm1152 = vsmask.f32 5376
      %v1154 = vshrl.u32 %v1024, 16
      %v1156 = vrot.slane %v1154, 2
      %v1157 = vshll.u32 %v1024, 16
      %v1159 = vrot.slane %v1157, 3
      %v1160 = vor.u32 %v1156, %v1159
      %v1162 = vshrl.u32 %v1151, 16
      %v1164 = vrot.slane %v1162, 2
      %v1165 = vshll.u32 %v1151, 16
      %v1167 = vrot.slane %v1165, 3
      %v1168 = vor.u32 %v1164, %v1167
      %v1169 = vsel %vm1152, %v1160, %v1168
      %v1188 = vunpack.c.l.b16 %v1133
      %v1189 = vunpack.c.l.b16 %v1134
      %v1190 = vunpack.c.l.b16 %v1135
      %v1191 = vunpack.c.l.b16 %v1136
      %v1192 = vunpack.c.l.b16 %v1137
      %v1193 = vunpack.c.l.b16 %v1138
      %v1194 = vunpack.c.l.b16 %v1139
      %v1195 = vunpack.c.l.b16 %v1140
      %v1196 = vunpack.c.l.b16 %v1141
      %v1197 = vunpack.c.l.b16 %v1142
      %v1198 = vunpack.c.l.b16 %v1143
      %v1199 = vunpack.c.l.b16 %v1144
      %v1200 = vunpack.c.l.b16 %v1145
      %v1201 = vunpack.c.l.b16 %v1146
      %v1202 = vunpack.c.l.b16 %v1147
      %v1203 = vunpack.c.l.b16 %v1148
      %v1204 = vpack.c.b16 %v1189, %v1188
      %v1205 = vpack.c.b16 %v1191, %v1190
      %v1206 = vpack.c.b16 %v1193, %v1192
      %v1207 = vpack.c.b16 %v1195, %v1194
      %v1208 = vpack.c.b16 %v1197, %v1196
      %v1209 = vpack.c.b16 %v1199, %v1198
      %v1210 = vpack.c.b16 %v1201, %v1200
      %v1211 = vpack.c.b16 %v1203, %v1202
      %1220 = vmatprep.subr.bf16.mxu0 0
      %1221 = vmatpush1.bf16.msra.mxu0 %v1204
      %1222 = vmatprep.subr.bf16.mxu0 0
      %1223 = vmatpush1.bf16.msra.mxu0 %v1205
      %1224 = vmatprep.subr.bf16.mxu0 0
      %1225 = vmatpush1.bf16.msra.mxu0 %v1206
      %1226 = vmatprep.subr.bf16.mxu0 0
      %1227 = vmatpush1.bf16.msra.mxu0 %v1207
      %1228 = vmatprep.subr.bf16.mxu0 0
      %1229 = vmatpush1.bf16.msra.mxu0 %v1208
      %1230 = vmatprep.subr.bf16.mxu0 0
      %1231 = vmatpush1.bf16.msra.mxu0 %v1209
      %1232 = vmatprep.subr.bf16.mxu0 0
      %1233 = vmatpush1.bf16.msra.mxu0 %v1210
      %1234 = vmatprep.subr.bf16.mxu0 0
      %1235 = vmatpush1.bf16.msra.mxu0 %v1211
      %1236 = vmatprep.subr.bf16.mxu0 0
      %1237 = vmatpush1.bf16.msra.mxu0 0
      %1238 = vmatprep.subr.bf16.mxu0 0
      %1239 = vmatpush1.bf16.msra.mxu0 0
      %1240 = vmatprep.subr.bf16.mxu0 0
      %1241 = vmatpush1.bf16.msra.mxu0 0
      %1242 = vmatprep.subr.bf16.mxu0 0
      %1243 = vmatpush1.bf16.msra.mxu0 0
      %1244 = vmatprep.subr.bf16.mxu0 0
      %1245 = vmatpush1.bf16.msra.mxu0 0
      %1246 = vmatprep.subr.bf16.mxu0 0
      %1247 = vmatpush1.bf16.msra.mxu0 0
      %1248 = vmatprep.subr.bf16.mxu0 0
      %1249 = vmatpush1.bf16.msra.mxu0 0
      %1250 = vmatprep.subr.bf16.mxu0 0
      %1251 = vmatpush1.bf16.msra.mxu0 0
      %1252 = vmatprep.mubr.bf16.mxu0 0
      %1253 = vmatmul.mubr.bf16.gmra.mrb[0].mxu0 %v1169
      %v1254 = vpop.f32.mrb[0].mxu0
      %v1255 = vadd.f32 0.0, %v1254
      %v1256 = vpop.f32.mrb[0].mxu0
      %v1257 = vpop.f32.mrb[0].mxu0
      %v1258 = vadd.f32 0.0, %v1257
      %v1259 = vpop.f32.mrb[0].mxu0
      %1260 = vmatprep.mubr.bf16.mxu0 0
      %1261 = vmatmul.mubr.bf16.gmra.mrb[0].mxu0 %v1168
      %v1262 = vpop.f32.mrb[0].mxu0
      %v1263 = vadd.f32 0.0, %v1262
      %v1264 = vpop.f32.mrb[0].mxu0
      %v1265 = vpop.f32.mrb[0].mxu0
      %v1266 = vpop.f32.mrb[0].mxu0
      %1267 = vdwg.mxu0
      %v1268 = vadd.f32 %v1128, %v1255
      %v1269 = vadd.f32 %v1129, %v1258
      %v1270 = vadd.f32 %v1130, %v1263
      %v1271 = vld [vmem:[%s207 + $0x4] sm:$0x8]
      %s1272 = scalar_lea.vmem %s1, 512
      %v1273 = vld [vmem:[%s1272] sm:$0xf]
      %v1274 = vld [vmem:[%s1272 + $0x4] sm:$0xf]
      %v1275 = vld [vmem:[%s1272 + $0x8] sm:$0xf]
      %v1276 = vld [vmem:[%s1272 + $0xc] sm:$0xf]
      %v1277 = vld [vmem:[%s1272 + $0x10] sm:$0xf]
      %v1278 = vld [vmem:[%s1272 + $0x14] sm:$0xf]
      %v1279 = vld [vmem:[%s1272 + $0x18] sm:$0xf]
      %v1280 = vld [vmem:[%s1272 + $0x1c] sm:$0xf]
      %v1281 = vld [vmem:[%s1272 + $0x20] sm:$0xf]
      %v1282 = vld [vmem:[%s1272 + $0x24] sm:$0xf]
      %v1283 = vld [vmem:[%s1272 + $0x28] sm:$0xf]
      %v1284 = vld [vmem:[%s1272 + $0x2c] sm:$0xf]
      %v1285 = vld [vmem:[%s1272 + $0x30] sm:$0xf]
      %v1286 = vld [vmem:[%s1272 + $0x34] sm:$0xf]
      %v1287 = vld [vmem:[%s1272 + $0x38] sm:$0xf]
      %v1288 = vld [vmem:[%s1272 + $0x3c] sm:$0xf]
      %v1290 = vunpack.c.l.b16 %v1271
      %v1291 = vpack.c.b16 %v1021, %v1290
      %v1292 = vrot.slane %v1291, 3
      %v1293 = vrot.slane %v1151, 3
      %v1294 = vsel %vm630, %v1292, %v1293
      %v1313 = vunpack.c.l.b16 %v1273
      %v1314 = vunpack.c.l.b16 %v1274
      %v1315 = vunpack.c.l.b16 %v1275
      %v1316 = vunpack.c.l.b16 %v1276
      %v1317 = vunpack.c.l.b16 %v1277
      %v1318 = vunpack.c.l.b16 %v1278
      %v1319 = vunpack.c.l.b16 %v1279
      %v1320 = vunpack.c.l.b16 %v1280
      %v1321 = vunpack.c.l.b16 %v1281
      %v1322 = vunpack.c.l.b16 %v1282
      %v1323 = vunpack.c.l.b16 %v1283
      %v1324 = vunpack.c.l.b16 %v1284
      %v1325 = vunpack.c.l.b16 %v1285
      %v1326 = vunpack.c.l.b16 %v1286
      %v1327 = vunpack.c.l.b16 %v1287
      %v1328 = vunpack.c.l.b16 %v1288
      %v1329 = vpack.c.b16 %v1314, %v1313
      %v1330 = vpack.c.b16 %v1316, %v1315
      %v1331 = vpack.c.b16 %v1318, %v1317
      %v1332 = vpack.c.b16 %v1320, %v1319
      %v1333 = vpack.c.b16 %v1322, %v1321
      %v1334 = vpack.c.b16 %v1324, %v1323
      %v1335 = vpack.c.b16 %v1326, %v1325
      %v1336 = vpack.c.b16 %v1328, %v1327
      %1345 = vmatprep.subr.bf16.mxu0 0
      %1346 = vmatpush1.bf16.msra.mxu0 %v1329
      %1347 = vmatprep.subr.bf16.mxu0 0
      %1348 = vmatpush1.bf16.msra.mxu0 %v1330
      %1349 = vmatprep.subr.bf16.mxu0 0
      %1350 = vmatpush1.bf16.msra.mxu0 %v1331
      %1351 = vmatprep.subr.bf16.mxu0 0
      %1352 = vmatpush1.bf16.msra.mxu0 %v1332
      %1353 = vmatprep.subr.bf16.mxu0 0
      %1354 = vmatpush1.bf16.msra.mxu0 %v1333
      %1355 = vmatprep.subr.bf16.mxu0 0
      %1356 = vmatpush1.bf16.msra.mxu0 %v1334
      %1357 = vmatprep.subr.bf16.mxu0 0
      %1358 = vmatpush1.bf16.msra.mxu0 %v1335
      %1359 = vmatprep.subr.bf16.mxu0 0
      %1360 = vmatpush1.bf16.msra.mxu0 %v1336
      %1361 = vmatprep.subr.bf16.mxu0 0
      %1362 = vmatpush1.bf16.msra.mxu0 0
      %1363 = vmatprep.subr.bf16.mxu0 0
      %1364 = vmatpush1.bf16.msra.mxu0 0
      %1365 = vmatprep.subr.bf16.mxu0 0
      %1366 = vmatpush1.bf16.msra.mxu0 0
      %1367 = vmatprep.subr.bf16.mxu0 0
      %1368 = vmatpush1.bf16.msra.mxu0 0
      %1369 = vmatprep.subr.bf16.mxu0 0
      %1370 = vmatpush1.bf16.msra.mxu0 0
      %1371 = vmatprep.subr.bf16.mxu0 0
      %1372 = vmatpush1.bf16.msra.mxu0 0
      %1373 = vmatprep.subr.bf16.mxu0 0
      %1374 = vmatpush1.bf16.msra.mxu0 0
      %1375 = vmatprep.subr.bf16.mxu0 0
      %1376 = vmatpush1.bf16.msra.mxu0 0
      %1377 = vmatprep.mubr.bf16.mxu0 0
      %1378 = vmatmul.mubr.bf16.gmra.mrb[0].mxu0 %v1294
      %v1379 = vpop.f32.mrb[0].mxu0
      %v1380 = vadd.f32 0.0, %v1379
      %v1381 = vpop.f32.mrb[0].mxu0
      %v1382 = vpop.f32.mrb[0].mxu0
      %v1383 = vadd.f32 0.0, %v1382
      %v1384 = vpop.f32.mrb[0].mxu0
      %1385 = vmatprep.mubr.bf16.mxu0 0
      %1386 = vmatmul.mubr.bf16.gmra.mrb[0].mxu0 %v1293
      %v1387 = vpop.f32.mrb[0].mxu0
      %v1388 = vadd.f32 0.0, %v1387
      %v1389 = vpop.f32.mrb[0].mxu0
      %v1390 = vpop.f32.mrb[0].mxu0
      %v1391 = vpop.f32.mrb[0].mxu0
      %1392 = vdwg.mxu0
      %v1393 = vadd.f32 %v1268, %v1380
      %v1394 = vadd.f32 %v1269, %v1383
      %v1395 = vadd.f32 %v1270, %v1388
      %v1396 = vld [vmem:[%s2] sm:$0xff]
      %v1397 = vld [vmem:[%s2 + $0x8] sm:$0xff]
      %v1398 = vld [vmem:[%s2 + $0x10] sm:$0xff]
      %1400 = vset.pattern.permute.xlu0 0
      %1401 = vperm.xlu0 %1400, %v1396
      %v1402 = vpop.permute.xlu0 %1401
      %1405 = vset.pattern.permute.xlu0 0
      %1406 = vperm.xlu0 %1405, %v1397
      %v1407 = vpop.permute.xlu0 %1406
      %1410 = vset.pattern.permute.xlu0 0
      %1411 = vperm.xlu0 %1410, %v1398
      %v1412 = vpop.permute.xlu0 %1411
      %v1414 = vmul.f32 %v1393, %v1402
      %v1415 = vmul.f32 %v1394, %v1407
      %v1416 = vmul.f32 %v1395, %v1412
      %v1417 = vadd.f32 %v1414, %v1415
      %v1418 = vadd.f32 %v1417, %v1416
      %v1419 = vrot.slane %v1418, 4
      %v1420 = vadd.f32 %v1418, %v1419
      %v1421 = vrot.slane %v1420, 2
      %v1422 = vadd.f32 %v1420, %v1421
      %v1423 = vrot.slane %v1422, 1
      %v1424 = vadd.f32 %v1422, %v1423
      %v1425 = vmul.f32 %v1414, %v1393
      %v1426 = vmul.f32 %v1415, %v1394
      %v1427 = vmul.f32 %v1416, %v1395
      %v1428 = vadd.f32 %v1425, %v1426
      %v1429 = vadd.f32 %v1428, %v1427
      %v1430 = vrot.slane %v1429, 4
      %v1431 = vadd.f32 %v1429, %v1430
      %v1432 = vrot.slane %v1431, 2
      %v1433 = vadd.f32 %v1431, %v1432
      %v1434 = vrot.slane %v1433, 1
      %v1435 = vadd.f32 %v1433, %v1434
      %v1436 = vmul.f32 %v1424, 0.0625
      %v1437 = vmul.f32 %v1435, 0.0625
      %v1438 = vmul.f32 %v1436, %v1436
      %v1439 = vsub.f32 %v1437, %v1438
      %v1440 = vmax.f32 %v1439, 0.0
      %v1441 = vadd.f32 %v1440, 1e-05
      %v1442 = vrsqrt.pop %v1441
      %v1443 = vsub.f32 %v1393, %v1436
      %v1444 = vsub.f32 %v1394, %v1436
      %v1445 = vsub.f32 %v1395, %v1436
      %v1446 = vmul.f32 %v1443, %v1442
      %v1447 = vmul.f32 %v1444, %v1442
      %v1448 = vmul.f32 %v1445, %v1442
      %v1449 = vld [vmem:[%s212] sm:$0xf]
      %v1450 = vld [vmem:[%s212 + $0x4] sm:$0xf]
      %v1451 = vld [vmem:[%s212 + $0x8] sm:$0xf]
      %v1452 = vunpack.c.l.bf16 %v1449
      %v1453 = vunpack.c.l.bf16 %v1450
      %v1454 = vunpack.c.l.bf16 %v1451
      %v1455 = vadd.f32 %v1446, %v1452
      %v1456 = vadd.f32 %v1447, %v1453
      %v1457 = vadd.f32 %v1448, %v1454
      %v1458 = vpack.c.bf16 %v1456, %v1455
      %v1459 = vpack.c.bf16 %v1457, %v1457
      %v1462 = vunpack.c.l.b16 %v1458
      %v1463 = vunpack.c.h.b16 %v1458
      %v1464 = vunpack.c.l.b16 %v1459
      %v1465 = vpack.c.b16 %v1462, %v1462
      %v1466 = vpack.c.b16 %v1463, %v1463
      %v1467 = vpack.c.b16 %v1464, %v1464
      %1471 = vst [vmem:[%s217] sm:$0xf] %v1465
      %1472 = vst [vmem:[%s217 + $0x4] sm:$0xf] %v1466
      %1473 = vst [vmem:[%s217 + $0x8] sm:$0xf] %v1467
      %p1474 = scmp.lt.s32.totalorder %s15, 1
      %s1475 = scalar_select %p1474, %s15, 1
      %s1476 = smul.addr %s1475, 3
      %s1477 = smul.addr %s1476, 4
      %s1478 = scalar_lea.vmem %s4, %s1477
      // Predicated region
      $region37: #{generator_forward.27} parent=35 // pred_check
        %p1479 = pneg %p127
      $region38: #{generator_forward.27} parent=35 // pred_check_branch
        %1481 = sbr.rel (%p1479) target = $region40
      $region39: #{generator_forward.27} parent=35 // pred_region
        _
      $region40: #{generator_forward.27} parent=35 // pred_fallthru
        _
    $region36: #{generator_forward.27} parent=5 // pred_fallthru
      _
    %p1482 = scmp.le.s32.totalorder 2, %s10
    // Predicated region
    $region41: #{generator_forward.27} parent=5 // pred_check
      %p1483 = pneg %p1482
    $region42: #{generator_forward.27} parent=5 // pred_check_branch
      %1485 = sbr.rel (%p1483) target = $region44
    $region43: #{generator_forward.27} parent=5 // pred_region
      %s1486 = ssub.s32 %s10, 2
      // Predicated region
      $region45: #{generator_forward.27} parent=43 // pred_check
        %p1487 = pneg %p133
      $region46: #{generator_forward.27} parent=43 // pred_check_branch
        %1489 = sbr.rel (%p1487) target = $region48
      $region47: #{generator_forward.27} parent=43 // pred_region
        %p1490 = scmp.lt.s32.totalorder %s16, 1
        %s1491 = scalar_select %p1490, %s16, 1
        %s1492 = smul.addr %s1491, 3
        %s1493 = smul.addr %s1492, 4
        %s1494 = scalar_lea.vmem %s4, %s1493
      $region48: #{generator_forward.27} parent=43 // pred_fallthru
        _
    $region44: #{generator_forward.27} parent=5 // pred_fallthru
      _
  $region6: #{generator_forward.27} parent=0 // loop_footer
    %s14 = sadd.s32 1, %s10
  $region7: #{generator_forward.27} parent=0 // loop_footer_branch
    %9 = sbr.rel target = $region3
  $region8: #{generator_forward.27} parent=0 // loop_exit
    _

// kernel: generator_forward.44
$region0: #{generator_forward.44}
  #allocation0 [shape = 'u32[]', space=smem, size = 0x4, offset = 0x4, fixed_abs, tag = 'smem constant byte address 0x4 - core index']
  #allocation1 [shape = 'u32[144,128]{1,0:T(1,128)}', space=vmem, size = 0x12000, scoped, tag = 'internal scratch']
  %s0 = inlined_call_operand.vmem [shape: bf16[2,26,128], index: 0, kind: input, shape index: {}]
  %s1 = inlined_call_operand.vmem [shape: bf16[9,128,64], index: 1, kind: input, shape index: {}]
  %s2 = inlined_call_operand.vmem [shape: f32[20,1], index: 2, kind: input, shape index: {}]
  %s3 = inlined_call_operand.vmem [shape: bf16[2,4,20,64], index: 3, kind: output, shape index: {}]
  %s4 = sld [smem:[#allocation0]]
  $region45: #{generator_forward.44} parent=0
    _
  %s6 = ssub.s32 1, %s4
  %s7 = scalar_select 0, %s6, %s4
  loop: start=0, step=1, limit=4
  $region2: #{generator_forward.44} parent=0 // loop_pre_header
    _
  $region3: #{generator_forward.44} parent=0 // loop_header
    %s9 = sphi 0, %s13
    %p10 = scmp.ge.s32.totalorder %s9, 4
    %s19 = sphi 0, %s21
    %s22 = sphi 0, %s19
    %s23 = sphi 0, %s22
    %s39 = sphi 0, %s23
    %s43 = sphi 0, %s43
    %s45 = sphi 0, %s43
    %s46 = sphi 0, %s45
    %s60 = sphi 0, %s46
    %s64 = sphi 0, %s64
    %s66 = sphi 0, %s64
    %s67 = sphi 0, %s66
    %s81 = sphi 0, %s67
    %s87 = sphi 0, %s89
    %s90 = sphi 0, %s87
    %s91 = sphi 0, %s90
    %s107 = sphi 0, %s91
  $region4: #{generator_forward.44} parent=0 // loop_header_branch
    %12 = sbr.rel (%p10) target = $region8
  $region5: #{generator_forward.44} parent=0 // loop_body
    %s14 = ssub.s32 %s9, 1
    %s15 = ssub.s32 %s9, 2
    %s16 = sadd.s32 %s9, 1
    %s17 = ssub.s32 %s9, %s16
    %p18 = scmp.eq.s32.totalorder %s17, 0
    %s20 = sadd.s32 %s19, 1
    %s21 = scalar_select %p18, %s19, %s20
    %p24 = pneg %p18
    %p25 = scmp.eq.s32.totalorder %s9, 1
    %p26 = por %p24, %p25
    %p27 = scmp.ne.s32.totalorder %s19, %s22
    %p28 = scmp.eq.s32.totalorder %s9, 0
    %p29 = por %p27, %p28
    %p30 = scmp.ne.s32.totalorder %s19, %s22
    %p31 = scmp.eq.s32.totalorder %s14, 1
    %p32 = por %p30, %p31
    %p33 = scmp.ne.s32.totalorder %s22, %s23
    %p34 = scmp.eq.s32.totalorder %s14, 0
    %p35 = por %p33, %p34
    %p36 = scmp.ne.s32.totalorder %s22, %s23
    %p37 = scmp.eq.s32.totalorder %s15, 1
    %p38 = por %p36, %p37
    %p40 = scmp.ne.s32.totalorder %s23, %s39
    %p41 = scmp.eq.s32.totalorder %s15, 0
    %p42 = por %p40, %p41
    %s44 = sadd.s32 %s43, 1
    %p47 = scmp.eq.s32.totalorder %s9, 1
    %p48 = scmp.ne.s32.totalorder %s43, %s45
    %p49 = scmp.eq.s32.totalorder %s9, 0
    %p50 = por %p48, %p49
    %p51 = scmp.ne.s32.totalorder %s43, %s45
    %p52 = scmp.eq.s32.totalorder %s14, 1
    %p53 = por %p51, %p52
    %p54 = scmp.ne.s32.totalorder %s45, %s46
    %p55 = scmp.eq.s32.totalorder %s14, 0
    %p56 = por %p54, %p55
    %p57 = scmp.ne.s32.totalorder %s45, %s46
    %p58 = scmp.eq.s32.totalorder %s15, 1
    %p59 = por %p57, %p58
    %p61 = scmp.ne.s32.totalorder %s46, %s60
    %p62 = scmp.eq.s32.totalorder %s15, 0
    %p63 = por %p61, %p62
    %s65 = sadd.s32 %s64, 1
    %p68 = scmp.eq.s32.totalorder %s9, 1
    %p69 = scmp.ne.s32.totalorder %s64, %s66
    %p70 = scmp.eq.s32.totalorder %s9, 0
    %p71 = por %p69, %p70
    %p72 = scmp.ne.s32.totalorder %s64, %s66
    %p73 = scmp.eq.s32.totalorder %s14, 1
    %p74 = por %p72, %p73
    %p75 = scmp.ne.s32.totalorder %s66, %s67
    %p76 = scmp.eq.s32.totalorder %s14, 0
    %p77 = por %p75, %p76
    %p78 = scmp.ne.s32.totalorder %s66, %s67
    %p79 = scmp.eq.s32.totalorder %s15, 1
    %p80 = por %p78, %p79
    %p82 = scmp.ne.s32.totalorder %s67, %s81
    %p83 = scmp.eq.s32.totalorder %s15, 0
    %p84 = por %p82, %p83
    %s85 = ssub.s32 %s9, %s16
    %p86 = scmp.eq.s32.totalorder %s85, 0
    %s88 = sadd.s32 %s87, 1
    %s89 = scalar_select %p86, %s87, %s88
    %p92 = pneg %p86
    %p93 = scmp.eq.s32.totalorder %s9, 1
    %p94 = por %p92, %p93
    %p95 = scmp.ne.s32.totalorder %s87, %s90
    %p96 = scmp.eq.s32.totalorder %s9, 0
    %p97 = por %p95, %p96
    %p98 = scmp.ne.s32.totalorder %s87, %s90
    %p99 = scmp.eq.s32.totalorder %s14, 1
    %p100 = por %p98, %p99
    %p101 = scmp.ne.s32.totalorder %s90, %s91
    %p102 = scmp.eq.s32.totalorder %s14, 0
    %p103 = por %p101, %p102
    %p104 = scmp.ne.s32.totalorder %s90, %s91
    %p105 = scmp.eq.s32.totalorder %s15, 1
    %p106 = por %p104, %p105
    %p108 = scmp.ne.s32.totalorder %s91, %s107
    %p109 = scmp.eq.s32.totalorder %s15, 0
    %p110 = por %p108, %p109
    %p111 = scmp.le.s32.totalorder 1, %s9
    %p112 = scmp.lt.s32.totalorder %s9, 3
    %p113 = pnand %p111, %p112
    %p114 = pneg %p113
    // Predicated region
    $region9: #{generator_forward.44} parent=5 // pred_check
      _
    $region10: #{generator_forward.44} parent=5 // pred_check_branch
      %116 = sbr.rel (%p113) target = $region12
    $region11: #{generator_forward.44} parent=5 // pred_region
      %s117 = ssub.s32 %s9, 1
      // Predicated region
      $region13: #{generator_forward.44} parent=11 // pred_check
        %p118 = pneg %p56
      $region14: #{generator_forward.44} parent=11 // pred_check_branch
        %120 = sbr.rel (%p118) target = $region16
      $region15: #{generator_forward.44} parent=11 // pred_region
        _
      $region16: #{generator_forward.44} parent=11 // pred_fallthru
        _
      // Predicated region
      $region17: #{generator_forward.44} parent=11 // pred_check
        %p121 = pneg %p77
      $region18: #{generator_forward.44} parent=11 // pred_check_branch
        %123 = sbr.rel (%p121) target = $region20
      $region19: #{generator_forward.44} parent=11 // pred_region
        _
      $region20: #{generator_forward.44} parent=11 // pred_fallthru
        _
    $region12: #{generator_forward.44} parent=5 // pred_fallthru
      _
    %p124 = scmp.lt.s32.totalorder %s9, 2
    // Predicated region
    $region21: #{generator_forward.44} parent=5 // pred_check
      %p125 = pneg %p124
    $region22: #{generator_forward.44} parent=5 // pred_check_branch
      %127 = sbr.rel (%p125) target = $region24
    $region23: #{generator_forward.44} parent=5 // pred_region
      // Predicated region
      $region25: #{generator_forward.44} parent=23 // pred_check
        %p128 = pneg %p29
      $region26: #{generator_forward.44} parent=23 // pred_check_branch
        %130 = sbr.rel (%p128) target = $region28
      $region27: #{generator_forward.44} parent=23 // pred_region
        %p131 = scmp.lt.s32.totalorder %s9, 1
        %s132 = scalar_select %p131, %s9, 1
        %s133 = smul.addr %s132, 4
        %s134 = smul.addr %s133, 4
        %s135 = scalar_lea.vmem %s0, %s134
      $region28: #{generator_forward.44} parent=23 // pred_fallthru
        _
    $region24: #{generator_forward.44} parent=5 // pred_fallthru
      _
    %p136 = scmp.le.s32.totalorder 1, %s9
    %p137 = scmp.lt.s32.totalorder %s9, 3
    %p138 = pnand %p136, %p137
    %p139 = pneg %p138
    // Predicated region
    $region29: #{generator_forward.44} parent=5 // pred_check
      _
    $region30: #{generator_forward.44} parent=5 // pred_check_branch
      %141 = sbr.rel (%p138) target = $region32
    $region31: #{generator_forward.44} parent=5 // pred_region
      %s142 = ssub.s32 %s9, 1
      %p143 = scmp.lt.s32.totalorder %s14, 1
      %s144 = scalar_select %p143, %s14, 1
      %s145 = smul.addr %s144, 4
      %s146 = smul.addr %s145, 4
      %s147 = scalar_lea.vmem %s0, %s146
      %p148 = pneg %p35
      %p149 = pneg %p32
      %p150 = pneg %p56
      %p151 = pneg %p53
      %p152 = pneg %p77
      %p153 = pneg %p74
      %p154 = pneg %p103
      %p155 = pneg %p100
      %p156 = scmp.lt.s32.totalorder %s14, 1
      %s157 = scalar_select %p156, %s14, 1
      %s158 = smul.addr %s157, 12
      %s159 = smul.addr %s158, 4
      %s160 = scalar_lea.vmem %s3, %s159
      %p161 = scmp.lt.s32.totalorder %s14, 1
      %s162 = scalar_select %p161, %s14, 1
      %s163 = smul.addr %s162, 4
      %s164 = smul.addr %s163, 4
      %s165 = scalar_lea.vmem %s0, %s164
      %p166 = scmp.lt.s32.totalorder %s14, 1
      %s167 = scalar_select %p166, %s14, 1
      %s168 = smul.addr %s167, 12
      %s169 = smul.addr %s168, 4
      %s170 = scalar_lea.vmem %s3, %s169
      %v172 = vld [vmem:[%s165] sm:$0xf]
      %v173 = vld [vmem:[%s165 + $0x4] sm:$0xf]
      %v174 = vld [vmem:[%s165 + $0x8] sm:$0x3]
      %s175 = scalar_lea.vmem %s1, 256
      %v176 = vld [vmem:[%s175] sm:$0xf]
      %v177 = vld [vmem:[%s175 + $0x4] sm:$0xf]
      %v178 = vld [vmem:[%s175 + $0x8] sm:$0xf]
      %v179 = vld [vmem:[%s175 + $0xc] sm:$0xf]
      %v180 = vld [vmem:[%s175 + $0x10] sm:$0xf]
      %v181 = vld [vmem:[%s175 + $0x14] sm:$0xf]
      %v182 = vld [vmem:[%s175 + $0x18] sm:$0xf]
      %v183 = vld [vmem:[%s175 + $0x1c] sm:$0xf]
      %v184 = vld [vmem:[%s175 + $0x20] sm:$0xf]
      %v185 = vld [vmem:[%s175 + $0x24] sm:$0xf]
      %v186 = vld [vmem:[%s175 + $0x28] sm:$0xf]
      %v187 = vld [vmem:[%s175 + $0x2c] sm:$0xf]
      %v188 = vld [vmem:[%s175 + $0x30] sm:$0xf]
      %v189 = vld [vmem:[%s175 + $0x34] sm:$0xf]
      %v190 = vld [vmem:[%s175 + $0x38] sm:$0xf]
      %v191 = vld [vmem:[%s175 + $0x3c] sm:$0xf]
      %v195 = vunpack.c.l.b16 %v172
      %v196 = vunpack.c.l.b16 %v173
      %v197 = vunpack.c.l.b16 %v174
      %v198 = vpack.c.b16 %v196, %v195
      %v199 = vpack.c.b16 %v197, %v197
      %v218 = vunpack.c.l.b16 %v176
      %v219 = vunpack.c.l.b16 %v177
      %v220 = vunpack.c.l.b16 %v178
      %v221 = vunpack.c.l.b16 %v179
      %v222 = vunpack.c.l.b16 %v180
      %v223 = vunpack.c.l.b16 %v181
      %v224 = vunpack.c.l.b16 %v182
      %v225 = vunpack.c.l.b16 %v183
      %v226 = vunpack.c.l.b16 %v184
      %v227 = vunpack.c.l.b16 %v185
      %v228 = vunpack.c.l.b16 %v186
      %v229 = vunpack.c.l.b16 %v187
      %v230 = vunpack.c.l.b16 %v188
      %v231 = vunpack.c.l.b16 %v189
      %v232 = vunpack.c.l.b16 %v190
      %v233 = vunpack.c.l.b16 %v191
      %v234 = vpack.c.b16 %v219, %v218
      %v235 = vpack.c.b16 %v221, %v220
      %v236 = vpack.c.b16 %v223, %v222
      %v237 = vpack.c.b16 %v225, %v224
      %v238 = vpack.c.b16 %v227, %v226
      %v239 = vpack.c.b16 %v229, %v228
      %v240 = vpack.c.b16 %v231, %v230
      %v241 = vpack.c.b16 %v233, %v232
      %250 = vmatprep.subr.bf16.mxu0 0
      %251 = vmatpush1.bf16.msra.mxu0 %v234
      %252 = vmatprep.subr.bf16.mxu0 0
      %253 = vmatpush1.bf16.msra.mxu0 %v235
      %254 = vmatprep.subr.bf16.mxu0 0
      %255 = vmatpush1.bf16.msra.mxu0 %v236
      %256 = vmatprep.subr.bf16.mxu0 0
      %257 = vmatpush1.bf16.msra.mxu0 %v237
      %258 = vmatprep.subr.bf16.mxu0 0
      %259 = vmatpush1.bf16.msra.mxu0 %v238
      %260 = vmatprep.subr.bf16.mxu0 0
      %261 = vmatpush1.bf16.msra.mxu0 %v239
      %262 = vmatprep.subr.bf16.mxu0 0
      %263 = vmatpush1.bf16.msra.mxu0 %v240
      %264 = vmatprep.subr.bf16.mxu0 0
      %265 = vmatpush1.bf16.msra.mxu0 %v241
      %266 = vmatprep.subr.bf16.mxu0 0
      %267 = vmatpush1.bf16.msra.mxu0 0
      %268 = vmatprep.subr.bf16.mxu0 0
      %269 = vmatpush1.bf16.msra.mxu0 0
      %270 = vmatprep.subr.bf16.mxu0 0
      %271 = vmatpush1.bf16.msra.mxu0 0
      %272 = vmatprep.subr.bf16.mxu0 0
      %273 = vmatpush1.bf16.msra.mxu0 0
      %274 = vmatprep.subr.bf16.mxu0 0
      %275 = vmatpush1.bf16.msra.mxu0 0
      %276 = vmatprep.subr.bf16.mxu0 0
      %277 = vmatpush1.bf16.msra.mxu0 0
      %278 = vmatprep.subr.bf16.mxu0 0
      %279 = vmatpush1.bf16.msra.mxu0 0
      %280 = vmatprep.subr.bf16.mxu0 0
      %281 = vmatpush1.bf16.msra.mxu0 0
      %282 = vmatprep.mubr.bf16.mxu0 0
      %283 = vmatmul.mubr.bf16.gmra.mrb[0].mxu0 %v198
      %v284 = vpop.f32.mrb[0].mxu0
      %v285 = vadd.f32 0.0, %v284
      %v286 = vpop.f32.mrb[0].mxu0
      %v287 = vpop.f32.mrb[0].mxu0
      %v288 = vadd.f32 0.0, %v287
      %v289 = vpop.f32.mrb[0].mxu0
      %290 = vmatprep.mubr.bf16.mxu0 0
      %291 = vmatmul.mubr.bf16.gmra.mrb[0].mxu0 %v199
      %v292 = vpop.f32.mrb[0].mxu0
      %v293 = vadd.f32 0.0, %v292
      %v294 = vpop.f32.mrb[0].mxu0
      %v295 = vpop.f32.mrb[0].mxu0
      %v296 = vpop.f32.mrb[0].mxu0
      %297 = vdwg.mxu0
      %v298 = vld [vmem:[%s165 + $0x8] sm:$0x7]
      %s299 = scalar_lea.vmem %s1, 192
      %v300 = vld [vmem:[%s299] sm:$0xf]
      %v301 = vld [vmem:[%s299 + $0x4] sm:$0xf]
      %v302 = vld [vmem:[%s299 + $0x8] sm:$0xf]
      %v303 = vld [vmem:[%s299 + $0xc] sm:$0xf]
      %v304 = vld [vmem:[%s299 + $0x10] sm:$0xf]
      %v305 = vld [vmem:[%s299 + $0x14] sm:$0xf]
      %v306 = vld [vmem:[%s299 + $0x18] sm:$0xf]
      %v307 = vld [vmem:[%s299 + $0x1c] sm:$0xf]
      %v308 = vld [vmem:[%s299 + $0x20] sm:$0xf]
      %v309 = vld [vmem:[%s299 + $0x24] sm:$0xf]
      %v310 = vld [vmem:[%s299 + $0x28] sm:$0xf]
      %v311 = vld [vmem:[%s299 + $0x2c] sm:$0xf]
      %v312 = vld [vmem:[%s299 + $0x30] sm:$0xf]
      %v313 = vld [vmem:[%s299 + $0x34] sm:$0xf]
      %v314 = vld [vmem:[%s299 + $0x38] sm:$0xf]
      %v315 = vld [vmem:[%s299 + $0x3c] sm:$0xf]
      %s316 = scalar_lea.vmem %s1, 320
      %v317 = vld [vmem:[%s316] sm:$0xf]
      %v318 = vld [vmem:[%s316 + $0x4] sm:$0xf]
      %v319 = vld [vmem:[%s316 + $0x8] sm:$0xf]
      %v320 = vld [vmem:[%s316 + $0xc] sm:$0xf]
      %v321 = vld [vmem:[%s316 + $0x10] sm:$0xf]
      %v322 = vld [vmem:[%s316 + $0x14] sm:$0xf]
      %v323 = vld [vmem:[%s316 + $0x18] sm:$0xf]
      %v324 = vld [vmem:[%s316 + $0x1c] sm:$0xf]
      %v325 = vld [vmem:[%s316 + $0x20] sm:$0xf]
      %v326 = vld [vmem:[%s316 + $0x24] sm:$0xf]
      %v327 = vld [vmem:[%s316 + $0x28] sm:$0xf]
      %v328 = vld [vmem:[%s316 + $0x2c] sm:$0xf]
      %v329 = vld [vmem:[%s316 + $0x30] sm:$0xf]
      %v330 = vld [vmem:[%s316 + $0x34] sm:$0xf]
      %v331 = vld [vmem:[%s316 + $0x38] sm:$0xf]
      %v332 = vld [vmem:[%s316 + $0x3c] sm:$0xf]
      %v349 = vunpack.c.l.b16 %v317
      %v350 = vunpack.c.l.b16 %v318
      %v351 = vunpack.c.l.b16 %v319
      %v352 = vunpack.c.l.b16 %v320
      %v353 = vunpack.c.l.b16 %v321
      %v354 = vunpack.c.l.b16 %v322
      %v355 = vunpack.c.l.b16 %v323
      %v356 = vunpack.c.l.b16 %v324
      %v357 = vunpack.c.l.b16 %v325
      %v358 = vunpack.c.l.b16 %v326
      %v359 = vunpack.c.l.b16 %v327
      %v360 = vunpack.c.l.b16 %v328
      %v361 = vunpack.c.l.b16 %v329
      %v362 = vunpack.c.l.b16 %v330
      %v363 = vunpack.c.l.b16 %v331
      %v364 = vunpack.c.l.b16 %v332
      %v365 = vpack.c.b16 %v350, %v349
      %v366 = vpack.c.b16 %v352, %v351
      %v367 = vpack.c.b16 %v354, %v353
      %v368 = vpack.c.b16 %v356, %v355
      %v369 = vpack.c.b16 %v358, %v357
      %v370 = vpack.c.b16 %v360, %v359
      %v371 = vpack.c.b16 %v362, %v361
      %v372 = vpack.c.b16 %v364, %v363
      %381 = vmatprep.subr.bf16.mxu0 0
      %382 = vmatpush1.bf16.msra.mxu0 %v365
      %383 = vmatprep.subr.bf16.mxu0 0
      %384 = vmatpush1.bf16.msra.mxu0 %v366
      %385 = vmatprep.subr.bf16.mxu0 0
      %386 = vmatpush1.bf16.msra.mxu0 %v367
      %387 = vmatprep.subr.bf16.mxu0 0
      %388 = vmatpush1.bf16.msra.mxu0 %v368
      %389 = vmatprep.subr.bf16.mxu0 0
      %390 = vmatpush1.bf16.msra.mxu0 %v369
      %391 = vmatprep.subr.bf16.mxu0 0
      %392 = vmatpush1.bf16.msra.mxu0 %v370
      %393 = vmatprep.subr.bf16.mxu0 0
      %394 = vmatpush1.bf16.msra.mxu0 %v371
      %395 = vmatprep.subr.bf16.mxu0 0
      %396 = vmatpush1.bf16.msra.mxu0 %v372
      %397 = vmatprep.subr.bf16.mxu0 0
      %398 = vmatpush1.bf16.msra.mxu0 0
      %399 = vmatprep.subr.bf16.mxu0 0
      %400 = vmatpush1.bf16.msra.mxu0 0
      %401 = vmatprep.subr.bf16.mxu0 0
      %402 = vmatpush1.bf16.msra.mxu0 0
      %403 = vmatprep.subr.bf16.mxu0 0
      %404 = vmatpush1.bf16.msra.mxu0 0
      %405 = vmatprep.subr.bf16.mxu0 0
      %406 = vmatpush1.bf16.msra.mxu0 0
      %407 = vmatprep.subr.bf16.mxu0 0
      %408 = vmatpush1.bf16.msra.mxu0 0
      %409 = vmatprep.subr.bf16.mxu0 0
      %410 = vmatpush1.bf16.msra.mxu0 0
      %411 = vmatprep.subr.bf16.mxu0 0
      %412 = vmatpush1.bf16.msra.mxu0 0
      %413 = vmatprep.mubr.bf16.mxu0 0
      %414 = vmatmul.mubr.bf16.gmra.mrb[0].mxu0 %v198
      %v415 = vpop.f32.mrb[0].mxu0
      %v416 = vadd.f32 0.0, %v415
      %v417 = vpop.f32.mrb[0].mxu0
      %v418 = vpop.f32.mrb[0].mxu0
      %v419 = vadd.f32 0.0, %v418
      %v420 = vpop.f32.mrb[0].mxu0
      %421 = vmatprep.mubr.bf16.mxu0 0
      %422 = vmatmul.mubr.bf16.gmra.mrb[0].mxu0 %v199
      %v423 = vpop.f32.mrb[0].mxu0
      %v424 = vadd.f32 0.0, %v423
      %v425 = vpop.f32.mrb[0].mxu0
      %v426 = vpop.f32.mrb[0].mxu0
      %v427 = vpop.f32.mrb[0].mxu0
      %428 = vdwg.mxu0
      %v430 = vunpack.c.l.b16 %v298
      %v431 = vpack.c.b16 %v430, %v430
      %vm432 = vsmask.f32 7424
      %v434 = vshrl.u32 %v198, 16
      %v436 = vshll.u32 %v198, 16
      %v438 = vrot.slane %v436, 1
      %v439 = vor.u32 %v434, %v438
      %v441 = vshll.u32 %v431, 16
      %v443 = vrot.slane %v441, 1
      %v444 = vsel %vm432, %v439, %v443
      %v445 = vshrl.u32 %v431, 16
      %v447 = vor.u32 %v445, %v443
      %v466 = vunpack.c.l.b16 %v300
      %v467 = vunpack.c.l.b16 %v301
      %v468 = vunpack.c.l.b16 %v302
      %v469 = vunpack.c.l.b16 %v303
      %v470 = vunpack.c.l.b16 %v304
      %v471 = vunpack.c.l.b16 %v305
      %v472 = vunpack.c.l.b16 %v306
      %v473 = vunpack.c.l.b16 %v307
      %v474 = vunpack.c.l.b16 %v308
      %v475 = vunpack.c.l.b16 %v309
      %v476 = vunpack.c.l.b16 %v310
      %v477 = vunpack.c.l.b16 %v311
      %v478 = vunpack.c.l.b16 %v312
      %v479 = vunpack.c.l.b16 %v313
      %v480 = vunpack.c.l.b16 %v314
      %v481 = vunpack.c.l.b16 %v315
      %v482 = vpack.c.b16 %v467, %v466
      %v483 = vpack.c.b16 %v469, %v468
      %v484 = vpack.c.b16 %v471, %v470
      %v485 = vpack.c.b16 %v473, %v472
      %v486 = vpack.c.b16 %v475, %v474
      %v487 = vpack.c.b16 %v477, %v476
      %v488 = vpack.c.b16 %v479, %v478
      %v489 = vpack.c.b16 %v481, %v480
      %498 = vmatprep.subr.bf16.mxu0 0
      %499 = vmatpush1.bf16.msra.mxu0 %v482
      %500 = vmatprep.subr.bf16.mxu0 0
      %501 = vmatpush1.bf16.msra.mxu0 %v483
      %502 = vmatprep.subr.bf16.mxu0 0
      %503 = vmatpush1.bf16.msra.mxu0 %v484
      %504 = vmatprep.subr.bf16.mxu0 0
      %505 = vmatpush1.bf16.msra.mxu0 %v485
      %506 = vmatprep.subr.bf16.mxu0 0
      %507 = vmatpush1.bf16.msra.mxu0 %v486
      %508 = vmatprep.subr.bf16.mxu0 0
      %509 = vmatpush1.bf16.msra.mxu0 %v487
      %510 = vmatprep.subr.bf16.mxu0 0
      %511 = vmatpush1.bf16.msra.mxu0 %v488
      %512 = vmatprep.subr.bf16.mxu0 0
      %513 = vmatpush1.bf16.msra.mxu0 %v489
      %514 = vmatprep.subr.bf16.mxu0 0
      %515 = vmatpush1.bf16.msra.mxu0 0
      %516 = vmatprep.subr.bf16.mxu0 0
      %517 = vmatpush1.bf16.msra.mxu0 0
      %518 = vmatprep.subr.bf16.mxu0 0
      %519 = vmatpush1.bf16.msra.mxu0 0
      %520 = vmatprep.subr.bf16.mxu0 0
      %521 = vmatpush1.bf16.msra.mxu0 0
      %522 = vmatprep.subr.bf16.mxu0 0
      %523 = vmatpush1.bf16.msra.mxu0 0
      %524 = vmatprep.subr.bf16.mxu0 0
      %525 = vmatpush1.bf16.msra.mxu0 0
      %526 = vmatprep.subr.bf16.mxu0 0
      %527 = vmatpush1.bf16.msra.mxu0 0
      %528 = vmatprep.subr.bf16.mxu0 0
      %529 = vmatpush1.bf16.msra.mxu0 0
      %530 = vmatprep.mubr.bf16.mxu0 0
      %531 = vmatmul.mubr.bf16.gmra.mrb[0].mxu0 %v444
      %v532 = vpop.f32.mrb[0].mxu0
      %v533 = vadd.f32 %v416, %v532
      %v534 = vpop.f32.mrb[0].mxu0
      %v535 = vpop.f32.mrb[0].mxu0
      %v536 = vadd.f32 %v419, %v535
      %v537 = vpop.f32.mrb[0].mxu0
      %538 = vmatprep.mubr.bf16.mxu0 0
      %539 = vmatmul.mubr.bf16.gmra.mrb[0].mxu0 %v447
      %v540 = vpop.f32.mrb[0].mxu0
      %v541 = vadd.f32 %v424, %v540
      %v542 = vpop.f32.mrb[0].mxu0
      %v543 = vpop.f32.mrb[0].mxu0
      %v544 = vpop.f32.mrb[0].mxu0
      %545 = vdwg.mxu0
      %v546 = vld [vmem:[%s165] sm:$0xc]
      %v547 = vld [vmem:[%s165 + $0x4] sm:$0xf]
      %v548 = vld [vmem:[%s165 + $0x8] sm:$0xf]
      %v549 = vld [vmem:[%s165 + $0xc] sm:$0x1]
      %s550 = scalar_lea.vmem %s1, 64
      %v551 = vld [vmem:[%s550] sm:$0xf]
      %v552 = vld [vmem:[%s550 + $0x4] sm:$0xf]
      %v553 = vld [vmem:[%s550 + $0x8] sm:$0xf]
      %v554 = vld [vmem:[%s550 + $0xc] sm:$0xf]
      %v555 = vld [vmem:[%s550 + $0x10] sm:$0xf]
      %v556 = vld [vmem:[%s550 + $0x14] sm:$0xf]
      %v557 = vld [vmem:[%s550 + $0x18] sm:$0xf]
      %v558 = vld [vmem:[%s550 + $0x1c] sm:$0xf]
      %v559 = vld [vmem:[%s550 + $0x20] sm:$0xf]
      %v560 = vld [vmem:[%s550 + $0x24] sm:$0xf]
      %v561 = vld [vmem:[%s550 + $0x28] sm:$0xf]
      %v562 = vld [vmem:[%s550 + $0x2c] sm:$0xf]
      %v563 = vld [vmem:[%s550 + $0x30] sm:$0xf]
      %v564 = vld [vmem:[%s550 + $0x34] sm:$0xf]
      %v565 = vld [vmem:[%s550 + $0x38] sm:$0xf]
      %v566 = vld [vmem:[%s550 + $0x3c] sm:$0xf]
      %s567 = scalar_lea.vmem %s1, 448
      %v568 = vld [vmem:[%s567] sm:$0xf]
      %v569 = vld [vmem:[%s567 + $0x4] sm:$0xf]
      %v570 = vld [vmem:[%s567 + $0x8] sm:$0xf]
      %v571 = vld [vmem:[%s567 + $0xc] sm:$0xf]
      %v572 = vld [vmem:[%s567 + $0x10] sm:$0xf]
      %v573 = vld [vmem:[%s567 + $0x14] sm:$0xf]
      %v574 = vld [vmem:[%s567 + $0x18] sm:$0xf]
      %v575 = vld [vmem:[%s567 + $0x1c] sm:$0xf]
      %v576 = vld [vmem:[%s567 + $0x20] sm:$0xf]
      %v577 = vld [vmem:[%s567 + $0x24] sm:$0xf]
      %v578 = vld [vmem:[%s567 + $0x28] sm:$0xf]
      %v579 = vld [vmem:[%s567 + $0x2c] sm:$0xf]
      %v580 = vld [vmem:[%s567 + $0x30] sm:$0xf]
      %v581 = vld [vmem:[%s567 + $0x34] sm:$0xf]
      %v582 = vld [vmem:[%s567 + $0x38] sm:$0xf]
      %v583 = vld [vmem:[%s567 + $0x3c] sm:$0xf]
      %v600 = vunpack.c.l.b16 %v568
      %v601 = vunpack.c.l.b16 %v569
      %v602 = vunpack.c.l.b16 %v570
      %v603 = vunpack.c.l.b16 %v571
      %v604 = vunpack.c.l.b16 %v572
      %v605 = vunpack.c.l.b16 %v573
      %v606 = vunpack.c.l.b16 %v574
      %v607 = vunpack.c.l.b16 %v575
      %v608 = vunpack.c.l.b16 %v576
      %v609 = vunpack.c.l.b16 %v577
      %v610 = vunpack.c.l.b16 %v578
      %v611 = vunpack.c.l.b16 %v579
      %v612 = vunpack.c.l.b16 %v580
      %v613 = vunpack.c.l.b16 %v581
      %v614 = vunpack.c.l.b16 %v582
      %v615 = vunpack.c.l.b16 %v583
      %v616 = vpack.c.b16 %v601, %v600
      %v617 = vpack.c.b16 %v603, %v602
      %v618 = vpack.c.b16 %v605, %v604
      %v619 = vpack.c.b16 %v607, %v606
      %v620 = vpack.c.b16 %v609, %v608
      %v621 = vpack.c.b16 %v611, %v610
      %v622 = vpack.c.b16 %v613, %v612
      %v623 = vpack.c.b16 %v615, %v614
      %632 = vmatprep.subr.bf16.mxu0 0
      %633 = vmatpush1.bf16.msra.mxu0 %v616
      %634 = vmatprep.subr.bf16.mxu0 0
      %635 = vmatpush1.bf16.msra.mxu0 %v617
      %636 = vmatprep.subr.bf16.mxu0 0
      %637 = vmatpush1.bf16.msra.mxu0 %v618
      %638 = vmatprep.subr.bf16.mxu0 0
      %639 = vmatpush1.bf16.msra.mxu0 %v619
      %640 = vmatprep.subr.bf16.mxu0 0
      %641 = vmatpush1.bf16.msra.mxu0 %v620
      %642 = vmatprep.subr.bf16.mxu0 0
      %643 = vmatpush1.bf16.msra.mxu0 %v621
      %644 = vmatprep.subr.bf16.mxu0 0
      %645 = vmatpush1.bf16.msra.mxu0 %v622
      %646 = vmatprep.subr.bf16.mxu0 0
      %647 = vmatpush1.bf16.msra.mxu0 %v623
      %648 = vmatprep.subr.bf16.mxu0 0
      %649 = vmatpush1.bf16.msra.mxu0 0
      %650 = vmatprep.subr.bf16.mxu0 0
      %651 = vmatpush1.bf16.msra.mxu0 0
      %652 = vmatprep.subr.bf16.mxu0 0
      %653 = vmatpush1.bf16.msra.mxu0 0
      %654 = vmatprep.subr.bf16.mxu0 0
      %655 = vmatpush1.bf16.msra.mxu0 0
      %656 = vmatprep.subr.bf16.mxu0 0
      %657 = vmatpush1.bf16.msra.mxu0 0
      %658 = vmatprep.subr.bf16.mxu0 0
      %659 = vmatpush1.bf16.msra.mxu0 0
      %660 = vmatprep.subr.bf16.mxu0 0
      %661 = vmatpush1.bf16.msra.mxu0 0
      %662 = vmatprep.subr.bf16.mxu0 0
      %663 = vmatpush1.bf16.msra.mxu0 0
      %664 = vmatprep.mubr.bf16.mxu0 0
      %665 = vmatmul.mubr.bf16.gmra.mrb[0].mxu0 %v198
      %v666 = vpop.f32.mrb[0].mxu0
      %v667 = vadd.f32 0.0, %v666
      %v668 = vpop.f32.mrb[0].mxu0
      %v669 = vpop.f32.mrb[0].mxu0
      %v670 = vadd.f32 0.0, %v669
      %v671 = vpop.f32.mrb[0].mxu0
      %672 = vmatprep.mubr.bf16.mxu0 0
      %673 = vmatmul.mubr.bf16.gmra.mrb[0].mxu0 %v199
      %v674 = vpop.f32.mrb[0].mxu0
      %v675 = vadd.f32 0.0, %v674
      %v676 = vpop.f32.mrb[0].mxu0
      %v677 = vpop.f32.mrb[0].mxu0
      %v678 = vpop.f32.mrb[0].mxu0
      %679 = vdwg.mxu0
      %v684 = vunpack.c.l.b16 %v546
      %v685 = vunpack.c.l.b16 %v547
      %v686 = vunpack.c.l.b16 %v548
      %v687 = vunpack.c.l.b16 %v549
      %v688 = vpack.c.b16 %v685, %v684
      %v689 = vpack.c.b16 %v687, %v686
      %vm690 = vsmask.f32 5376
      %v692 = vshrl.u32 %v688, 16
      %v694 = vrot.slane %v692, 2
      %v695 = vshll.u32 %v688, 16
      %v697 = vrot.slane %v695, 3
      %v698 = vor.u32 %v694, %v697
      %v700 = vshrl.u32 %v689, 16
      %v702 = vrot.slane %v700, 2
      %v703 = vshll.u32 %v689, 16
      %v705 = vrot.slane %v703, 3
      %v706 = vor.u32 %v702, %v705
      %v707 = vsel %vm690, %v698, %v706
      %v726 = vunpack.c.l.b16 %v551
      %v727 = vunpack.c.l.b16 %v552
      %v728 = vunpack.c.l.b16 %v553
      %v729 = vunpack.c.l.b16 %v554
      %v730 = vunpack.c.l.b16 %v555
      %v731 = vunpack.c.l.b16 %v556
      %v732 = vunpack.c.l.b16 %v557
      %v733 = vunpack.c.l.b16 %v558
      %v734 = vunpack.c.l.b16 %v559
      %v735 = vunpack.c.l.b16 %v560
      %v736 = vunpack.c.l.b16 %v561
      %v737 = vunpack.c.l.b16 %v562
      %v738 = vunpack.c.l.b16 %v563
      %v739 = vunpack.c.l.b16 %v564
      %v740 = vunpack.c.l.b16 %v565
      %v741 = vunpack.c.l.b16 %v566
      %v742 = vpack.c.b16 %v727, %v726
      %v743 = vpack.c.b16 %v729, %v728
      %v744 = vpack.c.b16 %v731, %v730
      %v745 = vpack.c.b16 %v733, %v732
      %v746 = vpack.c.b16 %v735, %v734
      %v747 = vpack.c.b16 %v737, %v736
      %v748 = vpack.c.b16 %v739, %v738
      %v749 = vpack.c.b16 %v741, %v740
      %758 = vmatprep.subr.bf16.mxu0 0
      %759 = vmatpush1.bf16.msra.mxu0 %v742
      %760 = vmatprep.subr.bf16.mxu0 0
      %761 = vmatpush1.bf16.msra.mxu0 %v743
      %762 = vmatprep.subr.bf16.mxu0 0
      %763 = vmatpush1.bf16.msra.mxu0 %v744
      %764 = vmatprep.subr.bf16.mxu0 0
      %765 = vmatpush1.bf16.msra.mxu0 %v745
      %766 = vmatprep.subr.bf16.mxu0 0
      %767 = vmatpush1.bf16.msra.mxu0 %v746
      %768 = vmatprep.subr.bf16.mxu0 0
      %769 = vmatpush1.bf16.msra.mxu0 %v747
      %770 = vmatprep.subr.bf16.mxu0 0
      %771 = vmatpush1.bf16.msra.mxu0 %v748
      %772 = vmatprep.subr.bf16.mxu0 0
      %773 = vmatpush1.bf16.msra.mxu0 %v749
      %774 = vmatprep.subr.bf16.mxu0 0
      %775 = vmatpush1.bf16.msra.mxu0 0
      %776 = vmatprep.subr.bf16.mxu0 0
      %777 = vmatpush1.bf16.msra.mxu0 0
      %778 = vmatprep.subr.bf16.mxu0 0
      %779 = vmatpush1.bf16.msra.mxu0 0
      %780 = vmatprep.subr.bf16.mxu0 0
      %781 = vmatpush1.bf16.msra.mxu0 0
      %782 = vmatprep.subr.bf16.mxu0 0
      %783 = vmatpush1.bf16.msra.mxu0 0
      %784 = vmatprep.subr.bf16.mxu0 0
      %785 = vmatpush1.bf16.msra.mxu0 0
      %786 = vmatprep.subr.bf16.mxu0 0
      %787 = vmatpush1.bf16.msra.mxu0 0
      %788 = vmatprep.subr.bf16.mxu0 0
      %789 = vmatpush1.bf16.msra.mxu0 0
      %790 = vmatprep.mubr.bf16.mxu0 0
      %791 = vmatmul.mubr.bf16.gmra.mrb[0].mxu0 %v707
      %v792 = vpop.f32.mrb[0].mxu0
      %v793 = vadd.f32 %v667, %v792
      %v794 = vpop.f32.mrb[0].mxu0
      %v795 = vpop.f32.mrb[0].mxu0
      %v796 = vadd.f32 %v670, %v795
      %v797 = vpop.f32.mrb[0].mxu0
      %798 = vmatprep.mubr.bf16.mxu0 0
      %799 = vmatmul.mubr.bf16.gmra.mrb[0].mxu0 %v706
      %v800 = vpop.f32.mrb[0].mxu0
      %v801 = vadd.f32 %v675, %v800
      %v802 = vpop.f32.mrb[0].mxu0
      %v803 = vpop.f32.mrb[0].mxu0
      %v804 = vpop.f32.mrb[0].mxu0
      %805 = vdwg.mxu0
      %v806 = vld [vmem:[%s165] sm:$0x8]
      %v807 = vld [vmem:[%s1] sm:$0xf]
      %v808 = vld [vmem:[%s1 + $0x4] sm:$0xf]
      %v809 = vld [vmem:[%s1 + $0x8] sm:$0xf]
      %v810 = vld [vmem:[%s1 + $0xc] sm:$0xf]
      %v811 = vld [vmem:[%s1 + $0x10] sm:$0xf]
      %v812 = vld [vmem:[%s1 + $0x14] sm:$0xf]
      %v813 = vld [vmem:[%s1 + $0x18] sm:$0xf]
      %v814 = vld [vmem:[%s1 + $0x1c] sm:$0xf]
      %v815 = vld [vmem:[%s1 + $0x20] sm:$0xf]
      %v816 = vld [vmem:[%s1 + $0x24] sm:$0xf]
      %v817 = vld [vmem:[%s1 + $0x28] sm:$0xf]
      %v818 = vld [vmem:[%s1 + $0x2c] sm:$0xf]
      %v819 = vld [vmem:[%s1 + $0x30] sm:$0xf]
      %v820 = vld [vmem:[%s1 + $0x34] sm:$0xf]
      %v821 = vld [vmem:[%s1 + $0x38] sm:$0xf]
      %v822 = vld [vmem:[%s1 + $0x3c] sm:$0xf]
      %s823 = scalar_lea.vmem %s1, 128
      %v824 = vld [vmem:[%s823] sm:$0xf]
      %v825 = vld [vmem:[%s823 + $0x4] sm:$0xf]
      %v826 = vld [vmem:[%s823 + $0x8] sm:$0xf]
      %v827 = vld [vmem:[%s823 + $0xc] sm:$0xf]
      %v828 = vld [vmem:[%s823 + $0x10] sm:$0xf]
      %v829 = vld [vmem:[%s823 + $0x14] sm:$0xf]
      %v830 = vld [vmem:[%s823 + $0x18] sm:$0xf]
      %v831 = vld [vmem:[%s823 + $0x1c] sm:$0xf]
      %v832 = vld [vmem:[%s823 + $0x20] sm:$0xf]
      %v833 = vld [vmem:[%s823 + $0x24] sm:$0xf]
      %v834 = vld [vmem:[%s823 + $0x28] sm:$0xf]
      %v835 = vld [vmem:[%s823 + $0x2c] sm:$0xf]
      %v836 = vld [vmem:[%s823 + $0x30] sm:$0xf]
      %v837 = vld [vmem:[%s823 + $0x34] sm:$0xf]
      %v838 = vld [vmem:[%s823 + $0x38] sm:$0xf]
      %v839 = vld [vmem:[%s823 + $0x3c] sm:$0xf]
      %v856 = vunpack.c.l.b16 %v824
      %v857 = vunpack.c.l.b16 %v825
      %v858 = vunpack.c.l.b16 %v826
      %v859 = vunpack.c.l.b16 %v827
      %v860 = vunpack.c.l.b16 %v828
      %v861 = vunpack.c.l.b16 %v829
      %v862 = vunpack.c.l.b16 %v830
      %v863 = vunpack.c.l.b16 %v831
      %v864 = vunpack.c.l.b16 %v832
      %v865 = vunpack.c.l.b16 %v833
      %v866 = vunpack.c.l.b16 %v834
      %v867 = vunpack.c.l.b16 %v835
      %v868 = vunpack.c.l.b16 %v836
      %v869 = vunpack.c.l.b16 %v837
      %v870 = vunpack.c.l.b16 %v838
      %v871 = vunpack.c.l.b16 %v839
      %v872 = vpack.c.b16 %v857, %v856
      %v873 = vpack.c.b16 %v859, %v858
      %v874 = vpack.c.b16 %v861, %v860
      %v875 = vpack.c.b16 %v863, %v862
      %v876 = vpack.c.b16 %v865, %v864
      %v877 = vpack.c.b16 %v867, %v866
      %v878 = vpack.c.b16 %v869, %v868
      %v879 = vpack.c.b16 %v871, %v870
      %888 = vmatprep.subr.bf16.mxu0 0
      %889 = vmatpush1.bf16.msra.mxu0 %v872
      %890 = vmatprep.subr.bf16.mxu0 0
      %891 = vmatpush1.bf16.msra.mxu0 %v873
      %892 = vmatprep.subr.bf16.mxu0 0
      %893 = vmatpush1.bf16.msra.mxu0 %v874
      %894 = vmatprep.subr.bf16.mxu0 0
      %895 = vmatpush1.bf16.msra.mxu0 %v875
      %896 = vmatprep.subr.bf16.mxu0 0
      %897 = vmatpush1.bf16.msra.mxu0 %v876
      %898 = vmatprep.subr.bf16.mxu0 0
      %899 = vmatpush1.bf16.msra.mxu0 %v877
      %900 = vmatprep.subr.bf16.mxu0 0
      %901 = vmatpush1.bf16.msra.mxu0 %v878
      %902 = vmatprep.subr.bf16.mxu0 0
      %903 = vmatpush1.bf16.msra.mxu0 %v879
      %904 = vmatprep.subr.bf16.mxu0 0
      %905 = vmatpush1.bf16.msra.mxu0 0
      %906 = vmatprep.subr.bf16.mxu0 0
      %907 = vmatpush1.bf16.msra.mxu0 0
      %908 = vmatprep.subr.bf16.mxu0 0
      %909 = vmatpush1.bf16.msra.mxu0 0
      %910 = vmatprep.subr.bf16.mxu0 0
      %911 = vmatpush1.bf16.msra.mxu0 0
      %912 = vmatprep.subr.bf16.mxu0 0
      %913 = vmatpush1.bf16.msra.mxu0 0
      %914 = vmatprep.subr.bf16.mxu0 0
      %915 = vmatpush1.bf16.msra.mxu0 0
      %916 = vmatprep.subr.bf16.mxu0 0
      %917 = vmatpush1.bf16.msra.mxu0 0
      %918 = vmatprep.subr.bf16.mxu0 0
      %919 = vmatpush1.bf16.msra.mxu0 0
      %920 = vmatprep.mubr.bf16.mxu0 0
      %921 = vmatmul.mubr.bf16.gmra.mrb[0].mxu0 %v707
      %v922 = vpop.f32.mrb[0].mxu0
      %v923 = vadd.f32 0.0, %v922
      %v924 = vpop.f32.mrb[0].mxu0
      %v925 = vpop.f32.mrb[0].mxu0
      %v926 = vadd.f32 0.0, %v925
      %v927 = vpop.f32.mrb[0].mxu0
      %928 = vmatprep.mubr.bf16.mxu0 0
      %929 = vmatmul.mubr.bf16.gmra.mrb[0].mxu0 %v706
      %v930 = vpop.f32.mrb[0].mxu0
      %v931 = vadd.f32 0.0, %v930
      %v932 = vpop.f32.mrb[0].mxu0
      %v933 = vpop.f32.mrb[0].mxu0
      %v934 = vpop.f32.mrb[0].mxu0
      %935 = vdwg.mxu0
      %v937 = vunpack.c.l.b16 %v806
      %v938 = vpack.c.b16 %v685, %v937
      %vm939 = vcmask 1044480
      %v940 = vrot.slane %v938, 3
      %v941 = vrot.slane %v689, 3
      %v942 = vsel %vm939, %v940, %v941
      %v961 = vunpack.c.l.b16 %v807
      %v962 = vunpack.c.l.b16 %v808
      %v963 = vunpack.c.l.b16 %v809
      %v964 = vunpack.c.l.b16 %v810
      %v965 = vunpack.c.l.b16 %v811
      %v966 = vunpack.c.l.b16 %v812
      %v967 = vunpack.c.l.b16 %v813
      %v968 = vunpack.c.l.b16 %v814
      %v969 = vunpack.c.l.b16 %v815
      %v970 = vunpack.c.l.b16 %v816
      %v971 = vunpack.c.l.b16 %v817
      %v972 = vunpack.c.l.b16 %v818
      %v973 = vunpack.c.l.b16 %v819
      %v974 = vunpack.c.l.b16 %v820
      %v975 = vunpack.c.l.b16 %v821
      %v976 = vunpack.c.l.b16 %v822
      %v977 = vpack.c.b16 %v962, %v961
      %v978 = vpack.c.b16 %v964, %v963
      %v979 = vpack.c.b16 %v966, %v965
      %v980 = vpack.c.b16 %v968, %v967
      %v981 = vpack.c.b16 %v970, %v969
      %v982 = vpack.c.b16 %v972, %v971
      %v983 = vpack.c.b16 %v974, %v973
      %v984 = vpack.c.b16 %v976, %v975
      %993 = vmatprep.subr.bf16.mxu0 0
      %994 = vmatpush1.bf16.msra.mxu0 %v977
      %995 = vmatprep.subr.bf16.mxu0 0
      %996 = vmatpush1.bf16.msra.mxu0 %v978
      %997 = vmatprep.subr.bf16.mxu0 0
      %998 = vmatpush1.bf16.msra.mxu0 %v979
      %999 = vmatprep.subr.bf16.mxu0 0
      %1000 = vmatpush1.bf16.msra.mxu0 %v980
      %1001 = vmatprep.subr.bf16.mxu0 0
      %1002 = vmatpush1.bf16.msra.mxu0 %v981
      %1003 = vmatprep.subr.bf16.mxu0 0
      %1004 = vmatpush1.bf16.msra.mxu0 %v982
      %1005 = vmatprep.subr.bf16.mxu0 0
      %1006 = vmatpush1.bf16.msra.mxu0 %v983
      %1007 = vmatprep.subr.bf16.mxu0 0
      %1008 = vmatpush1.bf16.msra.mxu0 %v984
      %1009 = vmatprep.subr.bf16.mxu0 0
      %1010 = vmatpush1.bf16.msra.mxu0 0
      %1011 = vmatprep.subr.bf16.mxu0 0
      %1012 = vmatpush1.bf16.msra.mxu0 0
      %1013 = vmatprep.subr.bf16.mxu0 0
      %1014 = vmatpush1.bf16.msra.mxu0 0
      %1015 = vmatprep.subr.bf16.mxu0 0
      %1016 = vmatpush1.bf16.msra.mxu0 0
      %1017 = vmatprep.subr.bf16.mxu0 0
      %1018 = vmatpush1.bf16.msra.mxu0 0
      %1019 = vmatprep.subr.bf16.mxu0 0
      %1020 = vmatpush1.bf16.msra.mxu0 0
      %1021 = vmatprep.subr.bf16.mxu0 0
      %1022 = vmatpush1.bf16.msra.mxu0 0
      %1023 = vmatprep.subr.bf16.mxu0 0
      %1024 = vmatpush1.bf16.msra.mxu0 0
      %1025 = vmatprep.mubr.bf16.mxu0 0
      %1026 = vmatmul.mubr.bf16.gmra.mrb[0].mxu0 %v942
      %v1027 = vpop.f32.mrb[0].mxu0
      %v1028 = vadd.f32 %v923, %v1027
      %v1029 = vpop.f32.mrb[0].mxu0
      %v1030 = vpop.f32.mrb[0].mxu0
      %v1031 = vadd.f32 %v926, %v1030
      %v1032 = vpop.f32.mrb[0].mxu0
      %1033 = vmatprep.mubr.bf16.mxu0 0
      %1034 = vmatmul.mubr.bf16.gmra.mrb[0].mxu0 %v941
      %v1035 = vpop.f32.mrb[0].mxu0
      %v1036 = vadd.f32 %v931, %v1035
      %v1037 = vpop.f32.mrb[0].mxu0
      %v1038 = vpop.f32.mrb[0].mxu0
      %v1039 = vpop.f32.mrb[0].mxu0
      %1040 = vdwg.mxu0
      %s1041 = scalar_lea.vmem %s1, 384
      %v1042 = vld [vmem:[%s1041] sm:$0xf]
      %v1043 = vld [vmem:[%s1041 + $0x4] sm:$0xf]
      %v1044 = vld [vmem:[%s1041 + $0x8] sm:$0xf]
      %v1045 = vld [vmem:[%s1041 + $0xc] sm:$0xf]
      %v1046 = vld [vmem:[%s1041 + $0x10] sm:$0xf]
      %v1047 = vld [vmem:[%s1041 + $0x14] sm:$0xf]
      %v1048 = vld [vmem:[%s1041 + $0x18] sm:$0xf]
      %v1049 = vld [vmem:[%s1041 + $0x1c] sm:$0xf]
      %v1050 = vld [vmem:[%s1041 + $0x20] sm:$0xf]
      %v1051 = vld [vmem:[%s1041 + $0x24] sm:$0xf]
      %v1052 = vld [vmem:[%s1041 + $0x28] sm:$0xf]
      %v1053 = vld [vmem:[%s1041 + $0x2c] sm:$0xf]
      %v1054 = vld [vmem:[%s1041 + $0x30] sm:$0xf]
      %v1055 = vld [vmem:[%s1041 + $0x34] sm:$0xf]
      %v1056 = vld [vmem:[%s1041 + $0x38] sm:$0xf]
      %v1057 = vld [vmem:[%s1041 + $0x3c] sm:$0xf]
      %v1074 = vunpack.c.l.b16 %v1042
      %v1075 = vunpack.c.l.b16 %v1043
      %v1076 = vunpack.c.l.b16 %v1044
      %v1077 = vunpack.c.l.b16 %v1045
      %v1078 = vunpack.c.l.b16 %v1046
      %v1079 = vunpack.c.l.b16 %v1047
      %v1080 = vunpack.c.l.b16 %v1048
      %v1081 = vunpack.c.l.b16 %v1049
      %v1082 = vunpack.c.l.b16 %v1050
      %v1083 = vunpack.c.l.b16 %v1051
      %v1084 = vunpack.c.l.b16 %v1052
      %v1085 = vunpack.c.l.b16 %v1053
      %v1086 = vunpack.c.l.b16 %v1054
      %v1087 = vunpack.c.l.b16 %v1055
      %v1088 = vunpack.c.l.b16 %v1056
      %v1089 = vunpack.c.l.b16 %v1057
      %v1090 = vpack.c.b16 %v1075, %v1074
      %v1091 = vpack.c.b16 %v1077, %v1076
      %v1092 = vpack.c.b16 %v1079, %v1078
      %v1093 = vpack.c.b16 %v1081, %v1080
      %v1094 = vpack.c.b16 %v1083, %v1082
      %v1095 = vpack.c.b16 %v1085, %v1084
      %v1096 = vpack.c.b16 %v1087, %v1086
      %v1097 = vpack.c.b16 %v1089, %v1088
      %1106 = vmatprep.subr.bf16.mxu0 0
      %1107 = vmatpush1.bf16.msra.mxu0 %v1090
      %1108 = vmatprep.subr.bf16.mxu0 0
      %1109 = vmatpush1.bf16.msra.mxu0 %v1091
      %1110 = vmatprep.subr.bf16.mxu0 0
      %1111 = vmatpush1.bf16.msra.mxu0 %v1092
      %1112 = vmatprep.subr.bf16.mxu0 0
      %1113 = vmatpush1.bf16.msra.mxu0 %v1093
      %1114 = vmatprep.subr.bf16.mxu0 0
      %1115 = vmatpush1.bf16.msra.mxu0 %v1094
      %1116 = vmatprep.subr.bf16.mxu0 0
      %1117 = vmatpush1.bf16.msra.mxu0 %v1095
      %1118 = vmatprep.subr.bf16.mxu0 0
      %1119 = vmatpush1.bf16.msra.mxu0 %v1096
      %1120 = vmatprep.subr.bf16.mxu0 0
      %1121 = vmatpush1.bf16.msra.mxu0 %v1097
      %1122 = vmatprep.subr.bf16.mxu0 0
      %1123 = vmatpush1.bf16.msra.mxu0 0
      %1124 = vmatprep.subr.bf16.mxu0 0
      %1125 = vmatpush1.bf16.msra.mxu0 0
      %1126 = vmatprep.subr.bf16.mxu0 0
      %1127 = vmatpush1.bf16.msra.mxu0 0
      %1128 = vmatprep.subr.bf16.mxu0 0
      %1129 = vmatpush1.bf16.msra.mxu0 0
      %1130 = vmatprep.subr.bf16.mxu0 0
      %1131 = vmatpush1.bf16.msra.mxu0 0
      %1132 = vmatprep.subr.bf16.mxu0 0
      %1133 = vmatpush1.bf16.msra.mxu0 0
      %1134 = vmatprep.subr.bf16.mxu0 0
      %1135 = vmatpush1.bf16.msra.mxu0 0
      %1136 = vmatprep.subr.bf16.mxu0 0
      %1137 = vmatpush1.bf16.msra.mxu0 0
      %1138 = vmatprep.mubr.bf16.mxu0 0
      %1139 = vmatmul.mubr.bf16.gmra.mrb[0].mxu0 %v444
      %v1140 = vpop.f32.mrb[0].mxu0
      %v1141 = vadd.f32 0.0, %v1140
      %v1142 = vpop.f32.mrb[0].mxu0
      %v1143 = vpop.f32.mrb[0].mxu0
      %v1144 = vadd.f32 0.0, %v1143
      %v1145 = vpop.f32.mrb[0].mxu0
      %1146 = vmatprep.mubr.bf16.mxu0 0
      %1147 = vmatmul.mubr.bf16.gmra.mrb[0].mxu0 %v447
      %v1148 = vpop.f32.mrb[0].mxu0
      %v1149 = vadd.f32 0.0, %v1148
      %v1150 = vpop.f32.mrb[0].mxu0
      %v1151 = vpop.f32.mrb[0].mxu0
      %v1152 = vpop.f32.mrb[0].mxu0
      %1153 = vdwg.mxu0
      %v1154 = vadd.f32 %v1028, %v1141
      %v1155 = vadd.f32 %v1031, %v1144
      %v1156 = vadd.f32 %v1036, %v1149
      %s1157 = scalar_lea.vmem %s1, 512
      %v1158 = vld [vmem:[%s1157] sm:$0xf]
      %v1159 = vld [vmem:[%s1157 + $0x4] sm:$0xf]
      %v1160 = vld [vmem:[%s1157 + $0x8] sm:$0xf]
      %v1161 = vld [vmem:[%s1157 + $0xc] sm:$0xf]
      %v1162 = vld [vmem:[%s1157 + $0x10] sm:$0xf]
      %v1163 = vld [vmem:[%s1157 + $0x14] sm:$0xf]
      %v1164 = vld [vmem:[%s1157 + $0x18] sm:$0xf]
      %v1165 = vld [vmem:[%s1157 + $0x1c] sm:$0xf]
      %v1166 = vld [vmem:[%s1157 + $0x20] sm:$0xf]
      %v1167 = vld [vmem:[%s1157 + $0x24] sm:$0xf]
      %v1168 = vld [vmem:[%s1157 + $0x28] sm:$0xf]
      %v1169 = vld [vmem:[%s1157 + $0x2c] sm:$0xf]
      %v1170 = vld [vmem:[%s1157 + $0x30] sm:$0xf]
      %v1171 = vld [vmem:[%s1157 + $0x34] sm:$0xf]
      %v1172 = vld [vmem:[%s1157 + $0x38] sm:$0xf]
      %v1173 = vld [vmem:[%s1157 + $0x3c] sm:$0xf]
      %v1190 = vunpack.c.l.b16 %v1158
      %v1191 = vunpack.c.l.b16 %v1159
      %v1192 = vunpack.c.l.b16 %v1160
      %v1193 = vunpack.c.l.b16 %v1161
      %v1194 = vunpack.c.l.b16 %v1162
      %v1195 = vunpack.c.l.b16 %v1163
      %v1196 = vunpack.c.l.b16 %v1164
      %v1197 = vunpack.c.l.b16 %v1165
      %v1198 = vunpack.c.l.b16 %v1166
      %v1199 = vunpack.c.l.b16 %v1167
      %v1200 = vunpack.c.l.b16 %v1168
      %v1201 = vunpack.c.l.b16 %v1169
      %v1202 = vunpack.c.l.b16 %v1170
      %v1203 = vunpack.c.l.b16 %v1171
      %v1204 = vunpack.c.l.b16 %v1172
      %v1205 = vunpack.c.l.b16 %v1173
      %v1206 = vpack.c.b16 %v1191, %v1190
      %v1207 = vpack.c.b16 %v1193, %v1192
      %v1208 = vpack.c.b16 %v1195, %v1194
      %v1209 = vpack.c.b16 %v1197, %v1196
      %v1210 = vpack.c.b16 %v1199, %v1198
      %v1211 = vpack.c.b16 %v1201, %v1200
      %v1212 = vpack.c.b16 %v1203, %v1202
      %v1213 = vpack.c.b16 %v1205, %v1204
      %1222 = vmatprep.subr.bf16.mxu0 0
      %1223 = vmatpush1.bf16.msra.mxu0 %v1206
      %1224 = vmatprep.subr.bf16.mxu0 0
      %1225 = vmatpush1.bf16.msra.mxu0 %v1207
      %1226 = vmatprep.subr.bf16.mxu0 0
      %1227 = vmatpush1.bf16.msra.mxu0 %v1208
      %1228 = vmatprep.subr.bf16.mxu0 0
      %1229 = vmatpush1.bf16.msra.mxu0 %v1209
      %1230 = vmatprep.subr.bf16.mxu0 0
      %1231 = vmatpush1.bf16.msra.mxu0 %v1210
      %1232 = vmatprep.subr.bf16.mxu0 0
      %1233 = vmatpush1.bf16.msra.mxu0 %v1211
      %1234 = vmatprep.subr.bf16.mxu0 0
      %1235 = vmatpush1.bf16.msra.mxu0 %v1212
      %1236 = vmatprep.subr.bf16.mxu0 0
      %1237 = vmatpush1.bf16.msra.mxu0 %v1213
      %1238 = vmatprep.subr.bf16.mxu0 0
      %1239 = vmatpush1.bf16.msra.mxu0 0
      %1240 = vmatprep.subr.bf16.mxu0 0
      %1241 = vmatpush1.bf16.msra.mxu0 0
      %1242 = vmatprep.subr.bf16.mxu0 0
      %1243 = vmatpush1.bf16.msra.mxu0 0
      %1244 = vmatprep.subr.bf16.mxu0 0
      %1245 = vmatpush1.bf16.msra.mxu0 0
      %1246 = vmatprep.subr.bf16.mxu0 0
      %1247 = vmatpush1.bf16.msra.mxu0 0
      %1248 = vmatprep.subr.bf16.mxu0 0
      %1249 = vmatpush1.bf16.msra.mxu0 0
      %1250 = vmatprep.subr.bf16.mxu0 0
      %1251 = vmatpush1.bf16.msra.mxu0 0
      %1252 = vmatprep.subr.bf16.mxu0 0
      %1253 = vmatpush1.bf16.msra.mxu0 0
      %1254 = vmatprep.mubr.bf16.mxu0 0
      %1255 = vmatmul.mubr.bf16.gmra.mrb[0].mxu0 %v198
      %v1256 = vpop.f32.mrb[0].mxu0
      %v1257 = vadd.f32 0.0, %v1256
      %v1258 = vpop.f32.mrb[0].mxu0
      %v1259 = vpop.f32.mrb[0].mxu0
      %v1260 = vadd.f32 0.0, %v1259
      %v1261 = vpop.f32.mrb[0].mxu0
      %1262 = vmatprep.mubr.bf16.mxu0 0
      %1263 = vmatmul.mubr.bf16.gmra.mrb[0].mxu0 %v199
      %v1264 = vpop.f32.mrb[0].mxu0
      %v1265 = vadd.f32 0.0, %v1264
      %v1266 = vpop.f32.mrb[0].mxu0
      %v1267 = vpop.f32.mrb[0].mxu0
      %v1268 = vpop.f32.mrb[0].mxu0
      %1269 = vdwg.mxu0
      %v1270 = vadd.f32 %v1154, %v1257
      %v1271 = vadd.f32 %v1155, %v1260
      %v1272 = vadd.f32 %v1156, %v1265
      %v1273 = vld [vmem:[%s2] sm:$0xff]
      %v1274 = vld [vmem:[%s2 + $0x8] sm:$0xff]
      %v1275 = vld [vmem:[%s2 + $0x10] sm:$0xf]
      %1277 = vset.pattern.permute.xlu0 0
      %1278 = vperm.xlu0 %1277, %v1273
      %v1279 = vpop.permute.xlu0 %1278
      %1282 = vset.pattern.permute.xlu0 0
      %1283 = vperm.xlu0 %1282, %v1274
      %v1284 = vpop.permute.xlu0 %1283
      %1287 = vset.pattern.permute.xlu0 0
      %1288 = vperm.xlu0 %1287, %v1275
      %v1289 = vpop.permute.xlu0 %1288
      %v1291 = vmul.f32 %v285, %v1279
      %v1292 = vmul.f32 %v288, %v1284
      %v1293 = vmul.f32 %v293, %v1289
      %vm1294 = vcmask 523264
      %v1295 = vsel %vm1294, %v1291, 0.0
      %v1296 = vsel %vm1294, %v1292, 0.0
      %v1297 = vadd.f32 %v1295, %v1296
      %vm1298 = vcmask 519168
      %v1299 = vsel %vm1298, %v1293, 0.0
      %v1300 = vadd.f32 %v1297, %v1299
      %v1301 = vrot.slane %v1300, 4
      %v1302 = vadd.f32 %v1300, %v1301
      %v1303 = vrot.slane %v1302, 2
      %v1304 = vadd.f32 %v1302, %v1303
      %v1305 = vrot.slane %v1304, 1
      %v1306 = vadd.f32 %v1304, %v1305
      %v1307 = vmul.f32 %v1291, %v285
      %v1308 = vmul.f32 %v1292, %v288
      %v1309 = vmul.f32 %v1293, %v293
      %v1310 = vsel %vm1294, %v1307, 0.0
      %v1311 = vsel %vm1294, %v1308, 0.0
      %v1312 = vadd.f32 %v1310, %v1311
      %v1313 = vsel %vm1298, %v1309, 0.0
      %v1314 = vadd.f32 %v1312, %v1313
      %v1315 = vrot.slane %v1314, 4
      %v1316 = vadd.f32 %v1314, %v1315
      %v1317 = vrot.slane %v1316, 2
      %v1318 = vadd.f32 %v1316, %v1317
      %v1319 = vrot.slane %v1318, 1
      %v1320 = vadd.f32 %v1318, %v1319
      %v1321 = vmul.f32 %v533, %v1279
      %v1322 = vmul.f32 %v536, %v1284
      %v1323 = vmul.f32 %v541, %v1289
      %v1324 = vsel %vm1294, %v1321, 0.0
      %v1325 = vsel %vm1294, %v1322, 0.0
      %v1326 = vadd.f32 %v1324, %v1325
      %v1327 = vsel %vm1298, %v1323, 0.0
      %v1328 = vadd.f32 %v1326, %v1327
      %v1329 = vrot.slane %v1328, 4
      %v1330 = vadd.f32 %v1328, %v1329
      %v1331 = vrot.slane %v1330, 2
      %v1332 = vadd.f32 %v1330, %v1331
      %v1333 = vrot.slane %v1332, 1
      %v1334 = vadd.f32 %v1332, %v1333
      %v1335 = vmul.f32 %v1321, %v533
      %v1336 = vmul.f32 %v1322, %v536
      %v1337 = vmul.f32 %v1323, %v541
      %v1338 = vsel %vm1294, %v1335, 0.0
      %v1339 = vsel %vm1294, %v1336, 0.0
      %v1340 = vadd.f32 %v1338, %v1339
      %v1341 = vsel %vm1298, %v1337, 0.0
      %v1342 = vadd.f32 %v1340, %v1341
      %v1343 = vrot.slane %v1342, 4
      %v1344 = vadd.f32 %v1342, %v1343
      %v1345 = vrot.slane %v1344, 2
      %v1346 = vadd.f32 %v1344, %v1345
      %v1347 = vrot.slane %v1346, 1
      %v1348 = vadd.f32 %v1346, %v1347
      %v1349 = vadd.f32 %v1306, %v1334
      %v1350 = vadd.f32 %v1320, %v1348
      %v1351 = vmul.f32 %v793, %v1279
      %v1352 = vmul.f32 %v796, %v1284
      %v1353 = vmul.f32 %v801, %v1289
      %v1354 = vsel %vm1294, %v1351, 0.0
      %v1355 = vsel %vm1294, %v1352, 0.0
      %v1356 = vadd.f32 %v1354, %v1355
      %v1357 = vsel %vm1298, %v1353, 0.0
      %v1358 = vadd.f32 %v1356, %v1357
      %v1359 = vrot.slane %v1358, 4
      %v1360 = vadd.f32 %v1358, %v1359
      %v1361 = vrot.slane %v1360, 2
      %v1362 = vadd.f32 %v1360, %v1361
      %v1363 = vrot.slane %v1362, 1
      %v1364 = vadd.f32 %v1362, %v1363
      %v1365 = vmul.f32 %v1351, %v793
      %v1366 = vmul.f32 %v1352, %v796
      %v1367 = vmul.f32 %v1353, %v801
      %v1368 = vsel %vm1294, %v1365, 0.0
      %v1369 = vsel %vm1294, %v1366, 0.0
      %v1370 = vadd.f32 %v1368, %v1369
      %v1371 = vsel %vm1298, %v1367, 0.0
      %v1372 = vadd.f32 %v1370, %v1371
      %v1373 = vrot.slane %v1372, 4
      %v1374 = vadd.f32 %v1372, %v1373
      %v1375 = vrot.slane %v1374, 2
      %v1376 = vadd.f32 %v1374, %v1375
      %v1377 = vrot.slane %v1376, 1
      %v1378 = vadd.f32 %v1376, %v1377
      %v1379 = vadd.f32 %v1349, %v1364
      %v1380 = vadd.f32 %v1350, %v1378
      %v1381 = vmul.f32 %v1270, %v1279
      %v1382 = vmul.f32 %v1271, %v1284
      %v1383 = vmul.f32 %v1272, %v1289
      %v1384 = vsel %vm1294, %v1381, 0.0
      %v1385 = vsel %vm1294, %v1382, 0.0
      %v1386 = vadd.f32 %v1384, %v1385
      %v1387 = vsel %vm1298, %v1383, 0.0
      %v1388 = vadd.f32 %v1386, %v1387
      %v1389 = vrot.slane %v1388, 4
      %v1390 = vadd.f32 %v1388, %v1389
      %v1391 = vrot.slane %v1390, 2
      %v1392 = vadd.f32 %v1390, %v1391
      %v1393 = vrot.slane %v1392, 1
      %v1394 = vadd.f32 %v1392, %v1393
      %v1395 = vmul.f32 %v1381, %v1270
      %v1396 = vmul.f32 %v1382, %v1271
      %v1397 = vmul.f32 %v1383, %v1272
      %v1398 = vsel %vm1294, %v1395, 0.0
      %v1399 = vsel %vm1294, %v1396, 0.0
      %v1400 = vadd.f32 %v1398, %v1399
      %v1401 = vsel %vm1298, %v1397, 0.0
      %v1402 = vadd.f32 %v1400, %v1401
      %v1403 = vrot.slane %v1402, 4
      %v1404 = vadd.f32 %v1402, %v1403
      %v1405 = vrot.slane %v1404, 2
      %v1406 = vadd.f32 %v1404, %v1405
      %v1407 = vrot.slane %v1406, 1
      %v1408 = vadd.f32 %v1406, %v1407
      %v1409 = vadd.f32 %v1379, %v1394
      %v1410 = vadd.f32 %v1380, %v1408
      %v1411 = vmul.f32 %v1409, 0.015625
      %v1412 = vmul.f32 %v1410, 0.015625
      %v1413 = vmul.f32 %v1411, %v1411
      %v1414 = vsub.f32 %v1412, %v1413
      %v1415 = vmax.f32 %v1414, 0.0
      %v1416 = vadd.f32 %v1415, 1e-05
      %v1417 = vrsqrt.pop %v1416
      %v1418 = vsub.f32 %v285, %v1411
      %v1419 = vsub.f32 %v288, %v1411
      %v1420 = vsub.f32 %v293, %v1411
      %v1421 = vmul.f32 %v1418, %v1417
      %v1422 = vmul.f32 %v1419, %v1417
      %v1423 = vmul.f32 %v1420, %v1417
      %v1424 = vmax.f32 %v1421, 0.0
      %v1425 = vmax.f32 %v1422, 0.0
      %v1426 = vmax.f32 %v1423, 0.0
      %v1427 = vpack.c.bf16 %v1425, %v1424
      %v1428 = vpack.c.bf16 %v1426, %v1426
      %v1431 = vunpack.c.l.b16 %v1427
      %v1432 = vunpack.c.h.b16 %v1427
      %v1433 = vunpack.c.l.b16 %v1428
      %v1434 = vpack.c.b16 %v1431, %v1431
      %v1435 = vpack.c.b16 %v1432, %v1432
      %v1436 = vpack.c.b16 %v1433, %v1433
      %1440 = vst.msk [vmem:[%s170] sm:$0xf] %vm1298, %v1434
      %1441 = vst.msk [vmem:[%s170 + $0x4] sm:$0xf] %vm1298, %v1435
      %vm1442 = vcmask 517120
      %1443 = vst.msk [vmem:[%s170 + $0x8] sm:$0x3] %vm1442, %v1436
      %v1444 = vsub.f32 %v533, %v1411
      %v1445 = vsub.f32 %v536, %v1411
      %v1446 = vsub.f32 %v541, %v1411
      %v1447 = vmul.f32 %v1444, %v1417
      %v1448 = vmul.f32 %v1445, %v1417
      %v1449 = vmul.f32 %v1446, %v1417
      %v1450 = vmax.f32 %v1447, 0.0
      %v1451 = vmax.f32 %v1448, 0.0
      %v1452 = vmax.f32 %v1449, 0.0
      %v1453 = vpack.c.bf16 %v1451, %v1450
      %v1454 = vpack.c.bf16 %v1452, %v1452
      %v1457 = vunpack.c.l.b16 %v1453
      %v1458 = vunpack.c.h.b16 %v1453
      %v1459 = vunpack.c.l.b16 %v1454
      %v1460 = vpack.c.b16 %v1457, %v1457
      %v1461 = vpack.c.b16 %v1458, %v1458
      %v1462 = vpack.c.b16 %v1459, %v1459
      %s1466 = scalar_lea.vmem %s170, 12
      %1467 = vst.msk [vmem:[%s1466] sm:$0xf] %vm1298, %v1460
      %1468 = vst.msk [vmem:[%s1466 + $0x4] sm:$0xf] %vm1298, %v1461
      %1469 = vst.msk [vmem:[%s1466 + $0x8] sm:$0x3] %vm1442, %v1462
      %v1470 = vsub.f32 %v793, %v1411
      %v1471 = vsub.f32 %v796, %v1411
      %v1472 = vsub.f32 %v801, %v1411
      %v1473 = vmul.f32 %v1470, %v1417
      %v1474 = vmul.f32 %v1471, %v1417
      %v1475 = vmul.f32 %v1472, %v1417
      %v1476 = vmax.f32 %v1473, 0.0
      %v1477 = vmax.f32 %v1474, 0.0
      %v1478 = vmax.f32 %v1475, 0.0
      %v1479 = vpack.c.bf16 %v1477, %v1476
      %v1480 = vpack.c.bf16 %v1478, %v1478
      %v1483 = vunpack.c.l.b16 %v1479
      %v1484 = vunpack.c.h.b16 %v1479
      %v1485 = vunpack.c.l.b16 %v1480
      %v1486 = vpack.c.b16 %v1483, %v1483
      %v1487 = vpack.c.b16 %v1484, %v1484
      %v1488 = vpack.c.b16 %v1485, %v1485
      %s1492 = scalar_lea.vmem %s170, 24
      %1493 = vst.msk [vmem:[%s1492] sm:$0xf] %vm1298, %v1486
      %1494 = vst.msk [vmem:[%s1492 + $0x4] sm:$0xf] %vm1298, %v1487
      %1495 = vst.msk [vmem:[%s1492 + $0x8] sm:$0x3] %vm1442, %v1488
      %v1496 = vsub.f32 %v1270, %v1411
      %v1497 = vsub.f32 %v1271, %v1411
      %v1498 = vsub.f32 %v1272, %v1411
      %v1499 = vmul.f32 %v1496, %v1417
      %v1500 = vmul.f32 %v1497, %v1417
      %v1501 = vmul.f32 %v1498, %v1417
      %v1502 = vmax.f32 %v1499, 0.0
      %v1503 = vmax.f32 %v1500, 0.0
      %v1504 = vmax.f32 %v1501, 0.0
      %v1505 = vpack.c.bf16 %v1503, %v1502
      %v1506 = vpack.c.bf16 %v1504, %v1504
      %v1509 = vunpack.c.l.b16 %v1505
      %v1510 = vunpack.c.h.b16 %v1505
      %v1511 = vunpack.c.l.b16 %v1506
      %v1512 = vpack.c.b16 %v1509, %v1509
      %v1513 = vpack.c.b16 %v1510, %v1510
      %v1514 = vpack.c.b16 %v1511, %v1511
      %s1518 = scalar_lea.vmem %s170, 36
      %1519 = vst.msk [vmem:[%s1518] sm:$0xf] %vm1298, %v1512
      %1520 = vst.msk [vmem:[%s1518 + $0x4] sm:$0xf] %vm1298, %v1513
      %1521 = vst.msk [vmem:[%s1518 + $0x8] sm:$0x3] %vm1442, %v1514
      %p1522 = scmp.lt.s32.totalorder %s14, 1
      %s1523 = scalar_select %p1522, %s14, 1
      %s1524 = smul.addr %s1523, 12
      %s1525 = smul.addr %s1524, 4
      %s1526 = scalar_lea.vmem %s3, %s1525
      // Predicated region
      $region33: #{generator_forward.44} parent=31 // pred_check
        %p1527 = pneg %p100
      $region34: #{generator_forward.44} parent=31 // pred_check_branch
        %1529 = sbr.rel (%p1527) target = $region36
      $region35: #{generator_forward.44} parent=31 // pred_region
        _
      $region36: #{generator_forward.44} parent=31 // pred_fallthru
        _
    $region32: #{generator_forward.44} parent=5 // pred_fallthru
      _
    %p1530 = scmp.le.s32.totalorder 2, %s9
    // Predicated region
    $region37: #{generator_forward.44} parent=5 // pred_check
      %p1531 = pneg %p1530
    $region38: #{generator_forward.44} parent=5 // pred_check_branch
      %1533 = sbr.rel (%p1531) target = $region40
    $region39: #{generator_forward.44} parent=5 // pred_region
      %s1534 = ssub.s32 %s9, 2
      // Predicated region
      $region41: #{generator_forward.44} parent=39 // pred_check
        %p1535 = pneg %p106
      $region42: #{generator_forward.44} parent=39 // pred_check_branch
        %1537 = sbr.rel (%p1535) target = $region44
      $region43: #{generator_forward.44} parent=39 // pred_region
        %p1538 = scmp.lt.s32.totalorder %s15, 1
        %s1539 = scalar_select %p1538, %s15, 1
        %s1540 = smul.addr %s1539, 12
        %s1541 = smul.addr %s1540, 4
        %s1542 = scalar_lea.vmem %s3, %s1541
      $region44: #{generator_forward.44} parent=39 // pred_fallthru
        _
    $region40: #{generator_forward.44} parent=5 // pred_fallthru
      _
  $region6: #{generator_forward.44} parent=0 // loop_footer
    %s13 = sadd.s32 1, %s9
  $region7: #{generator_forward.44} parent=0 // loop_footer_branch
    %8 = sbr.rel target = $region3
  $region8: #{generator_forward.44} parent=0 // loop_exit
    _

// kernel: generator_forward.45
$region0: #{generator_forward.45}
  #allocation0 [shape = 'u32[]', space=smem, size = 0x4, offset = 0x4, fixed_abs, tag = 'smem constant byte address 0x4 - core index']
  #allocation1 [shape = 'u32[144,128]{1,0:T(1,128)}', space=vmem, size = 0x12000, scoped, tag = 'internal scratch']
  %s0 = inlined_call_operand.vmem [shape: bf16[2,82,64], index: 0, kind: input, shape index: {}]
  %s1 = inlined_call_operand.vmem [shape: bf16[9,64,32], index: 1, kind: input, shape index: {}]
  %s2 = inlined_call_operand.vmem [shape: f32[72,1], index: 2, kind: input, shape index: {}]
  %s3 = inlined_call_operand.vmem [shape: bf16[2,4,72,32], index: 3, kind: output, shape index: {}]
  %s4 = sld [smem:[#allocation0]]
  $region45: #{generator_forward.45} parent=0
    _
  %s6 = ssub.s32 1, %s4
  %s7 = scalar_select 0, %s6, %s4
  loop: start=0, step=1, limit=4
  $region2: #{generator_forward.45} parent=0 // loop_pre_header
    _
  $region3: #{generator_forward.45} parent=0 // loop_header
    %s9 = sphi 0, %s13
    %p10 = scmp.ge.s32.totalorder %s9, 4
    %s19 = sphi 0, %s21
    %s22 = sphi 0, %s19
    %s23 = sphi 0, %s22
    %s39 = sphi 0, %s23
    %s43 = sphi 0, %s43
    %s45 = sphi 0, %s43
    %s46 = sphi 0, %s45
    %s60 = sphi 0, %s46
    %s64 = sphi 0, %s64
    %s66 = sphi 0, %s64
    %s67 = sphi 0, %s66
    %s81 = sphi 0, %s67
    %s87 = sphi 0, %s89
    %s90 = sphi 0, %s87
    %s91 = sphi 0, %s90
    %s107 = sphi 0, %s91
  $region4: #{generator_forward.45} parent=0 // loop_header_branch
    %12 = sbr.rel (%p10) target = $region8
  $region5: #{generator_forward.45} parent=0 // loop_body
    %s14 = ssub.s32 %s9, 1
    %s15 = ssub.s32 %s9, 2
    %s16 = sadd.s32 %s9, 1
    %s17 = ssub.s32 %s9, %s16
    %p18 = scmp.eq.s32.totalorder %s17, 0
    %s20 = sadd.s32 %s19, 1
    %s21 = scalar_select %p18, %s19, %s20
    %p24 = pneg %p18
    %p25 = scmp.eq.s32.totalorder %s9, 1
    %p26 = por %p24, %p25
    %p27 = scmp.ne.s32.totalorder %s19, %s22
    %p28 = scmp.eq.s32.totalorder %s9, 0
    %p29 = por %p27, %p28
    %p30 = scmp.ne.s32.totalorder %s19, %s22
    %p31 = scmp.eq.s32.totalorder %s14, 1
    %p32 = por %p30, %p31
    %p33 = scmp.ne.s32.totalorder %s22, %s23
    %p34 = scmp.eq.s32.totalorder %s14, 0
    %p35 = por %p33, %p34
    %p36 = scmp.ne.s32.totalorder %s22, %s23
    %p37 = scmp.eq.s32.totalorder %s15, 1
    %p38 = por %p36, %p37
    %p40 = scmp.ne.s32.totalorder %s23, %s39
    %p41 = scmp.eq.s32.totalorder %s15, 0
    %p42 = por %p40, %p41
    %s44 = sadd.s32 %s43, 1
    %p47 = scmp.eq.s32.totalorder %s9, 1
    %p48 = scmp.ne.s32.totalorder %s43, %s45
    %p49 = scmp.eq.s32.totalorder %s9, 0
    %p50 = por %p48, %p49
    %p51 = scmp.ne.s32.totalorder %s43, %s45
    %p52 = scmp.eq.s32.totalorder %s14, 1
    %p53 = por %p51, %p52
    %p54 = scmp.ne.s32.totalorder %s45, %s46
    %p55 = scmp.eq.s32.totalorder %s14, 0
    %p56 = por %p54, %p55
    %p57 = scmp.ne.s32.totalorder %s45, %s46
    %p58 = scmp.eq.s32.totalorder %s15, 1
    %p59 = por %p57, %p58
    %p61 = scmp.ne.s32.totalorder %s46, %s60
    %p62 = scmp.eq.s32.totalorder %s15, 0
    %p63 = por %p61, %p62
    %s65 = sadd.s32 %s64, 1
    %p68 = scmp.eq.s32.totalorder %s9, 1
    %p69 = scmp.ne.s32.totalorder %s64, %s66
    %p70 = scmp.eq.s32.totalorder %s9, 0
    %p71 = por %p69, %p70
    %p72 = scmp.ne.s32.totalorder %s64, %s66
    %p73 = scmp.eq.s32.totalorder %s14, 1
    %p74 = por %p72, %p73
    %p75 = scmp.ne.s32.totalorder %s66, %s67
    %p76 = scmp.eq.s32.totalorder %s14, 0
    %p77 = por %p75, %p76
    %p78 = scmp.ne.s32.totalorder %s66, %s67
    %p79 = scmp.eq.s32.totalorder %s15, 1
    %p80 = por %p78, %p79
    %p82 = scmp.ne.s32.totalorder %s67, %s81
    %p83 = scmp.eq.s32.totalorder %s15, 0
    %p84 = por %p82, %p83
    %s85 = ssub.s32 %s9, %s16
    %p86 = scmp.eq.s32.totalorder %s85, 0
    %s88 = sadd.s32 %s87, 1
    %s89 = scalar_select %p86, %s87, %s88
    %p92 = pneg %p86
    %p93 = scmp.eq.s32.totalorder %s9, 1
    %p94 = por %p92, %p93
    %p95 = scmp.ne.s32.totalorder %s87, %s90
    %p96 = scmp.eq.s32.totalorder %s9, 0
    %p97 = por %p95, %p96
    %p98 = scmp.ne.s32.totalorder %s87, %s90
    %p99 = scmp.eq.s32.totalorder %s14, 1
    %p100 = por %p98, %p99
    %p101 = scmp.ne.s32.totalorder %s90, %s91
    %p102 = scmp.eq.s32.totalorder %s14, 0
    %p103 = por %p101, %p102
    %p104 = scmp.ne.s32.totalorder %s90, %s91
    %p105 = scmp.eq.s32.totalorder %s15, 1
    %p106 = por %p104, %p105
    %p108 = scmp.ne.s32.totalorder %s91, %s107
    %p109 = scmp.eq.s32.totalorder %s15, 0
    %p110 = por %p108, %p109
    %p111 = scmp.le.s32.totalorder 1, %s9
    %p112 = scmp.lt.s32.totalorder %s9, 3
    %p113 = pnand %p111, %p112
    %p114 = pneg %p113
    // Predicated region
    $region9: #{generator_forward.45} parent=5 // pred_check
      _
    $region10: #{generator_forward.45} parent=5 // pred_check_branch
      %116 = sbr.rel (%p113) target = $region12
    $region11: #{generator_forward.45} parent=5 // pred_region
      %s117 = ssub.s32 %s9, 1
      // Predicated region
      $region13: #{generator_forward.45} parent=11 // pred_check
        %p118 = pneg %p56
      $region14: #{generator_forward.45} parent=11 // pred_check_branch
        %120 = sbr.rel (%p118) target = $region16
      $region15: #{generator_forward.45} parent=11 // pred_region
        _
      $region16: #{generator_forward.45} parent=11 // pred_fallthru
        _
      // Predicated region
      $region17: #{generator_forward.45} parent=11 // pred_check
        %p121 = pneg %p77
      $region18: #{generator_forward.45} parent=11 // pred_check_branch
        %123 = sbr.rel (%p121) target = $region20
      $region19: #{generator_forward.45} parent=11 // pred_region
        _
      $region20: #{generator_forward.45} parent=11 // pred_fallthru
        _
    $region12: #{generator_forward.45} parent=5 // pred_fallthru
      _
    %p124 = scmp.lt.s32.totalorder %s9, 2
    // Predicated region
    $region21: #{generator_forward.45} parent=5 // pred_check
      %p125 = pneg %p124
    $region22: #{generator_forward.45} parent=5 // pred_check_branch
      %127 = sbr.rel (%p125) target = $region24
    $region23: #{generator_forward.45} parent=5 // pred_region
      // Predicated region
      $region25: #{generator_forward.45} parent=23 // pred_check
        %p128 = pneg %p29
      $region26: #{generator_forward.45} parent=23 // pred_check_branch
        %130 = sbr.rel (%p128) target = $region28
      $region27: #{generator_forward.45} parent=23 // pred_region
        %p131 = scmp.lt.s32.totalorder %s9, 1
        %s132 = scalar_select %p131, %s9, 1
        %s133 = smul.addr %s132, 11
        %s134 = smul.addr %s133, 4
        %s135 = scalar_lea.vmem %s0, %s134
      $region28: #{generator_forward.45} parent=23 // pred_fallthru
        _
    $region24: #{generator_forward.45} parent=5 // pred_fallthru
      _
    %p136 = scmp.le.s32.totalorder 1, %s9
    %p137 = scmp.lt.s32.totalorder %s9, 3
    %p138 = pnand %p136, %p137
    %p139 = pneg %p138
    // Predicated region
    $region29: #{generator_forward.45} parent=5 // pred_check
      _
    $region30: #{generator_forward.45} parent=5 // pred_check_branch
      %141 = sbr.rel (%p138) target = $region32
    $region31: #{generator_forward.45} parent=5 // pred_region
      %s142 = ssub.s32 %s9, 1
      %p143 = scmp.lt.s32.totalorder %s14, 1
      %s144 = scalar_select %p143, %s14, 1
      %s145 = smul.addr %s144, 11
      %s146 = smul.addr %s145, 4
      %s147 = scalar_lea.vmem %s0, %s146
      %p148 = pneg %p35
      %p149 = pneg %p32
      %p150 = pneg %p56
      %p151 = pneg %p53
      %p152 = pneg %p77
      %p153 = pneg %p74
      %p154 = pneg %p103
      %p155 = pneg %p100
      %p156 = scmp.lt.s32.totalorder %s14, 1
      %s157 = scalar_select %p156, %s14, 1
      %s158 = smul.addr %s157, 36
      %s159 = smul.addr %s158, 4
      %s160 = scalar_lea.vmem %s3, %s159
      %p161 = scmp.lt.s32.totalorder %s14, 1
      %s162 = scalar_select %p161, %s14, 1
      %s163 = smul.addr %s162, 11
      %s164 = smul.addr %s163, 4
      %s165 = scalar_lea.vmem %s0, %s164
      %p166 = scmp.lt.s32.totalorder %s14, 1
      %s167 = scalar_select %p166, %s14, 1
      %s168 = smul.addr %s167, 36
      %s169 = smul.addr %s168, 4
      %s170 = scalar_lea.vmem %s3, %s169
      %v172 = vld [vmem:[%s165] sm:$0xf]
      %v173 = vld [vmem:[%s165 + $0x4] sm:$0xf]
      %v174 = vld [vmem:[%s165 + $0x8] sm:$0xf]
      %v175 = vld [vmem:[%s165 + $0xc] sm:$0xf]
      %v176 = vld [vmem:[%s165 + $0x10] sm:$0xf]
      %v177 = vld [vmem:[%s165 + $0x14] sm:$0xf]
      %v178 = vld [vmem:[%s165 + $0x18] sm:$0xf]
      %v179 = vld [vmem:[%s165 + $0x1c] sm:$0xf]
      %v180 = vld [vmem:[%s165 + $0x20] sm:$0xf]
      %s181 = scalar_lea.vmem %s1, 128
      %v182 = vld [vmem:[%s181] sm:$0xf]
      %v183 = vld [vmem:[%s181 + $0x4] sm:$0xf]
      %v184 = vld [vmem:[%s181 + $0x8] sm:$0xf]
      %v185 = vld [vmem:[%s181 + $0xc] sm:$0xf]
      %v186 = vld [vmem:[%s181 + $0x10] sm:$0xf]
      %v187 = vld [vmem:[%s181 + $0x14] sm:$0xf]
      %v188 = vld [vmem:[%s181 + $0x18] sm:$0xf]
      %v189 = vld [vmem:[%s181 + $0x1c] sm:$0xf]
      %v199 = vunpack.c.l.b16 %v172
      %v200 = vunpack.c.l.b16 %v173
      %v201 = vunpack.c.l.b16 %v174
      %v202 = vunpack.c.l.b16 %v175
      %v203 = vunpack.c.l.b16 %v176
      %v204 = vunpack.c.l.b16 %v177
      %v205 = vunpack.c.l.b16 %v178
      %v206 = vunpack.c.l.b16 %v179
      %v207 = vunpack.c.l.b16 %v180
      %v208 = vpack.c.b16 %v200, %v199
      %v209 = vpack.c.b16 %v202, %v201
      %v210 = vpack.c.b16 %v204, %v203
      %v211 = vpack.c.b16 %v206, %v205
      %v212 = vpack.c.b16 %v207, %v207
      %v221 = vunpack.c.l.b16 %v182
      %v222 = vunpack.c.l.b16 %v183
      %v223 = vunpack.c.l.b16 %v184
      %v224 = vunpack.c.l.b16 %v185
      %v225 = vunpack.c.l.b16 %v186
      %v226 = vunpack.c.l.b16 %v187
      %v227 = vunpack.c.l.b16 %v188
      %v228 = vunpack.c.l.b16 %v189
      %v229 = vpack.c.b16 %v222, %v221
      %v230 = vpack.c.b16 %v224, %v223
      %v231 = vpack.c.b16 %v226, %v225
      %v232 = vpack.c.b16 %v228, %v227
      %vm237 = vcmask 523264
      %v239 = vsel %vm237, %v208, 0
      %v242 = vsel %vm237, %v209, 0
      %v245 = vsel %vm237, %v210, 0
      %v248 = vsel %vm237, %v211, 0
      %v251 = vsel %vm237, %v212, 0
      %253 = vmatprep.subr.bf16.mxu0 0
      %254 = vmatpush1.bf16.msra.mxu0 %v229
      %255 = vmatprep.subr.bf16.mxu0 0
      %256 = vmatpush1.bf16.msra.mxu0 %v230
      %257 = vmatprep.subr.bf16.mxu0 0
      %258 = vmatpush1.bf16.msra.mxu0 %v231
      %259 = vmatprep.subr.bf16.mxu0 0
      %260 = vmatpush1.bf16.msra.mxu0 %v232
      %261 = vmatprep.subr.bf16.mxu0 0
      %262 = vmatpush1.bf16.msra.mxu0 0
      %263 = vmatprep.subr.bf16.mxu0 0
      %264 = vmatpush1.bf16.msra.mxu0 0
      %265 = vmatprep.subr.bf16.mxu0 0
      %266 = vmatpush1.bf16.msra.mxu0 0
      %267 = vmatprep.subr.bf16.mxu0 0
      %268 = vmatpush1.bf16.msra.mxu0 0
      %269 = vmatprep.subr.bf16.mxu0 0
      %270 = vmatpush1.bf16.msra.mxu0 0
      %271 = vmatprep.subr.bf16.mxu0 0
      %272 = vmatpush1.bf16.msra.mxu0 0
      %273 = vmatprep.subr.bf16.mxu0 0
      %274 = vmatpush1.bf16.msra.mxu0 0
      %275 = vmatprep.subr.bf16.mxu0 0
      %276 = vmatpush1.bf16.msra.mxu0 0
      %277 = vmatprep.subr.bf16.mxu0 0
      %278 = vmatpush1.bf16.msra.mxu0 0
      %279 = vmatprep.subr.bf16.mxu0 0
      %280 = vmatpush1.bf16.msra.mxu0 0
      %281 = vmatprep.subr.bf16.mxu0 0
      %282 = vmatpush1.bf16.msra.mxu0 0
      %283 = vmatprep.subr.bf16.mxu0 0
      %284 = vmatpush1.bf16.msra.mxu0 0
      %285 = vmatprep.mubr.bf16.mxu0 0
      %286 = vmatmul.mubr.bf16.gmra.mrb[0].mxu0 %v239
      %v287 = vpop.f32.mrb[0].mxu0
      %v288 = vadd.f32 0.0, %v287
      %v289 = vpop.f32.mrb[0].mxu0
      %v290 = vpop.f32.mrb[0].mxu0
      %v291 = vadd.f32 0.0, %v290
      %v292 = vpop.f32.mrb[0].mxu0
      %293 = vmatprep.mubr.bf16.mxu0 0
      %294 = vmatmul.mubr.bf16.gmra.mrb[0].mxu0 %v242
      %v295 = vpop.f32.mrb[0].mxu0
      %v296 = vadd.f32 0.0, %v295
      %v297 = vpop.f32.mrb[0].mxu0
      %v298 = vpop.f32.mrb[0].mxu0
      %v299 = vadd.f32 0.0, %v298
      %v300 = vpop.f32.mrb[0].mxu0
      %301 = vmatprep.mubr.bf16.mxu0 0
      %302 = vmatmul.mubr.bf16.gmra.mrb[0].mxu0 %v245
      %v303 = vpop.f32.mrb[0].mxu0
      %v304 = vadd.f32 0.0, %v303
      %v305 = vpop.f32.mrb[0].mxu0
      %v306 = vpop.f32.mrb[0].mxu0
      %v307 = vadd.f32 0.0, %v306
      %v308 = vpop.f32.mrb[0].mxu0
      %309 = vmatprep.mubr.bf16.mxu0 0
      %310 = vmatmul.mubr.bf16.gmra.mrb[0].mxu0 %v248
      %v311 = vpop.f32.mrb[0].mxu0
      %v312 = vadd.f32 0.0, %v311
      %v313 = vpop.f32.mrb[0].mxu0
      %v314 = vpop.f32.mrb[0].mxu0
      %v315 = vadd.f32 0.0, %v314
      %v316 = vpop.f32.mrb[0].mxu0
      %317 = vmatprep.mubr.bf16.mxu0 0
      %318 = vmatmul.mubr.bf16.gmra.mrb[0].mxu0 %v251
      %v319 = vpop.f32.mrb[0].mxu0
      %v320 = vadd.f32 0.0, %v319
      %v321 = vpop.f32.mrb[0].mxu0
      %v322 = vpop.f32.mrb[0].mxu0
      %v323 = vpop.f32.mrb[0].mxu0
      %324 = vdwg.mxu0
      %v325 = vld [vmem:[%s165] sm:$0xf]
      %v326 = vld [vmem:[%s165 + $0x4] sm:$0xf]
      %v327 = vld [vmem:[%s165 + $0x8] sm:$0xf]
      %v328 = vld [vmem:[%s165 + $0xc] sm:$0xf]
      %v329 = vld [vmem:[%s165 + $0x10] sm:$0xf]
      %v330 = vld [vmem:[%s165 + $0x14] sm:$0xf]
      %v331 = vld [vmem:[%s165 + $0x18] sm:$0xf]
      %v332 = vld [vmem:[%s165 + $0x1c] sm:$0xf]
      %v333 = vld [vmem:[%s165 + $0x20] sm:$0xf]
      %v334 = vld [vmem:[%s165 + $0x24] sm:$0x1]
      %s335 = scalar_lea.vmem %s1, 96
      %v336 = vld [vmem:[%s335] sm:$0xf]
      %v337 = vld [vmem:[%s335 + $0x4] sm:$0xf]
      %v338 = vld [vmem:[%s335 + $0x8] sm:$0xf]
      %v339 = vld [vmem:[%s335 + $0xc] sm:$0xf]
      %v340 = vld [vmem:[%s335 + $0x10] sm:$0xf]
      %v341 = vld [vmem:[%s335 + $0x14] sm:$0xf]
      %v342 = vld [vmem:[%s335 + $0x18] sm:$0xf]
      %v343 = vld [vmem:[%s335 + $0x1c] sm:$0xf]
      %s344 = scalar_lea.vmem %s1, 160
      %v345 = vld [vmem:[%s344] sm:$0xf]
      %v346 = vld [vmem:[%s344 + $0x4] sm:$0xf]
      %v347 = vld [vmem:[%s344 + $0x8] sm:$0xf]
      %v348 = vld [vmem:[%s344 + $0xc] sm:$0xf]
      %v349 = vld [vmem:[%s344 + $0x10] sm:$0xf]
      %v350 = vld [vmem:[%s344 + $0x14] sm:$0xf]
      %v351 = vld [vmem:[%s344 + $0x18] sm:$0xf]
      %v352 = vld [vmem:[%s344 + $0x1c] sm:$0xf]
      %v361 = vunpack.c.l.b16 %v345
      %v362 = vunpack.c.l.b16 %v346
      %v363 = vunpack.c.l.b16 %v347
      %v364 = vunpack.c.l.b16 %v348
      %v365 = vunpack.c.l.b16 %v349
      %v366 = vunpack.c.l.b16 %v350
      %v367 = vunpack.c.l.b16 %v351
      %v368 = vunpack.c.l.b16 %v352
      %v369 = vpack.c.b16 %v362, %v361
      %v370 = vpack.c.b16 %v364, %v363
      %v371 = vpack.c.b16 %v366, %v365
      %v372 = vpack.c.b16 %v368, %v367
      %377 = vmatprep.subr.bf16.mxu0 0
      %378 = vmatpush1.bf16.msra.mxu0 %v369
      %379 = vmatprep.subr.bf16.mxu0 0
      %380 = vmatpush1.bf16.msra.mxu0 %v370
      %381 = vmatprep.subr.bf16.mxu0 0
      %382 = vmatpush1.bf16.msra.mxu0 %v371
      %383 = vmatprep.subr.bf16.mxu0 0
      %384 = vmatpush1.bf16.msra.mxu0 %v372
      %385 = vmatprep.subr.bf16.mxu0 0
      %386 = vmatpush1.bf16.msra.mxu0 0
      %387 = vmatprep.subr.bf16.mxu0 0
      %388 = vmatpush1.bf16.msra.mxu0 0
      %389 = vmatprep.subr.bf16.mxu0 0
      %390 = vmatpush1.bf16.msra.mxu0 0
      %391 = vmatprep.subr.bf16.mxu0 0
      %392 = vmatpush1.bf16.msra.mxu0 0
      %393 = vmatprep.subr.bf16.mxu0 0
      %394 = vmatpush1.bf16.msra.mxu0 0
      %395 = vmatprep.subr.bf16.mxu0 0
      %396 = vmatpush1.bf16.msra.mxu0 0
      %397 = vmatprep.subr.bf16.mxu0 0
      %398 = vmatpush1.bf16.msra.mxu0 0
      %399 = vmatprep.subr.bf16.mxu0 0
      %400 = vmatpush1.bf16.msra.mxu0 0
      %401 = vmatprep.subr.bf16.mxu0 0
      %402 = vmatpush1.bf16.msra.mxu0 0
      %403 = vmatprep.subr.bf16.mxu0 0
      %404 = vmatpush1.bf16.msra.mxu0 0
      %405 = vmatprep.subr.bf16.mxu0 0
      %406 = vmatpush1.bf16.msra.mxu0 0
      %407 = vmatprep.subr.bf16.mxu0 0
      %408 = vmatpush1.bf16.msra.mxu0 0
      %409 = vmatprep.mubr.bf16.mxu0 0
      %410 = vmatmul.mubr.bf16.gmra.mrb[0].mxu0 %v239
      %v411 = vpop.f32.mrb[0].mxu0
      %v412 = vadd.f32 0.0, %v411
      %v413 = vpop.f32.mrb[0].mxu0
      %v414 = vpop.f32.mrb[0].mxu0
      %v415 = vadd.f32 0.0, %v414
      %v416 = vpop.f32.mrb[0].mxu0
      %417 = vmatprep.mubr.bf16.mxu0 0
      %418 = vmatmul.mubr.bf16.gmra.mrb[0].mxu0 %v242
      %v419 = vpop.f32.mrb[0].mxu0
      %v420 = vadd.f32 0.0, %v419
      %v421 = vpop.f32.mrb[0].mxu0
      %v422 = vpop.f32.mrb[0].mxu0
      %v423 = vadd.f32 0.0, %v422
      %v424 = vpop.f32.mrb[0].mxu0
      %425 = vmatprep.mubr.bf16.mxu0 0
      %426 = vmatmul.mubr.bf16.gmra.mrb[0].mxu0 %v245
      %v427 = vpop.f32.mrb[0].mxu0
      %v428 = vadd.f32 0.0, %v427
      %v429 = vpop.f32.mrb[0].mxu0
      %v430 = vpop.f32.mrb[0].mxu0
      %v431 = vadd.f32 0.0, %v430
      %v432 = vpop.f32.mrb[0].mxu0
      %433 = vmatprep.mubr.bf16.mxu0 0
      %434 = vmatmul.mubr.bf16.gmra.mrb[0].mxu0 %v248
      %v435 = vpop.f32.mrb[0].mxu0
      %v436 = vadd.f32 0.0, %v435
      %v437 = vpop.f32.mrb[0].mxu0
      %v438 = vpop.f32.mrb[0].mxu0
      %v439 = vadd.f32 0.0, %v438
      %v440 = vpop.f32.mrb[0].mxu0
      %441 = vmatprep.mubr.bf16.mxu0 0
      %442 = vmatmul.mubr.bf16.gmra.mrb[0].mxu0 %v251
      %v443 = vpop.f32.mrb[0].mxu0
      %v444 = vadd.f32 0.0, %v443
      %v445 = vpop.f32.mrb[0].mxu0
      %v446 = vpop.f32.mrb[0].mxu0
      %v447 = vpop.f32.mrb[0].mxu0
      %448 = vdwg.mxu0
      %v459 = vunpack.c.l.b16 %v325
      %v460 = vunpack.c.l.b16 %v326
      %v461 = vunpack.c.l.b16 %v327
      %v462 = vunpack.c.l.b16 %v328
      %v463 = vunpack.c.l.b16 %v329
      %v464 = vunpack.c.l.b16 %v330
      %v465 = vunpack.c.l.b16 %v331
      %v466 = vunpack.c.l.b16 %v332
      %v467 = vunpack.c.l.b16 %v333
      %v468 = vunpack.c.l.b16 %v334
      %v469 = vpack.c.b16 %v460, %v459
      %v470 = vpack.c.b16 %v462, %v461
      %v471 = vpack.c.b16 %v464, %v463
      %v472 = vpack.c.b16 %v466, %v465
      %v473 = vpack.c.b16 %v468, %v467
      %vm474 = vsmask.f32 7424
      %v476 = vshrl.u32 %v469, 16
      %v478 = vshll.u32 %v469, 16
      %v480 = vrot.slane %v478, 1
      %v481 = vor.u32 %v476, %v480
      %v483 = vshll.u32 %v470, 16
      %v485 = vrot.slane %v483, 1
      %v486 = vsel %vm474, %v481, %v485
      %v487 = vshrl.u32 %v470, 16
      %v489 = vor.u32 %v487, %v485
      %v491 = vshll.u32 %v471, 16
      %v493 = vrot.slane %v491, 1
      %v494 = vsel %vm474, %v489, %v493
      %v495 = vshrl.u32 %v471, 16
      %v497 = vor.u32 %v495, %v493
      %v499 = vshll.u32 %v472, 16
      %v501 = vrot.slane %v499, 1
      %v502 = vsel %vm474, %v497, %v501
      %v503 = vshrl.u32 %v472, 16
      %v505 = vor.u32 %v503, %v501
      %v507 = vshll.u32 %v473, 16
      %v509 = vrot.slane %v507, 1
      %v510 = vsel %vm474, %v505, %v509
      %v511 = vshrl.u32 %v473, 16
      %v513 = vor.u32 %v511, %v509
      %v522 = vunpack.c.l.b16 %v336
      %v523 = vunpack.c.l.b16 %v337
      %v524 = vunpack.c.l.b16 %v338
      %v525 = vunpack.c.l.b16 %v339
      %v526 = vunpack.c.l.b16 %v340
      %v527 = vunpack.c.l.b16 %v341
      %v528 = vunpack.c.l.b16 %v342
      %v529 = vunpack.c.l.b16 %v343
      %v530 = vpack.c.b16 %v523, %v522
      %v531 = vpack.c.b16 %v525, %v524
      %v532 = vpack.c.b16 %v527, %v526
      %v533 = vpack.c.b16 %v529, %v528
      %v539 = vsel %vm237, %v486, 0
      %v542 = vsel %vm237, %v494, 0
      %v545 = vsel %vm237, %v502, 0
      %v548 = vsel %vm237, %v510, 0
      %v551 = vsel %vm237, %v513, 0
      %553 = vmatprep.subr.bf16.mxu0 0
      %554 = vmatpush1.bf16.msra.mxu0 %v530
      %555 = vmatprep.subr.bf16.mxu0 0
      %556 = vmatpush1.bf16.msra.mxu0 %v531
      %557 = vmatprep.subr.bf16.mxu0 0
      %558 = vmatpush1.bf16.msra.mxu0 %v532
      %559 = vmatprep.subr.bf16.mxu0 0
      %560 = vmatpush1.bf16.msra.mxu0 %v533
      %561 = vmatprep.subr.bf16.mxu0 0
      %562 = vmatpush1.bf16.msra.mxu0 0
      %563 = vmatprep.subr.bf16.mxu0 0
      %564 = vmatpush1.bf16.msra.mxu0 0
      %565 = vmatprep.subr.bf16.mxu0 0
      %566 = vmatpush1.bf16.msra.mxu0 0
      %567 = vmatprep.subr.bf16.mxu0 0
      %568 = vmatpush1.bf16.msra.mxu0 0
      %569 = vmatprep.subr.bf16.mxu0 0
      %570 = vmatpush1.bf16.msra.mxu0 0
      %571 = vmatprep.subr.bf16.mxu0 0
      %572 = vmatpush1.bf16.msra.mxu0 0
      %573 = vmatprep.subr.bf16.mxu0 0
      %574 = vmatpush1.bf16.msra.mxu0 0
      %575 = vmatprep.subr.bf16.mxu0 0
      %576 = vmatpush1.bf16.msra.mxu0 0
      %577 = vmatprep.subr.bf16.mxu0 0
      %578 = vmatpush1.bf16.msra.mxu0 0
      %579 = vmatprep.subr.bf16.mxu0 0
      %580 = vmatpush1.bf16.msra.mxu0 0
      %581 = vmatprep.subr.bf16.mxu0 0
      %582 = vmatpush1.bf16.msra.mxu0 0
      %583 = vmatprep.subr.bf16.mxu0 0
      %584 = vmatpush1.bf16.msra.mxu0 0
      %585 = vmatprep.mubr.bf16.mxu0 0
      %586 = vmatmul.mubr.bf16.gmra.mrb[0].mxu0 %v539
      %v587 = vpop.f32.mrb[0].mxu0
      %v588 = vadd.f32 %v412, %v587
      %v589 = vpop.f32.mrb[0].mxu0
      %v590 = vpop.f32.mrb[0].mxu0
      %v591 = vadd.f32 %v415, %v590
      %v592 = vpop.f32.mrb[0].mxu0
      %593 = vmatprep.mubr.bf16.mxu0 0
      %594 = vmatmul.mubr.bf16.gmra.mrb[0].mxu0 %v542
      %v595 = vpop.f32.mrb[0].mxu0
      %v596 = vadd.f32 %v420, %v595
      %v597 = vpop.f32.mrb[0].mxu0
      %v598 = vpop.f32.mrb[0].mxu0
      %v599 = vadd.f32 %v423, %v598
      %v600 = vpop.f32.mrb[0].mxu0
      %601 = vmatprep.mubr.bf16.mxu0 0
      %602 = vmatmul.mubr.bf16.gmra.mrb[0].mxu0 %v545
      %v603 = vpop.f32.mrb[0].mxu0
      %v604 = vadd.f32 %v428, %v603
      %v605 = vpop.f32.mrb[0].mxu0
      %v606 = vpop.f32.mrb[0].mxu0
      %v607 = vadd.f32 %v431, %v606
      %v608 = vpop.f32.mrb[0].mxu0
      %609 = vmatprep.mubr.bf16.mxu0 0
      %610 = vmatmul.mubr.bf16.gmra.mrb[0].mxu0 %v548
      %v611 = vpop.f32.mrb[0].mxu0
      %v612 = vadd.f32 %v436, %v611
      %v613 = vpop.f32.mrb[0].mxu0
      %v614 = vpop.f32.mrb[0].mxu0
      %v615 = vadd.f32 %v439, %v614
      %v616 = vpop.f32.mrb[0].mxu0
      %617 = vmatprep.mubr.bf16.mxu0 0
      %618 = vmatmul.mubr.bf16.gmra.mrb[0].mxu0 %v551
      %v619 = vpop.f32.mrb[0].mxu0
      %v620 = vadd.f32 %v444, %v619
      %v621 = vpop.f32.mrb[0].mxu0
      %v622 = vpop.f32.mrb[0].mxu0
      %v623 = vpop.f32.mrb[0].mxu0
      %624 = vdwg.mxu0
      %v625 = vld [vmem:[%s165 + $0x4] sm:$0xf]
      %v626 = vld [vmem:[%s165 + $0x8] sm:$0xf]
      %v627 = vld [vmem:[%s165 + $0xc] sm:$0xf]
      %v628 = vld [vmem:[%s165 + $0x10] sm:$0xf]
      %v629 = vld [vmem:[%s165 + $0x14] sm:$0xf]
      %v630 = vld [vmem:[%s165 + $0x18] sm:$0xf]
      %v631 = vld [vmem:[%s165 + $0x1c] sm:$0xf]
      %v632 = vld [vmem:[%s165 + $0x20] sm:$0xf]
      %v633 = vld [vmem:[%s165 + $0x24] sm:$0xf]
      %v634 = vld [vmem:[%s165 + $0x28] sm:$0x1]
      %s635 = scalar_lea.vmem %s1, 32
      %v636 = vld [vmem:[%s635] sm:$0xf]
      %v637 = vld [vmem:[%s635 + $0x4] sm:$0xf]
      %v638 = vld [vmem:[%s635 + $0x8] sm:$0xf]
      %v639 = vld [vmem:[%s635 + $0xc] sm:$0xf]
      %v640 = vld [vmem:[%s635 + $0x10] sm:$0xf]
      %v641 = vld [vmem:[%s635 + $0x14] sm:$0xf]
      %v642 = vld [vmem:[%s635 + $0x18] sm:$0xf]
      %v643 = vld [vmem:[%s635 + $0x1c] sm:$0xf]
      %s644 = scalar_lea.vmem %s1, 224
      %v645 = vld [vmem:[%s644] sm:$0xf]
      %v646 = vld [vmem:[%s644 + $0x4] sm:$0xf]
      %v647 = vld [vmem:[%s644 + $0x8] sm:$0xf]
      %v648 = vld [vmem:[%s644 + $0xc] sm:$0xf]
      %v649 = vld [vmem:[%s644 + $0x10] sm:$0xf]
      %v650 = vld [vmem:[%s644 + $0x14] sm:$0xf]
      %v651 = vld [vmem:[%s644 + $0x18] sm:$0xf]
      %v652 = vld [vmem:[%s644 + $0x1c] sm:$0xf]
      %v661 = vunpack.c.l.b16 %v645
      %v662 = vunpack.c.l.b16 %v646
      %v663 = vunpack.c.l.b16 %v647
      %v664 = vunpack.c.l.b16 %v648
      %v665 = vunpack.c.l.b16 %v649
      %v666 = vunpack.c.l.b16 %v650
      %v667 = vunpack.c.l.b16 %v651
      %v668 = vunpack.c.l.b16 %v652
      %v669 = vpack.c.b16 %v662, %v661
      %v670 = vpack.c.b16 %v664, %v663
      %v671 = vpack.c.b16 %v666, %v665
      %v672 = vpack.c.b16 %v668, %v667
      %677 = vmatprep.subr.bf16.mxu0 0
      %678 = vmatpush1.bf16.msra.mxu0 %v669
      %679 = vmatprep.subr.bf16.mxu0 0
      %680 = vmatpush1.bf16.msra.mxu0 %v670
      %681 = vmatprep.subr.bf16.mxu0 0
      %682 = vmatpush1.bf16.msra.mxu0 %v671
      %683 = vmatprep.subr.bf16.mxu0 0
      %684 = vmatpush1.bf16.msra.mxu0 %v672
      %685 = vmatprep.subr.bf16.mxu0 0
      %686 = vmatpush1.bf16.msra.mxu0 0
      %687 = vmatprep.subr.bf16.mxu0 0
      %688 = vmatpush1.bf16.msra.mxu0 0
      %689 = vmatprep.subr.bf16.mxu0 0
      %690 = vmatpush1.bf16.msra.mxu0 0
      %691 = vmatprep.subr.bf16.mxu0 0
      %692 = vmatpush1.bf16.msra.mxu0 0
      %693 = vmatprep.subr.bf16.mxu0 0
      %694 = vmatpush1.bf16.msra.mxu0 0
      %695 = vmatprep.subr.bf16.mxu0 0
      %696 = vmatpush1.bf16.msra.mxu0 0
      %697 = vmatprep.subr.bf16.mxu0 0
      %698 = vmatpush1.bf16.msra.mxu0 0
      %699 = vmatprep.subr.bf16.mxu0 0
      %700 = vmatpush1.bf16.msra.mxu0 0
      %701 = vmatprep.subr.bf16.mxu0 0
      %702 = vmatpush1.bf16.msra.mxu0 0
      %703 = vmatprep.subr.bf16.mxu0 0
      %704 = vmatpush1.bf16.msra.mxu0 0
      %705 = vmatprep.subr.bf16.mxu0 0
      %706 = vmatpush1.bf16.msra.mxu0 0
      %707 = vmatprep.subr.bf16.mxu0 0
      %708 = vmatpush1.bf16.msra.mxu0 0
      %709 = vmatprep.mubr.bf16.mxu0 0
      %710 = vmatmul.mubr.bf16.gmra.mrb[0].mxu0 %v239
      %v711 = vpop.f32.mrb[0].mxu0
      %v712 = vadd.f32 0.0, %v711
      %v713 = vpop.f32.mrb[0].mxu0
      %v714 = vpop.f32.mrb[0].mxu0
      %v715 = vadd.f32 0.0, %v714
      %v716 = vpop.f32.mrb[0].mxu0
      %717 = vmatprep.mubr.bf16.mxu0 0
      %718 = vmatmul.mubr.bf16.gmra.mrb[0].mxu0 %v242
      %v719 = vpop.f32.mrb[0].mxu0
      %v720 = vadd.f32 0.0, %v719
      %v721 = vpop.f32.mrb[0].mxu0
      %v722 = vpop.f32.mrb[0].mxu0
      %v723 = vadd.f32 0.0, %v722
      %v724 = vpop.f32.mrb[0].mxu0
      %725 = vmatprep.mubr.bf16.mxu0 0
      %726 = vmatmul.mubr.bf16.gmra.mrb[0].mxu0 %v245
      %v727 = vpop.f32.mrb[0].mxu0
      %v728 = vadd.f32 0.0, %v727
      %v729 = vpop.f32.mrb[0].mxu0
      %v730 = vpop.f32.mrb[0].mxu0
      %v731 = vadd.f32 0.0, %v730
      %v732 = vpop.f32.mrb[0].mxu0
      %733 = vmatprep.mubr.bf16.mxu0 0
      %734 = vmatmul.mubr.bf16.gmra.mrb[0].mxu0 %v248
      %v735 = vpop.f32.mrb[0].mxu0
      %v736 = vadd.f32 0.0, %v735
      %v737 = vpop.f32.mrb[0].mxu0
      %v738 = vpop.f32.mrb[0].mxu0
      %v739 = vadd.f32 0.0, %v738
      %v740 = vpop.f32.mrb[0].mxu0
      %741 = vmatprep.mubr.bf16.mxu0 0
      %742 = vmatmul.mubr.bf16.gmra.mrb[0].mxu0 %v251
      %v743 = vpop.f32.mrb[0].mxu0
      %v744 = vadd.f32 0.0, %v743
      %v745 = vpop.f32.mrb[0].mxu0
      %v746 = vpop.f32.mrb[0].mxu0
      %v747 = vpop.f32.mrb[0].mxu0
      %748 = vdwg.mxu0
      %v759 = vunpack.c.l.b16 %v625
      %v760 = vunpack.c.l.b16 %v626
      %v761 = vunpack.c.l.b16 %v627
      %v762 = vunpack.c.l.b16 %v628
      %v763 = vunpack.c.l.b16 %v629
      %v764 = vunpack.c.l.b16 %v630
      %v765 = vunpack.c.l.b16 %v631
      %v766 = vunpack.c.l.b16 %v632
      %v767 = vunpack.c.l.b16 %v633
      %v768 = vunpack.c.l.b16 %v634
      %v769 = vpack.c.b16 %v760, %v759
      %v770 = vpack.c.b16 %v762, %v761
      %v771 = vpack.c.b16 %v764, %v763
      %v772 = vpack.c.b16 %v766, %v765
      %v773 = vpack.c.b16 %v768, %v767
      %v775 = vshrl.u32 %v769, 16
      %v777 = vshll.u32 %v769, 16
      %v779 = vrot.slane %v777, 1
      %v780 = vor.u32 %v775, %v779
      %v782 = vshll.u32 %v770, 16
      %v784 = vrot.slane %v782, 1
      %v785 = vsel %vm474, %v780, %v784
      %v786 = vshrl.u32 %v770, 16
      %v788 = vor.u32 %v786, %v784
      %v790 = vshll.u32 %v771, 16
      %v792 = vrot.slane %v790, 1
      %v793 = vsel %vm474, %v788, %v792
      %v794 = vshrl.u32 %v771, 16
      %v796 = vor.u32 %v794, %v792
      %v798 = vshll.u32 %v772, 16
      %v800 = vrot.slane %v798, 1
      %v801 = vsel %vm474, %v796, %v800
      %v802 = vshrl.u32 %v772, 16
      %v804 = vor.u32 %v802, %v800
      %v806 = vshll.u32 %v773, 16
      %v808 = vrot.slane %v806, 1
      %v809 = vsel %vm474, %v804, %v808
      %v810 = vshrl.u32 %v773, 16
      %v812 = vor.u32 %v810, %v808
      %v821 = vunpack.c.l.b16 %v636
      %v822 = vunpack.c.l.b16 %v637
      %v823 = vunpack.c.l.b16 %v638
      %v824 = vunpack.c.l.b16 %v639
      %v825 = vunpack.c.l.b16 %v640
      %v826 = vunpack.c.l.b16 %v641
      %v827 = vunpack.c.l.b16 %v642
      %v828 = vunpack.c.l.b16 %v643
      %v829 = vpack.c.b16 %v822, %v821
      %v830 = vpack.c.b16 %v824, %v823
      %v831 = vpack.c.b16 %v826, %v825
      %v832 = vpack.c.b16 %v828, %v827
      %v838 = vsel %vm237, %v785, 0
      %v841 = vsel %vm237, %v793, 0
      %v844 = vsel %vm237, %v801, 0
      %v847 = vsel %vm237, %v809, 0
      %v850 = vsel %vm237, %v812, 0
      %852 = vmatprep.subr.bf16.mxu0 0
      %853 = vmatpush1.bf16.msra.mxu0 %v829
      %854 = vmatprep.subr.bf16.mxu0 0
      %855 = vmatpush1.bf16.msra.mxu0 %v830
      %856 = vmatprep.subr.bf16.mxu0 0
      %857 = vmatpush1.bf16.msra.mxu0 %v831
      %858 = vmatprep.subr.bf16.mxu0 0
      %859 = vmatpush1.bf16.msra.mxu0 %v832
      %860 = vmatprep.subr.bf16.mxu0 0
      %861 = vmatpush1.bf16.msra.mxu0 0
      %862 = vmatprep.subr.bf16.mxu0 0
      %863 = vmatpush1.bf16.msra.mxu0 0
      %864 = vmatprep.subr.bf16.mxu0 0
      %865 = vmatpush1.bf16.msra.mxu0 0
      %866 = vmatprep.subr.bf16.mxu0 0
      %867 = vmatpush1.bf16.msra.mxu0 0
      %868 = vmatprep.subr.bf16.mxu0 0
      %869 = vmatpush1.bf16.msra.mxu0 0
      %870 = vmatprep.subr.bf16.mxu0 0
      %871 = vmatpush1.bf16.msra.mxu0 0
      %872 = vmatprep.subr.bf16.mxu0 0
      %873 = vmatpush1.bf16.msra.mxu0 0
      %874 = vmatprep.subr.bf16.mxu0 0
      %875 = vmatpush1.bf16.msra.mxu0 0
      %876 = vmatprep.subr.bf16.mxu0 0
      %877 = vmatpush1.bf16.msra.mxu0 0
      %878 = vmatprep.subr.bf16.mxu0 0
      %879 = vmatpush1.bf16.msra.mxu0 0
      %880 = vmatprep.subr.bf16.mxu0 0
      %881 = vmatpush1.bf16.msra.mxu0 0
      %882 = vmatprep.subr.bf16.mxu0 0
      %883 = vmatpush1.bf16.msra.mxu0 0
      %884 = vmatprep.mubr.bf16.mxu0 0
      %885 = vmatmul.mubr.bf16.gmra.mrb[0].mxu0 %v838
      %v886 = vpop.f32.mrb[0].mxu0
      %v887 = vadd.f32 %v712, %v886
      %v888 = vpop.f32.mrb[0].mxu0
      %v889 = vpop.f32.mrb[0].mxu0
      %v890 = vadd.f32 %v715, %v889
      %v891 = vpop.f32.mrb[0].mxu0
      %892 = vmatprep.mubr.bf16.mxu0 0
      %893 = vmatmul.mubr.bf16.gmra.mrb[0].mxu0 %v841
      %v894 = vpop.f32.mrb[0].mxu0
      %v895 = vadd.f32 %v720, %v894
      %v896 = vpop.f32.mrb[0].mxu0
      %v897 = vpop.f32.mrb[0].mxu0
      %v898 = vadd.f32 %v723, %v897
      %v899 = vpop.f32.mrb[0].mxu0
      %900 = vmatprep.mubr.bf16.mxu0 0
      %901 = vmatmul.mubr.bf16.gmra.mrb[0].mxu0 %v844
      %v902 = vpop.f32.mrb[0].mxu0
      %v903 = vadd.f32 %v728, %v902
      %v904 = vpop.f32.mrb[0].mxu0
      %v905 = vpop.f32.mrb[0].mxu0
      %v906 = vadd.f32 %v731, %v905
      %v907 = vpop.f32.mrb[0].mxu0
      %908 = vmatprep.mubr.bf16.mxu0 0
      %909 = vmatmul.mubr.bf16.gmra.mrb[0].mxu0 %v847
      %v910 = vpop.f32.mrb[0].mxu0
      %v911 = vadd.f32 %v736, %v910
      %v912 = vpop.f32.mrb[0].mxu0
      %v913 = vpop.f32.mrb[0].mxu0
      %v914 = vadd.f32 %v739, %v913
      %v915 = vpop.f32.mrb[0].mxu0
      %916 = vmatprep.mubr.bf16.mxu0 0
      %917 = vmatmul.mubr.bf16.gmra.mrb[0].mxu0 %v850
      %v918 = vpop.f32.mrb[0].mxu0
      %v919 = vadd.f32 %v744, %v918
      %v920 = vpop.f32.mrb[0].mxu0
      %v921 = vpop.f32.mrb[0].mxu0
      %v922 = vpop.f32.mrb[0].mxu0
      %923 = vdwg.mxu0
      %v924 = vld [vmem:[%s165 + $0x4] sm:$0xe]
      %v925 = vld [vmem:[%s1] sm:$0xf]
      %v926 = vld [vmem:[%s1 + $0x4] sm:$0xf]
      %v927 = vld [vmem:[%s1 + $0x8] sm:$0xf]
      %v928 = vld [vmem:[%s1 + $0xc] sm:$0xf]
      %v929 = vld [vmem:[%s1 + $0x10] sm:$0xf]
      %v930 = vld [vmem:[%s1 + $0x14] sm:$0xf]
      %v931 = vld [vmem:[%s1 + $0x18] sm:$0xf]
      %v932 = vld [vmem:[%s1 + $0x1c] sm:$0xf]
      %s933 = scalar_lea.vmem %s1, 64
      %v934 = vld [vmem:[%s933] sm:$0xf]
      %v935 = vld [vmem:[%s933 + $0x4] sm:$0xf]
      %v936 = vld [vmem:[%s933 + $0x8] sm:$0xf]
      %v937 = vld [vmem:[%s933 + $0xc] sm:$0xf]
      %v938 = vld [vmem:[%s933 + $0x10] sm:$0xf]
      %v939 = vld [vmem:[%s933 + $0x14] sm:$0xf]
      %v940 = vld [vmem:[%s933 + $0x18] sm:$0xf]
      %v941 = vld [vmem:[%s933 + $0x1c] sm:$0xf]
      %v950 = vunpack.c.l.b16 %v934
      %v951 = vunpack.c.l.b16 %v935
      %v952 = vunpack.c.l.b16 %v936
      %v953 = vunpack.c.l.b16 %v937
      %v954 = vunpack.c.l.b16 %v938
      %v955 = vunpack.c.l.b16 %v939
      %v956 = vunpack.c.l.b16 %v940
      %v957 = vunpack.c.l.b16 %v941
      %v958 = vpack.c.b16 %v951, %v950
      %v959 = vpack.c.b16 %v953, %v952
      %v960 = vpack.c.b16 %v955, %v954
      %v961 = vpack.c.b16 %v957, %v956
      %966 = vmatprep.subr.bf16.mxu0 0
      %967 = vmatpush1.bf16.msra.mxu0 %v958
      %968 = vmatprep.subr.bf16.mxu0 0
      %969 = vmatpush1.bf16.msra.mxu0 %v959
      %970 = vmatprep.subr.bf16.mxu0 0
      %971 = vmatpush1.bf16.msra.mxu0 %v960
      %972 = vmatprep.subr.bf16.mxu0 0
      %973 = vmatpush1.bf16.msra.mxu0 %v961
      %974 = vmatprep.subr.bf16.mxu0 0
      %975 = vmatpush1.bf16.msra.mxu0 0
      %976 = vmatprep.subr.bf16.mxu0 0
      %977 = vmatpush1.bf16.msra.mxu0 0
      %978 = vmatprep.subr.bf16.mxu0 0
      %979 = vmatpush1.bf16.msra.mxu0 0
      %980 = vmatprep.subr.bf16.mxu0 0
      %981 = vmatpush1.bf16.msra.mxu0 0
      %982 = vmatprep.subr.bf16.mxu0 0
      %983 = vmatpush1.bf16.msra.mxu0 0
      %984 = vmatprep.subr.bf16.mxu0 0
      %985 = vmatpush1.bf16.msra.mxu0 0
      %986 = vmatprep.subr.bf16.mxu0 0
      %987 = vmatpush1.bf16.msra.mxu0 0
      %988 = vmatprep.subr.bf16.mxu0 0
      %989 = vmatpush1.bf16.msra.mxu0 0
      %990 = vmatprep.subr.bf16.mxu0 0
      %991 = vmatpush1.bf16.msra.mxu0 0
      %992 = vmatprep.subr.bf16.mxu0 0
      %993 = vmatpush1.bf16.msra.mxu0 0
      %994 = vmatprep.subr.bf16.mxu0 0
      %995 = vmatpush1.bf16.msra.mxu0 0
      %996 = vmatprep.subr.bf16.mxu0 0
      %997 = vmatpush1.bf16.msra.mxu0 0
      %998 = vmatprep.mubr.bf16.mxu0 0
      %999 = vmatmul.mubr.bf16.gmra.mrb[0].mxu0 %v838
      %v1000 = vpop.f32.mrb[0].mxu0
      %v1001 = vadd.f32 0.0, %v1000
      %v1002 = vpop.f32.mrb[0].mxu0
      %v1003 = vpop.f32.mrb[0].mxu0
      %v1004 = vadd.f32 0.0, %v1003
      %v1005 = vpop.f32.mrb[0].mxu0
      %1006 = vmatprep.mubr.bf16.mxu0 0
      %1007 = vmatmul.mubr.bf16.gmra.mrb[0].mxu0 %v841
      %v1008 = vpop.f32.mrb[0].mxu0
      %v1009 = vadd.f32 0.0, %v1008
      %v1010 = vpop.f32.mrb[0].mxu0
      %v1011 = vpop.f32.mrb[0].mxu0
      %v1012 = vadd.f32 0.0, %v1011
      %v1013 = vpop.f32.mrb[0].mxu0
      %1014 = vmatprep.mubr.bf16.mxu0 0
      %1015 = vmatmul.mubr.bf16.gmra.mrb[0].mxu0 %v844
      %v1016 = vpop.f32.mrb[0].mxu0
      %v1017 = vadd.f32 0.0, %v1016
      %v1018 = vpop.f32.mrb[0].mxu0
      %v1019 = vpop.f32.mrb[0].mxu0
      %v1020 = vadd.f32 0.0, %v1019
      %v1021 = vpop.f32.mrb[0].mxu0
      %1022 = vmatprep.mubr.bf16.mxu0 0
      %1023 = vmatmul.mubr.bf16.gmra.mrb[0].mxu0 %v847
      %v1024 = vpop.f32.mrb[0].mxu0
      %v1025 = vadd.f32 0.0, %v1024
      %v1026 = vpop.f32.mrb[0].mxu0
      %v1027 = vpop.f32.mrb[0].mxu0
      %v1028 = vadd.f32 0.0, %v1027
      %v1029 = vpop.f32.mrb[0].mxu0
      %1030 = vmatprep.mubr.bf16.mxu0 0
      %1031 = vmatmul.mubr.bf16.gmra.mrb[0].mxu0 %v850
      %v1032 = vpop.f32.mrb[0].mxu0
      %v1033 = vadd.f32 0.0, %v1032
      %v1034 = vpop.f32.mrb[0].mxu0
      %v1035 = vpop.f32.mrb[0].mxu0
      %v1036 = vpop.f32.mrb[0].mxu0
      %1037 = vdwg.mxu0
      %v1039 = vunpack.c.l.b16 %v924
      %v1040 = vpack.c.b16 %v760, %v1039
      %vm1041 = vcmask 1046528
      %v1042 = vrot.slane %v1040, 1
      %v1043 = vrot.slane %v770, 1
      %v1044 = vsel %vm1041, %v1042, %v1043
      %v1045 = vrot.slane %v771, 1
      %v1046 = vsel %vm1041, %v1043, %v1045
      %v1047 = vrot.slane %v772, 1
      %v1048 = vsel %vm1041, %v1045, %v1047
      %v1049 = vrot.slane %v773, 1
      %v1050 = vsel %vm1041, %v1047, %v1049
      %v1059 = vunpack.c.l.b16 %v925
      %v1060 = vunpack.c.l.b16 %v926
      %v1061 = vunpack.c.l.b16 %v927
      %v1062 = vunpack.c.l.b16 %v928
      %v1063 = vunpack.c.l.b16 %v929
      %v1064 = vunpack.c.l.b16 %v930
      %v1065 = vunpack.c.l.b16 %v931
      %v1066 = vunpack.c.l.b16 %v932
      %v1067 = vpack.c.b16 %v1060, %v1059
      %v1068 = vpack.c.b16 %v1062, %v1061
      %v1069 = vpack.c.b16 %v1064, %v1063
      %v1070 = vpack.c.b16 %v1066, %v1065
      %v1076 = vsel %vm237, %v1044, 0
      %v1079 = vsel %vm237, %v1046, 0
      %v1082 = vsel %vm237, %v1048, 0
      %v1085 = vsel %vm237, %v1050, 0
      %v1088 = vsel %vm237, %v1049, 0
      %1090 = vmatprep.subr.bf16.mxu0 0
      %1091 = vmatpush1.bf16.msra.mxu0 %v1067
      %1092 = vmatprep.subr.bf16.mxu0 0
      %1093 = vmatpush1.bf16.msra.mxu0 %v1068
      %1094 = vmatprep.subr.bf16.mxu0 0
      %1095 = vmatpush1.bf16.msra.mxu0 %v1069
      %1096 = vmatprep.subr.bf16.mxu0 0
      %1097 = vmatpush1.bf16.msra.mxu0 %v1070
      %1098 = vmatprep.subr.bf16.mxu0 0
      %1099 = vmatpush1.bf16.msra.mxu0 0
      %1100 = vmatprep.subr.bf16.mxu0 0
      %1101 = vmatpush1.bf16.msra.mxu0 0
      %1102 = vmatprep.subr.bf16.mxu0 0
      %1103 = vmatpush1.bf16.msra.mxu0 0
      %1104 = vmatprep.subr.bf16.mxu0 0
      %1105 = vmatpush1.bf16.msra.mxu0 0
      %1106 = vmatprep.subr.bf16.mxu0 0
      %1107 = vmatpush1.bf16.msra.mxu0 0
      %1108 = vmatprep.subr.bf16.mxu0 0
      %1109 = vmatpush1.bf16.msra.mxu0 0
      %1110 = vmatprep.subr.bf16.mxu0 0
      %1111 = vmatpush1.bf16.msra.mxu0 0
      %1112 = vmatprep.subr.bf16.mxu0 0
      %1113 = vmatpush1.bf16.msra.mxu0 0
      %1114 = vmatprep.subr.bf16.mxu0 0
      %1115 = vmatpush1.bf16.msra.mxu0 0
      %1116 = vmatprep.subr.bf16.mxu0 0
      %1117 = vmatpush1.bf16.msra.mxu0 0
      %1118 = vmatprep.subr.bf16.mxu0 0
      %1119 = vmatpush1.bf16.msra.mxu0 0
      %1120 = vmatprep.subr.bf16.mxu0 0
      %1121 = vmatpush1.bf16.msra.mxu0 0
      %1122 = vmatprep.mubr.bf16.mxu0 0
      %1123 = vmatmul.mubr.bf16.gmra.mrb[0].mxu0 %v1076
      %v1124 = vpop.f32.mrb[0].mxu0
      %v1125 = vadd.f32 %v1001, %v1124
      %v1126 = vpop.f32.mrb[0].mxu0
      %v1127 = vpop.f32.mrb[0].mxu0
      %v1128 = vadd.f32 %v1004, %v1127
      %v1129 = vpop.f32.mrb[0].mxu0
      %1130 = vmatprep.mubr.bf16.mxu0 0
      %1131 = vmatmul.mubr.bf16.gmra.mrb[0].mxu0 %v1079
      %v1132 = vpop.f32.mrb[0].mxu0
      %v1133 = vadd.f32 %v1009, %v1132
      %v1134 = vpop.f32.mrb[0].mxu0
      %v1135 = vpop.f32.mrb[0].mxu0
      %v1136 = vadd.f32 %v1012, %v1135
      %v1137 = vpop.f32.mrb[0].mxu0
      %1138 = vmatprep.mubr.bf16.mxu0 0
      %1139 = vmatmul.mubr.bf16.gmra.mrb[0].mxu0 %v1082
      %v1140 = vpop.f32.mrb[0].mxu0
      %v1141 = vadd.f32 %v1017, %v1140
      %v1142 = vpop.f32.mrb[0].mxu0
      %v1143 = vpop.f32.mrb[0].mxu0
      %v1144 = vadd.f32 %v1020, %v1143
      %v1145 = vpop.f32.mrb[0].mxu0
      %1146 = vmatprep.mubr.bf16.mxu0 0
      %1147 = vmatmul.mubr.bf16.gmra.mrb[0].mxu0 %v1085
      %v1148 = vpop.f32.mrb[0].mxu0
      %v1149 = vadd.f32 %v1025, %v1148
      %v1150 = vpop.f32.mrb[0].mxu0
      %v1151 = vpop.f32.mrb[0].mxu0
      %v1152 = vadd.f32 %v1028, %v1151
      %v1153 = vpop.f32.mrb[0].mxu0
      %1154 = vmatprep.mubr.bf16.mxu0 0
      %1155 = vmatmul.mubr.bf16.gmra.mrb[0].mxu0 %v1088
      %v1156 = vpop.f32.mrb[0].mxu0
      %v1157 = vadd.f32 %v1033, %v1156
      %v1158 = vpop.f32.mrb[0].mxu0
      %v1159 = vpop.f32.mrb[0].mxu0
      %v1160 = vpop.f32.mrb[0].mxu0
      %1161 = vdwg.mxu0
      %s1162 = scalar_lea.vmem %s1, 192
      %v1163 = vld [vmem:[%s1162] sm:$0xf]
      %v1164 = vld [vmem:[%s1162 + $0x4] sm:$0xf]
      %v1165 = vld [vmem:[%s1162 + $0x8] sm:$0xf]
      %v1166 = vld [vmem:[%s1162 + $0xc] sm:$0xf]
      %v1167 = vld [vmem:[%s1162 + $0x10] sm:$0xf]
      %v1168 = vld [vmem:[%s1162 + $0x14] sm:$0xf]
      %v1169 = vld [vmem:[%s1162 + $0x18] sm:$0xf]
      %v1170 = vld [vmem:[%s1162 + $0x1c] sm:$0xf]
      %v1179 = vunpack.c.l.b16 %v1163
      %v1180 = vunpack.c.l.b16 %v1164
      %v1181 = vunpack.c.l.b16 %v1165
      %v1182 = vunpack.c.l.b16 %v1166
      %v1183 = vunpack.c.l.b16 %v1167
      %v1184 = vunpack.c.l.b16 %v1168
      %v1185 = vunpack.c.l.b16 %v1169
      %v1186 = vunpack.c.l.b16 %v1170
      %v1187 = vpack.c.b16 %v1180, %v1179
      %v1188 = vpack.c.b16 %v1182, %v1181
      %v1189 = vpack.c.b16 %v1184, %v1183
      %v1190 = vpack.c.b16 %v1186, %v1185
      %1195 = vmatprep.subr.bf16.mxu0 0
      %1196 = vmatpush1.bf16.msra.mxu0 %v1187
      %1197 = vmatprep.subr.bf16.mxu0 0
      %1198 = vmatpush1.bf16.msra.mxu0 %v1188
      %1199 = vmatprep.subr.bf16.mxu0 0
      %1200 = vmatpush1.bf16.msra.mxu0 %v1189
      %1201 = vmatprep.subr.bf16.mxu0 0
      %1202 = vmatpush1.bf16.msra.mxu0 %v1190
      %1203 = vmatprep.subr.bf16.mxu0 0
      %1204 = vmatpush1.bf16.msra.mxu0 0
      %1205 = vmatprep.subr.bf16.mxu0 0
      %1206 = vmatpush1.bf16.msra.mxu0 0
      %1207 = vmatprep.subr.bf16.mxu0 0
      %1208 = vmatpush1.bf16.msra.mxu0 0
      %1209 = vmatprep.subr.bf16.mxu0 0
      %1210 = vmatpush1.bf16.msra.mxu0 0
      %1211 = vmatprep.subr.bf16.mxu0 0
      %1212 = vmatpush1.bf16.msra.mxu0 0
      %1213 = vmatprep.subr.bf16.mxu0 0
      %1214 = vmatpush1.bf16.msra.mxu0 0
      %1215 = vmatprep.subr.bf16.mxu0 0
      %1216 = vmatpush1.bf16.msra.mxu0 0
      %1217 = vmatprep.subr.bf16.mxu0 0
      %1218 = vmatpush1.bf16.msra.mxu0 0
      %1219 = vmatprep.subr.bf16.mxu0 0
      %1220 = vmatpush1.bf16.msra.mxu0 0
      %1221 = vmatprep.subr.bf16.mxu0 0
      %1222 = vmatpush1.bf16.msra.mxu0 0
      %1223 = vmatprep.subr.bf16.mxu0 0
      %1224 = vmatpush1.bf16.msra.mxu0 0
      %1225 = vmatprep.subr.bf16.mxu0 0
      %1226 = vmatpush1.bf16.msra.mxu0 0
      %1227 = vmatprep.mubr.bf16.mxu0 0
      %1228 = vmatmul.mubr.bf16.gmra.mrb[0].mxu0 %v539
      %v1229 = vpop.f32.mrb[0].mxu0
      %v1230 = vadd.f32 0.0, %v1229
      %v1231 = vpop.f32.mrb[0].mxu0
      %v1232 = vpop.f32.mrb[0].mxu0
      %v1233 = vadd.f32 0.0, %v1232
      %v1234 = vpop.f32.mrb[0].mxu0
      %1235 = vmatprep.mubr.bf16.mxu0 0
      %1236 = vmatmul.mubr.bf16.gmra.mrb[0].mxu0 %v542
      %v1237 = vpop.f32.mrb[0].mxu0
      %v1238 = vadd.f32 0.0, %v1237
      %v1239 = vpop.f32.mrb[0].mxu0
      %v1240 = vpop.f32.mrb[0].mxu0
      %v1241 = vadd.f32 0.0, %v1240
      %v1242 = vpop.f32.mrb[0].mxu0
      %1243 = vmatprep.mubr.bf16.mxu0 0
      %1244 = vmatmul.mubr.bf16.gmra.mrb[0].mxu0 %v545
      %v1245 = vpop.f32.mrb[0].mxu0
      %v1246 = vadd.f32 0.0, %v1245
      %v1247 = vpop.f32.mrb[0].mxu0
      %v1248 = vpop.f32.mrb[0].mxu0
      %v1249 = vadd.f32 0.0, %v1248
      %v1250 = vpop.f32.mrb[0].mxu0
      %1251 = vmatprep.mubr.bf16.mxu0 0
      %1252 = vmatmul.mubr.bf16.gmra.mrb[0].mxu0 %v548
      %v1253 = vpop.f32.mrb[0].mxu0
      %v1254 = vadd.f32 0.0, %v1253
      %v1255 = vpop.f32.mrb[0].mxu0
      %v1256 = vpop.f32.mrb[0].mxu0
      %v1257 = vadd.f32 0.0, %v1256
      %v1258 = vpop.f32.mrb[0].mxu0
      %1259 = vmatprep.mubr.bf16.mxu0 0
      %1260 = vmatmul.mubr.bf16.gmra.mrb[0].mxu0 %v551
      %v1261 = vpop.f32.mrb[0].mxu0
      %v1262 = vadd.f32 0.0, %v1261
      %v1263 = vpop.f32.mrb[0].mxu0
      %v1264 = vpop.f32.mrb[0].mxu0
      %v1265 = vpop.f32.mrb[0].mxu0
      %1266 = vdwg.mxu0
      %v1267 = vadd.f32 %v1125, %v1230
      %v1268 = vadd.f32 %v1128, %v1233
      %v1269 = vadd.f32 %v1133, %v1238
      %v1270 = vadd.f32 %v1136, %v1241
      %v1271 = vadd.f32 %v1141, %v1246
      %v1272 = vadd.f32 %v1144, %v1249
      %v1273 = vadd.f32 %v1149, %v1254
      %v1274 = vadd.f32 %v1152, %v1257
      %v1275 = vadd.f32 %v1157, %v1262
      %s1276 = scalar_lea.vmem %s1, 256
      %v1277 = vld [vmem:[%s1276] sm:$0xf]
      %v1278 = vld [vmem:[%s1276 + $0x4] sm:$0xf]
      %v1279 = vld [vmem:[%s1276 + $0x8] sm:$0xf]
      %v1280 = vld [vmem:[%s1276 + $0xc] sm:$0xf]
      %v1281 = vld [vmem:[%s1276 + $0x10] sm:$0xf]
      %v1282 = vld [vmem:[%s1276 + $0x14] sm:$0xf]
      %v1283 = vld [vmem:[%s1276 + $0x18] sm:$0xf]
      %v1284 = vld [vmem:[%s1276 + $0x1c] sm:$0xf]
      %v1293 = vunpack.c.l.b16 %v1277
      %v1294 = vunpack.c.l.b16 %v1278
      %v1295 = vunpack.c.l.b16 %v1279
      %v1296 = vunpack.c.l.b16 %v1280
      %v1297 = vunpack.c.l.b16 %v1281
      %v1298 = vunpack.c.l.b16 %v1282
      %v1299 = vunpack.c.l.b16 %v1283
      %v1300 = vunpack.c.l.b16 %v1284
      %v1301 = vpack.c.b16 %v1294, %v1293
      %v1302 = vpack.c.b16 %v1296, %v1295
      %v1303 = vpack.c.b16 %v1298, %v1297
      %v1304 = vpack.c.b16 %v1300, %v1299
      %1309 = vmatprep.subr.bf16.mxu0 0
      %1310 = vmatpush1.bf16.msra.mxu0 %v1301
      %1311 = vmatprep.subr.bf16.mxu0 0
      %1312 = vmatpush1.bf16.msra.mxu0 %v1302
      %1313 = vmatprep.subr.bf16.mxu0 0
      %1314 = vmatpush1.bf16.msra.mxu0 %v1303
      %1315 = vmatprep.subr.bf16.mxu0 0
      %1316 = vmatpush1.bf16.msra.mxu0 %v1304
      %1317 = vmatprep.subr.bf16.mxu0 0
      %1318 = vmatpush1.bf16.msra.mxu0 0
      %1319 = vmatprep.subr.bf16.mxu0 0
      %1320 = vmatpush1.bf16.msra.mxu0 0
      %1321 = vmatprep.subr.bf16.mxu0 0
      %1322 = vmatpush1.bf16.msra.mxu0 0
      %1323 = vmatprep.subr.bf16.mxu0 0
      %1324 = vmatpush1.bf16.msra.mxu0 0
      %1325 = vmatprep.subr.bf16.mxu0 0
      %1326 = vmatpush1.bf16.msra.mxu0 0
      %1327 = vmatprep.subr.bf16.mxu0 0
      %1328 = vmatpush1.bf16.msra.mxu0 0
      %1329 = vmatprep.subr.bf16.mxu0 0
      %1330 = vmatpush1.bf16.msra.mxu0 0
      %1331 = vmatprep.subr.bf16.mxu0 0
      %1332 = vmatpush1.bf16.msra.mxu0 0
      %1333 = vmatprep.subr.bf16.mxu0 0
      %1334 = vmatpush1.bf16.msra.mxu0 0
      %1335 = vmatprep.subr.bf16.mxu0 0
      %1336 = vmatpush1.bf16.msra.mxu0 0
      %1337 = vmatprep.subr.bf16.mxu0 0
      %1338 = vmatpush1.bf16.msra.mxu0 0
      %1339 = vmatprep.subr.bf16.mxu0 0
      %1340 = vmatpush1.bf16.msra.mxu0 0
      %1341 = vmatprep.mubr.bf16.mxu0 0
      %1342 = vmatmul.mubr.bf16.gmra.mrb[0].mxu0 %v239
      %v1343 = vpop.f32.mrb[0].mxu0
      %v1344 = vadd.f32 0.0, %v1343
      %v1345 = vpop.f32.mrb[0].mxu0
      %v1346 = vpop.f32.mrb[0].mxu0
      %v1347 = vadd.f32 0.0, %v1346
      %v1348 = vpop.f32.mrb[0].mxu0
      %1349 = vmatprep.mubr.bf16.mxu0 0
      %1350 = vmatmul.mubr.bf16.gmra.mrb[0].mxu0 %v242
      %v1351 = vpop.f32.mrb[0].mxu0
      %v1352 = vadd.f32 0.0, %v1351
      %v1353 = vpop.f32.mrb[0].mxu0
      %v1354 = vpop.f32.mrb[0].mxu0
      %v1355 = vadd.f32 0.0, %v1354
      %v1356 = vpop.f32.mrb[0].mxu0
      %1357 = vmatprep.mubr.bf16.mxu0 0
      %1358 = vmatmul.mubr.bf16.gmra.mrb[0].mxu0 %v245
      %v1359 = vpop.f32.mrb[0].mxu0
      %v1360 = vadd.f32 0.0, %v1359
      %v1361 = vpop.f32.mrb[0].mxu0
      %v1362 = vpop.f32.mrb[0].mxu0
      %v1363 = vadd.f32 0.0, %v1362
      %v1364 = vpop.f32.mrb[0].mxu0
      %1365 = vmatprep.mubr.bf16.mxu0 0
      %1366 = vmatmul.mubr.bf16.gmra.mrb[0].mxu0 %v248
      %v1367 = vpop.f32.mrb[0].mxu0
      %v1368 = vadd.f32 0.0, %v1367
      %v1369 = vpop.f32.mrb[0].mxu0
      %v1370 = vpop.f32.mrb[0].mxu0
      %v1371 = vadd.f32 0.0, %v1370
      %v1372 = vpop.f32.mrb[0].mxu0
      %1373 = vmatprep.mubr.bf16.mxu0 0
      %1374 = vmatmul.mubr.bf16.gmra.mrb[0].mxu0 %v251
      %v1375 = vpop.f32.mrb[0].mxu0
      %v1376 = vadd.f32 0.0, %v1375
      %v1377 = vpop.f32.mrb[0].mxu0
      %v1378 = vpop.f32.mrb[0].mxu0
      %v1379 = vpop.f32.mrb[0].mxu0
      %1380 = vdwg.mxu0
      %v1381 = vadd.f32 %v1267, %v1344
      %v1382 = vadd.f32 %v1268, %v1347
      %v1383 = vadd.f32 %v1269, %v1352
      %v1384 = vadd.f32 %v1270, %v1355
      %v1385 = vadd.f32 %v1271, %v1360
      %v1386 = vadd.f32 %v1272, %v1363
      %v1387 = vadd.f32 %v1273, %v1368
      %v1388 = vadd.f32 %v1274, %v1371
      %v1389 = vadd.f32 %v1275, %v1376
      %v1390 = vld [vmem:[%s2] sm:$0xff]
      %v1391 = vld [vmem:[%s2 + $0x8] sm:$0xff]
      %v1392 = vld [vmem:[%s2 + $0x10] sm:$0xff]
      %v1393 = vld [vmem:[%s2 + $0x18] sm:$0xff]
      %v1394 = vld [vmem:[%s2 + $0x20] sm:$0xff]
      %v1395 = vld [vmem:[%s2 + $0x28] sm:$0xff]
      %v1396 = vld [vmem:[%s2 + $0x30] sm:$0xff]
      %v1397 = vld [vmem:[%s2 + $0x38] sm:$0xff]
      %v1398 = vld [vmem:[%s2 + $0x40] sm:$0xff]
      %1400 = vset.pattern.permute.xlu0 0
      %1401 = vperm.xlu0 %1400, %v1390
      %v1402 = vpop.permute.xlu0 %1401
      %1405 = vset.pattern.permute.xlu0 0
      %1406 = vperm.xlu0 %1405, %v1391
      %v1407 = vpop.permute.xlu0 %1406
      %1410 = vset.pattern.permute.xlu0 0
      %1411 = vperm.xlu0 %1410, %v1392
      %v1412 = vpop.permute.xlu0 %1411
      %1415 = vset.pattern.permute.xlu0 0
      %1416 = vperm.xlu0 %1415, %v1393
      %v1417 = vpop.permute.xlu0 %1416
      %1420 = vset.pattern.permute.xlu0 0
      %1421 = vperm.xlu0 %1420, %v1394
      %v1422 = vpop.permute.xlu0 %1421
      %1425 = vset.pattern.permute.xlu0 0
      %1426 = vperm.xlu0 %1425, %v1395
      %v1427 = vpop.permute.xlu0 %1426
      %1430 = vset.pattern.permute.xlu0 0
      %1431 = vperm.xlu0 %1430, %v1396
      %v1432 = vpop.permute.xlu0 %1431
      %1435 = vset.pattern.permute.xlu0 0
      %1436 = vperm.xlu0 %1435, %v1397
      %v1437 = vpop.permute.xlu0 %1436
      %1440 = vset.pattern.permute.xlu0 0
      %1441 = vperm.xlu0 %1440, %v1398
      %v1442 = vpop.permute.xlu0 %1441
      %v1444 = vmul.f32 %v288, %v1402
      %v1445 = vmul.f32 %v291, %v1407
      %v1446 = vmul.f32 %v296, %v1412
      %v1447 = vmul.f32 %v299, %v1417
      %v1448 = vmul.f32 %v304, %v1422
      %v1449 = vmul.f32 %v307, %v1427
      %v1450 = vmul.f32 %v312, %v1432
      %v1451 = vmul.f32 %v315, %v1437
      %v1452 = vmul.f32 %v320, %v1442
      %vm1453 = vcmask 261120
      %v1454 = vsel %vm1453, %v1444, 0.0
      %v1455 = vsel %vm1453, %v1445, 0.0
      %v1456 = vadd.f32 %v1454, %v1455
      %v1457 = vsel %vm1453, %v1446, 0.0
      %v1458 = vadd.f32 %v1456, %v1457
      %v1459 = vsel %vm1453, %v1447, 0.0
      %v1460 = vadd.f32 %v1458, %v1459
      %v1461 = vsel %vm1453, %v1448, 0.0
      %v1462 = vadd.f32 %v1460, %v1461
      %v1463 = vsel %vm1453, %v1449, 0.0
      %v1464 = vadd.f32 %v1462, %v1463
      %v1465 = vsel %vm1453, %v1450, 0.0
      %v1466 = vadd.f32 %v1464, %v1465
      %v1467 = vsel %vm1453, %v1451, 0.0
      %v1468 = vadd.f32 %v1466, %v1467
      %v1469 = vsel %vm1453, %v1452, 0.0
      %v1470 = vadd.f32 %v1468, %v1469
      %v1471 = vrot.slane %v1470, 4
      %v1472 = vadd.f32 %v1470, %v1471
      %v1473 = vrot.slane %v1472, 2
      %v1474 = vadd.f32 %v1472, %v1473
      %v1475 = vrot.slane %v1474, 1
      %v1476 = vadd.f32 %v1474, %v1475
      %v1477 = vmul.f32 %v1444, %v288
      %v1478 = vmul.f32 %v1445, %v291
      %v1479 = vmul.f32 %v1446, %v296
      %v1480 = vmul.f32 %v1447, %v299
      %v1481 = vmul.f32 %v1448, %v304
      %v1482 = vmul.f32 %v1449, %v307
      %v1483 = vmul.f32 %v1450, %v312
      %v1484 = vmul.f32 %v1451, %v315
      %v1485 = vmul.f32 %v1452, %v320
      %v1486 = vsel %vm1453, %v1477, 0.0
      %v1487 = vsel %vm1453, %v1478, 0.0
      %v1488 = vadd.f32 %v1486, %v1487
      %v1489 = vsel %vm1453, %v1479, 0.0
      %v1490 = vadd.f32 %v1488, %v1489
      %v1491 = vsel %vm1453, %v1480, 0.0
      %v1492 = vadd.f32 %v1490, %v1491
      %v1493 = vsel %vm1453, %v1481, 0.0
      %v1494 = vadd.f32 %v1492, %v1493
      %v1495 = vsel %vm1453, %v1482, 0.0
      %v1496 = vadd.f32 %v1494, %v1495
      %v1497 = vsel %vm1453, %v1483, 0.0
      %v1498 = vadd.f32 %v1496, %v1497
      %v1499 = vsel %vm1453, %v1484, 0.0
      %v1500 = vadd.f32 %v1498, %v1499
      %v1501 = vsel %vm1453, %v1485, 0.0
      %v1502 = vadd.f32 %v1500, %v1501
      %v1503 = vrot.slane %v1502, 4
      %v1504 = vadd.f32 %v1502, %v1503
      %v1505 = vrot.slane %v1504, 2
      %v1506 = vadd.f32 %v1504, %v1505
      %v1507 = vrot.slane %v1506, 1
      %v1508 = vadd.f32 %v1506, %v1507
      %v1509 = vmul.f32 %v588, %v1402
      %v1510 = vmul.f32 %v591, %v1407
      %v1511 = vmul.f32 %v596, %v1412
      %v1512 = vmul.f32 %v599, %v1417
      %v1513 = vmul.f32 %v604, %v1422
      %v1514 = vmul.f32 %v607, %v1427
      %v1515 = vmul.f32 %v612, %v1432
      %v1516 = vmul.f32 %v615, %v1437
      %v1517 = vmul.f32 %v620, %v1442
      %v1518 = vsel %vm1453, %v1509, 0.0
      %v1519 = vsel %vm1453, %v1510, 0.0
      %v1520 = vadd.f32 %v1518, %v1519
      %v1521 = vsel %vm1453, %v1511, 0.0
      %v1522 = vadd.f32 %v1520, %v1521
      %v1523 = vsel %vm1453, %v1512, 0.0
      %v1524 = vadd.f32 %v1522, %v1523
      %v1525 = vsel %vm1453, %v1513, 0.0
      %v1526 = vadd.f32 %v1524, %v1525
      %v1527 = vsel %vm1453, %v1514, 0.0
      %v1528 = vadd.f32 %v1526, %v1527
      %v1529 = vsel %vm1453, %v1515, 0.0
      %v1530 = vadd.f32 %v1528, %v1529
      %v1531 = vsel %vm1453, %v1516, 0.0
      %v1532 = vadd.f32 %v1530, %v1531
      %v1533 = vsel %vm1453, %v1517, 0.0
      %v1534 = vadd.f32 %v1532, %v1533
      %v1535 = vrot.slane %v1534, 4
      %v1536 = vadd.f32 %v1534, %v1535
      %v1537 = vrot.slane %v1536, 2
      %v1538 = vadd.f32 %v1536, %v1537
      %v1539 = vrot.slane %v1538, 1
      %v1540 = vadd.f32 %v1538, %v1539
      %v1541 = vmul.f32 %v1509, %v588
      %v1542 = vmul.f32 %v1510, %v591
      %v1543 = vmul.f32 %v1511, %v596
      %v1544 = vmul.f32 %v1512, %v599
      %v1545 = vmul.f32 %v1513, %v604
      %v1546 = vmul.f32 %v1514, %v607
      %v1547 = vmul.f32 %v1515, %v612
      %v1548 = vmul.f32 %v1516, %v615
      %v1549 = vmul.f32 %v1517, %v620
      %v1550 = vsel %vm1453, %v1541, 0.0
      %v1551 = vsel %vm1453, %v1542, 0.0
      %v1552 = vadd.f32 %v1550, %v1551
      %v1553 = vsel %vm1453, %v1543, 0.0
      %v1554 = vadd.f32 %v1552, %v1553
      %v1555 = vsel %vm1453, %v1544, 0.0
      %v1556 = vadd.f32 %v1554, %v1555
      %v1557 = vsel %vm1453, %v1545, 0.0
      %v1558 = vadd.f32 %v1556, %v1557
      %v1559 = vsel %vm1453, %v1546, 0.0
      %v1560 = vadd.f32 %v1558, %v1559
      %v1561 = vsel %vm1453, %v1547, 0.0
      %v1562 = vadd.f32 %v1560, %v1561
      %v1563 = vsel %vm1453, %v1548, 0.0
      %v1564 = vadd.f32 %v1562, %v1563
      %v1565 = vsel %vm1453, %v1549, 0.0
      %v1566 = vadd.f32 %v1564, %v1565
      %v1567 = vrot.slane %v1566, 4
      %v1568 = vadd.f32 %v1566, %v1567
      %v1569 = vrot.slane %v1568, 2
      %v1570 = vadd.f32 %v1568, %v1569
      %v1571 = vrot.slane %v1570, 1
      %v1572 = vadd.f32 %v1570, %v1571
      %v1573 = vadd.f32 %v1476, %v1540
      %v1574 = vadd.f32 %v1508, %v1572
      %v1575 = vmul.f32 %v887, %v1402
      %v1576 = vmul.f32 %v890, %v1407
      %v1577 = vmul.f32 %v895, %v1412
      %v1578 = vmul.f32 %v898, %v1417
      %v1579 = vmul.f32 %v903, %v1422
      %v1580 = vmul.f32 %v906, %v1427
      %v1581 = vmul.f32 %v911, %v1432
      %v1582 = vmul.f32 %v914, %v1437
      %v1583 = vmul.f32 %v919, %v1442
      %v1584 = vsel %vm1453, %v1575, 0.0
      %v1585 = vsel %vm1453, %v1576, 0.0
      %v1586 = vadd.f32 %v1584, %v1585
      %v1587 = vsel %vm1453, %v1577, 0.0
      %v1588 = vadd.f32 %v1586, %v1587
      %v1589 = vsel %vm1453, %v1578, 0.0
      %v1590 = vadd.f32 %v1588, %v1589
      %v1591 = vsel %vm1453, %v1579, 0.0
      %v1592 = vadd.f32 %v1590, %v1591
      %v1593 = vsel %vm1453, %v1580, 0.0
      %v1594 = vadd.f32 %v1592, %v1593
      %v1595 = vsel %vm1453, %v1581, 0.0
      %v1596 = vadd.f32 %v1594, %v1595
      %v1597 = vsel %vm1453, %v1582, 0.0
      %v1598 = vadd.f32 %v1596, %v1597
      %v1599 = vsel %vm1453, %v1583, 0.0
      %v1600 = vadd.f32 %v1598, %v1599
      %v1601 = vrot.slane %v1600, 4
      %v1602 = vadd.f32 %v1600, %v1601
      %v1603 = vrot.slane %v1602, 2
      %v1604 = vadd.f32 %v1602, %v1603
      %v1605 = vrot.slane %v1604, 1
      %v1606 = vadd.f32 %v1604, %v1605
      %v1607 = vmul.f32 %v1575, %v887
      %v1608 = vmul.f32 %v1576, %v890
      %v1609 = vmul.f32 %v1577, %v895
      %v1610 = vmul.f32 %v1578, %v898
      %v1611 = vmul.f32 %v1579, %v903
      %v1612 = vmul.f32 %v1580, %v906
      %v1613 = vmul.f32 %v1581, %v911
      %v1614 = vmul.f32 %v1582, %v914
      %v1615 = vmul.f32 %v1583, %v919
      %v1616 = vsel %vm1453, %v1607, 0.0
      %v1617 = vsel %vm1453, %v1608, 0.0
      %v1618 = vadd.f32 %v1616, %v1617
      %v1619 = vsel %vm1453, %v1609, 0.0
      %v1620 = vadd.f32 %v1618, %v1619
      %v1621 = vsel %vm1453, %v1610, 0.0
      %v1622 = vadd.f32 %v1620, %v1621
      %v1623 = vsel %vm1453, %v1611, 0.0
      %v1624 = vadd.f32 %v1622, %v1623
      %v1625 = vsel %vm1453, %v1612, 0.0
      %v1626 = vadd.f32 %v1624, %v1625
      %v1627 = vsel %vm1453, %v1613, 0.0
      %v1628 = vadd.f32 %v1626, %v1627
      %v1629 = vsel %vm1453, %v1614, 0.0
      %v1630 = vadd.f32 %v1628, %v1629
      %v1631 = vsel %vm1453, %v1615, 0.0
      %v1632 = vadd.f32 %v1630, %v1631
      %v1633 = vrot.slane %v1632, 4
      %v1634 = vadd.f32 %v1632, %v1633
      %v1635 = vrot.slane %v1634, 2
      %v1636 = vadd.f32 %v1634, %v1635
      %v1637 = vrot.slane %v1636, 1
      %v1638 = vadd.f32 %v1636, %v1637
      %v1639 = vadd.f32 %v1573, %v1606
      %v1640 = vadd.f32 %v1574, %v1638
      %v1641 = vmul.f32 %v1381, %v1402
      %v1642 = vmul.f32 %v1382, %v1407
      %v1643 = vmul.f32 %v1383, %v1412
      %v1644 = vmul.f32 %v1384, %v1417
      %v1645 = vmul.f32 %v1385, %v1422
      %v1646 = vmul.f32 %v1386, %v1427
      %v1647 = vmul.f32 %v1387, %v1432
      %v1648 = vmul.f32 %v1388, %v1437
      %v1649 = vmul.f32 %v1389, %v1442
      %v1650 = vsel %vm1453, %v1641, 0.0
      %v1651 = vsel %vm1453, %v1642, 0.0
      %v1652 = vadd.f32 %v1650, %v1651
      %v1653 = vsel %vm1453, %v1643, 0.0
      %v1654 = vadd.f32 %v1652, %v1653
      %v1655 = vsel %vm1453, %v1644, 0.0
      %v1656 = vadd.f32 %v1654, %v1655
      %v1657 = vsel %vm1453, %v1645, 0.0
      %v1658 = vadd.f32 %v1656, %v1657
      %v1659 = vsel %vm1453, %v1646, 0.0
      %v1660 = vadd.f32 %v1658, %v1659
      %v1661 = vsel %vm1453, %v1647, 0.0
      %v1662 = vadd.f32 %v1660, %v1661
      %v1663 = vsel %vm1453, %v1648, 0.0
      %v1664 = vadd.f32 %v1662, %v1663
      %v1665 = vsel %vm1453, %v1649, 0.0
      %v1666 = vadd.f32 %v1664, %v1665
      %v1667 = vrot.slane %v1666, 4
      %v1668 = vadd.f32 %v1666, %v1667
      %v1669 = vrot.slane %v1668, 2
      %v1670 = vadd.f32 %v1668, %v1669
      %v1671 = vrot.slane %v1670, 1
      %v1672 = vadd.f32 %v1670, %v1671
      %v1673 = vmul.f32 %v1641, %v1381
      %v1674 = vmul.f32 %v1642, %v1382
      %v1675 = vmul.f32 %v1643, %v1383
      %v1676 = vmul.f32 %v1644, %v1384
      %v1677 = vmul.f32 %v1645, %v1385
      %v1678 = vmul.f32 %v1646, %v1386
      %v1679 = vmul.f32 %v1647, %v1387
      %v1680 = vmul.f32 %v1648, %v1388
      %v1681 = vmul.f32 %v1649, %v1389
      %v1682 = vsel %vm1453, %v1673, 0.0
      %v1683 = vsel %vm1453, %v1674, 0.0
      %v1684 = vadd.f32 %v1682, %v1683
      %v1685 = vsel %vm1453, %v1675, 0.0
      %v1686 = vadd.f32 %v1684, %v1685
      %v1687 = vsel %vm1453, %v1676, 0.0
      %v1688 = vadd.f32 %v1686, %v1687
      %v1689 = vsel %vm1453, %v1677, 0.0
      %v1690 = vadd.f32 %v1688, %v1689
      %v1691 = vsel %vm1453, %v1678, 0.0
      %v1692 = vadd.f32 %v1690, %v1691
      %v1693 = vsel %vm1453, %v1679, 0.0
      %v1694 = vadd.f32 %v1692, %v1693
      %v1695 = vsel %vm1453, %v1680, 0.0
      %v1696 = vadd.f32 %v1694, %v1695
      %v1697 = vsel %vm1453, %v1681, 0.0
      %v1698 = vadd.f32 %v1696, %v1697
      %v1699 = vrot.slane %v1698, 4
      %v1700 = vadd.f32 %v1698, %v1699
      %v1701 = vrot.slane %v1700, 2
      %v1702 = vadd.f32 %v1700, %v1701
      %v1703 = vrot.slane %v1702, 1
      %v1704 = vadd.f32 %v1702, %v1703
      %v1705 = vadd.f32 %v1639, %v1672
      %v1706 = vadd.f32 %v1640, %v1704
      %v1707 = vmul.f32 %v1705, 0.00390625
      %v1708 = vmul.f32 %v1706, 0.00390625
      %v1709 = vmul.f32 %v1707, %v1707
      %v1710 = vsub.f32 %v1708, %v1709
      %v1711 = vmax.f32 %v1710, 0.0
      %v1712 = vadd.f32 %v1711, 1e-05
      %v1713 = vrsqrt.pop %v1712
      %v1714 = vsub.f32 %v288, %v1707
      %v1715 = vsub.f32 %v291, %v1707
      %v1716 = vsub.f32 %v296, %v1707
      %v1717 = vsub.f32 %v299, %v1707
      %v1718 = vsub.f32 %v304, %v1707
      %v1719 = vsub.f32 %v307, %v1707
      %v1720 = vsub.f32 %v312, %v1707
      %v1721 = vsub.f32 %v315, %v1707
      %v1722 = vsub.f32 %v320, %v1707
      %v1723 = vmul.f32 %v1714, %v1713
      %v1724 = vmul.f32 %v1715, %v1713
      %v1725 = vmul.f32 %v1716, %v1713
      %v1726 = vmul.f32 %v1717, %v1713
      %v1727 = vmul.f32 %v1718, %v1713
      %v1728 = vmul.f32 %v1719, %v1713
      %v1729 = vmul.f32 %v1720, %v1713
      %v1730 = vmul.f32 %v1721, %v1713
      %v1731 = vmul.f32 %v1722, %v1713
      %v1732 = vmax.f32 %v1723, 0.0
      %v1733 = vmax.f32 %v1724, 0.0
      %v1734 = vmax.f32 %v1725, 0.0
      %v1735 = vmax.f32 %v1726, 0.0
      %v1736 = vmax.f32 %v1727, 0.0
      %v1737 = vmax.f32 %v1728, 0.0
      %v1738 = vmax.f32 %v1729, 0.0
      %v1739 = vmax.f32 %v1730, 0.0
      %v1740 = vmax.f32 %v1731, 0.0
      %v1741 = vpack.c.bf16 %v1733, %v1732
      %v1742 = vpack.c.bf16 %v1735, %v1734
      %v1743 = vpack.c.bf16 %v1737, %v1736
      %v1744 = vpack.c.bf16 %v1739, %v1738
      %v1745 = vpack.c.bf16 %v1740, %v1740
      %v1751 = vunpack.c.l.b16 %v1741
      %v1752 = vunpack.c.h.b16 %v1741
      %v1753 = vunpack.c.l.b16 %v1742
      %v1754 = vunpack.c.h.b16 %v1742
      %v1755 = vunpack.c.l.b16 %v1743
      %v1756 = vunpack.c.h.b16 %v1743
      %v1757 = vunpack.c.l.b16 %v1744
      %v1758 = vunpack.c.h.b16 %v1744
      %v1759 = vunpack.c.l.b16 %v1745
      %v1760 = vpack.c.b16 %v1751, %v1751
      %v1761 = vpack.c.b16 %v1752, %v1752
      %v1762 = vpack.c.b16 %v1753, %v1753
      %v1763 = vpack.c.b16 %v1754, %v1754
      %v1764 = vpack.c.b16 %v1755, %v1755
      %v1765 = vpack.c.b16 %v1756, %v1756
      %v1766 = vpack.c.b16 %v1757, %v1757
      %v1767 = vpack.c.b16 %v1758, %v1758
      %v1768 = vpack.c.b16 %v1759, %v1759
      %vm1778 = vcmask 257024
      %1779 = vst.msk [vmem:[%s170] sm:$0xf] %vm1778, %v1760
      %1780 = vst.msk [vmem:[%s170 + $0x4] sm:$0xf] %vm1778, %v1761
      %1781 = vst.msk [vmem:[%s170 + $0x8] sm:$0xf] %vm1778, %v1762
      %1782 = vst.msk [vmem:[%s170 + $0xc] sm:$0xf] %vm1778, %v1763
      %1783 = vst.msk [vmem:[%s170 + $0x10] sm:$0xf] %vm1778, %v1764
      %1784 = vst.msk [vmem:[%s170 + $0x14] sm:$0xf] %vm1778, %v1765
      %1785 = vst.msk [vmem:[%s170 + $0x18] sm:$0xf] %vm1778, %v1766
      %1786 = vst.msk [vmem:[%s170 + $0x1c] sm:$0xf] %vm1778, %v1767
      %1787 = vst.msk [vmem:[%s170 + $0x20] sm:$0xf] %vm1778, %v1768
      %v1788 = vsub.f32 %v588, %v1707
      %v1789 = vsub.f32 %v591, %v1707
      %v1790 = vsub.f32 %v596, %v1707
      %v1791 = vsub.f32 %v599, %v1707
      %v1792 = vsub.f32 %v604, %v1707
      %v1793 = vsub.f32 %v607, %v1707
      %v1794 = vsub.f32 %v612, %v1707
      %v1795 = vsub.f32 %v615, %v1707
      %v1796 = vsub.f32 %v620, %v1707
      %v1797 = vmul.f32 %v1788, %v1713
      %v1798 = vmul.f32 %v1789, %v1713
      %v1799 = vmul.f32 %v1790, %v1713
      %v1800 = vmul.f32 %v1791, %v1713
      %v1801 = vmul.f32 %v1792, %v1713
      %v1802 = vmul.f32 %v1793, %v1713
      %v1803 = vmul.f32 %v1794, %v1713
      %v1804 = vmul.f32 %v1795, %v1713
      %v1805 = vmul.f32 %v1796, %v1713
      %v1806 = vmax.f32 %v1797, 0.0
      %v1807 = vmax.f32 %v1798, 0.0
      %v1808 = vmax.f32 %v1799, 0.0
      %v1809 = vmax.f32 %v1800, 0.0
      %v1810 = vmax.f32 %v1801, 0.0
      %v1811 = vmax.f32 %v1802, 0.0
      %v1812 = vmax.f32 %v1803, 0.0
      %v1813 = vmax.f32 %v1804, 0.0
      %v1814 = vmax.f32 %v1805, 0.0
      %v1815 = vpack.c.bf16 %v1807, %v1806
      %v1816 = vpack.c.bf16 %v1809, %v1808
      %v1817 = vpack.c.bf16 %v1811, %v1810
      %v1818 = vpack.c.bf16 %v1813, %v1812
      %v1819 = vpack.c.bf16 %v1814, %v1814
      %v1825 = vunpack.c.l.b16 %v1815
      %v1826 = vunpack.c.h.b16 %v1815
      %v1827 = vunpack.c.l.b16 %v1816
      %v1828 = vunpack.c.h.b16 %v1816
      %v1829 = vunpack.c.l.b16 %v1817
      %v1830 = vunpack.c.h.b16 %v1817
      %v1831 = vunpack.c.l.b16 %v1818
      %v1832 = vunpack.c.h.b16 %v1818
      %v1833 = vunpack.c.l.b16 %v1819
      %v1834 = vpack.c.b16 %v1825, %v1825
      %v1835 = vpack.c.b16 %v1826, %v1826
      %v1836 = vpack.c.b16 %v1827, %v1827
      %v1837 = vpack.c.b16 %v1828, %v1828
      %v1838 = vpack.c.b16 %v1829, %v1829
      %v1839 = vpack.c.b16 %v1830, %v1830
      %v1840 = vpack.c.b16 %v1831, %v1831
      %v1841 = vpack.c.b16 %v1832, %v1832
      %v1842 = vpack.c.b16 %v1833, %v1833
      %s1852 = scalar_lea.vmem %s170, 36
      %1853 = vst.msk [vmem:[%s1852] sm:$0xf] %vm1778, %v1834
      %1854 = vst.msk [vmem:[%s1852 + $0x4] sm:$0xf] %vm1778, %v1835
      %1855 = vst.msk [vmem:[%s1852 + $0x8] sm:$0xf] %vm1778, %v1836
      %1856 = vst.msk [vmem:[%s1852 + $0xc] sm:$0xf] %vm1778, %v1837
      %1857 = vst.msk [vmem:[%s1852 + $0x10] sm:$0xf] %vm1778, %v1838
      %1858 = vst.msk [vmem:[%s1852 + $0x14] sm:$0xf] %vm1778, %v1839
      %1859 = vst.msk [vmem:[%s1852 + $0x18] sm:$0xf] %vm1778, %v1840
      %1860 = vst.msk [vmem:[%s1852 + $0x1c] sm:$0xf] %vm1778, %v1841
      %1861 = vst.msk [vmem:[%s1852 + $0x20] sm:$0xf] %vm1778, %v1842
      %v1862 = vsub.f32 %v887, %v1707
      %v1863 = vsub.f32 %v890, %v1707
      %v1864 = vsub.f32 %v895, %v1707
      %v1865 = vsub.f32 %v898, %v1707
      %v1866 = vsub.f32 %v903, %v1707
      %v1867 = vsub.f32 %v906, %v1707
      %v1868 = vsub.f32 %v911, %v1707
      %v1869 = vsub.f32 %v914, %v1707
      %v1870 = vsub.f32 %v919, %v1707
      %v1871 = vmul.f32 %v1862, %v1713
      %v1872 = vmul.f32 %v1863, %v1713
      %v1873 = vmul.f32 %v1864, %v1713
      %v1874 = vmul.f32 %v1865, %v1713
      %v1875 = vmul.f32 %v1866, %v1713
      %v1876 = vmul.f32 %v1867, %v1713
      %v1877 = vmul.f32 %v1868, %v1713
      %v1878 = vmul.f32 %v1869, %v1713
      %v1879 = vmul.f32 %v1870, %v1713
      %v1880 = vmax.f32 %v1871, 0.0
      %v1881 = vmax.f32 %v1872, 0.0
      %v1882 = vmax.f32 %v1873, 0.0
      %v1883 = vmax.f32 %v1874, 0.0
      %v1884 = vmax.f32 %v1875, 0.0
      %v1885 = vmax.f32 %v1876, 0.0
      %v1886 = vmax.f32 %v1877, 0.0
      %v1887 = vmax.f32 %v1878, 0.0
      %v1888 = vmax.f32 %v1879, 0.0
      %v1889 = vpack.c.bf16 %v1881, %v1880
      %v1890 = vpack.c.bf16 %v1883, %v1882
      %v1891 = vpack.c.bf16 %v1885, %v1884
      %v1892 = vpack.c.bf16 %v1887, %v1886
      %v1893 = vpack.c.bf16 %v1888, %v1888
      %v1899 = vunpack.c.l.b16 %v1889
      %v1900 = vunpack.c.h.b16 %v1889
      %v1901 = vunpack.c.l.b16 %v1890
      %v1902 = vunpack.c.h.b16 %v1890
      %v1903 = vunpack.c.l.b16 %v1891
      %v1904 = vunpack.c.h.b16 %v1891
      %v1905 = vunpack.c.l.b16 %v1892
      %v1906 = vunpack.c.h.b16 %v1892
      %v1907 = vunpack.c.l.b16 %v1893
      %v1908 = vpack.c.b16 %v1899, %v1899
      %v1909 = vpack.c.b16 %v1900, %v1900
      %v1910 = vpack.c.b16 %v1901, %v1901
      %v1911 = vpack.c.b16 %v1902, %v1902
      %v1912 = vpack.c.b16 %v1903, %v1903
      %v1913 = vpack.c.b16 %v1904, %v1904
      %v1914 = vpack.c.b16 %v1905, %v1905
      %v1915 = vpack.c.b16 %v1906, %v1906
      %v1916 = vpack.c.b16 %v1907, %v1907
      %s1926 = scalar_lea.vmem %s170, 72
      %1927 = vst.msk [vmem:[%s1926] sm:$0xf] %vm1778, %v1908
      %1928 = vst.msk [vmem:[%s1926 + $0x4] sm:$0xf] %vm1778, %v1909
      %1929 = vst.msk [vmem:[%s1926 + $0x8] sm:$0xf] %vm1778, %v1910
      %1930 = vst.msk [vmem:[%s1926 + $0xc] sm:$0xf] %vm1778, %v1911
      %1931 = vst.msk [vmem:[%s1926 + $0x10] sm:$0xf] %vm1778, %v1912
      %1932 = vst.msk [vmem:[%s1926 + $0x14] sm:$0xf] %vm1778, %v1913
      %1933 = vst.msk [vmem:[%s1926 + $0x18] sm:$0xf] %vm1778, %v1914
      %1934 = vst.msk [vmem:[%s1926 + $0x1c] sm:$0xf] %vm1778, %v1915
      %1935 = vst.msk [vmem:[%s1926 + $0x20] sm:$0xf] %vm1778, %v1916
      %v1936 = vsub.f32 %v1381, %v1707
      %v1937 = vsub.f32 %v1382, %v1707
      %v1938 = vsub.f32 %v1383, %v1707
      %v1939 = vsub.f32 %v1384, %v1707
      %v1940 = vsub.f32 %v1385, %v1707
      %v1941 = vsub.f32 %v1386, %v1707
      %v1942 = vsub.f32 %v1387, %v1707
      %v1943 = vsub.f32 %v1388, %v1707
      %v1944 = vsub.f32 %v1389, %v1707
      %v1945 = vmul.f32 %v1936, %v1713
      %v1946 = vmul.f32 %v1937, %v1713
      %v1947 = vmul.f32 %v1938, %v1713
      %v1948 = vmul.f32 %v1939, %v1713
      %v1949 = vmul.f32 %v1940, %v1713
      %v1950 = vmul.f32 %v1941, %v1713
      %v1951 = vmul.f32 %v1942, %v1713
      %v1952 = vmul.f32 %v1943, %v1713
      %v1953 = vmul.f32 %v1944, %v1713
      %v1954 = vmax.f32 %v1945, 0.0
      %v1955 = vmax.f32 %v1946, 0.0
      %v1956 = vmax.f32 %v1947, 0.0
      %v1957 = vmax.f32 %v1948, 0.0
      %v1958 = vmax.f32 %v1949, 0.0
      %v1959 = vmax.f32 %v1950, 0.0
      %v1960 = vmax.f32 %v1951, 0.0
      %v1961 = vmax.f32 %v1952, 0.0
      %v1962 = vmax.f32 %v1953, 0.0
      %v1963 = vpack.c.bf16 %v1955, %v1954
      %v1964 = vpack.c.bf16 %v1957, %v1956
      %v1965 = vpack.c.bf16 %v1959, %v1958
      %v1966 = vpack.c.bf16 %v1961, %v1960
      %v1967 = vpack.c.bf16 %v1962, %v1962
      %v1973 = vunpack.c.l.b16 %v1963
      %v1974 = vunpack.c.h.b16 %v1963
      %v1975 = vunpack.c.l.b16 %v1964
      %v1976 = vunpack.c.h.b16 %v1964
      %v1977 = vunpack.c.l.b16 %v1965
      %v1978 = vunpack.c.h.b16 %v1965
      %v1979 = vunpack.c.l.b16 %v1966
      %v1980 = vunpack.c.h.b16 %v1966
      %v1981 = vunpack.c.l.b16 %v1967
      %v1982 = vpack.c.b16 %v1973, %v1973
      %v1983 = vpack.c.b16 %v1974, %v1974
      %v1984 = vpack.c.b16 %v1975, %v1975
      %v1985 = vpack.c.b16 %v1976, %v1976
      %v1986 = vpack.c.b16 %v1977, %v1977
      %v1987 = vpack.c.b16 %v1978, %v1978
      %v1988 = vpack.c.b16 %v1979, %v1979
      %v1989 = vpack.c.b16 %v1980, %v1980
      %v1990 = vpack.c.b16 %v1981, %v1981
      %s2000 = scalar_lea.vmem %s170, 108
      %2001 = vst.msk [vmem:[%s2000] sm:$0xf] %vm1778, %v1982
      %2002 = vst.msk [vmem:[%s2000 + $0x4] sm:$0xf] %vm1778, %v1983
      %2003 = vst.msk [vmem:[%s2000 + $0x8] sm:$0xf] %vm1778, %v1984
      %2004 = vst.msk [vmem:[%s2000 + $0xc] sm:$0xf] %vm1778, %v1985
      %2005 = vst.msk [vmem:[%s2000 + $0x10] sm:$0xf] %vm1778, %v1986
      %2006 = vst.msk [vmem:[%s2000 + $0x14] sm:$0xf] %vm1778, %v1987
      %2007 = vst.msk [vmem:[%s2000 + $0x18] sm:$0xf] %vm1778, %v1988
      %2008 = vst.msk [vmem:[%s2000 + $0x1c] sm:$0xf] %vm1778, %v1989
      %2009 = vst.msk [vmem:[%s2000 + $0x20] sm:$0xf] %vm1778, %v1990
      %p2010 = scmp.lt.s32.totalorder %s14, 1
      %s2011 = scalar_select %p2010, %s14, 1
      %s2012 = smul.addr %s2011, 36
      %s2013 = smul.addr %s2012, 4
      %s2014 = scalar_lea.vmem %s3, %s2013
      // Predicated region
      $region33: #{generator_forward.45} parent=31 // pred_check
        %p2015 = pneg %p100
      $region34: #{generator_forward.45} parent=31 // pred_check_branch
        %2017 = sbr.rel (%p2015) target = $region36
      $region35: #{generator_forward.45} parent=31 // pred_region
        _
      $region36: #{generator_forward.45} parent=31 // pred_fallthru
        _
    $region32: #{generator_forward.45} parent=5 // pred_fallthru
      _
    %p2018 = scmp.le.s32.totalorder 2, %s9
    // Predicated region
    $region37: #{generator_forward.45} parent=5 // pred_check
      %p2019 = pneg %p2018
    $region38: #{generator_forward.45} parent=5 // pred_check_branch
      %2021 = sbr.rel (%p2019) target = $region40
    $region39: #{generator_forward.45} parent=5 // pred_region
      %s2022 = ssub.s32 %s9, 2
      // Predicated region
      $region41: #{generator_forward.45} parent=39 // pred_check
        %p2023 = pneg %p106
      $region42: #{generator_forward.45} parent=39 // pred_check_branch
        %2025 = sbr.rel (%p2023) target = $region44
      $region43: #{generator_forward.45} parent=39 // pred_region
        %p2026 = scmp.lt.s32.totalorder %s15, 1
        %s2027 = scalar_select %p2026, %s15, 1
        %s2028 = smul.addr %s2027, 36
        %s2029 = smul.addr %s2028, 4
        %s2030 = scalar_lea.vmem %s3, %s2029
      $region44: #{generator_forward.45} parent=39 // pred_fallthru
        _
    $region40: #{generator_forward.45} parent=5 // pred_fallthru
      _
  $region6: #{generator_forward.45} parent=0 // loop_footer
    %s13 = sadd.s32 1, %s9
  $region7: #{generator_forward.45} parent=0 // loop_footer_branch
    %8 = sbr.rel target = $region3
  $region8: #{generator_forward.45} parent=0 // loop_exit
    _

</llo_original>
